<compile_context>
chip_gen: v7x
topology: tpu7x:2x2x1
jax: 0.10.0
libtpu: 0.0.40
codegen_flags: <defaults>
</compile_context>

<pallas_src>
import jax
import jax.numpy as jnp
from jax.experimental import pallas as pl
from jax.experimental.pallas import tpu as pltpu

FEATURE_DIM = 32      # logical feature dim (analogue of backbone.fc.in_features)
C_PAD = 128           # all channel axes padded to one full lane width


# ---------------------------------------------------------------------------
# Fused backbone kernel: stem + residual block + 1x1 expand + global avg pool
# ---------------------------------------------------------------------------

def _backbone_kernel(x_ref,
                     w_stem_ref, s_stem_ref, b_stem_ref,
                     w_b1_ref, s_b1_ref, b_b1_ref,
                     w_b2_ref, s_b2_ref, b_b2_ref,
                     w_exp_ref, s_exp_ref, b_exp_ref,
                     o_ref,
                     pa_ref, pb_ref):
    # x_ref: (1, 3*Hp, W, C) bf16 -- three column-phase copies of the
    # halo-padded input stacked along the row axis (phase dx occupies rows
    # [dx*Hp, (dx+1)*Hp); phase dx row yy holds padded_input[yy, x+dx]).
    Hp3, W, C = x_ref.shape[1], x_ref.shape[2], x_ref.shape[3]
    Hp = Hp3 // 3
    H = Hp - 2
    HW = H * W

    def conv3x3(read, w_ref, s_ref, b_ref, res=None):
        # 3x3 same-padding conv: 9 aligned whole-tile slabs, value-accumulated
        # f32 matmuls, fused folded-BN affine (+ optional residual) + ReLU.
        acc = None
        for dy in range(3):
            for dx in range(3):
                xs = read(dx, dy).reshape(HW, C)            # bf16, aligned view
                part = jnp.dot(xs, w_ref[3 * dy + dx],
                               preferred_element_type=jnp.float32)
                acc = part if acc is None else acc + part
        out = acc * s_ref[...] + b_ref[...]
        if res is not None:
            out = out + res
        return jnp.maximum(out, 0.0)

    def store_phases(buf_ref, h):
        # Write conv output h (HW, C) f32 as three bf16 column-phase copies
        # with the zero halo baked in.  Phase-1 store is full-width & aligned;
        # phases 0/2 pay the single inherent column-shift relayout each.
        h3 = h.astype(jnp.bfloat16).reshape(H, W, C)
        zrow = jnp.zeros((W, C), jnp.bfloat16)
        zcol = jnp.zeros((H, 1, C), jnp.bfloat16)
        # phase 1: P1[yy, x] = h[yy-1, x]
        buf_ref[Hp + 1:Hp + 1 + H] = h3
        # phase 0: P0[yy, 0] = 0 (left halo), P0[yy, x] = h[yy-1, x-1]
        buf_ref[1:1 + H, 1:W] = h3[:, :W - 1, :]
        buf_ref[1:1 + H, 0:1] = zcol
        # phase 2: P2[yy, x] = h[yy-1, x+1], P2[yy, W-1] = 0 (right halo)
        buf_ref[2 * Hp + 1:2 * Hp + 1 + H, 0:W - 1] = h3[:, 1:, :]
        buf_ref[2 * Hp + 1:2 * Hp + 1 + H, W - 1:W] = zcol
        # halo rows: tiny aligned stores, redone every step so the kernel is
        # correct even when the parallel grid axis is split across TensorCores.
        for p in range(3):
            buf_ref[p * Hp] = zrow
            buf_ref[p * Hp + Hp - 1] = zrow

    # ---- stem: conv3x3 + BN + ReLU ------------------------------------------
    h = conv3x3(lambda dx, dy: x_ref[0, dx * Hp + dy:dx * Hp + dy + H],
                w_stem_ref, s_stem_ref, b_stem_ref)
    store_phases(pa_ref, h)

    # ---- residual block: conv3x3 + BN + ReLU --------------------------------
    h1 = conv3x3(lambda dx, dy: pa_ref[dx * Hp + dy:dx * Hp + dy + H],
                 w_b1_ref, s_b1_ref, b_b1_ref)
    store_phases(pb_ref, h1)

    # ---- residual block: conv3x3 + BN, +skip (stem output), ReLU ------------
    res = pa_ref[Hp + 1:Hp + 1 + H].reshape(HW, C)          # bf16 stem output
    h2 = conv3x3(lambda dx, dy: pb_ref[dx * Hp + dy:dx * Hp + dy + H],
                 w_b2_ref, s_b2_ref, b_b2_ref, res=res)

    # ---- 1x1 conv + BN + ReLU to (padded) feature_dim ------------------------
    f = jnp.dot(h2.astype(jnp.bfloat16), w_exp_ref[...],
                preferred_element_type=jnp.float32)
    f = jnp.maximum(f * s_exp_ref[...] + b_exp_ref[...], 0.0)   # (HW, C)

    # ---- global average pool: XLU sublane reduce (no M=1 MXU matmul) ---------
    pooled = jnp.sum(f, axis=0, keepdims=True) * (1.0 / HW)     # (1, C) f32

    # Lane-dense, sublane-aligned store; row 0 is read back outside.
    o_ref[...] = jnp.broadcast_to(pooled.reshape(1, 1, C), (1, 8, C))


def _backbone_pallas(xp, p):
    """xp: (B, 3*Hp, W, C_PAD) bf16 column-phase input (see _make_input_phases)."""
    B, Hp3, W, C = xp.shape

    def full_spec(shape):
        return pl.BlockSpec(shape, lambda b: (0,) * len(shape))

    return pl.pallas_call(
        _backbone_kernel,
        out_shape=jax.ShapeDtypeStruct((B, 8, C), jnp.float32),
        grid_spec=pltpu.PrefetchScalarGridSpec(
            num_scalar_prefetch=0,
            grid=(B,),
            in_specs=[
                pl.BlockSpec((1, Hp3, W, C), lambda b: (b, 0, 0, 0)),
                full_spec((9, C, C)), full_spec((1, C)), full_spec((1, C)),
                full_spec((9, C, C)), full_spec((1, C)), full_spec((1, C)),
                full_spec((9, C, C)), full_spec((1, C)), full_spec((1, C)),
                full_spec((C, C)), full_spec((1, C)), full_spec((1, C)),
            ],
            out_specs=pl.BlockSpec((1, 8, C), lambda b: (b, 0, 0)),
            scratch_shapes=[
                pltpu.VMEM((Hp3, W, C), jnp.bfloat16),   # stem-out column phases
                pltpu.VMEM((Hp3, W, C), jnp.bfloat16),   # block-mid column phases
            ],
        ),
        compiler_params=pltpu.CompilerParams(
            dimension_semantics=("parallel",),           # v7x: one image per TC
            vmem_limit_bytes=16 * 1024 * 1024,
        ),
    )(xp,
      p['w_stem'], p['s_stem'], p['b_stem'],
      p['w_b1'], p['s_b1'], p['b_b1'],
      p['w_b2'], p['s_b2'], p['b_b2'],
      p['w_exp'], p['s_exp'], p['b_exp'])


# ---------------------------------------------------------------------------
# Deterministic parameter init (conv weights + folded eval-mode BatchNorm),
# zero-padded on all channel axes to C_PAD (pad scale=1, bias=0 => padded
# channels stay exactly 0 through the whole network).
# ---------------------------------------------------------------------------

def _bn_fold(key, c, c_pad=C_PAD, eps=1e-5):
    k1, k2, k3, k4 = jax.random.split(key, 4)
    gamma = 1.0 + 0.1 * jax.random.normal(k1, (c,), jnp.float32)
    beta = 0.1 * jax.random.normal(k2, (c,), jnp.float32)
    mean = 0.1 * jax.random.normal(k3, (c,), jnp.float32)
    var = 1.0 + 0.1 * jax.random.uniform(k4, (c,), jnp.float32)
    scale = gamma / jnp.sqrt(var + eps)
    bias = beta - mean * scale
    scale_p = jnp.ones((1, c_pad), jnp.float32).at[0, :c].set(scale)
    bias_p = jnp.zeros((1, c_pad), jnp.float32).at[0, :c].set(bias)
    return scale_p, bias_p


def _pad_w3x3(w, c_pad=C_PAD):
    k, cin, cout = w.shape
    wp = jnp.zeros((k, c_pad, c_pad), jnp.float32).at[:, :cin, :cout].set(w)
    return wp.astype(jnp.bfloat16)


def _pad_w1x1(w, c_pad=C_PAD):
    cin, cout = w.shape
    wp = jnp.zeros((c_pad, c_pad), jnp.float32).at[:cin, :cout].set(w)
    return wp.astype(jnp.bfloat16)


def init_params(key, c_in=4, c_mid=16, feature_dim=FEATURE_DIM):
    ks = jax.random.split(key, 8)
    p = {}
    p['w_stem'] = _pad_w3x3(0.1 * jax.random.normal(ks[0], (9, c_in, c_mid), jnp.float32))
    p['s_stem'], p['b_stem'] = _bn_fold(ks[1], c_mid)
    p['w_b1'] = _pad_w3x3(0.1 * jax.random.normal(ks[2], (9, c_mid, c_mid), jnp.float32))
    p['s_b1'], p['b_b1'] = _bn_fold(ks[3], c_mid)
    p['w_b2'] = _pad_w3x3(0.1 * jax.random.normal(ks[4], (9, c_mid, c_mid), jnp.float32))
    p['s_b2'], p['b_b2'] = _bn_fold(ks[5], c_mid)
    p['w_exp'] = _pad_w1x1(0.1 * jax.random.normal(ks[6], (c_mid, feature_dim), jnp.float32))
    p['s_exp'], p['b_exp'] = _bn_fold(ks[7], feature_dim)
    return p


# ---------------------------------------------------------------------------
# Forward pass  (== FeatureExtractor.forward: backbone(x) with fc = Identity)
# ---------------------------------------------------------------------------

def _make_input_phases(x_nchw, c_pad=C_PAD):
    # NCHW -> NHWC, channel-pad to C_PAD, spatial halo pad, then build the three
    # column-phase copies expected by the kernel: (B, 3*(H+2), W, C_PAD) bf16.
    x = jnp.transpose(x_nchw, (0, 2, 3, 1)).astype(jnp.float32)
    B, H, W, c_in = x.shape
    xc = jnp.zeros((B, H, W, c_pad), jnp.float32).at[..., :c_in].set(x)
    xpad = jnp.pad(xc, ((0, 0), (1, 1), (1, 1), (0, 0)))        # (B, H+2, W+2, C)
    phases = [xpad[:, :, dx:dx + W, :] for dx in range(3)]
    return jnp.concatenate(phases, axis=1).astype(jnp.bfloat16)  # (B, 3*(H+2), W, C)


def feature_extractor_forward(params, x_nchw):
    xp = _make_input_phases(x_nchw)                    # (B, 3*Hp, W, C_PAD) bf16
    out = _backbone_pallas(xp, params)                 # (B, 8, C_PAD) f32
    return out[:, 0, :FEATURE_DIM]                     # (B, feature_dim)


# ---------------------------------------------------------------------------
# Pure-JAX reference (same stand-in backbone, same bf16 activation storage)
# ---------------------------------------------------------------------------

def _reference_forward(params, x_nchw):
    p = params
    x = jnp.transpose(x_nchw, (0, 2, 3, 1)).astype(jnp.float32)
    B, H, W, c_in = x.shape

    def conv3x3(a, w, s, b):
        ap = jnp.pad(a, ((0, 0), (1, 1), (1, 1), (0, 0)))
        out = jnp.zeros((B, H, W, C_PAD), jnp.float32)
        for idx in range(9):
            dy, dx = idx // 3, idx % 3
            out = out + jnp.einsum("bhwc,cd->bhwd",
                                   ap[:, dy:dy + H, dx:dx + W, :],
                                   w[idx].astype(jnp.float32))
        return out * s[0] + b[0]

    def bf16(a):
        return a.astype(jnp.bfloat16).astype(jnp.float32)

    x0 = jnp.zeros((B, H, W, C_PAD), jnp.float32).at[..., :c_in].set(x)
    x0 = bf16(x0)
    h = bf16(jax.nn.relu(conv3x3(x0, p['w_stem'], p['s_stem'], p['b_stem'])))
    h1 = bf16(jax.nn.relu(conv3x3(h, p['w_b1'], p['s_b1'], p['b_b1'])))
    h2 = bf16(jax.nn.relu(conv3x3(h1, p['w_b2'], p['s_b2'], p['b_b2']) + h))
    f = jax.nn.relu(jnp.einsum("bhwc,cd->bhwd", h2, p['w_exp'].astype(jnp.float32))
                    * p['s_exp'][0] + p['b_exp'][0])
    return jnp.mean(f, axis=(1, 2))[:, :FEATURE_DIM]


if __name__ == "__main__":
    key = jax.random.PRNGKey(0)
    k_param, k_x = jax.random.split(key)
    params = init_params(k_param, c_in=4, c_mid=16, feature_dim=FEATURE_DIM)

    x = jax.random.normal(k_x, (2, 4, 16, 16), jnp.float32)   # NCHW like PyTorch

    fwd = jax.jit(feature_extractor_forward)
    feats = jax.block_until_ready(fwd(params, x))

    assert feats.shape == (2, FEATURE_DIM), feats.shape
    assert feats.dtype == jnp.float32
    assert bool(jnp.all(jnp.isfinite(feats)))

    ref = _reference_forward(params, x)
    max_err = float(jnp.max(jnp.abs(feats - ref)))
    assert bool(jnp.allclose(feats, ref, atol=5e-2, rtol=5e-2)), max_err

    print("KERNEL_OK")
</pallas_src>

<mosaic_0001>
module attributes {stable_mosaic.version = 11 : i64} {
  func.func @_backbone_kernel(%arg0: i32, %arg1: memref<1x54x16x128xbf16, #tpu.memory_space<vmem>>, %arg2: memref<9x128x128xbf16, #tpu.memory_space<vmem>>, %arg3: memref<1x128xf32, #tpu.memory_space<vmem>>, %arg4: memref<1x128xf32, #tpu.memory_space<vmem>>, %arg5: memref<9x128x128xbf16, #tpu.memory_space<vmem>>, %arg6: memref<1x128xf32, #tpu.memory_space<vmem>>, %arg7: memref<1x128xf32, #tpu.memory_space<vmem>>, %arg8: memref<9x128x128xbf16, #tpu.memory_space<vmem>>, %arg9: memref<1x128xf32, #tpu.memory_space<vmem>>, %arg10: memref<1x128xf32, #tpu.memory_space<vmem>>, %arg11: memref<128x128xbf16, #tpu.memory_space<vmem>>, %arg12: memref<1x128xf32, #tpu.memory_space<vmem>>, %arg13: memref<1x128xf32, #tpu.memory_space<vmem>>, %arg14: memref<1x8x128xf32, #tpu.memory_space<vmem>>, %arg15: memref<54x16x128xbf16, #tpu.memory_space<vmem>>, %arg16: memref<54x16x128xbf16, #tpu.memory_space<vmem>>) attributes {dimension_semantics = [#tpu.dimension_semantics<parallel>], iteration_bounds = array<i64: 2>, scalar_prefetch = 0 : i64, scratch_operands = 2 : i64, tpu.core_type = #tpu.core_type<tc>, window_params = [{transform_indices = @transform_0, window_bounds = array<i64: 1, 54, 16, 128>}, {pipeline_mode = #tpu.pipeline_mode<synchronous>, transform_indices = @transform_1, window_bounds = array<i64: 9, 128, 128>}, {pipeline_mode = #tpu.pipeline_mode<synchronous>, transform_indices = @transform_2, window_bounds = array<i64: 1, 128>}, {pipeline_mode = #tpu.pipeline_mode<synchronous>, transform_indices = @transform_3, window_bounds = array<i64: 1, 128>}, {pipeline_mode = #tpu.pipeline_mode<synchronous>, transform_indices = @transform_4, window_bounds = array<i64: 9, 128, 128>}, {pipeline_mode = #tpu.pipeline_mode<synchronous>, transform_indices = @transform_5, window_bounds = array<i64: 1, 128>}, {pipeline_mode = #tpu.pipeline_mode<synchronous>, transform_indices = @transform_6, window_bounds = array<i64: 1, 128>}, {pipeline_mode = #tpu.pipeline_mode<synchronous>, transform_indices = @transform_7, window_bounds = array<i64: 9, 128, 128>}, {pipeline_mode = #tpu.pipeline_mode<synchronous>, transform_indices = @transform_8, window_bounds = array<i64: 1, 128>}, {pipeline_mode = #tpu.pipeline_mode<synchronous>, transform_indices = @transform_9, window_bounds = array<i64: 1, 128>}, {pipeline_mode = #tpu.pipeline_mode<synchronous>, transform_indices = @transform_10, window_bounds = array<i64: 128, 128>}, {pipeline_mode = #tpu.pipeline_mode<synchronous>, transform_indices = @transform_11, window_bounds = array<i64: 1, 128>}, {pipeline_mode = #tpu.pipeline_mode<synchronous>, transform_indices = @transform_12, window_bounds = array<i64: 1, 128>}, {transform_indices = @transform_13, window_bounds = array<i64: 1, 8, 128>}]} {
    %c0 = arith.constant 0 : index
    %c0_0 = arith.constant 0 : index
    %c0_1 = arith.constant 0 : index
    %c0_2 = arith.constant 0 : index
    %0 = vector.load %arg1[%c0, %c0_0, %c0_1, %c0_2] : memref<1x54x16x128xbf16, #tpu.memory_space<vmem>>, vector<1x16x16x128xbf16>
    %1 = vector.shape_cast %0 : vector<1x16x16x128xbf16> to vector<16x16x128xbf16>
    %2 = vector.shape_cast %1 : vector<16x16x128xbf16> to vector<256x128xbf16>
    %c0_3 = arith.constant 0 : index
    %c0_4 = arith.constant 0 : index
    %c0_5 = arith.constant 0 : index
    %3 = vector.load %arg2[%c0_3, %c0_4, %c0_5] : memref<9x128x128xbf16, #tpu.memory_space<vmem>>, vector<1x128x128xbf16>
    %4 = vector.shape_cast %3 : vector<1x128x128xbf16> to vector<128x128xbf16>
    %cst = arith.constant dense<0.000000e+00> : vector<256x128xf32>
    %5 = tpu.matmul %2, %4, %cst {dimension_numbers = #tpu.dot_dimension_numbers<[1], [0], [0], [1], [0, 0, 1, 1], [], []>} : vector<256x128xbf16>, vector<128x128xbf16>, vector<256x128xf32> -> vector<256x128xf32>
    %c0_6 = arith.constant 0 : index
    %c18 = arith.constant 18 : index
    %c0_7 = arith.constant 0 : index
    %c0_8 = arith.constant 0 : index
    %6 = vector.load %arg1[%c0_6, %c18, %c0_7, %c0_8] : memref<1x54x16x128xbf16, #tpu.memory_space<vmem>>, vector<1x16x16x128xbf16>
    %7 = vector.shape_cast %6 : vector<1x16x16x128xbf16> to vector<16x16x128xbf16>
    %8 = vector.shape_cast %7 : vector<16x16x128xbf16> to vector<256x128xbf16>
    %c1 = arith.constant 1 : index
    %c0_9 = arith.constant 0 : index
    %c0_10 = arith.constant 0 : index
    %9 = vector.load %arg2[%c1, %c0_9, %c0_10] : memref<9x128x128xbf16, #tpu.memory_space<vmem>>, vector<1x128x128xbf16>
    %10 = vector.shape_cast %9 : vector<1x128x128xbf16> to vector<128x128xbf16>
    %cst_11 = arith.constant dense<0.000000e+00> : vector<256x128xf32>
    %11 = tpu.matmul %8, %10, %cst_11 {dimension_numbers = #tpu.dot_dimension_numbers<[1], [0], [0], [1], [0, 0, 1, 1], [], []>} : vector<256x128xbf16>, vector<128x128xbf16>, vector<256x128xf32> -> vector<256x128xf32>
    %12 = arith.addf %5, %11 : vector<256x128xf32>
    %c0_12 = arith.constant 0 : index
    %c36 = arith.constant 36 : index
    %c0_13 = arith.constant 0 : index
    %c0_14 = arith.constant 0 : index
    %13 = vector.load %arg1[%c0_12, %c36, %c0_13, %c0_14] : memref<1x54x16x128xbf16, #tpu.memory_space<vmem>>, vector<1x16x16x128xbf16>
    %14 = vector.shape_cast %13 : vector<1x16x16x128xbf16> to vector<16x16x128xbf16>
    %15 = vector.shape_cast %14 : vector<16x16x128xbf16> to vector<256x128xbf16>
    %c2 = arith.constant 2 : index
    %c0_15 = arith.constant 0 : index
    %c0_16 = arith.constant 0 : index
    %16 = vector.load %arg2[%c2, %c0_15, %c0_16] : memref<9x128x128xbf16, #tpu.memory_space<vmem>>, vector<1x128x128xbf16>
    %17 = vector.shape_cast %16 : vector<1x128x128xbf16> to vector<128x128xbf16>
    %cst_17 = arith.constant dense<0.000000e+00> : vector<256x128xf32>
    %18 = tpu.matmul %15, %17, %cst_17 {dimension_numbers = #tpu.dot_dimension_numbers<[1], [0], [0], [1], [0, 0, 1, 1], [], []>} : vector<256x128xbf16>, vector<128x128xbf16>, vector<256x128xf32> -> vector<256x128xf32>
    %19 = arith.addf %12, %18 : vector<256x128xf32>
    %c0_18 = arith.constant 0 : index
    %c1_19 = arith.constant 1 : index
    %c0_20 = arith.constant 0 : index
    %c0_21 = arith.constant 0 : index
    %20 = vector.load %arg1[%c0_18, %c1_19, %c0_20, %c0_21] : memref<1x54x16x128xbf16, #tpu.memory_space<vmem>>, vector<1x16x16x128xbf16>
    %21 = vector.shape_cast %20 : vector<1x16x16x128xbf16> to vector<16x16x128xbf16>
    %22 = vector.shape_cast %21 : vector<16x16x128xbf16> to vector<256x128xbf16>
    %c3 = arith.constant 3 : index
    %c0_22 = arith.constant 0 : index
    %c0_23 = arith.constant 0 : index
    %23 = vector.load %arg2[%c3, %c0_22, %c0_23] : memref<9x128x128xbf16, #tpu.memory_space<vmem>>, vector<1x128x128xbf16>
    %24 = vector.shape_cast %23 : vector<1x128x128xbf16> to vector<128x128xbf16>
    %cst_24 = arith.constant dense<0.000000e+00> : vector<256x128xf32>
    %25 = tpu.matmul %22, %24, %cst_24 {dimension_numbers = #tpu.dot_dimension_numbers<[1], [0], [0], [1], [0, 0, 1, 1], [], []>} : vector<256x128xbf16>, vector<128x128xbf16>, vector<256x128xf32> -> vector<256x128xf32>
    %26 = arith.addf %19, %25 : vector<256x128xf32>
    %c0_25 = arith.constant 0 : index
    %c19 = arith.constant 19 : index
    %c0_26 = arith.constant 0 : index
    %c0_27 = arith.constant 0 : index
    %27 = vector.load %arg1[%c0_25, %c19, %c0_26, %c0_27] : memref<1x54x16x128xbf16, #tpu.memory_space<vmem>>, vector<1x16x16x128xbf16>
    %28 = vector.shape_cast %27 : vector<1x16x16x128xbf16> to vector<16x16x128xbf16>
    %29 = vector.shape_cast %28 : vector<16x16x128xbf16> to vector<256x128xbf16>
    %c4 = arith.constant 4 : index
    %c0_28 = arith.constant 0 : index
    %c0_29 = arith.constant 0 : index
    %30 = vector.load %arg2[%c4, %c0_28, %c0_29] : memref<9x128x128xbf16, #tpu.memory_space<vmem>>, vector<1x128x128xbf16>
    %31 = vector.shape_cast %30 : vector<1x128x128xbf16> to vector<128x128xbf16>
    %cst_30 = arith.constant dense<0.000000e+00> : vector<256x128xf32>
    %32 = tpu.matmul %29, %31, %cst_30 {dimension_numbers = #tpu.dot_dimension_numbers<[1], [0], [0], [1], [0, 0, 1, 1], [], []>} : vector<256x128xbf16>, vector<128x128xbf16>, vector<256x128xf32> -> vector<256x128xf32>
    %33 = arith.addf %26, %32 : vector<256x128xf32>
    %c0_31 = arith.constant 0 : index
    %c37 = arith.constant 37 : index
    %c0_32 = arith.constant 0 : index
    %c0_33 = arith.constant 0 : index
    %34 = vector.load %arg1[%c0_31, %c37, %c0_32, %c0_33] : memref<1x54x16x128xbf16, #tpu.memory_space<vmem>>, vector<1x16x16x128xbf16>
    %35 = vector.shape_cast %34 : vector<1x16x16x128xbf16> to vector<16x16x128xbf16>
    %36 = vector.shape_cast %35 : vector<16x16x128xbf16> to vector<256x128xbf16>
    %c5 = arith.constant 5 : index
    %c0_34 = arith.constant 0 : index
    %c0_35 = arith.constant 0 : index
    %37 = vector.load %arg2[%c5, %c0_34, %c0_35] : memref<9x128x128xbf16, #tpu.memory_space<vmem>>, vector<1x128x128xbf16>
    %38 = vector.shape_cast %37 : vector<1x128x128xbf16> to vector<128x128xbf16>
    %cst_36 = arith.constant dense<0.000000e+00> : vector<256x128xf32>
    %39 = tpu.matmul %36, %38, %cst_36 {dimension_numbers = #tpu.dot_dimension_numbers<[1], [0], [0], [1], [0, 0, 1, 1], [], []>} : vector<256x128xbf16>, vector<128x128xbf16>, vector<256x128xf32> -> vector<256x128xf32>
    %40 = arith.addf %33, %39 : vector<256x128xf32>
    %c0_37 = arith.constant 0 : index
    %c2_38 = arith.constant 2 : index
    %c0_39 = arith.constant 0 : index
    %c0_40 = arith.constant 0 : index
    %41 = vector.load %arg1[%c0_37, %c2_38, %c0_39, %c0_40] : memref<1x54x16x128xbf16, #tpu.memory_space<vmem>>, vector<1x16x16x128xbf16>
    %42 = vector.shape_cast %41 : vector<1x16x16x128xbf16> to vector<16x16x128xbf16>
    %43 = vector.shape_cast %42 : vector<16x16x128xbf16> to vector<256x128xbf16>
    %c6 = arith.constant 6 : index
    %c0_41 = arith.constant 0 : index
    %c0_42 = arith.constant 0 : index
    %44 = vector.load %arg2[%c6, %c0_41, %c0_42] : memref<9x128x128xbf16, #tpu.memory_space<vmem>>, vector<1x128x128xbf16>
    %45 = vector.shape_cast %44 : vector<1x128x128xbf16> to vector<128x128xbf16>
    %cst_43 = arith.constant dense<0.000000e+00> : vector<256x128xf32>
    %46 = tpu.matmul %43, %45, %cst_43 {dimension_numbers = #tpu.dot_dimension_numbers<[1], [0], [0], [1], [0, 0, 1, 1], [], []>} : vector<256x128xbf16>, vector<128x128xbf16>, vector<256x128xf32> -> vector<256x128xf32>
    %47 = arith.addf %40, %46 : vector<256x128xf32>
    %c0_44 = arith.constant 0 : index
    %c20 = arith.constant 20 : index
    %c0_45 = arith.constant 0 : index
    %c0_46 = arith.constant 0 : index
    %48 = vector.load %arg1[%c0_44, %c20, %c0_45, %c0_46] : memref<1x54x16x128xbf16, #tpu.memory_space<vmem>>, vector<1x16x16x128xbf16>
    %49 = vector.shape_cast %48 : vector<1x16x16x128xbf16> to vector<16x16x128xbf16>
    %50 = vector.shape_cast %49 : vector<16x16x128xbf16> to vector<256x128xbf16>
    %c7 = arith.constant 7 : index
    %c0_47 = arith.constant 0 : index
    %c0_48 = arith.constant 0 : index
    %51 = vector.load %arg2[%c7, %c0_47, %c0_48] : memref<9x128x128xbf16, #tpu.memory_space<vmem>>, vector<1x128x128xbf16>
    %52 = vector.shape_cast %51 : vector<1x128x128xbf16> to vector<128x128xbf16>
    %cst_49 = arith.constant dense<0.000000e+00> : vector<256x128xf32>
    %53 = tpu.matmul %50, %52, %cst_49 {dimension_numbers = #tpu.dot_dimension_numbers<[1], [0], [0], [1], [0, 0, 1, 1], [], []>} : vector<256x128xbf16>, vector<128x128xbf16>, vector<256x128xf32> -> vector<256x128xf32>
    %54 = arith.addf %47, %53 : vector<256x128xf32>
    %c0_50 = arith.constant 0 : index
    %c38 = arith.constant 38 : index
    %c0_51 = arith.constant 0 : index
    %c0_52 = arith.constant 0 : index
    %55 = vector.load %arg1[%c0_50, %c38, %c0_51, %c0_52] : memref<1x54x16x128xbf16, #tpu.memory_space<vmem>>, vector<1x16x16x128xbf16>
    %56 = vector.shape_cast %55 : vector<1x16x16x128xbf16> to vector<16x16x128xbf16>
    %57 = vector.shape_cast %56 : vector<16x16x128xbf16> to vector<256x128xbf16>
    %c8 = arith.constant 8 : index
    %c0_53 = arith.constant 0 : index
    %c0_54 = arith.constant 0 : index
    %58 = vector.load %arg2[%c8, %c0_53, %c0_54] : memref<9x128x128xbf16, #tpu.memory_space<vmem>>, vector<1x128x128xbf16>
    %59 = vector.shape_cast %58 : vector<1x128x128xbf16> to vector<128x128xbf16>
    %cst_55 = arith.constant dense<0.000000e+00> : vector<256x128xf32>
    %60 = tpu.matmul %57, %59, %cst_55 {dimension_numbers = #tpu.dot_dimension_numbers<[1], [0], [0], [1], [0, 0, 1, 1], [], []>} : vector<256x128xbf16>, vector<128x128xbf16>, vector<256x128xf32> -> vector<256x128xf32>
    %61 = arith.addf %54, %60 : vector<256x128xf32>
    %c0_56 = arith.constant 0 : index
    %c0_57 = arith.constant 0 : index
    %62 = vector.load %arg3[%c0_56, %c0_57] : memref<1x128xf32, #tpu.memory_space<vmem>>, vector<1x128xf32>
    %63 = vector.broadcast %62 : vector<1x128xf32> to vector<256x128xf32>
    %64 = arith.mulf %61, %63 : vector<256x128xf32>
    %c0_58 = arith.constant 0 : index
    %c0_59 = arith.constant 0 : index
    %65 = vector.load %arg4[%c0_58, %c0_59] : memref<1x128xf32, #tpu.memory_space<vmem>>, vector<1x128xf32>
    %66 = vector.broadcast %65 : vector<1x128xf32> to vector<256x128xf32>
    %67 = arith.addf %64, %66 : vector<256x128xf32>
    %cst_60 = arith.constant 0.000000e+00 : f32
    %68 = vector.broadcast %cst_60 : f32 to vector<256x128xf32>
    %69 = arith.maximumf %67, %68 : vector<256x128xf32>
    %70 = arith.truncf %69 : vector<256x128xf32> to vector<256x128xbf16>
    %71 = vector.shape_cast %70 : vector<256x128xbf16> to vector<16x16x128xbf16>
    %cst_61 = arith.constant 0.000000e+00 : bf16
    %72 = vector.broadcast %cst_61 : bf16 to vector<16x128xbf16>
    %cst_62 = arith.constant 0.000000e+00 : bf16
    %73 = vector.broadcast %cst_62 : bf16 to vector<16x1x128xbf16>
    %c19_63 = arith.constant 19 : index
    %c0_64 = arith.constant 0 : index
    %c0_65 = arith.constant 0 : index
    %74 = vector.load %arg15[%c19_63, %c0_64, %c0_65] : memref<54x16x128xbf16, #tpu.memory_space<vmem>>, vector<16x16x128xbf16>
    tpu.vector_store %arg15[%c19_63, %c0_64, %c0_65], %71 {strides = array<i32>} : memref<54x16x128xbf16, #tpu.memory_space<vmem>>, vector<16x16x128xbf16>,
    %75 = vector.extract_strided_slice %71 {offsets = [0, 0, 0], sizes = [16, 15, 128], strides = [1, 1, 1]} : vector<16x16x128xbf16> to vector<16x15x128xbf16>
    %c1_66 = arith.constant 1 : index
    %c1_67 = arith.constant 1 : index
    %c0_68 = arith.constant 0 : index
    %76 = vector.load %arg15[%c1_66, %c1_67, %c0_68] : memref<54x16x128xbf16, #tpu.memory_space<vmem>>, vector<16x15x128xbf16>
    tpu.vector_store %arg15[%c1_66, %c1_67, %c0_68], %75 {strides = array<i32>} : memref<54x16x128xbf16, #tpu.memory_space<vmem>>, vector<16x15x128xbf16>,
    %c1_69 = arith.constant 1 : index
    %c0_70 = arith.constant 0 : index
    %c0_71 = arith.constant 0 : index
    %77 = vector.load %arg15[%c1_69, %c0_70, %c0_71] : memref<54x16x128xbf16, #tpu.memory_space<vmem>>, vector<16x1x128xbf16>
    tpu.vector_store %arg15[%c1_69, %c0_70, %c0_71], %73 {strides = array<i32>} : memref<54x16x128xbf16, #tpu.memory_space<vmem>>, vector<16x1x128xbf16>,
    %78 = vector.extract_strided_slice %71 {offsets = [0, 1, 0], sizes = [16, 15, 128], strides = [1, 1, 1]} : vector<16x16x128xbf16> to vector<16x15x128xbf16>
    %c37_72 = arith.constant 37 : index
    %c0_73 = arith.constant 0 : index
    %c0_74 = arith.constant 0 : index
    %79 = vector.load %arg15[%c37_72, %c0_73, %c0_74] : memref<54x16x128xbf16, #tpu.memory_space<vmem>>, vector<16x15x128xbf16>
    tpu.vector_store %arg15[%c37_72, %c0_73, %c0_74], %78 {strides = array<i32>} : memref<54x16x128xbf16, #tpu.memory_space<vmem>>, vector<16x15x128xbf16>,
    %c37_75 = arith.constant 37 : index
    %c15 = arith.constant 15 : index
    %c0_76 = arith.constant 0 : index
    %80 = vector.load %arg15[%c37_75, %c15, %c0_76] : memref<54x16x128xbf16, #tpu.memory_space<vmem>>, vector<16x1x128xbf16>
    tpu.vector_store %arg15[%c37_75, %c15, %c0_76], %73 {strides = array<i32>} : memref<54x16x128xbf16, #tpu.memory_space<vmem>>, vector<16x1x128xbf16>,
    %c0_77 = arith.constant 0 : index
    %c0_78 = arith.constant 0 : index
    %c0_79 = arith.constant 0 : index
    %81 = vector.load %arg15[%c0_77, %c0_78, %c0_79] : memref<54x16x128xbf16, #tpu.memory_space<vmem>>, vector<1x16x128xbf16>
    %82 = vector.shape_cast %81 : vector<1x16x128xbf16> to vector<16x128xbf16>
    %83 = vector.shape_cast %72 : vector<16x128xbf16> to vector<1x16x128xbf16>
    tpu.vector_store %arg15[%c0_77, %c0_78, %c0_79], %83 {strides = array<i32>} : memref<54x16x128xbf16, #tpu.memory_space<vmem>>, vector<1x16x128xbf16>,
    %c17 = arith.constant 17 : index
    %c0_80 = arith.constant 0 : index
    %c0_81 = arith.constant 0 : index
    %84 = vector.load %arg15[%c17, %c0_80, %c0_81] : memref<54x16x128xbf16, #tpu.memory_space<vmem>>, vector<1x16x128xbf16>
    %85 = vector.shape_cast %84 : vector<1x16x128xbf16> to vector<16x128xbf16>
    %86 = vector.shape_cast %72 : vector<16x128xbf16> to vector<1x16x128xbf16>
    tpu.vector_store %arg15[%c17, %c0_80, %c0_81], %86 {strides = array<i32>} : memref<54x16x128xbf16, #tpu.memory_space<vmem>>, vector<1x16x128xbf16>,
    %c18_82 = arith.constant 18 : index
    %c0_83 = arith.constant 0 : index
    %c0_84 = arith.constant 0 : index
    %87 = vector.load %arg15[%c18_82, %c0_83, %c0_84] : memref<54x16x128xbf16, #tpu.memory_space<vmem>>, vector<1x16x128xbf16>
    %88 = vector.shape_cast %87 : vector<1x16x128xbf16> to vector<16x128xbf16>
    %89 = vector.shape_cast %72 : vector<16x128xbf16> to vector<1x16x128xbf16>
    tpu.vector_store %arg15[%c18_82, %c0_83, %c0_84], %89 {strides = array<i32>} : memref<54x16x128xbf16, #tpu.memory_space<vmem>>, vector<1x16x128xbf16>,
    %c35 = arith.constant 35 : index
    %c0_85 = arith.constant 0 : index
    %c0_86 = arith.constant 0 : index
    %90 = vector.load %arg15[%c35, %c0_85, %c0_86] : memref<54x16x128xbf16, #tpu.memory_space<vmem>>, vector<1x16x128xbf16>
    %91 = vector.shape_cast %90 : vector<1x16x128xbf16> to vector<16x128xbf16>
    %92 = vector.shape_cast %72 : vector<16x128xbf16> to vector<1x16x128xbf16>
    tpu.vector_store %arg15[%c35, %c0_85, %c0_86], %92 {strides = array<i32>} : memref<54x16x128xbf16, #tpu.memory_space<vmem>>, vector<1x16x128xbf16>,
    %c36_87 = arith.constant 36 : index
    %c0_88 = arith.constant 0 : index
    %c0_89 = arith.constant 0 : index
    %93 = vector.load %arg15[%c36_87, %c0_88, %c0_89] : memref<54x16x128xbf16, #tpu.memory_space<vmem>>, vector<1x16x128xbf16>
    %94 = vector.shape_cast %93 : vector<1x16x128xbf16> to vector<16x128xbf16>
    %95 = vector.shape_cast %72 : vector<16x128xbf16> to vector<1x16x128xbf16>
    tpu.vector_store %arg15[%c36_87, %c0_88, %c0_89], %95 {strides = array<i32>} : memref<54x16x128xbf16, #tpu.memory_space<vmem>>, vector<1x16x128xbf16>,
    %c53 = arith.constant 53 : index
    %c0_90 = arith.constant 0 : index
    %c0_91 = arith.constant 0 : index
    %96 = vector.load %arg15[%c53, %c0_90, %c0_91] : memref<54x16x128xbf16, #tpu.memory_space<vmem>>, vector<1x16x128xbf16>
    %97 = vector.shape_cast %96 : vector<1x16x128xbf16> to vector<16x128xbf16>
    %98 = vector.shape_cast %72 : vector<16x128xbf16> to vector<1x16x128xbf16>
    tpu.vector_store %arg15[%c53, %c0_90, %c0_91], %98 {strides = array<i32>} : memref<54x16x128xbf16, #tpu.memory_space<vmem>>, vector<1x16x128xbf16>,
    %c0_92 = arith.constant 0 : index
    %c0_93 = arith.constant 0 : index
    %c0_94 = arith.constant 0 : index
    %99 = vector.load %arg15[%c0_92, %c0_93, %c0_94] : memref<54x16x128xbf16, #tpu.memory_space<vmem>>, vector<16x16x128xbf16>
    %100 = vector.shape_cast %99 : vector<16x16x128xbf16> to vector<256x128xbf16>
    %c0_95 = arith.constant 0 : index
    %c0_96 = arith.constant 0 : index
    %c0_97 = arith.constant 0 : index
    %101 = vector.load %arg5[%c0_95, %c0_96, %c0_97] : memref<9x128x128xbf16, #tpu.memory_space<vmem>>, vector<1x128x128xbf16>
    %102 = vector.shape_cast %101 : vector<1x128x128xbf16> to vector<128x128xbf16>
    %cst_98 = arith.constant dense<0.000000e+00> : vector<256x128xf32>
    %103 = tpu.matmul %100, %102, %cst_98 {dimension_numbers = #tpu.dot_dimension_numbers<[1], [0], [0], [1], [0, 0, 1, 1], [], []>} : vector<256x128xbf16>, vector<128x128xbf16>, vector<256x128xf32> -> vector<256x128xf32>
    %c18_99 = arith.constant 18 : index
    %c0_100 = arith.constant 0 : index
    %c0_101 = arith.constant 0 : index
    %104 = vector.load %arg15[%c18_99, %c0_100, %c0_101] : memref<54x16x128xbf16, #tpu.memory_space<vmem>>, vector<16x16x128xbf16>
    %105 = vector.shape_cast %104 : vector<16x16x128xbf16> to vector<256x128xbf16>
    %c1_102 = arith.constant 1 : index
    %c0_103 = arith.constant 0 : index
    %c0_104 = arith.constant 0 : index
    %106 = vector.load %arg5[%c1_102, %c0_103, %c0_104] : memref<9x128x128xbf16, #tpu.memory_space<vmem>>, vector<1x128x128xbf16>
    %107 = vector.shape_cast %106 : vector<1x128x128xbf16> to vector<128x128xbf16>
    %cst_105 = arith.constant dense<0.000000e+00> : vector<256x128xf32>
    %108 = tpu.matmul %105, %107, %cst_105 {dimension_numbers = #tpu.dot_dimension_numbers<[1], [0], [0], [1], [0, 0, 1, 1], [], []>} : vector<256x128xbf16>, vector<128x128xbf16>, vector<256x128xf32> -> vector<256x128xf32>
    %109 = arith.addf %103, %108 : vector<256x128xf32>
    %c36_106 = arith.constant 36 : index
    %c0_107 = arith.constant 0 : index
    %c0_108 = arith.constant 0 : index
    %110 = vector.load %arg15[%c36_106, %c0_107, %c0_108] : memref<54x16x128xbf16, #tpu.memory_space<vmem>>, vector<16x16x128xbf16>
    %111 = vector.shape_cast %110 : vector<16x16x128xbf16> to vector<256x128xbf16>
    %c2_109 = arith.constant 2 : index
    %c0_110 = arith.constant 0 : index
    %c0_111 = arith.constant 0 : index
    %112 = vector.load %arg5[%c2_109, %c0_110, %c0_111] : memref<9x128x128xbf16, #tpu.memory_space<vmem>>, vector<1x128x128xbf16>
    %113 = vector.shape_cast %112 : vector<1x128x128xbf16> to vector<128x128xbf16>
    %cst_112 = arith.constant dense<0.000000e+00> : vector<256x128xf32>
    %114 = tpu.matmul %111, %113, %cst_112 {dimension_numbers = #tpu.dot_dimension_numbers<[1], [0], [0], [1], [0, 0, 1, 1], [], []>} : vector<256x128xbf16>, vector<128x128xbf16>, vector<256x128xf32> -> vector<256x128xf32>
    %115 = arith.addf %109, %114 : vector<256x128xf32>
    %c1_113 = arith.constant 1 : index
    %c0_114 = arith.constant 0 : index
    %c0_115 = arith.constant 0 : index
    %116 = vector.load %arg15[%c1_113, %c0_114, %c0_115] : memref<54x16x128xbf16, #tpu.memory_space<vmem>>, vector<16x16x128xbf16>
    %117 = vector.shape_cast %116 : vector<16x16x128xbf16> to vector<256x128xbf16>
    %c3_116 = arith.constant 3 : index
    %c0_117 = arith.constant 0 : index
    %c0_118 = arith.constant 0 : index
    %118 = vector.load %arg5[%c3_116, %c0_117, %c0_118] : memref<9x128x128xbf16, #tpu.memory_space<vmem>>, vector<1x128x128xbf16>
    %119 = vector.shape_cast %118 : vector<1x128x128xbf16> to vector<128x128xbf16>
    %cst_119 = arith.constant dense<0.000000e+00> : vector<256x128xf32>
    %120 = tpu.matmul %117, %119, %cst_119 {dimension_numbers = #tpu.dot_dimension_numbers<[1], [0], [0], [1], [0, 0, 1, 1], [], []>} : vector<256x128xbf16>, vector<128x128xbf16>, vector<256x128xf32> -> vector<256x128xf32>
    %121 = arith.addf %115, %120 : vector<256x128xf32>
    %c19_120 = arith.constant 19 : index
    %c0_121 = arith.constant 0 : index
    %c0_122 = arith.constant 0 : index
    %122 = vector.load %arg15[%c19_120, %c0_121, %c0_122] : memref<54x16x128xbf16, #tpu.memory_space<vmem>>, vector<16x16x128xbf16>
    %123 = vector.shape_cast %122 : vector<16x16x128xbf16> to vector<256x128xbf16>
    %c4_123 = arith.constant 4 : index
    %c0_124 = arith.constant 0 : index
    %c0_125 = arith.constant 0 : index
    %124 = vector.load %arg5[%c4_123, %c0_124, %c0_125] : memref<9x128x128xbf16, #tpu.memory_space<vmem>>, vector<1x128x128xbf16>
    %125 = vector.shape_cast %124 : vector<1x128x128xbf16> to vector<128x128xbf16>
    %cst_126 = arith.constant dense<0.000000e+00> : vector<256x128xf32>
    %126 = tpu.matmul %123, %125, %cst_126 {dimension_numbers = #tpu.dot_dimension_numbers<[1], [0], [0], [1], [0, 0, 1, 1], [], []>} : vector<256x128xbf16>, vector<128x128xbf16>, vector<256x128xf32> -> vector<256x128xf32>
    %127 = arith.addf %121, %126 : vector<256x128xf32>
    %c37_127 = arith.constant 37 : index
    %c0_128 = arith.constant 0 : index
    %c0_129 = arith.constant 0 : index
    %128 = vector.load %arg15[%c37_127, %c0_128, %c0_129] : memref<54x16x128xbf16, #tpu.memory_space<vmem>>, vector<16x16x128xbf16>
    %129 = vector.shape_cast %128 : vector<16x16x128xbf16> to vector<256x128xbf16>
    %c5_130 = arith.constant 5 : index
    %c0_131 = arith.constant 0 : index
    %c0_132 = arith.constant 0 : index
    %130 = vector.load %arg5[%c5_130, %c0_131, %c0_132] : memref<9x128x128xbf16, #tpu.memory_space<vmem>>, vector<1x128x128xbf16>
    %131 = vector.shape_cast %130 : vector<1x128x128xbf16> to vector<128x128xbf16>
    %cst_133 = arith.constant dense<0.000000e+00> : vector<256x128xf32>
    %132 = tpu.matmul %129, %131, %cst_133 {dimension_numbers = #tpu.dot_dimension_numbers<[1], [0], [0], [1], [0, 0, 1, 1], [], []>} : vector<256x128xbf16>, vector<128x128xbf16>, vector<256x128xf32> -> vector<256x128xf32>
    %133 = arith.addf %127, %132 : vector<256x128xf32>
    %c2_134 = arith.constant 2 : index
    %c0_135 = arith.constant 0 : index
    %c0_136 = arith.constant 0 : index
    %134 = vector.load %arg15[%c2_134, %c0_135, %c0_136] : memref<54x16x128xbf16, #tpu.memory_space<vmem>>, vector<16x16x128xbf16>
    %135 = vector.shape_cast %134 : vector<16x16x128xbf16> to vector<256x128xbf16>
    %c6_137 = arith.constant 6 : index
    %c0_138 = arith.constant 0 : index
    %c0_139 = arith.constant 0 : index
    %136 = vector.load %arg5[%c6_137, %c0_138, %c0_139] : memref<9x128x128xbf16, #tpu.memory_space<vmem>>, vector<1x128x128xbf16>
    %137 = vector.shape_cast %136 : vector<1x128x128xbf16> to vector<128x128xbf16>
    %cst_140 = arith.constant dense<0.000000e+00> : vector<256x128xf32>
    %138 = tpu.matmul %135, %137, %cst_140 {dimension_numbers = #tpu.dot_dimension_numbers<[1], [0], [0], [1], [0, 0, 1, 1], [], []>} : vector<256x128xbf16>, vector<128x128xbf16>, vector<256x128xf32> -> vector<256x128xf32>
    %139 = arith.addf %133, %138 : vector<256x128xf32>
    %c20_141 = arith.constant 20 : index
    %c0_142 = arith.constant 0 : index
    %c0_143 = arith.constant 0 : index
    %140 = vector.load %arg15[%c20_141, %c0_142, %c0_143] : memref<54x16x128xbf16, #tpu.memory_space<vmem>>, vector<16x16x128xbf16>
    %141 = vector.shape_cast %140 : vector<16x16x128xbf16> to vector<256x128xbf16>
    %c7_144 = arith.constant 7 : index
    %c0_145 = arith.constant 0 : index
    %c0_146 = arith.constant 0 : index
    %142 = vector.load %arg5[%c7_144, %c0_145, %c0_146] : memref<9x128x128xbf16, #tpu.memory_space<vmem>>, vector<1x128x128xbf16>
    %143 = vector.shape_cast %142 : vector<1x128x128xbf16> to vector<128x128xbf16>
    %cst_147 = arith.constant dense<0.000000e+00> : vector<256x128xf32>
    %144 = tpu.matmul %141, %143, %cst_147 {dimension_numbers = #tpu.dot_dimension_numbers<[1], [0], [0], [1], [0, 0, 1, 1], [], []>} : vector<256x128xbf16>, vector<128x128xbf16>, vector<256x128xf32> -> vector<256x128xf32>
    %145 = arith.addf %139, %144 : vector<256x128xf32>
    %c38_148 = arith.constant 38 : index
    %c0_149 = arith.constant 0 : index
    %c0_150 = arith.constant 0 : index
    %146 = vector.load %arg15[%c38_148, %c0_149, %c0_150] : memref<54x16x128xbf16, #tpu.memory_space<vmem>>, vector<16x16x128xbf16>
    %147 = vector.shape_cast %146 : vector<16x16x128xbf16> to vector<256x128xbf16>
    %c8_151 = arith.constant 8 : index
    %c0_152 = arith.constant 0 : index
    %c0_153 = arith.constant 0 : index
    %148 = vector.load %arg5[%c8_151, %c0_152, %c0_153] : memref<9x128x128xbf16, #tpu.memory_space<vmem>>, vector<1x128x128xbf16>
    %149 = vector.shape_cast %148 : vector<1x128x128xbf16> to vector<128x128xbf16>
    %cst_154 = arith.constant dense<0.000000e+00> : vector<256x128xf32>
    %150 = tpu.matmul %147, %149, %cst_154 {dimension_numbers = #tpu.dot_dimension_numbers<[1], [0], [0], [1], [0, 0, 1, 1], [], []>} : vector<256x128xbf16>, vector<128x128xbf16>, vector<256x128xf32> -> vector<256x128xf32>
    %151 = arith.addf %145, %150 : vector<256x128xf32>
    %c0_155 = arith.constant 0 : index
    %c0_156 = arith.constant 0 : index
    %152 = vector.load %arg6[%c0_155, %c0_156] : memref<1x128xf32, #tpu.memory_space<vmem>>, vector<1x128xf32>
    %153 = vector.broadcast %152 : vector<1x128xf32> to vector<256x128xf32>
    %154 = arith.mulf %151, %153 : vector<256x128xf32>
    %c0_157 = arith.constant 0 : index
    %c0_158 = arith.constant 0 : index
    %155 = vector.load %arg7[%c0_157, %c0_158] : memref<1x128xf32, #tpu.memory_space<vmem>>, vector<1x128xf32>
    %156 = vector.broadcast %155 : vector<1x128xf32> to vector<256x128xf32>
    %157 = arith.addf %154, %156 : vector<256x128xf32>
    %cst_159 = arith.constant 0.000000e+00 : f32
    %158 = vector.broadcast %cst_159 : f32 to vector<256x128xf32>
    %159 = arith.maximumf %157, %158 : vector<256x128xf32>
    %160 = arith.truncf %159 : vector<256x128xf32> to vector<256x128xbf16>
    %161 = vector.shape_cast %160 : vector<256x128xbf16> to vector<16x16x128xbf16>
    %cst_160 = arith.constant 0.000000e+00 : bf16
    %162 = vector.broadcast %cst_160 : bf16 to vector<16x128xbf16>
    %cst_161 = arith.constant 0.000000e+00 : bf16
    %163 = vector.broadcast %cst_161 : bf16 to vector<16x1x128xbf16>
    %c19_162 = arith.constant 19 : index
    %c0_163 = arith.constant 0 : index
    %c0_164 = arith.constant 0 : index
    %164 = vector.load %arg16[%c19_162, %c0_163, %c0_164] : memref<54x16x128xbf16, #tpu.memory_space<vmem>>, vector<16x16x128xbf16>
    tpu.vector_store %arg16[%c19_162, %c0_163, %c0_164], %161 {strides = array<i32>} : memref<54x16x128xbf16, #tpu.memory_space<vmem>>, vector<16x16x128xbf16>,
    %165 = vector.extract_strided_slice %161 {offsets = [0, 0, 0], sizes = [16, 15, 128], strides = [1, 1, 1]} : vector<16x16x128xbf16> to vector<16x15x128xbf16>
    %c1_165 = arith.constant 1 : index
    %c1_166 = arith.constant 1 : index
    %c0_167 = arith.constant 0 : index
    %166 = vector.load %arg16[%c1_165, %c1_166, %c0_167] : memref<54x16x128xbf16, #tpu.memory_space<vmem>>, vector<16x15x128xbf16>
    tpu.vector_store %arg16[%c1_165, %c1_166, %c0_167], %165 {strides = array<i32>} : memref<54x16x128xbf16, #tpu.memory_space<vmem>>, vector<16x15x128xbf16>,
    %c1_168 = arith.constant 1 : index
    %c0_169 = arith.constant 0 : index
    %c0_170 = arith.constant 0 : index
    %167 = vector.load %arg16[%c1_168, %c0_169, %c0_170] : memref<54x16x128xbf16, #tpu.memory_space<vmem>>, vector<16x1x128xbf16>
    tpu.vector_store %arg16[%c1_168, %c0_169, %c0_170], %163 {strides = array<i32>} : memref<54x16x128xbf16, #tpu.memory_space<vmem>>, vector<16x1x128xbf16>,
    %168 = vector.extract_strided_slice %161 {offsets = [0, 1, 0], sizes = [16, 15, 128], strides = [1, 1, 1]} : vector<16x16x128xbf16> to vector<16x15x128xbf16>
    %c37_171 = arith.constant 37 : index
    %c0_172 = arith.constant 0 : index
    %c0_173 = arith.constant 0 : index
    %169 = vector.load %arg16[%c37_171, %c0_172, %c0_173] : memref<54x16x128xbf16, #tpu.memory_space<vmem>>, vector<16x15x128xbf16>
    tpu.vector_store %arg16[%c37_171, %c0_172, %c0_173], %168 {strides = array<i32>} : memref<54x16x128xbf16, #tpu.memory_space<vmem>>, vector<16x15x128xbf16>,
    %c37_174 = arith.constant 37 : index
    %c15_175 = arith.constant 15 : index
    %c0_176 = arith.constant 0 : index
    %170 = vector.load %arg16[%c37_174, %c15_175, %c0_176] : memref<54x16x128xbf16, #tpu.memory_space<vmem>>, vector<16x1x128xbf16>
    tpu.vector_store %arg16[%c37_174, %c15_175, %c0_176], %163 {strides = array<i32>} : memref<54x16x128xbf16, #tpu.memory_space<vmem>>, vector<16x1x128xbf16>,
    %c0_177 = arith.constant 0 : index
    %c0_178 = arith.constant 0 : index
    %c0_179 = arith.constant 0 : index
    %171 = vector.load %arg16[%c0_177, %c0_178, %c0_179] : memref<54x16x128xbf16, #tpu.memory_space<vmem>>, vector<1x16x128xbf16>
    %172 = vector.shape_cast %171 : vector<1x16x128xbf16> to vector<16x128xbf16>
    %173 = vector.shape_cast %162 : vector<16x128xbf16> to vector<1x16x128xbf16>
    tpu.vector_store %arg16[%c0_177, %c0_178, %c0_179], %173 {strides = array<i32>} : memref<54x16x128xbf16, #tpu.memory_space<vmem>>, vector<1x16x128xbf16>,
    %c17_180 = arith.constant 17 : index
    %c0_181 = arith.constant 0 : index
    %c0_182 = arith.constant 0 : index
    %174 = vector.load %arg16[%c17_180, %c0_181, %c0_182] : memref<54x16x128xbf16, #tpu.memory_space<vmem>>, vector<1x16x128xbf16>
    %175 = vector.shape_cast %174 : vector<1x16x128xbf16> to vector<16x128xbf16>
    %176 = vector.shape_cast %162 : vector<16x128xbf16> to vector<1x16x128xbf16>
    tpu.vector_store %arg16[%c17_180, %c0_181, %c0_182], %176 {strides = array<i32>} : memref<54x16x128xbf16, #tpu.memory_space<vmem>>, vector<1x16x128xbf16>,
    %c18_183 = arith.constant 18 : index
    %c0_184 = arith.constant 0 : index
    %c0_185 = arith.constant 0 : index
    %177 = vector.load %arg16[%c18_183, %c0_184, %c0_185] : memref<54x16x128xbf16, #tpu.memory_space<vmem>>, vector<1x16x128xbf16>
    %178 = vector.shape_cast %177 : vector<1x16x128xbf16> to vector<16x128xbf16>
    %179 = vector.shape_cast %162 : vector<16x128xbf16> to vector<1x16x128xbf16>
    tpu.vector_store %arg16[%c18_183, %c0_184, %c0_185], %179 {strides = array<i32>} : memref<54x16x128xbf16, #tpu.memory_space<vmem>>, vector<1x16x128xbf16>,
    %c35_186 = arith.constant 35 : index
    %c0_187 = arith.constant 0 : index
    %c0_188 = arith.constant 0 : index
    %180 = vector.load %arg16[%c35_186, %c0_187, %c0_188] : memref<54x16x128xbf16, #tpu.memory_space<vmem>>, vector<1x16x128xbf16>
    %181 = vector.shape_cast %180 : vector<1x16x128xbf16> to vector<16x128xbf16>
    %182 = vector.shape_cast %162 : vector<16x128xbf16> to vector<1x16x128xbf16>
    tpu.vector_store %arg16[%c35_186, %c0_187, %c0_188], %182 {strides = array<i32>} : memref<54x16x128xbf16, #tpu.memory_space<vmem>>, vector<1x16x128xbf16>,
    %c36_189 = arith.constant 36 : index
    %c0_190 = arith.constant 0 : index
    %c0_191 = arith.constant 0 : index
    %183 = vector.load %arg16[%c36_189, %c0_190, %c0_191] : memref<54x16x128xbf16, #tpu.memory_space<vmem>>, vector<1x16x128xbf16>
    %184 = vector.shape_cast %183 : vector<1x16x128xbf16> to vector<16x128xbf16>
    %185 = vector.shape_cast %162 : vector<16x128xbf16> to vector<1x16x128xbf16>
    tpu.vector_store %arg16[%c36_189, %c0_190, %c0_191], %185 {strides = array<i32>} : memref<54x16x128xbf16, #tpu.memory_space<vmem>>, vector<1x16x128xbf16>,
    %c53_192 = arith.constant 53 : index
    %c0_193 = arith.constant 0 : index
    %c0_194 = arith.constant 0 : index
    %186 = vector.load %arg16[%c53_192, %c0_193, %c0_194] : memref<54x16x128xbf16, #tpu.memory_space<vmem>>, vector<1x16x128xbf16>
    %187 = vector.shape_cast %186 : vector<1x16x128xbf16> to vector<16x128xbf16>
    %188 = vector.shape_cast %162 : vector<16x128xbf16> to vector<1x16x128xbf16>
    tpu.vector_store %arg16[%c53_192, %c0_193, %c0_194], %188 {strides = array<i32>} : memref<54x16x128xbf16, #tpu.memory_space<vmem>>, vector<1x16x128xbf16>,
    %c19_195 = arith.constant 19 : index
    %c0_196 = arith.constant 0 : index
    %c0_197 = arith.constant 0 : index
    %189 = vector.load %arg15[%c19_195, %c0_196, %c0_197] : memref<54x16x128xbf16, #tpu.memory_space<vmem>>, vector<16x16x128xbf16>
    %190 = vector.shape_cast %189 : vector<16x16x128xbf16> to vector<256x128xbf16>
    %c0_198 = arith.constant 0 : index
    %c0_199 = arith.constant 0 : index
    %c0_200 = arith.constant 0 : index
    %191 = vector.load %arg16[%c0_198, %c0_199, %c0_200] : memref<54x16x128xbf16, #tpu.memory_space<vmem>>, vector<16x16x128xbf16>
    %192 = vector.shape_cast %191 : vector<16x16x128xbf16> to vector<256x128xbf16>
    %c0_201 = arith.constant 0 : index
    %c0_202 = arith.constant 0 : index
    %c0_203 = arith.constant 0 : index
    %193 = vector.load %arg8[%c0_201, %c0_202, %c0_203] : memref<9x128x128xbf16, #tpu.memory_space<vmem>>, vector<1x128x128xbf16>
    %194 = vector.shape_cast %193 : vector<1x128x128xbf16> to vector<128x128xbf16>
    %cst_204 = arith.constant dense<0.000000e+00> : vector<256x128xf32>
    %195 = tpu.matmul %192, %194, %cst_204 {dimension_numbers = #tpu.dot_dimension_numbers<[1], [0], [0], [1], [0, 0, 1, 1], [], []>} : vector<256x128xbf16>, vector<128x128xbf16>, vector<256x128xf32> -> vector<256x128xf32>
    %c18_205 = arith.constant 18 : index
    %c0_206 = arith.constant 0 : index
    %c0_207 = arith.constant 0 : index
    %196 = vector.load %arg16[%c18_205, %c0_206, %c0_207] : memref<54x16x128xbf16, #tpu.memory_space<vmem>>, vector<16x16x128xbf16>
    %197 = vector.shape_cast %196 : vector<16x16x128xbf16> to vector<256x128xbf16>
    %c1_208 = arith.constant 1 : index
    %c0_209 = arith.constant 0 : index
    %c0_210 = arith.constant 0 : index
    %198 = vector.load %arg8[%c1_208, %c0_209, %c0_210] : memref<9x128x128xbf16, #tpu.memory_space<vmem>>, vector<1x128x128xbf16>
    %199 = vector.shape_cast %198 : vector<1x128x128xbf16> to vector<128x128xbf16>
    %cst_211 = arith.constant dense<0.000000e+00> : vector<256x128xf32>
    %200 = tpu.matmul %197, %199, %cst_211 {dimension_numbers = #tpu.dot_dimension_numbers<[1], [0], [0], [1], [0, 0, 1, 1], [], []>} : vector<256x128xbf16>, vector<128x128xbf16>, vector<256x128xf32> -> vector<256x128xf32>
    %201 = arith.addf %195, %200 : vector<256x128xf32>
    %c36_212 = arith.constant 36 : index
    %c0_213 = arith.constant 0 : index
    %c0_214 = arith.constant 0 : index
    %202 = vector.load %arg16[%c36_212, %c0_213, %c0_214] : memref<54x16x128xbf16, #tpu.memory_space<vmem>>, vector<16x16x128xbf16>
    %203 = vector.shape_cast %202 : vector<16x16x128xbf16> to vector<256x128xbf16>
    %c2_215 = arith.constant 2 : index
    %c0_216 = arith.constant 0 : index
    %c0_217 = arith.constant 0 : index
    %204 = vector.load %arg8[%c2_215, %c0_216, %c0_217] : memref<9x128x128xbf16, #tpu.memory_space<vmem>>, vector<1x128x128xbf16>
    %205 = vector.shape_cast %204 : vector<1x128x128xbf16> to vector<128x128xbf16>
    %cst_218 = arith.constant dense<0.000000e+00> : vector<256x128xf32>
    %206 = tpu.matmul %203, %205, %cst_218 {dimension_numbers = #tpu.dot_dimension_numbers<[1], [0], [0], [1], [0, 0, 1, 1], [], []>} : vector<256x128xbf16>, vector<128x128xbf16>, vector<256x128xf32> -> vector<256x128xf32>
    %207 = arith.addf %201, %206 : vector<256x128xf32>
    %c1_219 = arith.constant 1 : index
    %c0_220 = arith.constant 0 : index
    %c0_221 = arith.constant 0 : index
    %208 = vector.load %arg16[%c1_219, %c0_220, %c0_221] : memref<54x16x128xbf16, #tpu.memory_space<vmem>>, vector<16x16x128xbf16>
    %209 = vector.shape_cast %208 : vector<16x16x128xbf16> to vector<256x128xbf16>
    %c3_222 = arith.constant 3 : index
    %c0_223 = arith.constant 0 : index
    %c0_224 = arith.constant 0 : index
    %210 = vector.load %arg8[%c3_222, %c0_223, %c0_224] : memref<9x128x128xbf16, #tpu.memory_space<vmem>>, vector<1x128x128xbf16>
    %211 = vector.shape_cast %210 : vector<1x128x128xbf16> to vector<128x128xbf16>
    %cst_225 = arith.constant dense<0.000000e+00> : vector<256x128xf32>
    %212 = tpu.matmul %209, %211, %cst_225 {dimension_numbers = #tpu.dot_dimension_numbers<[1], [0], [0], [1], [0, 0, 1, 1], [], []>} : vector<256x128xbf16>, vector<128x128xbf16>, vector<256x128xf32> -> vector<256x128xf32>
    %213 = arith.addf %207, %212 : vector<256x128xf32>
    %c19_226 = arith.constant 19 : index
    %c0_227 = arith.constant 0 : index
    %c0_228 = arith.constant 0 : index
    %214 = vector.load %arg16[%c19_226, %c0_227, %c0_228] : memref<54x16x128xbf16, #tpu.memory_space<vmem>>, vector<16x16x128xbf16>
    %215 = vector.shape_cast %214 : vector<16x16x128xbf16> to vector<256x128xbf16>
    %c4_229 = arith.constant 4 : index
    %c0_230 = arith.constant 0 : index
    %c0_231 = arith.constant 0 : index
    %216 = vector.load %arg8[%c4_229, %c0_230, %c0_231] : memref<9x128x128xbf16, #tpu.memory_space<vmem>>, vector<1x128x128xbf16>
    %217 = vector.shape_cast %216 : vector<1x128x128xbf16> to vector<128x128xbf16>
    %cst_232 = arith.constant dense<0.000000e+00> : vector<256x128xf32>
    %218 = tpu.matmul %215, %217, %cst_232 {dimension_numbers = #tpu.dot_dimension_numbers<[1], [0], [0], [1], [0, 0, 1, 1], [], []>} : vector<256x128xbf16>, vector<128x128xbf16>, vector<256x128xf32> -> vector<256x128xf32>
    %219 = arith.addf %213, %218 : vector<256x128xf32>
    %c37_233 = arith.constant 37 : index
    %c0_234 = arith.constant 0 : index
    %c0_235 = arith.constant 0 : index
    %220 = vector.load %arg16[%c37_233, %c0_234, %c0_235] : memref<54x16x128xbf16, #tpu.memory_space<vmem>>, vector<16x16x128xbf16>
    %221 = vector.shape_cast %220 : vector<16x16x128xbf16> to vector<256x128xbf16>
    %c5_236 = arith.constant 5 : index
    %c0_237 = arith.constant 0 : index
    %c0_238 = arith.constant 0 : index
    %222 = vector.load %arg8[%c5_236, %c0_237, %c0_238] : memref<9x128x128xbf16, #tpu.memory_space<vmem>>, vector<1x128x128xbf16>
    %223 = vector.shape_cast %222 : vector<1x128x128xbf16> to vector<128x128xbf16>
    %cst_239 = arith.constant dense<0.000000e+00> : vector<256x128xf32>
    %224 = tpu.matmul %221, %223, %cst_239 {dimension_numbers = #tpu.dot_dimension_numbers<[1], [0], [0], [1], [0, 0, 1, 1], [], []>} : vector<256x128xbf16>, vector<128x128xbf16>, vector<256x128xf32> -> vector<256x128xf32>
    %225 = arith.addf %219, %224 : vector<256x128xf32>
    %c2_240 = arith.constant 2 : index
    %c0_241 = arith.constant 0 : index
    %c0_242 = arith.constant 0 : index
    %226 = vector.load %arg16[%c2_240, %c0_241, %c0_242] : memref<54x16x128xbf16, #tpu.memory_space<vmem>>, vector<16x16x128xbf16>
    %227 = vector.shape_cast %226 : vector<16x16x128xbf16> to vector<256x128xbf16>
    %c6_243 = arith.constant 6 : index
    %c0_244 = arith.constant 0 : index
    %c0_245 = arith.constant 0 : index
    %228 = vector.load %arg8[%c6_243, %c0_244, %c0_245] : memref<9x128x128xbf16, #tpu.memory_space<vmem>>, vector<1x128x128xbf16>
    %229 = vector.shape_cast %228 : vector<1x128x128xbf16> to vector<128x128xbf16>
    %cst_246 = arith.constant dense<0.000000e+00> : vector<256x128xf32>
    %230 = tpu.matmul %227, %229, %cst_246 {dimension_numbers = #tpu.dot_dimension_numbers<[1], [0], [0], [1], [0, 0, 1, 1], [], []>} : vector<256x128xbf16>, vector<128x128xbf16>, vector<256x128xf32> -> vector<256x128xf32>
    %231 = arith.addf %225, %230 : vector<256x128xf32>
    %c20_247 = arith.constant 20 : index
    %c0_248 = arith.constant 0 : index
    %c0_249 = arith.constant 0 : index
    %232 = vector.load %arg16[%c20_247, %c0_248, %c0_249] : memref<54x16x128xbf16, #tpu.memory_space<vmem>>, vector<16x16x128xbf16>
    %233 = vector.shape_cast %232 : vector<16x16x128xbf16> to vector<256x128xbf16>
    %c7_250 = arith.constant 7 : index
    %c0_251 = arith.constant 0 : index
    %c0_252 = arith.constant 0 : index
    %234 = vector.load %arg8[%c7_250, %c0_251, %c0_252] : memref<9x128x128xbf16, #tpu.memory_space<vmem>>, vector<1x128x128xbf16>
    %235 = vector.shape_cast %234 : vector<1x128x128xbf16> to vector<128x128xbf16>
    %cst_253 = arith.constant dense<0.000000e+00> : vector<256x128xf32>
    %236 = tpu.matmul %233, %235, %cst_253 {dimension_numbers = #tpu.dot_dimension_numbers<[1], [0], [0], [1], [0, 0, 1, 1], [], []>} : vector<256x128xbf16>, vector<128x128xbf16>, vector<256x128xf32> -> vector<256x128xf32>
    %237 = arith.addf %231, %236 : vector<256x128xf32>
    %c38_254 = arith.constant 38 : index
    %c0_255 = arith.constant 0 : index
    %c0_256 = arith.constant 0 : index
    %238 = vector.load %arg16[%c38_254, %c0_255, %c0_256] : memref<54x16x128xbf16, #tpu.memory_space<vmem>>, vector<16x16x128xbf16>
    %239 = vector.shape_cast %238 : vector<16x16x128xbf16> to vector<256x128xbf16>
    %c8_257 = arith.constant 8 : index
    %c0_258 = arith.constant 0 : index
    %c0_259 = arith.constant 0 : index
    %240 = vector.load %arg8[%c8_257, %c0_258, %c0_259] : memref<9x128x128xbf16, #tpu.memory_space<vmem>>, vector<1x128x128xbf16>
    %241 = vector.shape_cast %240 : vector<1x128x128xbf16> to vector<128x128xbf16>
    %cst_260 = arith.constant dense<0.000000e+00> : vector<256x128xf32>
    %242 = tpu.matmul %239, %241, %cst_260 {dimension_numbers = #tpu.dot_dimension_numbers<[1], [0], [0], [1], [0, 0, 1, 1], [], []>} : vector<256x128xbf16>, vector<128x128xbf16>, vector<256x128xf32> -> vector<256x128xf32>
    %243 = arith.addf %237, %242 : vector<256x128xf32>
    %c0_261 = arith.constant 0 : index
    %c0_262 = arith.constant 0 : index
    %244 = vector.load %arg9[%c0_261, %c0_262] : memref<1x128xf32, #tpu.memory_space<vmem>>, vector<1x128xf32>
    %245 = vector.broadcast %244 : vector<1x128xf32> to vector<256x128xf32>
    %246 = arith.mulf %243, %245 : vector<256x128xf32>
    %c0_263 = arith.constant 0 : index
    %c0_264 = arith.constant 0 : index
    %247 = vector.load %arg10[%c0_263, %c0_264] : memref<1x128xf32, #tpu.memory_space<vmem>>, vector<1x128xf32>
    %248 = vector.broadcast %247 : vector<1x128xf32> to vector<256x128xf32>
    %249 = arith.addf %246, %248 : vector<256x128xf32>
    %250 = arith.extf %190 : vector<256x128xbf16> to vector<256x128xf32>
    %251 = arith.addf %249, %250 : vector<256x128xf32>
    %cst_265 = arith.constant 0.000000e+00 : f32
    %252 = vector.broadcast %cst_265 : f32 to vector<256x128xf32>
    %253 = arith.maximumf %251, %252 : vector<256x128xf32>
    %254 = arith.truncf %253 : vector<256x128xf32> to vector<256x128xbf16>
    %c0_266 = arith.constant 0 : index
    %c0_267 = arith.constant 0 : index
    %255 = vector.load %arg11[%c0_266, %c0_267] : memref<128x128xbf16, #tpu.memory_space<vmem>>, vector<128x128xbf16>
    %cst_268 = arith.constant dense<0.000000e+00> : vector<256x128xf32>
    %256 = tpu.matmul %254, %255, %cst_268 {dimension_numbers = #tpu.dot_dimension_numbers<[1], [0], [0], [1], [0, 0, 1, 1], [], []>} : vector<256x128xbf16>, vector<128x128xbf16>, vector<256x128xf32> -> vector<256x128xf32>
    %c0_269 = arith.constant 0 : index
    %c0_270 = arith.constant 0 : index
    %257 = vector.load %arg12[%c0_269, %c0_270] : memref<1x128xf32, #tpu.memory_space<vmem>>, vector<1x128xf32>
    %258 = vector.broadcast %257 : vector<1x128xf32> to vector<256x128xf32>
    %259 = arith.mulf %256, %258 : vector<256x128xf32>
    %c0_271 = arith.constant 0 : index
    %c0_272 = arith.constant 0 : index
    %260 = vector.load %arg13[%c0_271, %c0_272] : memref<1x128xf32, #tpu.memory_space<vmem>>, vector<1x128xf32>
    %261 = vector.broadcast %260 : vector<1x128xf32> to vector<256x128xf32>
    %262 = arith.addf %259, %261 : vector<256x128xf32>
    %cst_273 = arith.constant 0.000000e+00 : f32
    %263 = vector.broadcast %cst_273 : f32 to vector<256x128xf32>
    %264 = arith.maximumf %262, %263 : vector<256x128xf32>
    %cst_274 = arith.constant dense<0.000000e+00> : vector<128xf32>
    %265 = vector.multi_reduction <add>, %264, %cst_274 [0] : vector<256x128xf32> to vector<128xf32>
    %266 = vector.shape_cast %265 : vector<128xf32> to vector<1x128xf32>
    %cst_275 = arith.constant 3.906250e-03 : f32
    %267 = vector.broadcast %cst_275 : f32 to vector<1x128xf32>
    %268 = arith.mulf %266, %267 : vector<1x128xf32>
    %269 = vector.shape_cast %268 : vector<1x128xf32> to vector<1x1x128xf32>
    %270 = vector.shape_cast %269 : vector<1x1x128xf32> to vector<1x1x128xf32>
    %271 = vector.broadcast %270 : vector<1x1x128xf32> to vector<1x8x128xf32>
    %c0_276 = arith.constant 0 : index
    %c0_277 = arith.constant 0 : index
    %c0_278 = arith.constant 0 : index
    %272 = vector.load %arg14[%c0_276, %c0_277, %c0_278] : memref<1x8x128xf32, #tpu.memory_space<vmem>>, vector<1x8x128xf32>
    tpu.vector_store %arg14[%c0_276, %c0_277, %c0_278], %271 {strides = array<i32>} : memref<1x8x128xf32, #tpu.memory_space<vmem>>, vector<1x8x128xf32>,
    return
  }
  func.func @transform_0(%arg0: i32) -> (i32, i32, i32, i32) {
    %c0_i32 = arith.constant 0 : i32
    %c0_i32_0 = arith.constant 0 : i32
    %c0_i32_1 = arith.constant 0 : i32
    %c0_i32_2 = arith.constant 0 : i32
    return %arg0, %c0_i32, %c0_i32_0, %c0_i32_1 : i32, i32, i32, i32
  }
  func.func @transform_1(%arg0: i32) -> (i32, i32, i32) {
    %c0_i32 = arith.constant 0 : i32
    %c0_i32_0 = arith.constant 0 : i32
    %c0_i32_1 = arith.constant 0 : i32
    %c0_i32_2 = arith.constant 0 : i32
    return %c0_i32, %c0_i32_0, %c0_i32_1 : i32, i32, i32
  }
  func.func @transform_2(%arg0: i32) -> (i32, i32) {
    %c0_i32 = arith.constant 0 : i32
    %c0_i32_0 = arith.constant 0 : i32
    %c0_i32_1 = arith.constant 0 : i32
    return %c0_i32, %c0_i32_0 : i32, i32
  }
  func.func @transform_3(%arg0: i32) -> (i32, i32) {
    %c0_i32 = arith.constant 0 : i32
    %c0_i32_0 = arith.constant 0 : i32
    %c0_i32_1 = arith.constant 0 : i32
    return %c0_i32, %c0_i32_0 : i32, i32
  }
  func.func @transform_4(%arg0: i32) -> (i32, i32, i32) {
    %c0_i32 = arith.constant 0 : i32
    %c0_i32_0 = arith.constant 0 : i32
    %c0_i32_1 = arith.constant 0 : i32
    %c0_i32_2 = arith.constant 0 : i32
    return %c0_i32, %c0_i32_0, %c0_i32_1 : i32, i32, i32
  }
  func.func @transform_5(%arg0: i32) -> (i32, i32) {
    %c0_i32 = arith.constant 0 : i32
    %c0_i32_0 = arith.constant 0 : i32
    %c0_i32_1 = arith.constant 0 : i32
    return %c0_i32, %c0_i32_0 : i32, i32
  }
  func.func @transform_6(%arg0: i32) -> (i32, i32) {
    %c0_i32 = arith.constant 0 : i32
    %c0_i32_0 = arith.constant 0 : i32
    %c0_i32_1 = arith.constant 0 : i32
    return %c0_i32, %c0_i32_0 : i32, i32
  }
  func.func @transform_7(%arg0: i32) -> (i32, i32, i32) {
    %c0_i32 = arith.constant 0 : i32
    %c0_i32_0 = arith.constant 0 : i32
    %c0_i32_1 = arith.constant 0 : i32
    %c0_i32_2 = arith.constant 0 : i32
    return %c0_i32, %c0_i32_0, %c0_i32_1 : i32, i32, i32
  }
  func.func @transform_8(%arg0: i32) -> (i32, i32) {
    %c0_i32 = arith.constant 0 : i32
    %c0_i32_0 = arith.constant 0 : i32
    %c0_i32_1 = arith.constant 0 : i32
    return %c0_i32, %c0_i32_0 : i32, i32
  }
  func.func @transform_9(%arg0: i32) -> (i32, i32) {
    %c0_i32 = arith.constant 0 : i32
    %c0_i32_0 = arith.constant 0 : i32
    %c0_i32_1 = arith.constant 0 : i32
    return %c0_i32, %c0_i32_0 : i32, i32
  }
  func.func @transform_10(%arg0: i32) -> (i32, i32) {
    %c0_i32 = arith.constant 0 : i32
    %c0_i32_0 = arith.constant 0 : i32
    %c0_i32_1 = arith.constant 0 : i32
    return %c0_i32, %c0_i32_0 : i32, i32
  }
  func.func @transform_11(%arg0: i32) -> (i32, i32) {
    %c0_i32 = arith.constant 0 : i32
    %c0_i32_0 = arith.constant 0 : i32
    %c0_i32_1 = arith.constant 0 : i32
    return %c0_i32, %c0_i32_0 : i32, i32
  }
  func.func @transform_12(%arg0: i32) -> (i32, i32) {
    %c0_i32 = arith.constant 0 : i32
    %c0_i32_0 = arith.constant 0 : i32
    %c0_i32_1 = arith.constant 0 : i32
    return %c0_i32, %c0_i32_0 : i32, i32
  }
  func.func @transform_13(%arg0: i32) -> (i32, i32, i32) {
    %c0_i32 = arith.constant 0 : i32
    %c0_i32_0 = arith.constant 0 : i32
    %c0_i32_1 = arith.constant 0 : i32
    return %arg0, %c0_i32, %c0_i32_0 : i32, i32, i32
  }
}

</mosaic_0001>

<llo_original>
// kernel: feature_extractor_forward.1
$region0: #{feature_extractor_forward.1}
  #allocation0 [shape = 'u32[]', space=smem, size = 0x4, offset = 0x4, fixed_abs, tag = 'smem constant byte address 0x4 - core index']
  #allocation1 [shape = 'u32[144,128]{1,0:T(1,128)}', space=vmem, size = 0x12000, scoped, tag = 'internal scratch']
  #allocation2 [shape = 'bf16[54,16,128]{2,1,0:T(16,128)(2,1)}', space=vmem, size = 0x36000, scoped, tag = 'scratch operand']
  #allocation3 [shape = 'bf16[54,16,128]{2,1,0:T(16,128)(2,1)}', space=vmem, size = 0x36000, scoped, tag = 'scratch operand']
  %s0 = inlined_call_operand.vmem [shape: bf16[2,54,16,128], index: 0, kind: input, shape index: {}]
  %s1 = inlined_call_operand.vmem [shape: bf16[9,128,128], index: 1, kind: input, shape index: {}]
  %s2 = inlined_call_operand.vmem [shape: f32[1,128], index: 2, kind: input, shape index: {}]
  %s3 = inlined_call_operand.vmem [shape: f32[1,128], index: 3, kind: input, shape index: {}]
  %s4 = inlined_call_operand.vmem [shape: bf16[9,128,128], index: 4, kind: input, shape index: {}]
  %s5 = inlined_call_operand.vmem [shape: f32[1,128], index: 5, kind: input, shape index: {}]
  %s6 = inlined_call_operand.vmem [shape: f32[1,128], index: 6, kind: input, shape index: {}]
  %s7 = inlined_call_operand.vmem [shape: bf16[9,128,128], index: 7, kind: input, shape index: {}]
  %s8 = inlined_call_operand.vmem [shape: f32[1,128], index: 8, kind: input, shape index: {}]
  %s9 = inlined_call_operand.vmem [shape: f32[1,128], index: 9, kind: input, shape index: {}]
  %s10 = inlined_call_operand.vmem [shape: bf16[128,128], index: 10, kind: input, shape index: {}]
  %s11 = inlined_call_operand.vmem [shape: f32[1,128], index: 11, kind: input, shape index: {}]
  %s12 = inlined_call_operand.vmem [shape: f32[1,128], index: 12, kind: input, shape index: {}]
  %s13 = inlined_call_operand.vmem [shape: f32[2,8,128], index: 13, kind: output, shape index: {}]
  %s14 = sld [smem:[#allocation0]]
  $region85: #{feature_extractor_forward.1} parent=0
    _
  %s16 = ssub.s32 1, %s14
  %s17 = scalar_select 0, %s16, %s14
  loop: start=0, step=1, limit=4
  $region2: #{feature_extractor_forward.1} parent=0 // loop_pre_header
    _
  $region3: #{feature_extractor_forward.1} parent=0 // loop_header
    %s19 = sphi 0, %s23
    %p20 = scmp.ge.s32.totalorder %s19, 4
    %s29 = sphi 0, %s31
    %s32 = sphi 0, %s29
    %s33 = sphi 0, %s32
    %s49 = sphi 0, %s33
    %s53 = sphi 0, %s53
    %s55 = sphi 0, %s53
    %s56 = sphi 0, %s55
    %s70 = sphi 0, %s56
    %s74 = sphi 0, %s74
    %s76 = sphi 0, %s74
    %s77 = sphi 0, %s76
    %s91 = sphi 0, %s77
    %s95 = sphi 0, %s95
    %s97 = sphi 0, %s95
    %s98 = sphi 0, %s97
    %s112 = sphi 0, %s98
    %s116 = sphi 0, %s116
    %s118 = sphi 0, %s116
    %s119 = sphi 0, %s118
    %s133 = sphi 0, %s119
    %s137 = sphi 0, %s137
    %s139 = sphi 0, %s137
    %s140 = sphi 0, %s139
    %s154 = sphi 0, %s140
    %s158 = sphi 0, %s158
    %s160 = sphi 0, %s158
    %s161 = sphi 0, %s160
    %s175 = sphi 0, %s161
    %s179 = sphi 0, %s179
    %s181 = sphi 0, %s179
    %s182 = sphi 0, %s181
    %s196 = sphi 0, %s182
    %s200 = sphi 0, %s200
    %s202 = sphi 0, %s200
    %s203 = sphi 0, %s202
    %s217 = sphi 0, %s203
    %s221 = sphi 0, %s221
    %s223 = sphi 0, %s221
    %s224 = sphi 0, %s223
    %s238 = sphi 0, %s224
    %s242 = sphi 0, %s242
    %s244 = sphi 0, %s242
    %s245 = sphi 0, %s244
    %s259 = sphi 0, %s245
    %s263 = sphi 0, %s263
    %s265 = sphi 0, %s263
    %s266 = sphi 0, %s265
    %s280 = sphi 0, %s266
    %s284 = sphi 0, %s284
    %s286 = sphi 0, %s284
    %s287 = sphi 0, %s286
    %s301 = sphi 0, %s287
    %s307 = sphi 0, %s309
    %s310 = sphi 0, %s307
    %s311 = sphi 0, %s310
    %s327 = sphi 0, %s311
  $region4: #{feature_extractor_forward.1} parent=0 // loop_header_branch
    %22 = sbr.rel (%p20) target = $region8
  $region5: #{feature_extractor_forward.1} parent=0 // loop_body
    %s24 = ssub.s32 %s19, 1
    %s25 = ssub.s32 %s19, 2
    %s26 = sadd.s32 %s19, 1
    %s27 = ssub.s32 %s19, %s26
    %p28 = scmp.eq.s32.totalorder %s27, 0
    %s30 = sadd.s32 %s29, 1
    %s31 = scalar_select %p28, %s29, %s30
    %p34 = pneg %p28
    %p35 = scmp.eq.s32.totalorder %s19, 1
    %p36 = por %p34, %p35
    %p37 = scmp.ne.s32.totalorder %s29, %s32
    %p38 = scmp.eq.s32.totalorder %s19, 0
    %p39 = por %p37, %p38
    %p40 = scmp.ne.s32.totalorder %s29, %s32
    %p41 = scmp.eq.s32.totalorder %s24, 1
    %p42 = por %p40, %p41
    %p43 = scmp.ne.s32.totalorder %s32, %s33
    %p44 = scmp.eq.s32.totalorder %s24, 0
    %p45 = por %p43, %p44
    %p46 = scmp.ne.s32.totalorder %s32, %s33
    %p47 = scmp.eq.s32.totalorder %s25, 1
    %p48 = por %p46, %p47
    %p50 = scmp.ne.s32.totalorder %s33, %s49
    %p51 = scmp.eq.s32.totalorder %s25, 0
    %p52 = por %p50, %p51
    %s54 = sadd.s32 %s53, 1
    %p57 = scmp.eq.s32.totalorder %s19, 1
    %p58 = scmp.ne.s32.totalorder %s53, %s55
    %p59 = scmp.eq.s32.totalorder %s19, 0
    %p60 = por %p58, %p59
    %p61 = scmp.ne.s32.totalorder %s53, %s55
    %p62 = scmp.eq.s32.totalorder %s24, 1
    %p63 = por %p61, %p62
    %p64 = scmp.ne.s32.totalorder %s55, %s56
    %p65 = scmp.eq.s32.totalorder %s24, 0
    %p66 = por %p64, %p65
    %p67 = scmp.ne.s32.totalorder %s55, %s56
    %p68 = scmp.eq.s32.totalorder %s25, 1
    %p69 = por %p67, %p68
    %p71 = scmp.ne.s32.totalorder %s56, %s70
    %p72 = scmp.eq.s32.totalorder %s25, 0
    %p73 = por %p71, %p72
    %s75 = sadd.s32 %s74, 1
    %p78 = scmp.eq.s32.totalorder %s19, 1
    %p79 = scmp.ne.s32.totalorder %s74, %s76
    %p80 = scmp.eq.s32.totalorder %s19, 0
    %p81 = por %p79, %p80
    %p82 = scmp.ne.s32.totalorder %s74, %s76
    %p83 = scmp.eq.s32.totalorder %s24, 1
    %p84 = por %p82, %p83
    %p85 = scmp.ne.s32.totalorder %s76, %s77
    %p86 = scmp.eq.s32.totalorder %s24, 0
    %p87 = por %p85, %p86
    %p88 = scmp.ne.s32.totalorder %s76, %s77
    %p89 = scmp.eq.s32.totalorder %s25, 1
    %p90 = por %p88, %p89
    %p92 = scmp.ne.s32.totalorder %s77, %s91
    %p93 = scmp.eq.s32.totalorder %s25, 0
    %p94 = por %p92, %p93
    %s96 = sadd.s32 %s95, 1
    %p99 = scmp.eq.s32.totalorder %s19, 1
    %p100 = scmp.ne.s32.totalorder %s95, %s97
    %p101 = scmp.eq.s32.totalorder %s19, 0
    %p102 = por %p100, %p101
    %p103 = scmp.ne.s32.totalorder %s95, %s97
    %p104 = scmp.eq.s32.totalorder %s24, 1
    %p105 = por %p103, %p104
    %p106 = scmp.ne.s32.totalorder %s97, %s98
    %p107 = scmp.eq.s32.totalorder %s24, 0
    %p108 = por %p106, %p107
    %p109 = scmp.ne.s32.totalorder %s97, %s98
    %p110 = scmp.eq.s32.totalorder %s25, 1
    %p111 = por %p109, %p110
    %p113 = scmp.ne.s32.totalorder %s98, %s112
    %p114 = scmp.eq.s32.totalorder %s25, 0
    %p115 = por %p113, %p114
    %s117 = sadd.s32 %s116, 1
    %p120 = scmp.eq.s32.totalorder %s19, 1
    %p121 = scmp.ne.s32.totalorder %s116, %s118
    %p122 = scmp.eq.s32.totalorder %s19, 0
    %p123 = por %p121, %p122
    %p124 = scmp.ne.s32.totalorder %s116, %s118
    %p125 = scmp.eq.s32.totalorder %s24, 1
    %p126 = por %p124, %p125
    %p127 = scmp.ne.s32.totalorder %s118, %s119
    %p128 = scmp.eq.s32.totalorder %s24, 0
    %p129 = por %p127, %p128
    %p130 = scmp.ne.s32.totalorder %s118, %s119
    %p131 = scmp.eq.s32.totalorder %s25, 1
    %p132 = por %p130, %p131
    %p134 = scmp.ne.s32.totalorder %s119, %s133
    %p135 = scmp.eq.s32.totalorder %s25, 0
    %p136 = por %p134, %p135
    %s138 = sadd.s32 %s137, 1
    %p141 = scmp.eq.s32.totalorder %s19, 1
    %p142 = scmp.ne.s32.totalorder %s137, %s139
    %p143 = scmp.eq.s32.totalorder %s19, 0
    %p144 = por %p142, %p143
    %p145 = scmp.ne.s32.totalorder %s137, %s139
    %p146 = scmp.eq.s32.totalorder %s24, 1
    %p147 = por %p145, %p146
    %p148 = scmp.ne.s32.totalorder %s139, %s140
    %p149 = scmp.eq.s32.totalorder %s24, 0
    %p150 = por %p148, %p149
    %p151 = scmp.ne.s32.totalorder %s139, %s140
    %p152 = scmp.eq.s32.totalorder %s25, 1
    %p153 = por %p151, %p152
    %p155 = scmp.ne.s32.totalorder %s140, %s154
    %p156 = scmp.eq.s32.totalorder %s25, 0
    %p157 = por %p155, %p156
    %s159 = sadd.s32 %s158, 1
    %p162 = scmp.eq.s32.totalorder %s19, 1
    %p163 = scmp.ne.s32.totalorder %s158, %s160
    %p164 = scmp.eq.s32.totalorder %s19, 0
    %p165 = por %p163, %p164
    %p166 = scmp.ne.s32.totalorder %s158, %s160
    %p167 = scmp.eq.s32.totalorder %s24, 1
    %p168 = por %p166, %p167
    %p169 = scmp.ne.s32.totalorder %s160, %s161
    %p170 = scmp.eq.s32.totalorder %s24, 0
    %p171 = por %p169, %p170
    %p172 = scmp.ne.s32.totalorder %s160, %s161
    %p173 = scmp.eq.s32.totalorder %s25, 1
    %p174 = por %p172, %p173
    %p176 = scmp.ne.s32.totalorder %s161, %s175
    %p177 = scmp.eq.s32.totalorder %s25, 0
    %p178 = por %p176, %p177
    %s180 = sadd.s32 %s179, 1
    %p183 = scmp.eq.s32.totalorder %s19, 1
    %p184 = scmp.ne.s32.totalorder %s179, %s181
    %p185 = scmp.eq.s32.totalorder %s19, 0
    %p186 = por %p184, %p185
    %p187 = scmp.ne.s32.totalorder %s179, %s181
    %p188 = scmp.eq.s32.totalorder %s24, 1
    %p189 = por %p187, %p188
    %p190 = scmp.ne.s32.totalorder %s181, %s182
    %p191 = scmp.eq.s32.totalorder %s24, 0
    %p192 = por %p190, %p191
    %p193 = scmp.ne.s32.totalorder %s181, %s182
    %p194 = scmp.eq.s32.totalorder %s25, 1
    %p195 = por %p193, %p194
    %p197 = scmp.ne.s32.totalorder %s182, %s196
    %p198 = scmp.eq.s32.totalorder %s25, 0
    %p199 = por %p197, %p198
    %s201 = sadd.s32 %s200, 1
    %p204 = scmp.eq.s32.totalorder %s19, 1
    %p205 = scmp.ne.s32.totalorder %s200, %s202
    %p206 = scmp.eq.s32.totalorder %s19, 0
    %p207 = por %p205, %p206
    %p208 = scmp.ne.s32.totalorder %s200, %s202
    %p209 = scmp.eq.s32.totalorder %s24, 1
    %p210 = por %p208, %p209
    %p211 = scmp.ne.s32.totalorder %s202, %s203
    %p212 = scmp.eq.s32.totalorder %s24, 0
    %p213 = por %p211, %p212
    %p214 = scmp.ne.s32.totalorder %s202, %s203
    %p215 = scmp.eq.s32.totalorder %s25, 1
    %p216 = por %p214, %p215
    %p218 = scmp.ne.s32.totalorder %s203, %s217
    %p219 = scmp.eq.s32.totalorder %s25, 0
    %p220 = por %p218, %p219
    %s222 = sadd.s32 %s221, 1
    %p225 = scmp.eq.s32.totalorder %s19, 1
    %p226 = scmp.ne.s32.totalorder %s221, %s223
    %p227 = scmp.eq.s32.totalorder %s19, 0
    %p228 = por %p226, %p227
    %p229 = scmp.ne.s32.totalorder %s221, %s223
    %p230 = scmp.eq.s32.totalorder %s24, 1
    %p231 = por %p229, %p230
    %p232 = scmp.ne.s32.totalorder %s223, %s224
    %p233 = scmp.eq.s32.totalorder %s24, 0
    %p234 = por %p232, %p233
    %p235 = scmp.ne.s32.totalorder %s223, %s224
    %p236 = scmp.eq.s32.totalorder %s25, 1
    %p237 = por %p235, %p236
    %p239 = scmp.ne.s32.totalorder %s224, %s238
    %p240 = scmp.eq.s32.totalorder %s25, 0
    %p241 = por %p239, %p240
    %s243 = sadd.s32 %s242, 1
    %p246 = scmp.eq.s32.totalorder %s19, 1
    %p247 = scmp.ne.s32.totalorder %s242, %s244
    %p248 = scmp.eq.s32.totalorder %s19, 0
    %p249 = por %p247, %p248
    %p250 = scmp.ne.s32.totalorder %s242, %s244
    %p251 = scmp.eq.s32.totalorder %s24, 1
    %p252 = por %p250, %p251
    %p253 = scmp.ne.s32.totalorder %s244, %s245
    %p254 = scmp.eq.s32.totalorder %s24, 0
    %p255 = por %p253, %p254
    %p256 = scmp.ne.s32.totalorder %s244, %s245
    %p257 = scmp.eq.s32.totalorder %s25, 1
    %p258 = por %p256, %p257
    %p260 = scmp.ne.s32.totalorder %s245, %s259
    %p261 = scmp.eq.s32.totalorder %s25, 0
    %p262 = por %p260, %p261
    %s264 = sadd.s32 %s263, 1
    %p267 = scmp.eq.s32.totalorder %s19, 1
    %p268 = scmp.ne.s32.totalorder %s263, %s265
    %p269 = scmp.eq.s32.totalorder %s19, 0
    %p270 = por %p268, %p269
    %p271 = scmp.ne.s32.totalorder %s263, %s265
    %p272 = scmp.eq.s32.totalorder %s24, 1
    %p273 = por %p271, %p272
    %p274 = scmp.ne.s32.totalorder %s265, %s266
    %p275 = scmp.eq.s32.totalorder %s24, 0
    %p276 = por %p274, %p275
    %p277 = scmp.ne.s32.totalorder %s265, %s266
    %p278 = scmp.eq.s32.totalorder %s25, 1
    %p279 = por %p277, %p278
    %p281 = scmp.ne.s32.totalorder %s266, %s280
    %p282 = scmp.eq.s32.totalorder %s25, 0
    %p283 = por %p281, %p282
    %s285 = sadd.s32 %s284, 1
    %p288 = scmp.eq.s32.totalorder %s19, 1
    %p289 = scmp.ne.s32.totalorder %s284, %s286
    %p290 = scmp.eq.s32.totalorder %s19, 0
    %p291 = por %p289, %p290
    %p292 = scmp.ne.s32.totalorder %s284, %s286
    %p293 = scmp.eq.s32.totalorder %s24, 1
    %p294 = por %p292, %p293
    %p295 = scmp.ne.s32.totalorder %s286, %s287
    %p296 = scmp.eq.s32.totalorder %s24, 0
    %p297 = por %p295, %p296
    %p298 = scmp.ne.s32.totalorder %s286, %s287
    %p299 = scmp.eq.s32.totalorder %s25, 1
    %p300 = por %p298, %p299
    %p302 = scmp.ne.s32.totalorder %s287, %s301
    %p303 = scmp.eq.s32.totalorder %s25, 0
    %p304 = por %p302, %p303
    %s305 = ssub.s32 %s19, %s26
    %p306 = scmp.eq.s32.totalorder %s305, 0
    %s308 = sadd.s32 %s307, 1
    %s309 = scalar_select %p306, %s307, %s308
    %p312 = pneg %p306
    %p313 = scmp.eq.s32.totalorder %s19, 1
    %p314 = por %p312, %p313
    %p315 = scmp.ne.s32.totalorder %s307, %s310
    %p316 = scmp.eq.s32.totalorder %s19, 0
    %p317 = por %p315, %p316
    %p318 = scmp.ne.s32.totalorder %s307, %s310
    %p319 = scmp.eq.s32.totalorder %s24, 1
    %p320 = por %p318, %p319
    %p321 = scmp.ne.s32.totalorder %s310, %s311
    %p322 = scmp.eq.s32.totalorder %s24, 0
    %p323 = por %p321, %p322
    %p324 = scmp.ne.s32.totalorder %s310, %s311
    %p325 = scmp.eq.s32.totalorder %s25, 1
    %p326 = por %p324, %p325
    %p328 = scmp.ne.s32.totalorder %s311, %s327
    %p329 = scmp.eq.s32.totalorder %s25, 0
    %p330 = por %p328, %p329
    %p331 = scmp.le.s32.totalorder 1, %s19
    %p332 = scmp.lt.s32.totalorder %s19, 3
    %p333 = pnand %p331, %p332
    %p334 = pneg %p333
    // Predicated region
    $region9: #{feature_extractor_forward.1} parent=5 // pred_check
      _
    $region10: #{feature_extractor_forward.1} parent=5 // pred_check_branch
      %336 = sbr.rel (%p333) target = $region12
    $region11: #{feature_extractor_forward.1} parent=5 // pred_region
      %s337 = ssub.s32 %s19, 1
      // Predicated region
      $region13: #{feature_extractor_forward.1} parent=11 // pred_check
        %p338 = pneg %p66
      $region14: #{feature_extractor_forward.1} parent=11 // pred_check_branch
        %340 = sbr.rel (%p338) target = $region16
      $region15: #{feature_extractor_forward.1} parent=11 // pred_region
        _
      $region16: #{feature_extractor_forward.1} parent=11 // pred_fallthru
        _
      // Predicated region
      $region17: #{feature_extractor_forward.1} parent=11 // pred_check
        %p341 = pneg %p87
      $region18: #{feature_extractor_forward.1} parent=11 // pred_check_branch
        %343 = sbr.rel (%p341) target = $region20
      $region19: #{feature_extractor_forward.1} parent=11 // pred_region
        _
      $region20: #{feature_extractor_forward.1} parent=11 // pred_fallthru
        _
      // Predicated region
      $region21: #{feature_extractor_forward.1} parent=11 // pred_check
        %p344 = pneg %p108
      $region22: #{feature_extractor_forward.1} parent=11 // pred_check_branch
        %346 = sbr.rel (%p344) target = $region24
      $region23: #{feature_extractor_forward.1} parent=11 // pred_region
        _
      $region24: #{feature_extractor_forward.1} parent=11 // pred_fallthru
        _
      // Predicated region
      $region25: #{feature_extractor_forward.1} parent=11 // pred_check
        %p347 = pneg %p129
      $region26: #{feature_extractor_forward.1} parent=11 // pred_check_branch
        %349 = sbr.rel (%p347) target = $region28
      $region27: #{feature_extractor_forward.1} parent=11 // pred_region
        _
      $region28: #{feature_extractor_forward.1} parent=11 // pred_fallthru
        _
      // Predicated region
      $region29: #{feature_extractor_forward.1} parent=11 // pred_check
        %p350 = pneg %p150
      $region30: #{feature_extractor_forward.1} parent=11 // pred_check_branch
        %352 = sbr.rel (%p350) target = $region32
      $region31: #{feature_extractor_forward.1} parent=11 // pred_region
        _
      $region32: #{feature_extractor_forward.1} parent=11 // pred_fallthru
        _
      // Predicated region
      $region33: #{feature_extractor_forward.1} parent=11 // pred_check
        %p353 = pneg %p171
      $region34: #{feature_extractor_forward.1} parent=11 // pred_check_branch
        %355 = sbr.rel (%p353) target = $region36
      $region35: #{feature_extractor_forward.1} parent=11 // pred_region
        _
      $region36: #{feature_extractor_forward.1} parent=11 // pred_fallthru
        _
      // Predicated region
      $region37: #{feature_extractor_forward.1} parent=11 // pred_check
        %p356 = pneg %p192
      $region38: #{feature_extractor_forward.1} parent=11 // pred_check_branch
        %358 = sbr.rel (%p356) target = $region40
      $region39: #{feature_extractor_forward.1} parent=11 // pred_region
        _
      $region40: #{feature_extractor_forward.1} parent=11 // pred_fallthru
        _
      // Predicated region
      $region41: #{feature_extractor_forward.1} parent=11 // pred_check
        %p359 = pneg %p213
      $region42: #{feature_extractor_forward.1} parent=11 // pred_check_branch
        %361 = sbr.rel (%p359) target = $region44
      $region43: #{feature_extractor_forward.1} parent=11 // pred_region
        _
      $region44: #{feature_extractor_forward.1} parent=11 // pred_fallthru
        _
      // Predicated region
      $region45: #{feature_extractor_forward.1} parent=11 // pred_check
        %p362 = pneg %p234
      $region46: #{feature_extractor_forward.1} parent=11 // pred_check_branch
        %364 = sbr.rel (%p362) target = $region48
      $region47: #{feature_extractor_forward.1} parent=11 // pred_region
        _
      $region48: #{feature_extractor_forward.1} parent=11 // pred_fallthru
        _
      // Predicated region
      $region49: #{feature_extractor_forward.1} parent=11 // pred_check
        %p365 = pneg %p255
      $region50: #{feature_extractor_forward.1} parent=11 // pred_check_branch
        %367 = sbr.rel (%p365) target = $region52
      $region51: #{feature_extractor_forward.1} parent=11 // pred_region
        _
      $region52: #{feature_extractor_forward.1} parent=11 // pred_fallthru
        _
      // Predicated region
      $region53: #{feature_extractor_forward.1} parent=11 // pred_check
        %p368 = pneg %p276
      $region54: #{feature_extractor_forward.1} parent=11 // pred_check_branch
        %370 = sbr.rel (%p368) target = $region56
      $region55: #{feature_extractor_forward.1} parent=11 // pred_region
        _
      $region56: #{feature_extractor_forward.1} parent=11 // pred_fallthru
        _
      // Predicated region
      $region57: #{feature_extractor_forward.1} parent=11 // pred_check
        %p371 = pneg %p297
      $region58: #{feature_extractor_forward.1} parent=11 // pred_check_branch
        %373 = sbr.rel (%p371) target = $region60
      $region59: #{feature_extractor_forward.1} parent=11 // pred_region
        _
      $region60: #{feature_extractor_forward.1} parent=11 // pred_fallthru
        _
    $region12: #{feature_extractor_forward.1} parent=5 // pred_fallthru
      _
    %p374 = scmp.lt.s32.totalorder %s19, 2
    // Predicated region
    $region61: #{feature_extractor_forward.1} parent=5 // pred_check
      %p375 = pneg %p374
    $region62: #{feature_extractor_forward.1} parent=5 // pred_check_branch
      %377 = sbr.rel (%p375) target = $region64
    $region63: #{feature_extractor_forward.1} parent=5 // pred_region
      // Predicated region
      $region65: #{feature_extractor_forward.1} parent=63 // pred_check
        %p378 = pneg %p39
      $region66: #{feature_extractor_forward.1} parent=63 // pred_check_branch
        %380 = sbr.rel (%p378) target = $region68
      $region67: #{feature_extractor_forward.1} parent=63 // pred_region
        %p381 = scmp.lt.s32.totalorder %s19, 1
        %s382 = scalar_select %p381, %s19, 1
        %s383 = smul.addr %s382, 108
        %s384 = smul.addr %s383, 4
        %s385 = scalar_lea.vmem %s0, %s384
      $region68: #{feature_extractor_forward.1} parent=63 // pred_fallthru
        _
    $region64: #{feature_extractor_forward.1} parent=5 // pred_fallthru
      _
    %p386 = scmp.le.s32.totalorder 1, %s19
    %p387 = scmp.lt.s32.totalorder %s19, 3
    %p388 = pnand %p386, %p387
    %p389 = pneg %p388
    // Predicated region
    $region69: #{feature_extractor_forward.1} parent=5 // pred_check
      _
    $region70: #{feature_extractor_forward.1} parent=5 // pred_check_branch
      %391 = sbr.rel (%p388) target = $region72
    $region71: #{feature_extractor_forward.1} parent=5 // pred_region
      %s392 = ssub.s32 %s19, 1
      %p393 = scmp.lt.s32.totalorder %s24, 1
      %s394 = scalar_select %p393, %s24, 1
      %s395 = smul.addr %s394, 108
      %s396 = smul.addr %s395, 4
      %s397 = scalar_lea.vmem %s0, %s396
      %p398 = pneg %p45
      %p399 = pneg %p42
      %p400 = pneg %p66
      %p401 = pneg %p63
      %p402 = pneg %p87
      %p403 = pneg %p84
      %p404 = pneg %p108
      %p405 = pneg %p105
      %p406 = pneg %p129
      %p407 = pneg %p126
      %p408 = pneg %p150
      %p409 = pneg %p147
      %p410 = pneg %p171
      %p411 = pneg %p168
      %p412 = pneg %p192
      %p413 = pneg %p189
      %p414 = pneg %p213
      %p415 = pneg %p210
      %p416 = pneg %p234
      %p417 = pneg %p231
      %p418 = pneg %p255
      %p419 = pneg %p252
      %p420 = pneg %p276
      %p421 = pneg %p273
      %p422 = pneg %p297
      %p423 = pneg %p294
      %p424 = pneg %p323
      %p425 = pneg %p320
      %p426 = scmp.lt.s32.totalorder %s24, 1
      %s427 = scalar_select %p426, %s24, 1
      %s428 = smul.addr %s427, 8
      %s429 = scalar_lea.vmem %s13, %s428
      %p430 = scmp.lt.s32.totalorder %s24, 1
      %s431 = scalar_select %p430, %s24, 1
      %s432 = smul.addr %s431, 108
      %s433 = smul.addr %s432, 4
      %s434 = scalar_lea.vmem %s0, %s433
      %p435 = scmp.lt.s32.totalorder %s24, 1
      %s436 = scalar_select %p435, %s24, 1
      %s437 = smul.addr %s436, 8
      %s438 = scalar_lea.vmem %s13, %s437
      %v440 = vld [vmem:[%s434] sm:$0xf]
      %v441 = vld [vmem:[%s434 + $0x4] sm:$0xf]
      %v442 = vld [vmem:[%s434 + $0x8] sm:$0xf]
      %v443 = vld [vmem:[%s434 + $0xc] sm:$0xf]
      %v444 = vld [vmem:[%s434 + $0x10] sm:$0xf]
      %v445 = vld [vmem:[%s434 + $0x14] sm:$0xf]
      %v446 = vld [vmem:[%s434 + $0x18] sm:$0xf]
      %v447 = vld [vmem:[%s434 + $0x1c] sm:$0xf]
      %v448 = vld [vmem:[%s434 + $0x20] sm:$0xf]
      %v449 = vld [vmem:[%s434 + $0x24] sm:$0xf]
      %v450 = vld [vmem:[%s434 + $0x28] sm:$0xf]
      %v451 = vld [vmem:[%s434 + $0x2c] sm:$0xf]
      %v452 = vld [vmem:[%s434 + $0x30] sm:$0xf]
      %v453 = vld [vmem:[%s434 + $0x34] sm:$0xf]
      %v454 = vld [vmem:[%s434 + $0x38] sm:$0xf]
      %v455 = vld [vmem:[%s434 + $0x3c] sm:$0xf]
      %v456 = vld [vmem:[%s434 + $0x40] sm:$0xf]
      %v457 = vld [vmem:[%s434 + $0x44] sm:$0xf]
      %v458 = vld [vmem:[%s434 + $0x48] sm:$0xf]
      %v459 = vld [vmem:[%s434 + $0x4c] sm:$0xf]
      %v460 = vld [vmem:[%s434 + $0x50] sm:$0xf]
      %v461 = vld [vmem:[%s434 + $0x54] sm:$0xf]
      %v462 = vld [vmem:[%s434 + $0x58] sm:$0xf]
      %v463 = vld [vmem:[%s434 + $0x5c] sm:$0xf]
      %v464 = vld [vmem:[%s434 + $0x60] sm:$0xf]
      %v465 = vld [vmem:[%s434 + $0x64] sm:$0xf]
      %v466 = vld [vmem:[%s434 + $0x68] sm:$0xf]
      %v467 = vld [vmem:[%s434 + $0x6c] sm:$0xf]
      %v468 = vld [vmem:[%s434 + $0x70] sm:$0xf]
      %v469 = vld [vmem:[%s434 + $0x74] sm:$0xf]
      %v470 = vld [vmem:[%s434 + $0x78] sm:$0xf]
      %v471 = vld [vmem:[%s434 + $0x7c] sm:$0xf]
      %v472 = vld [vmem:[%s1] sm:$0xf]
      %v473 = vld [vmem:[%s1 + $0x4] sm:$0xf]
      %v474 = vld [vmem:[%s1 + $0x8] sm:$0xf]
      %v475 = vld [vmem:[%s1 + $0xc] sm:$0xf]
      %v476 = vld [vmem:[%s1 + $0x10] sm:$0xf]
      %v477 = vld [vmem:[%s1 + $0x14] sm:$0xf]
      %v478 = vld [vmem:[%s1 + $0x18] sm:$0xf]
      %v479 = vld [vmem:[%s1 + $0x1c] sm:$0xf]
      %v480 = vld [vmem:[%s1 + $0x20] sm:$0xf]
      %v481 = vld [vmem:[%s1 + $0x24] sm:$0xf]
      %v482 = vld [vmem:[%s1 + $0x28] sm:$0xf]
      %v483 = vld [vmem:[%s1 + $0x2c] sm:$0xf]
      %v484 = vld [vmem:[%s1 + $0x30] sm:$0xf]
      %v485 = vld [vmem:[%s1 + $0x34] sm:$0xf]
      %v486 = vld [vmem:[%s1 + $0x38] sm:$0xf]
      %v487 = vld [vmem:[%s1 + $0x3c] sm:$0xf]
      %s488 = scalar_lea.vmem %s434, 144
      %v489 = vld [vmem:[%s488] sm:$0xf]
      %v490 = vld [vmem:[%s488 + $0x4] sm:$0xf]
      %v491 = vld [vmem:[%s488 + $0x8] sm:$0xf]
      %v492 = vld [vmem:[%s488 + $0xc] sm:$0xf]
      %v493 = vld [vmem:[%s488 + $0x10] sm:$0xf]
      %v494 = vld [vmem:[%s488 + $0x14] sm:$0xf]
      %v495 = vld [vmem:[%s488 + $0x18] sm:$0xf]
      %v496 = vld [vmem:[%s488 + $0x1c] sm:$0xf]
      %v497 = vld [vmem:[%s488 + $0x20] sm:$0xf]
      %v498 = vld [vmem:[%s488 + $0x24] sm:$0xf]
      %v499 = vld [vmem:[%s488 + $0x28] sm:$0xf]
      %v500 = vld [vmem:[%s488 + $0x2c] sm:$0xf]
      %v501 = vld [vmem:[%s488 + $0x30] sm:$0xf]
      %v502 = vld [vmem:[%s488 + $0x34] sm:$0xf]
      %v503 = vld [vmem:[%s488 + $0x38] sm:$0xf]
      %v504 = vld [vmem:[%s488 + $0x3c] sm:$0xf]
      %v505 = vld [vmem:[%s488 + $0x40] sm:$0xf]
      %v506 = vld [vmem:[%s488 + $0x44] sm:$0xf]
      %v507 = vld [vmem:[%s488 + $0x48] sm:$0xf]
      %v508 = vld [vmem:[%s488 + $0x4c] sm:$0xf]
      %v509 = vld [vmem:[%s488 + $0x50] sm:$0xf]
      %v510 = vld [vmem:[%s488 + $0x54] sm:$0xf]
      %v511 = vld [vmem:[%s488 + $0x58] sm:$0xf]
      %v512 = vld [vmem:[%s488 + $0x5c] sm:$0xf]
      %v513 = vld [vmem:[%s488 + $0x60] sm:$0xf]
      %v514 = vld [vmem:[%s488 + $0x64] sm:$0xf]
      %v515 = vld [vmem:[%s488 + $0x68] sm:$0xf]
      %v516 = vld [vmem:[%s488 + $0x6c] sm:$0xf]
      %v517 = vld [vmem:[%s488 + $0x70] sm:$0xf]
      %v518 = vld [vmem:[%s488 + $0x74] sm:$0xf]
      %v519 = vld [vmem:[%s488 + $0x78] sm:$0xf]
      %v520 = vld [vmem:[%s488 + $0x7c] sm:$0xf]
      %s521 = scalar_lea.vmem %s1, 64
      %v522 = vld [vmem:[%s521] sm:$0xf]
      %v523 = vld [vmem:[%s521 + $0x4] sm:$0xf]
      %v524 = vld [vmem:[%s521 + $0x8] sm:$0xf]
      %v525 = vld [vmem:[%s521 + $0xc] sm:$0xf]
      %v526 = vld [vmem:[%s521 + $0x10] sm:$0xf]
      %v527 = vld [vmem:[%s521 + $0x14] sm:$0xf]
      %v528 = vld [vmem:[%s521 + $0x18] sm:$0xf]
      %v529 = vld [vmem:[%s521 + $0x1c] sm:$0xf]
      %v530 = vld [vmem:[%s521 + $0x20] sm:$0xf]
      %v531 = vld [vmem:[%s521 + $0x24] sm:$0xf]
      %v532 = vld [vmem:[%s521 + $0x28] sm:$0xf]
      %v533 = vld [vmem:[%s521 + $0x2c] sm:$0xf]
      %v534 = vld [vmem:[%s521 + $0x30] sm:$0xf]
      %v535 = vld [vmem:[%s521 + $0x34] sm:$0xf]
      %v536 = vld [vmem:[%s521 + $0x38] sm:$0xf]
      %v537 = vld [vmem:[%s521 + $0x3c] sm:$0xf]
      %v570 = vunpack.c.l.b16 %v489
      %v571 = vunpack.c.l.b16 %v490
      %v572 = vunpack.c.l.b16 %v491
      %v573 = vunpack.c.l.b16 %v492
      %v574 = vunpack.c.l.b16 %v493
      %v575 = vunpack.c.l.b16 %v494
      %v576 = vunpack.c.l.b16 %v495
      %v577 = vunpack.c.l.b16 %v496
      %v578 = vunpack.c.l.b16 %v497
      %v579 = vunpack.c.l.b16 %v498
      %v580 = vunpack.c.l.b16 %v499
      %v581 = vunpack.c.l.b16 %v500
      %v582 = vunpack.c.l.b16 %v501
      %v583 = vunpack.c.l.b16 %v502
      %v584 = vunpack.c.l.b16 %v503
      %v585 = vunpack.c.l.b16 %v504
      %v586 = vunpack.c.l.b16 %v505
      %v587 = vunpack.c.l.b16 %v506
      %v588 = vunpack.c.l.b16 %v507
      %v589 = vunpack.c.l.b16 %v508
      %v590 = vunpack.c.l.b16 %v509
      %v591 = vunpack.c.l.b16 %v510
      %v592 = vunpack.c.l.b16 %v511
      %v593 = vunpack.c.l.b16 %v512
      %v594 = vunpack.c.l.b16 %v513
      %v595 = vunpack.c.l.b16 %v514
      %v596 = vunpack.c.l.b16 %v515
      %v597 = vunpack.c.l.b16 %v516
      %v598 = vunpack.c.l.b16 %v517
      %v599 = vunpack.c.l.b16 %v518
      %v600 = vunpack.c.l.b16 %v519
      %v601 = vunpack.c.l.b16 %v520
      %v602 = vpack.c.b16 %v571, %v570
      %v603 = vpack.c.b16 %v573, %v572
      %v604 = vpack.c.b16 %v575, %v574
      %v605 = vpack.c.b16 %v577, %v576
      %v606 = vpack.c.b16 %v579, %v578
      %v607 = vpack.c.b16 %v581, %v580
      %v608 = vpack.c.b16 %v583, %v582
      %v609 = vpack.c.b16 %v585, %v584
      %v610 = vpack.c.b16 %v587, %v586
      %v611 = vpack.c.b16 %v589, %v588
      %v612 = vpack.c.b16 %v591, %v590
      %v613 = vpack.c.b16 %v593, %v592
      %v614 = vpack.c.b16 %v595, %v594
      %v615 = vpack.c.b16 %v597, %v596
      %v616 = vpack.c.b16 %v599, %v598
      %v617 = vpack.c.b16 %v601, %v600
      %v650 = vunpack.c.l.b16 %v522
      %v651 = vunpack.c.l.b16 %v523
      %v652 = vunpack.c.l.b16 %v524
      %v653 = vunpack.c.l.b16 %v525
      %v654 = vunpack.c.l.b16 %v526
      %v655 = vunpack.c.l.b16 %v527
      %v656 = vunpack.c.l.b16 %v528
      %v657 = vunpack.c.l.b16 %v529
      %v658 = vunpack.c.l.b16 %v530
      %v659 = vunpack.c.l.b16 %v531
      %v660 = vunpack.c.l.b16 %v532
      %v661 = vunpack.c.l.b16 %v533
      %v662 = vunpack.c.l.b16 %v534
      %v663 = vunpack.c.l.b16 %v535
      %v664 = vunpack.c.l.b16 %v536
      %v665 = vunpack.c.l.b16 %v537
      %v666 = vpack.c.b16 %v651, %v650
      %v667 = vpack.c.b16 %v653, %v652
      %v668 = vpack.c.b16 %v655, %v654
      %v669 = vpack.c.b16 %v657, %v656
      %v670 = vpack.c.b16 %v659, %v658
      %v671 = vpack.c.b16 %v661, %v660
      %v672 = vpack.c.b16 %v663, %v662
      %v673 = vpack.c.b16 %v665, %v664
      %682 = vmatprep.subr.bf16.mxu0 0
      %683 = vmatpush1.bf16.msra.mxu0 %v666
      %684 = vmatprep.subr.bf16.mxu0 0
      %685 = vmatpush1.bf16.msra.mxu0 %v667
      %686 = vmatprep.subr.bf16.mxu0 0
      %687 = vmatpush1.bf16.msra.mxu0 %v668
      %688 = vmatprep.subr.bf16.mxu0 0
      %689 = vmatpush1.bf16.msra.mxu0 %v669
      %690 = vmatprep.subr.bf16.mxu0 0
      %691 = vmatpush1.bf16.msra.mxu0 %v670
      %692 = vmatprep.subr.bf16.mxu0 0
      %693 = vmatpush1.bf16.msra.mxu0 %v671
      %694 = vmatprep.subr.bf16.mxu0 0
      %695 = vmatpush1.bf16.msra.mxu0 %v672
      %696 = vmatprep.subr.bf16.mxu0 0
      %697 = vmatpush1.bf16.msra.mxu0 %v673
      %698 = vmatprep.subr.bf16.mxu0 0
      %699 = vmatpush1.bf16.msra.mxu0 0
      %700 = vmatprep.subr.bf16.mxu0 0
      %701 = vmatpush1.bf16.msra.mxu0 0
      %702 = vmatprep.subr.bf16.mxu0 0
      %703 = vmatpush1.bf16.msra.mxu0 0
      %704 = vmatprep.subr.bf16.mxu0 0
      %705 = vmatpush1.bf16.msra.mxu0 0
      %706 = vmatprep.subr.bf16.mxu0 0
      %707 = vmatpush1.bf16.msra.mxu0 0
      %708 = vmatprep.subr.bf16.mxu0 0
      %709 = vmatpush1.bf16.msra.mxu0 0
      %710 = vmatprep.subr.bf16.mxu0 0
      %711 = vmatpush1.bf16.msra.mxu0 0
      %712 = vmatprep.subr.bf16.mxu0 0
      %713 = vmatpush1.bf16.msra.mxu0 0
      %714 = vmatprep.mubr.bf16.mxu0 0
      %715 = vmatmul.mubr.bf16.gmra.mrb[0].mxu0 %v602
      %v716 = vpop.f32.mrb[0].mxu0
      %v717 = vadd.f32 0.0, %v716
      %v718 = vpop.f32.mrb[0].mxu0
      %v719 = vpop.f32.mrb[0].mxu0
      %v720 = vadd.f32 0.0, %v719
      %v721 = vpop.f32.mrb[0].mxu0
      %722 = vmatprep.mubr.bf16.mxu0 0
      %723 = vmatmul.mubr.bf16.gmra.mrb[0].mxu0 %v603
      %v724 = vpop.f32.mrb[0].mxu0
      %v725 = vadd.f32 0.0, %v724
      %v726 = vpop.f32.mrb[0].mxu0
      %v727 = vpop.f32.mrb[0].mxu0
      %v728 = vadd.f32 0.0, %v727
      %v729 = vpop.f32.mrb[0].mxu0
      %730 = vmatprep.mubr.bf16.mxu0 0
      %731 = vmatmul.mubr.bf16.gmra.mrb[0].mxu0 %v604
      %v732 = vpop.f32.mrb[0].mxu0
      %v733 = vadd.f32 0.0, %v732
      %v734 = vpop.f32.mrb[0].mxu0
      %v735 = vpop.f32.mrb[0].mxu0
      %v736 = vadd.f32 0.0, %v735
      %v737 = vpop.f32.mrb[0].mxu0
      %738 = vmatprep.mubr.bf16.mxu0 0
      %739 = vmatmul.mubr.bf16.gmra.mrb[0].mxu0 %v605
      %v740 = vpop.f32.mrb[0].mxu0
      %v741 = vadd.f32 0.0, %v740
      %v742 = vpop.f32.mrb[0].mxu0
      %v743 = vpop.f32.mrb[0].mxu0
      %v744 = vadd.f32 0.0, %v743
      %v745 = vpop.f32.mrb[0].mxu0
      %746 = vmatprep.mubr.bf16.mxu0 0
      %747 = vmatmul.mubr.bf16.gmra.mrb[0].mxu0 %v606
      %v748 = vpop.f32.mrb[0].mxu0
      %v749 = vadd.f32 0.0, %v748
      %v750 = vpop.f32.mrb[0].mxu0
      %v751 = vpop.f32.mrb[0].mxu0
      %v752 = vadd.f32 0.0, %v751
      %v753 = vpop.f32.mrb[0].mxu0
      %754 = vmatprep.mubr.bf16.mxu0 0
      %755 = vmatmul.mubr.bf16.gmra.mrb[0].mxu0 %v607
      %v756 = vpop.f32.mrb[0].mxu0
      %v757 = vadd.f32 0.0, %v756
      %v758 = vpop.f32.mrb[0].mxu0
      %v759 = vpop.f32.mrb[0].mxu0
      %v760 = vadd.f32 0.0, %v759
      %v761 = vpop.f32.mrb[0].mxu0
      %762 = vmatprep.mubr.bf16.mxu0 0
      %763 = vmatmul.mubr.bf16.gmra.mrb[0].mxu0 %v608
      %v764 = vpop.f32.mrb[0].mxu0
      %v765 = vadd.f32 0.0, %v764
      %v766 = vpop.f32.mrb[0].mxu0
      %v767 = vpop.f32.mrb[0].mxu0
      %v768 = vadd.f32 0.0, %v767
      %v769 = vpop.f32.mrb[0].mxu0
      %770 = vmatprep.mubr.bf16.mxu0 0
      %771 = vmatmul.mubr.bf16.gmra.mrb[0].mxu0 %v609
      %v772 = vpop.f32.mrb[0].mxu0
      %v773 = vadd.f32 0.0, %v772
      %v774 = vpop.f32.mrb[0].mxu0
      %v775 = vpop.f32.mrb[0].mxu0
      %v776 = vadd.f32 0.0, %v775
      %v777 = vpop.f32.mrb[0].mxu0
      %778 = vmatprep.mubr.bf16.mxu0 0
      %779 = vmatmul.mubr.bf16.gmra.mrb[0].mxu0 %v610
      %v780 = vpop.f32.mrb[0].mxu0
      %v781 = vadd.f32 0.0, %v780
      %v782 = vpop.f32.mrb[0].mxu0
      %v783 = vpop.f32.mrb[0].mxu0
      %v784 = vadd.f32 0.0, %v783
      %v785 = vpop.f32.mrb[0].mxu0
      %786 = vmatprep.mubr.bf16.mxu0 0
      %787 = vmatmul.mubr.bf16.gmra.mrb[0].mxu0 %v611
      %v788 = vpop.f32.mrb[0].mxu0
      %v789 = vadd.f32 0.0, %v788
      %v790 = vpop.f32.mrb[0].mxu0
      %v791 = vpop.f32.mrb[0].mxu0
      %v792 = vadd.f32 0.0, %v791
      %v793 = vpop.f32.mrb[0].mxu0
      %794 = vmatprep.mubr.bf16.mxu0 0
      %795 = vmatmul.mubr.bf16.gmra.mrb[0].mxu0 %v612
      %v796 = vpop.f32.mrb[0].mxu0
      %v797 = vadd.f32 0.0, %v796
      %v798 = vpop.f32.mrb[0].mxu0
      %v799 = vpop.f32.mrb[0].mxu0
      %v800 = vadd.f32 0.0, %v799
      %v801 = vpop.f32.mrb[0].mxu0
      %802 = vmatprep.mubr.bf16.mxu0 0
      %803 = vmatmul.mubr.bf16.gmra.mrb[0].mxu0 %v613
      %v804 = vpop.f32.mrb[0].mxu0
      %v805 = vadd.f32 0.0, %v804
      %v806 = vpop.f32.mrb[0].mxu0
      %v807 = vpop.f32.mrb[0].mxu0
      %v808 = vadd.f32 0.0, %v807
      %v809 = vpop.f32.mrb[0].mxu0
      %810 = vmatprep.mubr.bf16.mxu0 0
      %811 = vmatmul.mubr.bf16.gmra.mrb[0].mxu0 %v614
      %v812 = vpop.f32.mrb[0].mxu0
      %v813 = vadd.f32 0.0, %v812
      %v814 = vpop.f32.mrb[0].mxu0
      %v815 = vpop.f32.mrb[0].mxu0
      %v816 = vadd.f32 0.0, %v815
      %v817 = vpop.f32.mrb[0].mxu0
      %818 = vmatprep.mubr.bf16.mxu0 0
      %819 = vmatmul.mubr.bf16.gmra.mrb[0].mxu0 %v615
      %v820 = vpop.f32.mrb[0].mxu0
      %v821 = vadd.f32 0.0, %v820
      %v822 = vpop.f32.mrb[0].mxu0
      %v823 = vpop.f32.mrb[0].mxu0
      %v824 = vadd.f32 0.0, %v823
      %v825 = vpop.f32.mrb[0].mxu0
      %826 = vmatprep.mubr.bf16.mxu0 0
      %827 = vmatmul.mubr.bf16.gmra.mrb[0].mxu0 %v616
      %v828 = vpop.f32.mrb[0].mxu0
      %v829 = vadd.f32 0.0, %v828
      %v830 = vpop.f32.mrb[0].mxu0
      %v831 = vpop.f32.mrb[0].mxu0
      %v832 = vadd.f32 0.0, %v831
      %v833 = vpop.f32.mrb[0].mxu0
      %834 = vmatprep.mubr.bf16.mxu0 0
      %835 = vmatmul.mubr.bf16.gmra.mrb[0].mxu0 %v617
      %v836 = vpop.f32.mrb[0].mxu0
      %v837 = vadd.f32 0.0, %v836
      %v838 = vpop.f32.mrb[0].mxu0
      %v839 = vpop.f32.mrb[0].mxu0
      %v840 = vadd.f32 0.0, %v839
      %v841 = vpop.f32.mrb[0].mxu0
      %842 = vdwg.mxu0
      %v875 = vunpack.c.l.b16 %v440
      %v876 = vunpack.c.l.b16 %v441
      %v877 = vunpack.c.l.b16 %v442
      %v878 = vunpack.c.l.b16 %v443
      %v879 = vunpack.c.l.b16 %v444
      %v880 = vunpack.c.l.b16 %v445
      %v881 = vunpack.c.l.b16 %v446
      %v882 = vunpack.c.l.b16 %v447
      %v883 = vunpack.c.l.b16 %v448
      %v884 = vunpack.c.l.b16 %v449
      %v885 = vunpack.c.l.b16 %v450
      %v886 = vunpack.c.l.b16 %v451
      %v887 = vunpack.c.l.b16 %v452
      %v888 = vunpack.c.l.b16 %v453
      %v889 = vunpack.c.l.b16 %v454
      %v890 = vunpack.c.l.b16 %v455
      %v891 = vunpack.c.l.b16 %v456
      %v892 = vunpack.c.l.b16 %v457
      %v893 = vunpack.c.l.b16 %v458
      %v894 = vunpack.c.l.b16 %v459
      %v895 = vunpack.c.l.b16 %v460
      %v896 = vunpack.c.l.b16 %v461
      %v897 = vunpack.c.l.b16 %v462
      %v898 = vunpack.c.l.b16 %v463
      %v899 = vunpack.c.l.b16 %v464
      %v900 = vunpack.c.l.b16 %v465
      %v901 = vunpack.c.l.b16 %v466
      %v902 = vunpack.c.l.b16 %v467
      %v903 = vunpack.c.l.b16 %v468
      %v904 = vunpack.c.l.b16 %v469
      %v905 = vunpack.c.l.b16 %v470
      %v906 = vunpack.c.l.b16 %v471
      %v907 = vpack.c.b16 %v876, %v875
      %v908 = vpack.c.b16 %v878, %v877
      %v909 = vpack.c.b16 %v880, %v879
      %v910 = vpack.c.b16 %v882, %v881
      %v911 = vpack.c.b16 %v884, %v883
      %v912 = vpack.c.b16 %v886, %v885
      %v913 = vpack.c.b16 %v888, %v887
      %v914 = vpack.c.b16 %v890, %v889
      %v915 = vpack.c.b16 %v892, %v891
      %v916 = vpack.c.b16 %v894, %v893
      %v917 = vpack.c.b16 %v896, %v895
      %v918 = vpack.c.b16 %v898, %v897
      %v919 = vpack.c.b16 %v900, %v899
      %v920 = vpack.c.b16 %v902, %v901
      %v921 = vpack.c.b16 %v904, %v903
      %v922 = vpack.c.b16 %v906, %v905
      %v955 = vunpack.c.l.b16 %v472
      %v956 = vunpack.c.l.b16 %v473
      %v957 = vunpack.c.l.b16 %v474
      %v958 = vunpack.c.l.b16 %v475
      %v959 = vunpack.c.l.b16 %v476
      %v960 = vunpack.c.l.b16 %v477
      %v961 = vunpack.c.l.b16 %v478
      %v962 = vunpack.c.l.b16 %v479
      %v963 = vunpack.c.l.b16 %v480
      %v964 = vunpack.c.l.b16 %v481
      %v965 = vunpack.c.l.b16 %v482
      %v966 = vunpack.c.l.b16 %v483
      %v967 = vunpack.c.l.b16 %v484
      %v968 = vunpack.c.l.b16 %v485
      %v969 = vunpack.c.l.b16 %v486
      %v970 = vunpack.c.l.b16 %v487
      %v971 = vpack.c.b16 %v956, %v955
      %v972 = vpack.c.b16 %v958, %v957
      %v973 = vpack.c.b16 %v960, %v959
      %v974 = vpack.c.b16 %v962, %v961
      %v975 = vpack.c.b16 %v964, %v963
      %v976 = vpack.c.b16 %v966, %v965
      %v977 = vpack.c.b16 %v968, %v967
      %v978 = vpack.c.b16 %v970, %v969
      %987 = vmatprep.subr.bf16.mxu0 0
      %988 = vmatpush1.bf16.msra.mxu0 %v971
      %989 = vmatprep.subr.bf16.mxu0 0
      %990 = vmatpush1.bf16.msra.mxu0 %v972
      %991 = vmatprep.subr.bf16.mxu0 0
      %992 = vmatpush1.bf16.msra.mxu0 %v973
      %993 = vmatprep.subr.bf16.mxu0 0
      %994 = vmatpush1.bf16.msra.mxu0 %v974
      %995 = vmatprep.subr.bf16.mxu0 0
      %996 = vmatpush1.bf16.msra.mxu0 %v975
      %997 = vmatprep.subr.bf16.mxu0 0
      %998 = vmatpush1.bf16.msra.mxu0 %v976
      %999 = vmatprep.subr.bf16.mxu0 0
      %1000 = vmatpush1.bf16.msra.mxu0 %v977
      %1001 = vmatprep.subr.bf16.mxu0 0
      %1002 = vmatpush1.bf16.msra.mxu0 %v978
      %1003 = vmatprep.subr.bf16.mxu0 0
      %1004 = vmatpush1.bf16.msra.mxu0 0
      %1005 = vmatprep.subr.bf16.mxu0 0
      %1006 = vmatpush1.bf16.msra.mxu0 0
      %1007 = vmatprep.subr.bf16.mxu0 0
      %1008 = vmatpush1.bf16.msra.mxu0 0
      %1009 = vmatprep.subr.bf16.mxu0 0
      %1010 = vmatpush1.bf16.msra.mxu0 0
      %1011 = vmatprep.subr.bf16.mxu0 0
      %1012 = vmatpush1.bf16.msra.mxu0 0
      %1013 = vmatprep.subr.bf16.mxu0 0
      %1014 = vmatpush1.bf16.msra.mxu0 0
      %1015 = vmatprep.subr.bf16.mxu0 0
      %1016 = vmatpush1.bf16.msra.mxu0 0
      %1017 = vmatprep.subr.bf16.mxu0 0
      %1018 = vmatpush1.bf16.msra.mxu0 0
      %1019 = vmatprep.mubr.bf16.mxu0 0
      %1020 = vmatmul.mubr.bf16.gmra.mrb[0].mxu0 %v907
      %v1021 = vpop.f32.mrb[0].mxu0
      %v1022 = vadd.f32 %v717, %v1021
      %v1023 = vpop.f32.mrb[0].mxu0
      %v1024 = vpop.f32.mrb[0].mxu0
      %v1025 = vadd.f32 %v720, %v1024
      %v1026 = vpop.f32.mrb[0].mxu0
      %1027 = vmatprep.mubr.bf16.mxu0 0
      %1028 = vmatmul.mubr.bf16.gmra.mrb[0].mxu0 %v908
      %v1029 = vpop.f32.mrb[0].mxu0
      %v1030 = vadd.f32 %v725, %v1029
      %v1031 = vpop.f32.mrb[0].mxu0
      %v1032 = vpop.f32.mrb[0].mxu0
      %v1033 = vadd.f32 %v728, %v1032
      %v1034 = vpop.f32.mrb[0].mxu0
      %1035 = vmatprep.mubr.bf16.mxu0 0
      %1036 = vmatmul.mubr.bf16.gmra.mrb[0].mxu0 %v909
      %v1037 = vpop.f32.mrb[0].mxu0
      %v1038 = vadd.f32 %v733, %v1037
      %v1039 = vpop.f32.mrb[0].mxu0
      %v1040 = vpop.f32.mrb[0].mxu0
      %v1041 = vadd.f32 %v736, %v1040
      %v1042 = vpop.f32.mrb[0].mxu0
      %1043 = vmatprep.mubr.bf16.mxu0 0
      %1044 = vmatmul.mubr.bf16.gmra.mrb[0].mxu0 %v910
      %v1045 = vpop.f32.mrb[0].mxu0
      %v1046 = vadd.f32 %v741, %v1045
      %v1047 = vpop.f32.mrb[0].mxu0
      %v1048 = vpop.f32.mrb[0].mxu0
      %v1049 = vadd.f32 %v744, %v1048
      %v1050 = vpop.f32.mrb[0].mxu0
      %1051 = vmatprep.mubr.bf16.mxu0 0
      %1052 = vmatmul.mubr.bf16.gmra.mrb[0].mxu0 %v911
      %v1053 = vpop.f32.mrb[0].mxu0
      %v1054 = vadd.f32 %v749, %v1053
      %v1055 = vpop.f32.mrb[0].mxu0
      %v1056 = vpop.f32.mrb[0].mxu0
      %v1057 = vadd.f32 %v752, %v1056
      %v1058 = vpop.f32.mrb[0].mxu0
      %1059 = vmatprep.mubr.bf16.mxu0 0
      %1060 = vmatmul.mubr.bf16.gmra.mrb[0].mxu0 %v912
      %v1061 = vpop.f32.mrb[0].mxu0
      %v1062 = vadd.f32 %v757, %v1061
      %v1063 = vpop.f32.mrb[0].mxu0
      %v1064 = vpop.f32.mrb[0].mxu0
      %v1065 = vadd.f32 %v760, %v1064
      %v1066 = vpop.f32.mrb[0].mxu0
      %1067 = vmatprep.mubr.bf16.mxu0 0
      %1068 = vmatmul.mubr.bf16.gmra.mrb[0].mxu0 %v913
      %v1069 = vpop.f32.mrb[0].mxu0
      %v1070 = vadd.f32 %v765, %v1069
      %v1071 = vpop.f32.mrb[0].mxu0
      %v1072 = vpop.f32.mrb[0].mxu0
      %v1073 = vadd.f32 %v768, %v1072
      %v1074 = vpop.f32.mrb[0].mxu0
      %1075 = vmatprep.mubr.bf16.mxu0 0
      %1076 = vmatmul.mubr.bf16.gmra.mrb[0].mxu0 %v914
      %v1077 = vpop.f32.mrb[0].mxu0
      %v1078 = vadd.f32 %v773, %v1077
      %v1079 = vpop.f32.mrb[0].mxu0
      %v1080 = vpop.f32.mrb[0].mxu0
      %v1081 = vadd.f32 %v776, %v1080
      %v1082 = vpop.f32.mrb[0].mxu0
      %1083 = vmatprep.mubr.bf16.mxu0 0
      %1084 = vmatmul.mubr.bf16.gmra.mrb[0].mxu0 %v915
      %v1085 = vpop.f32.mrb[0].mxu0
      %v1086 = vadd.f32 %v781, %v1085
      %v1087 = vpop.f32.mrb[0].mxu0
      %v1088 = vpop.f32.mrb[0].mxu0
      %v1089 = vadd.f32 %v784, %v1088
      %v1090 = vpop.f32.mrb[0].mxu0
      %1091 = vmatprep.mubr.bf16.mxu0 0
      %1092 = vmatmul.mubr.bf16.gmra.mrb[0].mxu0 %v916
      %v1093 = vpop.f32.mrb[0].mxu0
      %v1094 = vadd.f32 %v789, %v1093
      %v1095 = vpop.f32.mrb[0].mxu0
      %v1096 = vpop.f32.mrb[0].mxu0
      %v1097 = vadd.f32 %v792, %v1096
      %v1098 = vpop.f32.mrb[0].mxu0
      %1099 = vmatprep.mubr.bf16.mxu0 0
      %1100 = vmatmul.mubr.bf16.gmra.mrb[0].mxu0 %v917
      %v1101 = vpop.f32.mrb[0].mxu0
      %v1102 = vadd.f32 %v797, %v1101
      %v1103 = vpop.f32.mrb[0].mxu0
      %v1104 = vpop.f32.mrb[0].mxu0
      %v1105 = vadd.f32 %v800, %v1104
      %v1106 = vpop.f32.mrb[0].mxu0
      %1107 = vmatprep.mubr.bf16.mxu0 0
      %1108 = vmatmul.mubr.bf16.gmra.mrb[0].mxu0 %v918
      %v1109 = vpop.f32.mrb[0].mxu0
      %v1110 = vadd.f32 %v805, %v1109
      %v1111 = vpop.f32.mrb[0].mxu0
      %v1112 = vpop.f32.mrb[0].mxu0
      %v1113 = vadd.f32 %v808, %v1112
      %v1114 = vpop.f32.mrb[0].mxu0
      %1115 = vmatprep.mubr.bf16.mxu0 0
      %1116 = vmatmul.mubr.bf16.gmra.mrb[0].mxu0 %v919
      %v1117 = vpop.f32.mrb[0].mxu0
      %v1118 = vadd.f32 %v813, %v1117
      %v1119 = vpop.f32.mrb[0].mxu0
      %v1120 = vpop.f32.mrb[0].mxu0
      %v1121 = vadd.f32 %v816, %v1120
      %v1122 = vpop.f32.mrb[0].mxu0
      %1123 = vmatprep.mubr.bf16.mxu0 0
      %1124 = vmatmul.mubr.bf16.gmra.mrb[0].mxu0 %v920
      %v1125 = vpop.f32.mrb[0].mxu0
      %v1126 = vadd.f32 %v821, %v1125
      %v1127 = vpop.f32.mrb[0].mxu0
      %v1128 = vpop.f32.mrb[0].mxu0
      %v1129 = vadd.f32 %v824, %v1128
      %v1130 = vpop.f32.mrb[0].mxu0
      %1131 = vmatprep.mubr.bf16.mxu0 0
      %1132 = vmatmul.mubr.bf16.gmra.mrb[0].mxu0 %v921
      %v1133 = vpop.f32.mrb[0].mxu0
      %v1134 = vadd.f32 %v829, %v1133
      %v1135 = vpop.f32.mrb[0].mxu0
      %v1136 = vpop.f32.mrb[0].mxu0
      %v1137 = vadd.f32 %v832, %v1136
      %v1138 = vpop.f32.mrb[0].mxu0
      %1139 = vmatprep.mubr.bf16.mxu0 0
      %1140 = vmatmul.mubr.bf16.gmra.mrb[0].mxu0 %v922
      %v1141 = vpop.f32.mrb[0].mxu0
      %v1142 = vadd.f32 %v837, %v1141
      %v1143 = vpop.f32.mrb[0].mxu0
      %v1144 = vpop.f32.mrb[0].mxu0
      %v1145 = vadd.f32 %v840, %v1144
      %v1146 = vpop.f32.mrb[0].mxu0
      %1147 = vdwg.mxu0
      %s1148 = scalar_lea.vmem %s434, 288
      %v1149 = vld [vmem:[%s1148] sm:$0xf]
      %v1150 = vld [vmem:[%s1148 + $0x4] sm:$0xf]
      %v1151 = vld [vmem:[%s1148 + $0x8] sm:$0xf]
      %v1152 = vld [vmem:[%s1148 + $0xc] sm:$0xf]
      %v1153 = vld [vmem:[%s1148 + $0x10] sm:$0xf]
      %v1154 = vld [vmem:[%s1148 + $0x14] sm:$0xf]
      %v1155 = vld [vmem:[%s1148 + $0x18] sm:$0xf]
      %v1156 = vld [vmem:[%s1148 + $0x1c] sm:$0xf]
      %v1157 = vld [vmem:[%s1148 + $0x20] sm:$0xf]
      %v1158 = vld [vmem:[%s1148 + $0x24] sm:$0xf]
      %v1159 = vld [vmem:[%s1148 + $0x28] sm:$0xf]
      %v1160 = vld [vmem:[%s1148 + $0x2c] sm:$0xf]
      %v1161 = vld [vmem:[%s1148 + $0x30] sm:$0xf]
      %v1162 = vld [vmem:[%s1148 + $0x34] sm:$0xf]
      %v1163 = vld [vmem:[%s1148 + $0x38] sm:$0xf]
      %v1164 = vld [vmem:[%s1148 + $0x3c] sm:$0xf]
      %v1165 = vld [vmem:[%s1148 + $0x40] sm:$0xf]
      %v1166 = vld [vmem:[%s1148 + $0x44] sm:$0xf]
      %v1167 = vld [vmem:[%s1148 + $0x48] sm:$0xf]
      %v1168 = vld [vmem:[%s1148 + $0x4c] sm:$0xf]
      %v1169 = vld [vmem:[%s1148 + $0x50] sm:$0xf]
      %v1170 = vld [vmem:[%s1148 + $0x54] sm:$0xf]
      %v1171 = vld [vmem:[%s1148 + $0x58] sm:$0xf]
      %v1172 = vld [vmem:[%s1148 + $0x5c] sm:$0xf]
      %v1173 = vld [vmem:[%s1148 + $0x60] sm:$0xf]
      %v1174 = vld [vmem:[%s1148 + $0x64] sm:$0xf]
      %v1175 = vld [vmem:[%s1148 + $0x68] sm:$0xf]
      %v1176 = vld [vmem:[%s1148 + $0x6c] sm:$0xf]
      %v1177 = vld [vmem:[%s1148 + $0x70] sm:$0xf]
      %v1178 = vld [vmem:[%s1148 + $0x74] sm:$0xf]
      %v1179 = vld [vmem:[%s1148 + $0x78] sm:$0xf]
      %v1180 = vld [vmem:[%s1148 + $0x7c] sm:$0xf]
      %s1181 = scalar_lea.vmem %s1, 128
      %v1182 = vld [vmem:[%s1181] sm:$0xf]
      %v1183 = vld [vmem:[%s1181 + $0x4] sm:$0xf]
      %v1184 = vld [vmem:[%s1181 + $0x8] sm:$0xf]
      %v1185 = vld [vmem:[%s1181 + $0xc] sm:$0xf]
      %v1186 = vld [vmem:[%s1181 + $0x10] sm:$0xf]
      %v1187 = vld [vmem:[%s1181 + $0x14] sm:$0xf]
      %v1188 = vld [vmem:[%s1181 + $0x18] sm:$0xf]
      %v1189 = vld [vmem:[%s1181 + $0x1c] sm:$0xf]
      %v1190 = vld [vmem:[%s1181 + $0x20] sm:$0xf]
      %v1191 = vld [vmem:[%s1181 + $0x24] sm:$0xf]
      %v1192 = vld [vmem:[%s1181 + $0x28] sm:$0xf]
      %v1193 = vld [vmem:[%s1181 + $0x2c] sm:$0xf]
      %v1194 = vld [vmem:[%s1181 + $0x30] sm:$0xf]
      %v1195 = vld [vmem:[%s1181 + $0x34] sm:$0xf]
      %v1196 = vld [vmem:[%s1181 + $0x38] sm:$0xf]
      %v1197 = vld [vmem:[%s1181 + $0x3c] sm:$0xf]
      %v1230 = vunpack.c.l.b16 %v1149
      %v1231 = vunpack.c.l.b16 %v1150
      %v1232 = vunpack.c.l.b16 %v1151
      %v1233 = vunpack.c.l.b16 %v1152
      %v1234 = vunpack.c.l.b16 %v1153
      %v1235 = vunpack.c.l.b16 %v1154
      %v1236 = vunpack.c.l.b16 %v1155
      %v1237 = vunpack.c.l.b16 %v1156
      %v1238 = vunpack.c.l.b16 %v1157
      %v1239 = vunpack.c.l.b16 %v1158
      %v1240 = vunpack.c.l.b16 %v1159
      %v1241 = vunpack.c.l.b16 %v1160
      %v1242 = vunpack.c.l.b16 %v1161
      %v1243 = vunpack.c.l.b16 %v1162
      %v1244 = vunpack.c.l.b16 %v1163
      %v1245 = vunpack.c.l.b16 %v1164
      %v1246 = vunpack.c.l.b16 %v1165
      %v1247 = vunpack.c.l.b16 %v1166
      %v1248 = vunpack.c.l.b16 %v1167
      %v1249 = vunpack.c.l.b16 %v1168
      %v1250 = vunpack.c.l.b16 %v1169
      %v1251 = vunpack.c.l.b16 %v1170
      %v1252 = vunpack.c.l.b16 %v1171
      %v1253 = vunpack.c.l.b16 %v1172
      %v1254 = vunpack.c.l.b16 %v1173
      %v1255 = vunpack.c.l.b16 %v1174
      %v1256 = vunpack.c.l.b16 %v1175
      %v1257 = vunpack.c.l.b16 %v1176
      %v1258 = vunpack.c.l.b16 %v1177
      %v1259 = vunpack.c.l.b16 %v1178
      %v1260 = vunpack.c.l.b16 %v1179
      %v1261 = vunpack.c.l.b16 %v1180
      %v1262 = vpack.c.b16 %v1231, %v1230
      %v1263 = vpack.c.b16 %v1233, %v1232
      %v1264 = vpack.c.b16 %v1235, %v1234
      %v1265 = vpack.c.b16 %v1237, %v1236
      %v1266 = vpack.c.b16 %v1239, %v1238
      %v1267 = vpack.c.b16 %v1241, %v1240
      %v1268 = vpack.c.b16 %v1243, %v1242
      %v1269 = vpack.c.b16 %v1245, %v1244
      %v1270 = vpack.c.b16 %v1247, %v1246
      %v1271 = vpack.c.b16 %v1249, %v1248
      %v1272 = vpack.c.b16 %v1251, %v1250
      %v1273 = vpack.c.b16 %v1253, %v1252
      %v1274 = vpack.c.b16 %v1255, %v1254
      %v1275 = vpack.c.b16 %v1257, %v1256
      %v1276 = vpack.c.b16 %v1259, %v1258
      %v1277 = vpack.c.b16 %v1261, %v1260
      %v1310 = vunpack.c.l.b16 %v1182
      %v1311 = vunpack.c.l.b16 %v1183
      %v1312 = vunpack.c.l.b16 %v1184
      %v1313 = vunpack.c.l.b16 %v1185
      %v1314 = vunpack.c.l.b16 %v1186
      %v1315 = vunpack.c.l.b16 %v1187
      %v1316 = vunpack.c.l.b16 %v1188
      %v1317 = vunpack.c.l.b16 %v1189
      %v1318 = vunpack.c.l.b16 %v1190
      %v1319 = vunpack.c.l.b16 %v1191
      %v1320 = vunpack.c.l.b16 %v1192
      %v1321 = vunpack.c.l.b16 %v1193
      %v1322 = vunpack.c.l.b16 %v1194
      %v1323 = vunpack.c.l.b16 %v1195
      %v1324 = vunpack.c.l.b16 %v1196
      %v1325 = vunpack.c.l.b16 %v1197
      %v1326 = vpack.c.b16 %v1311, %v1310
      %v1327 = vpack.c.b16 %v1313, %v1312
      %v1328 = vpack.c.b16 %v1315, %v1314
      %v1329 = vpack.c.b16 %v1317, %v1316
      %v1330 = vpack.c.b16 %v1319, %v1318
      %v1331 = vpack.c.b16 %v1321, %v1320
      %v1332 = vpack.c.b16 %v1323, %v1322
      %v1333 = vpack.c.b16 %v1325, %v1324
      %1342 = vmatprep.subr.bf16.mxu0 0
      %1343 = vmatpush1.bf16.msra.mxu0 %v1326
      %1344 = vmatprep.subr.bf16.mxu0 0
      %1345 = vmatpush1.bf16.msra.mxu0 %v1327
      %1346 = vmatprep.subr.bf16.mxu0 0
      %1347 = vmatpush1.bf16.msra.mxu0 %v1328
      %1348 = vmatprep.subr.bf16.mxu0 0
      %1349 = vmatpush1.bf16.msra.mxu0 %v1329
      %1350 = vmatprep.subr.bf16.mxu0 0
      %1351 = vmatpush1.bf16.msra.mxu0 %v1330
      %1352 = vmatprep.subr.bf16.mxu0 0
      %1353 = vmatpush1.bf16.msra.mxu0 %v1331
      %1354 = vmatprep.subr.bf16.mxu0 0
      %1355 = vmatpush1.bf16.msra.mxu0 %v1332
      %1356 = vmatprep.subr.bf16.mxu0 0
      %1357 = vmatpush1.bf16.msra.mxu0 %v1333
      %1358 = vmatprep.subr.bf16.mxu0 0
      %1359 = vmatpush1.bf16.msra.mxu0 0
      %1360 = vmatprep.subr.bf16.mxu0 0
      %1361 = vmatpush1.bf16.msra.mxu0 0
      %1362 = vmatprep.subr.bf16.mxu0 0
      %1363 = vmatpush1.bf16.msra.mxu0 0
      %1364 = vmatprep.subr.bf16.mxu0 0
      %1365 = vmatpush1.bf16.msra.mxu0 0
      %1366 = vmatprep.subr.bf16.mxu0 0
      %1367 = vmatpush1.bf16.msra.mxu0 0
      %1368 = vmatprep.subr.bf16.mxu0 0
      %1369 = vmatpush1.bf16.msra.mxu0 0
      %1370 = vmatprep.subr.bf16.mxu0 0
      %1371 = vmatpush1.bf16.msra.mxu0 0
      %1372 = vmatprep.subr.bf16.mxu0 0
      %1373 = vmatpush1.bf16.msra.mxu0 0
      %1374 = vmatprep.mubr.bf16.mxu0 0
      %1375 = vmatmul.mubr.bf16.gmra.mrb[0].mxu0 %v1262
      %v1376 = vpop.f32.mrb[0].mxu0
      %v1377 = vadd.f32 0.0, %v1376
      %v1378 = vpop.f32.mrb[0].mxu0
      %v1379 = vpop.f32.mrb[0].mxu0
      %v1380 = vadd.f32 0.0, %v1379
      %v1381 = vpop.f32.mrb[0].mxu0
      %1382 = vmatprep.mubr.bf16.mxu0 0
      %1383 = vmatmul.mubr.bf16.gmra.mrb[0].mxu0 %v1263
      %v1384 = vpop.f32.mrb[0].mxu0
      %v1385 = vadd.f32 0.0, %v1384
      %v1386 = vpop.f32.mrb[0].mxu0
      %v1387 = vpop.f32.mrb[0].mxu0
      %v1388 = vadd.f32 0.0, %v1387
      %v1389 = vpop.f32.mrb[0].mxu0
      %1390 = vmatprep.mubr.bf16.mxu0 0
      %1391 = vmatmul.mubr.bf16.gmra.mrb[0].mxu0 %v1264
      %v1392 = vpop.f32.mrb[0].mxu0
      %v1393 = vadd.f32 0.0, %v1392
      %v1394 = vpop.f32.mrb[0].mxu0
      %v1395 = vpop.f32.mrb[0].mxu0
      %v1396 = vadd.f32 0.0, %v1395
      %v1397 = vpop.f32.mrb[0].mxu0
      %1398 = vmatprep.mubr.bf16.mxu0 0
      %1399 = vmatmul.mubr.bf16.gmra.mrb[0].mxu0 %v1265
      %v1400 = vpop.f32.mrb[0].mxu0
      %v1401 = vadd.f32 0.0, %v1400
      %v1402 = vpop.f32.mrb[0].mxu0
      %v1403 = vpop.f32.mrb[0].mxu0
      %v1404 = vadd.f32 0.0, %v1403
      %v1405 = vpop.f32.mrb[0].mxu0
      %1406 = vmatprep.mubr.bf16.mxu0 0
      %1407 = vmatmul.mubr.bf16.gmra.mrb[0].mxu0 %v1266
      %v1408 = vpop.f32.mrb[0].mxu0
      %v1409 = vadd.f32 0.0, %v1408
      %v1410 = vpop.f32.mrb[0].mxu0
      %v1411 = vpop.f32.mrb[0].mxu0
      %v1412 = vadd.f32 0.0, %v1411
      %v1413 = vpop.f32.mrb[0].mxu0
      %1414 = vmatprep.mubr.bf16.mxu0 0
      %1415 = vmatmul.mubr.bf16.gmra.mrb[0].mxu0 %v1267
      %v1416 = vpop.f32.mrb[0].mxu0
      %v1417 = vadd.f32 0.0, %v1416
      %v1418 = vpop.f32.mrb[0].mxu0
      %v1419 = vpop.f32.mrb[0].mxu0
      %v1420 = vadd.f32 0.0, %v1419
      %v1421 = vpop.f32.mrb[0].mxu0
      %1422 = vmatprep.mubr.bf16.mxu0 0
      %1423 = vmatmul.mubr.bf16.gmra.mrb[0].mxu0 %v1268
      %v1424 = vpop.f32.mrb[0].mxu0
      %v1425 = vadd.f32 0.0, %v1424
      %v1426 = vpop.f32.mrb[0].mxu0
      %v1427 = vpop.f32.mrb[0].mxu0
      %v1428 = vadd.f32 0.0, %v1427
      %v1429 = vpop.f32.mrb[0].mxu0
      %1430 = vmatprep.mubr.bf16.mxu0 0
      %1431 = vmatmul.mubr.bf16.gmra.mrb[0].mxu0 %v1269
      %v1432 = vpop.f32.mrb[0].mxu0
      %v1433 = vadd.f32 0.0, %v1432
      %v1434 = vpop.f32.mrb[0].mxu0
      %v1435 = vpop.f32.mrb[0].mxu0
      %v1436 = vadd.f32 0.0, %v1435
      %v1437 = vpop.f32.mrb[0].mxu0
      %1438 = vmatprep.mubr.bf16.mxu0 0
      %1439 = vmatmul.mubr.bf16.gmra.mrb[0].mxu0 %v1270
      %v1440 = vpop.f32.mrb[0].mxu0
      %v1441 = vadd.f32 0.0, %v1440
      %v1442 = vpop.f32.mrb[0].mxu0
      %v1443 = vpop.f32.mrb[0].mxu0
      %v1444 = vadd.f32 0.0, %v1443
      %v1445 = vpop.f32.mrb[0].mxu0
      %1446 = vmatprep.mubr.bf16.mxu0 0
      %1447 = vmatmul.mubr.bf16.gmra.mrb[0].mxu0 %v1271
      %v1448 = vpop.f32.mrb[0].mxu0
      %v1449 = vadd.f32 0.0, %v1448
      %v1450 = vpop.f32.mrb[0].mxu0
      %v1451 = vpop.f32.mrb[0].mxu0
      %v1452 = vadd.f32 0.0, %v1451
      %v1453 = vpop.f32.mrb[0].mxu0
      %1454 = vmatprep.mubr.bf16.mxu0 0
      %1455 = vmatmul.mubr.bf16.gmra.mrb[0].mxu0 %v1272
      %v1456 = vpop.f32.mrb[0].mxu0
      %v1457 = vadd.f32 0.0, %v1456
      %v1458 = vpop.f32.mrb[0].mxu0
      %v1459 = vpop.f32.mrb[0].mxu0
      %v1460 = vadd.f32 0.0, %v1459
      %v1461 = vpop.f32.mrb[0].mxu0
      %1462 = vmatprep.mubr.bf16.mxu0 0
      %1463 = vmatmul.mubr.bf16.gmra.mrb[0].mxu0 %v1273
      %v1464 = vpop.f32.mrb[0].mxu0
      %v1465 = vadd.f32 0.0, %v1464
      %v1466 = vpop.f32.mrb[0].mxu0
      %v1467 = vpop.f32.mrb[0].mxu0
      %v1468 = vadd.f32 0.0, %v1467
      %v1469 = vpop.f32.mrb[0].mxu0
      %1470 = vmatprep.mubr.bf16.mxu0 0
      %1471 = vmatmul.mubr.bf16.gmra.mrb[0].mxu0 %v1274
      %v1472 = vpop.f32.mrb[0].mxu0
      %v1473 = vadd.f32 0.0, %v1472
      %v1474 = vpop.f32.mrb[0].mxu0
      %v1475 = vpop.f32.mrb[0].mxu0
      %v1476 = vadd.f32 0.0, %v1475
      %v1477 = vpop.f32.mrb[0].mxu0
      %1478 = vmatprep.mubr.bf16.mxu0 0
      %1479 = vmatmul.mubr.bf16.gmra.mrb[0].mxu0 %v1275
      %v1480 = vpop.f32.mrb[0].mxu0
      %v1481 = vadd.f32 0.0, %v1480
      %v1482 = vpop.f32.mrb[0].mxu0
      %v1483 = vpop.f32.mrb[0].mxu0
      %v1484 = vadd.f32 0.0, %v1483
      %v1485 = vpop.f32.mrb[0].mxu0
      %1486 = vmatprep.mubr.bf16.mxu0 0
      %1487 = vmatmul.mubr.bf16.gmra.mrb[0].mxu0 %v1276
      %v1488 = vpop.f32.mrb[0].mxu0
      %v1489 = vadd.f32 0.0, %v1488
      %v1490 = vpop.f32.mrb[0].mxu0
      %v1491 = vpop.f32.mrb[0].mxu0
      %v1492 = vadd.f32 0.0, %v1491
      %v1493 = vpop.f32.mrb[0].mxu0
      %1494 = vmatprep.mubr.bf16.mxu0 0
      %1495 = vmatmul.mubr.bf16.gmra.mrb[0].mxu0 %v1277
      %v1496 = vpop.f32.mrb[0].mxu0
      %v1497 = vadd.f32 0.0, %v1496
      %v1498 = vpop.f32.mrb[0].mxu0
      %v1499 = vpop.f32.mrb[0].mxu0
      %v1500 = vadd.f32 0.0, %v1499
      %v1501 = vpop.f32.mrb[0].mxu0
      %1502 = vdwg.mxu0
      %v1503 = vadd.f32 %v1022, %v1377
      %v1504 = vadd.f32 %v1025, %v1380
      %v1505 = vadd.f32 %v1030, %v1385
      %v1506 = vadd.f32 %v1033, %v1388
      %v1507 = vadd.f32 %v1038, %v1393
      %v1508 = vadd.f32 %v1041, %v1396
      %v1509 = vadd.f32 %v1046, %v1401
      %v1510 = vadd.f32 %v1049, %v1404
      %v1511 = vadd.f32 %v1054, %v1409
      %v1512 = vadd.f32 %v1057, %v1412
      %v1513 = vadd.f32 %v1062, %v1417
      %v1514 = vadd.f32 %v1065, %v1420
      %v1515 = vadd.f32 %v1070, %v1425
      %v1516 = vadd.f32 %v1073, %v1428
      %v1517 = vadd.f32 %v1078, %v1433
      %v1518 = vadd.f32 %v1081, %v1436
      %v1519 = vadd.f32 %v1086, %v1441
      %v1520 = vadd.f32 %v1089, %v1444
      %v1521 = vadd.f32 %v1094, %v1449
      %v1522 = vadd.f32 %v1097, %v1452
      %v1523 = vadd.f32 %v1102, %v1457
      %v1524 = vadd.f32 %v1105, %v1460
      %v1525 = vadd.f32 %v1110, %v1465
      %v1526 = vadd.f32 %v1113, %v1468
      %v1527 = vadd.f32 %v1118, %v1473
      %v1528 = vadd.f32 %v1121, %v1476
      %v1529 = vadd.f32 %v1126, %v1481
      %v1530 = vadd.f32 %v1129, %v1484
      %v1531 = vadd.f32 %v1134, %v1489
      %v1532 = vadd.f32 %v1137, %v1492
      %v1533 = vadd.f32 %v1142, %v1497
      %v1534 = vadd.f32 %v1145, %v1500
      %s1535 = scalar_lea.vmem %s434, 8
      %v1536 = vld [vmem:[%s1535] sm:$0xf]
      %v1537 = vld [vmem:[%s1535 + $0x4] sm:$0xf]
      %v1538 = vld [vmem:[%s1535 + $0x8] sm:$0xf]
      %v1539 = vld [vmem:[%s1535 + $0xc] sm:$0xf]
      %v1540 = vld [vmem:[%s1535 + $0x10] sm:$0xf]
      %v1541 = vld [vmem:[%s1535 + $0x14] sm:$0xf]
      %v1542 = vld [vmem:[%s1535 + $0x18] sm:$0xf]
      %v1543 = vld [vmem:[%s1535 + $0x1c] sm:$0xf]
      %v1544 = vld [vmem:[%s1535 + $0x20] sm:$0xf]
      %v1545 = vld [vmem:[%s1535 + $0x24] sm:$0xf]
      %v1546 = vld [vmem:[%s1535 + $0x28] sm:$0xf]
      %v1547 = vld [vmem:[%s1535 + $0x2c] sm:$0xf]
      %v1548 = vld [vmem:[%s1535 + $0x30] sm:$0xf]
      %v1549 = vld [vmem:[%s1535 + $0x34] sm:$0xf]
      %v1550 = vld [vmem:[%s1535 + $0x38] sm:$0xf]
      %v1551 = vld [vmem:[%s1535 + $0x3c] sm:$0xf]
      %v1552 = vld [vmem:[%s1535 + $0x40] sm:$0xf]
      %v1553 = vld [vmem:[%s1535 + $0x44] sm:$0xf]
      %v1554 = vld [vmem:[%s1535 + $0x48] sm:$0xf]
      %v1555 = vld [vmem:[%s1535 + $0x4c] sm:$0xf]
      %v1556 = vld [vmem:[%s1535 + $0x50] sm:$0xf]
      %v1557 = vld [vmem:[%s1535 + $0x54] sm:$0xf]
      %v1558 = vld [vmem:[%s1535 + $0x58] sm:$0xf]
      %v1559 = vld [vmem:[%s1535 + $0x5c] sm:$0xf]
      %v1560 = vld [vmem:[%s1535 + $0x60] sm:$0xf]
      %v1561 = vld [vmem:[%s1535 + $0x64] sm:$0xf]
      %v1562 = vld [vmem:[%s1535 + $0x68] sm:$0xf]
      %v1563 = vld [vmem:[%s1535 + $0x6c] sm:$0xf]
      %v1564 = vld [vmem:[%s1535 + $0x70] sm:$0xf]
      %v1565 = vld [vmem:[%s1535 + $0x74] sm:$0xf]
      %v1566 = vld [vmem:[%s1535 + $0x78] sm:$0xf]
      %v1567 = vld [vmem:[%s1535 + $0x7c] sm:$0xf]
      %s1568 = scalar_lea.vmem %s1, 192
      %v1569 = vld [vmem:[%s1568] sm:$0xf]
      %v1570 = vld [vmem:[%s1568 + $0x4] sm:$0xf]
      %v1571 = vld [vmem:[%s1568 + $0x8] sm:$0xf]
      %v1572 = vld [vmem:[%s1568 + $0xc] sm:$0xf]
      %v1573 = vld [vmem:[%s1568 + $0x10] sm:$0xf]
      %v1574 = vld [vmem:[%s1568 + $0x14] sm:$0xf]
      %v1575 = vld [vmem:[%s1568 + $0x18] sm:$0xf]
      %v1576 = vld [vmem:[%s1568 + $0x1c] sm:$0xf]
      %v1577 = vld [vmem:[%s1568 + $0x20] sm:$0xf]
      %v1578 = vld [vmem:[%s1568 + $0x24] sm:$0xf]
      %v1579 = vld [vmem:[%s1568 + $0x28] sm:$0xf]
      %v1580 = vld [vmem:[%s1568 + $0x2c] sm:$0xf]
      %v1581 = vld [vmem:[%s1568 + $0x30] sm:$0xf]
      %v1582 = vld [vmem:[%s1568 + $0x34] sm:$0xf]
      %v1583 = vld [vmem:[%s1568 + $0x38] sm:$0xf]
      %v1584 = vld [vmem:[%s1568 + $0x3c] sm:$0xf]
      %v1617 = vunpack.c.l.b16 %v1536
      %v1618 = vunpack.c.l.b16 %v1537
      %v1619 = vunpack.c.l.b16 %v1538
      %v1620 = vunpack.c.l.b16 %v1539
      %v1621 = vunpack.c.l.b16 %v1540
      %v1622 = vunpack.c.l.b16 %v1541
      %v1623 = vunpack.c.l.b16 %v1542
      %v1624 = vunpack.c.l.b16 %v1543
      %v1625 = vunpack.c.l.b16 %v1544
      %v1626 = vunpack.c.l.b16 %v1545
      %v1627 = vunpack.c.l.b16 %v1546
      %v1628 = vunpack.c.l.b16 %v1547
      %v1629 = vunpack.c.l.b16 %v1548
      %v1630 = vunpack.c.l.b16 %v1549
      %v1631 = vunpack.c.l.b16 %v1550
      %v1632 = vunpack.c.l.b16 %v1551
      %v1633 = vunpack.c.l.b16 %v1552
      %v1634 = vunpack.c.l.b16 %v1553
      %v1635 = vunpack.c.l.b16 %v1554
      %v1636 = vunpack.c.l.b16 %v1555
      %v1637 = vunpack.c.l.b16 %v1556
      %v1638 = vunpack.c.l.b16 %v1557
      %v1639 = vunpack.c.l.b16 %v1558
      %v1640 = vunpack.c.l.b16 %v1559
      %v1641 = vunpack.c.l.b16 %v1560
      %v1642 = vunpack.c.l.b16 %v1561
      %v1643 = vunpack.c.l.b16 %v1562
      %v1644 = vunpack.c.l.b16 %v1563
      %v1645 = vunpack.c.l.b16 %v1564
      %v1646 = vunpack.c.l.b16 %v1565
      %v1647 = vunpack.c.l.b16 %v1566
      %v1648 = vunpack.c.l.b16 %v1567
      %v1649 = vpack.c.b16 %v1618, %v1617
      %v1650 = vpack.c.b16 %v1620, %v1619
      %v1651 = vpack.c.b16 %v1622, %v1621
      %v1652 = vpack.c.b16 %v1624, %v1623
      %v1653 = vpack.c.b16 %v1626, %v1625
      %v1654 = vpack.c.b16 %v1628, %v1627
      %v1655 = vpack.c.b16 %v1630, %v1629
      %v1656 = vpack.c.b16 %v1632, %v1631
      %v1657 = vpack.c.b16 %v1634, %v1633
      %v1658 = vpack.c.b16 %v1636, %v1635
      %v1659 = vpack.c.b16 %v1638, %v1637
      %v1660 = vpack.c.b16 %v1640, %v1639
      %v1661 = vpack.c.b16 %v1642, %v1641
      %v1662 = vpack.c.b16 %v1644, %v1643
      %v1663 = vpack.c.b16 %v1646, %v1645
      %v1664 = vpack.c.b16 %v1648, %v1647
      %v1697 = vunpack.c.l.b16 %v1569
      %v1698 = vunpack.c.l.b16 %v1570
      %v1699 = vunpack.c.l.b16 %v1571
      %v1700 = vunpack.c.l.b16 %v1572
      %v1701 = vunpack.c.l.b16 %v1573
      %v1702 = vunpack.c.l.b16 %v1574
      %v1703 = vunpack.c.l.b16 %v1575
      %v1704 = vunpack.c.l.b16 %v1576
      %v1705 = vunpack.c.l.b16 %v1577
      %v1706 = vunpack.c.l.b16 %v1578
      %v1707 = vunpack.c.l.b16 %v1579
      %v1708 = vunpack.c.l.b16 %v1580
      %v1709 = vunpack.c.l.b16 %v1581
      %v1710 = vunpack.c.l.b16 %v1582
      %v1711 = vunpack.c.l.b16 %v1583
      %v1712 = vunpack.c.l.b16 %v1584
      %v1713 = vpack.c.b16 %v1698, %v1697
      %v1714 = vpack.c.b16 %v1700, %v1699
      %v1715 = vpack.c.b16 %v1702, %v1701
      %v1716 = vpack.c.b16 %v1704, %v1703
      %v1717 = vpack.c.b16 %v1706, %v1705
      %v1718 = vpack.c.b16 %v1708, %v1707
      %v1719 = vpack.c.b16 %v1710, %v1709
      %v1720 = vpack.c.b16 %v1712, %v1711
      %1729 = vmatprep.subr.bf16.mxu0 0
      %1730 = vmatpush1.bf16.msra.mxu0 %v1713
      %1731 = vmatprep.subr.bf16.mxu0 0
      %1732 = vmatpush1.bf16.msra.mxu0 %v1714
      %1733 = vmatprep.subr.bf16.mxu0 0
      %1734 = vmatpush1.bf16.msra.mxu0 %v1715
      %1735 = vmatprep.subr.bf16.mxu0 0
      %1736 = vmatpush1.bf16.msra.mxu0 %v1716
      %1737 = vmatprep.subr.bf16.mxu0 0
      %1738 = vmatpush1.bf16.msra.mxu0 %v1717
      %1739 = vmatprep.subr.bf16.mxu0 0
      %1740 = vmatpush1.bf16.msra.mxu0 %v1718
      %1741 = vmatprep.subr.bf16.mxu0 0
      %1742 = vmatpush1.bf16.msra.mxu0 %v1719
      %1743 = vmatprep.subr.bf16.mxu0 0
      %1744 = vmatpush1.bf16.msra.mxu0 %v1720
      %1745 = vmatprep.subr.bf16.mxu0 0
      %1746 = vmatpush1.bf16.msra.mxu0 0
      %1747 = vmatprep.subr.bf16.mxu0 0
      %1748 = vmatpush1.bf16.msra.mxu0 0
      %1749 = vmatprep.subr.bf16.mxu0 0
      %1750 = vmatpush1.bf16.msra.mxu0 0
      %1751 = vmatprep.subr.bf16.mxu0 0
      %1752 = vmatpush1.bf16.msra.mxu0 0
      %1753 = vmatprep.subr.bf16.mxu0 0
      %1754 = vmatpush1.bf16.msra.mxu0 0
      %1755 = vmatprep.subr.bf16.mxu0 0
      %1756 = vmatpush1.bf16.msra.mxu0 0
      %1757 = vmatprep.subr.bf16.mxu0 0
      %1758 = vmatpush1.bf16.msra.mxu0 0
      %1759 = vmatprep.subr.bf16.mxu0 0
      %1760 = vmatpush1.bf16.msra.mxu0 0
      %1761 = vmatprep.mubr.bf16.mxu0 0
      %1762 = vmatmul.mubr.bf16.gmra.mrb[0].mxu0 %v1649
      %v1763 = vpop.f32.mrb[0].mxu0
      %v1764 = vadd.f32 0.0, %v1763
      %v1765 = vpop.f32.mrb[0].mxu0
      %v1766 = vpop.f32.mrb[0].mxu0
      %v1767 = vadd.f32 0.0, %v1766
      %v1768 = vpop.f32.mrb[0].mxu0
      %1769 = vmatprep.mubr.bf16.mxu0 0
      %1770 = vmatmul.mubr.bf16.gmra.mrb[0].mxu0 %v1650
      %v1771 = vpop.f32.mrb[0].mxu0
      %v1772 = vadd.f32 0.0, %v1771
      %v1773 = vpop.f32.mrb[0].mxu0
      %v1774 = vpop.f32.mrb[0].mxu0
      %v1775 = vadd.f32 0.0, %v1774
      %v1776 = vpop.f32.mrb[0].mxu0
      %1777 = vmatprep.mubr.bf16.mxu0 0
      %1778 = vmatmul.mubr.bf16.gmra.mrb[0].mxu0 %v1651
      %v1779 = vpop.f32.mrb[0].mxu0
      %v1780 = vadd.f32 0.0, %v1779
      %v1781 = vpop.f32.mrb[0].mxu0
      %v1782 = vpop.f32.mrb[0].mxu0
      %v1783 = vadd.f32 0.0, %v1782
      %v1784 = vpop.f32.mrb[0].mxu0
      %1785 = vmatprep.mubr.bf16.mxu0 0
      %1786 = vmatmul.mubr.bf16.gmra.mrb[0].mxu0 %v1652
      %v1787 = vpop.f32.mrb[0].mxu0
      %v1788 = vadd.f32 0.0, %v1787
      %v1789 = vpop.f32.mrb[0].mxu0
      %v1790 = vpop.f32.mrb[0].mxu0
      %v1791 = vadd.f32 0.0, %v1790
      %v1792 = vpop.f32.mrb[0].mxu0
      %1793 = vmatprep.mubr.bf16.mxu0 0
      %1794 = vmatmul.mubr.bf16.gmra.mrb[0].mxu0 %v1653
      %v1795 = vpop.f32.mrb[0].mxu0
      %v1796 = vadd.f32 0.0, %v1795
      %v1797 = vpop.f32.mrb[0].mxu0
      %v1798 = vpop.f32.mrb[0].mxu0
      %v1799 = vadd.f32 0.0, %v1798
      %v1800 = vpop.f32.mrb[0].mxu0
      %1801 = vmatprep.mubr.bf16.mxu0 0
      %1802 = vmatmul.mubr.bf16.gmra.mrb[0].mxu0 %v1654
      %v1803 = vpop.f32.mrb[0].mxu0
      %v1804 = vadd.f32 0.0, %v1803
      %v1805 = vpop.f32.mrb[0].mxu0
      %v1806 = vpop.f32.mrb[0].mxu0
      %v1807 = vadd.f32 0.0, %v1806
      %v1808 = vpop.f32.mrb[0].mxu0
      %1809 = vmatprep.mubr.bf16.mxu0 0
      %1810 = vmatmul.mubr.bf16.gmra.mrb[0].mxu0 %v1655
      %v1811 = vpop.f32.mrb[0].mxu0
      %v1812 = vadd.f32 0.0, %v1811
      %v1813 = vpop.f32.mrb[0].mxu0
      %v1814 = vpop.f32.mrb[0].mxu0
      %v1815 = vadd.f32 0.0, %v1814
      %v1816 = vpop.f32.mrb[0].mxu0
      %1817 = vmatprep.mubr.bf16.mxu0 0
      %1818 = vmatmul.mubr.bf16.gmra.mrb[0].mxu0 %v1656
      %v1819 = vpop.f32.mrb[0].mxu0
      %v1820 = vadd.f32 0.0, %v1819
      %v1821 = vpop.f32.mrb[0].mxu0
      %v1822 = vpop.f32.mrb[0].mxu0
      %v1823 = vadd.f32 0.0, %v1822
      %v1824 = vpop.f32.mrb[0].mxu0
      %1825 = vmatprep.mubr.bf16.mxu0 0
      %1826 = vmatmul.mubr.bf16.gmra.mrb[0].mxu0 %v1657
      %v1827 = vpop.f32.mrb[0].mxu0
      %v1828 = vadd.f32 0.0, %v1827
      %v1829 = vpop.f32.mrb[0].mxu0
      %v1830 = vpop.f32.mrb[0].mxu0
      %v1831 = vadd.f32 0.0, %v1830
      %v1832 = vpop.f32.mrb[0].mxu0
      %1833 = vmatprep.mubr.bf16.mxu0 0
      %1834 = vmatmul.mubr.bf16.gmra.mrb[0].mxu0 %v1658
      %v1835 = vpop.f32.mrb[0].mxu0
      %v1836 = vadd.f32 0.0, %v1835
      %v1837 = vpop.f32.mrb[0].mxu0
      %v1838 = vpop.f32.mrb[0].mxu0
      %v1839 = vadd.f32 0.0, %v1838
      %v1840 = vpop.f32.mrb[0].mxu0
      %1841 = vmatprep.mubr.bf16.mxu0 0
      %1842 = vmatmul.mubr.bf16.gmra.mrb[0].mxu0 %v1659
      %v1843 = vpop.f32.mrb[0].mxu0
      %v1844 = vadd.f32 0.0, %v1843
      %v1845 = vpop.f32.mrb[0].mxu0
      %v1846 = vpop.f32.mrb[0].mxu0
      %v1847 = vadd.f32 0.0, %v1846
      %v1848 = vpop.f32.mrb[0].mxu0
      %1849 = vmatprep.mubr.bf16.mxu0 0
      %1850 = vmatmul.mubr.bf16.gmra.mrb[0].mxu0 %v1660
      %v1851 = vpop.f32.mrb[0].mxu0
      %v1852 = vadd.f32 0.0, %v1851
      %v1853 = vpop.f32.mrb[0].mxu0
      %v1854 = vpop.f32.mrb[0].mxu0
      %v1855 = vadd.f32 0.0, %v1854
      %v1856 = vpop.f32.mrb[0].mxu0
      %1857 = vmatprep.mubr.bf16.mxu0 0
      %1858 = vmatmul.mubr.bf16.gmra.mrb[0].mxu0 %v1661
      %v1859 = vpop.f32.mrb[0].mxu0
      %v1860 = vadd.f32 0.0, %v1859
      %v1861 = vpop.f32.mrb[0].mxu0
      %v1862 = vpop.f32.mrb[0].mxu0
      %v1863 = vadd.f32 0.0, %v1862
      %v1864 = vpop.f32.mrb[0].mxu0
      %1865 = vmatprep.mubr.bf16.mxu0 0
      %1866 = vmatmul.mubr.bf16.gmra.mrb[0].mxu0 %v1662
      %v1867 = vpop.f32.mrb[0].mxu0
      %v1868 = vadd.f32 0.0, %v1867
      %v1869 = vpop.f32.mrb[0].mxu0
      %v1870 = vpop.f32.mrb[0].mxu0
      %v1871 = vadd.f32 0.0, %v1870
      %v1872 = vpop.f32.mrb[0].mxu0
      %1873 = vmatprep.mubr.bf16.mxu0 0
      %1874 = vmatmul.mubr.bf16.gmra.mrb[0].mxu0 %v1663
      %v1875 = vpop.f32.mrb[0].mxu0
      %v1876 = vadd.f32 0.0, %v1875
      %v1877 = vpop.f32.mrb[0].mxu0
      %v1878 = vpop.f32.mrb[0].mxu0
      %v1879 = vadd.f32 0.0, %v1878
      %v1880 = vpop.f32.mrb[0].mxu0
      %1881 = vmatprep.mubr.bf16.mxu0 0
      %1882 = vmatmul.mubr.bf16.gmra.mrb[0].mxu0 %v1664
      %v1883 = vpop.f32.mrb[0].mxu0
      %v1884 = vadd.f32 0.0, %v1883
      %v1885 = vpop.f32.mrb[0].mxu0
      %v1886 = vpop.f32.mrb[0].mxu0
      %v1887 = vadd.f32 0.0, %v1886
      %v1888 = vpop.f32.mrb[0].mxu0
      %1889 = vdwg.mxu0
      %v1890 = vadd.f32 %v1503, %v1764
      %v1891 = vadd.f32 %v1504, %v1767
      %v1892 = vadd.f32 %v1505, %v1772
      %v1893 = vadd.f32 %v1506, %v1775
      %v1894 = vadd.f32 %v1507, %v1780
      %v1895 = vadd.f32 %v1508, %v1783
      %v1896 = vadd.f32 %v1509, %v1788
      %v1897 = vadd.f32 %v1510, %v1791
      %v1898 = vadd.f32 %v1511, %v1796
      %v1899 = vadd.f32 %v1512, %v1799
      %v1900 = vadd.f32 %v1513, %v1804
      %v1901 = vadd.f32 %v1514, %v1807
      %v1902 = vadd.f32 %v1515, %v1812
      %v1903 = vadd.f32 %v1516, %v1815
      %v1904 = vadd.f32 %v1517, %v1820
      %v1905 = vadd.f32 %v1518, %v1823
      %v1906 = vadd.f32 %v1519, %v1828
      %v1907 = vadd.f32 %v1520, %v1831
      %v1908 = vadd.f32 %v1521, %v1836
      %v1909 = vadd.f32 %v1522, %v1839
      %v1910 = vadd.f32 %v1523, %v1844
      %v1911 = vadd.f32 %v1524, %v1847
      %v1912 = vadd.f32 %v1525, %v1852
      %v1913 = vadd.f32 %v1526, %v1855
      %v1914 = vadd.f32 %v1527, %v1860
      %v1915 = vadd.f32 %v1528, %v1863
      %v1916 = vadd.f32 %v1529, %v1868
      %v1917 = vadd.f32 %v1530, %v1871
      %v1918 = vadd.f32 %v1531, %v1876
      %v1919 = vadd.f32 %v1532, %v1879
      %v1920 = vadd.f32 %v1533, %v1884
      %v1921 = vadd.f32 %v1534, %v1887
      %s1922 = scalar_lea.vmem %s434, 152
      %v1923 = vld [vmem:[%s1922] sm:$0xf]
      %v1924 = vld [vmem:[%s1922 + $0x4] sm:$0xf]
      %v1925 = vld [vmem:[%s1922 + $0x8] sm:$0xf]
      %v1926 = vld [vmem:[%s1922 + $0xc] sm:$0xf]
      %v1927 = vld [vmem:[%s1922 + $0x10] sm:$0xf]
      %v1928 = vld [vmem:[%s1922 + $0x14] sm:$0xf]
      %v1929 = vld [vmem:[%s1922 + $0x18] sm:$0xf]
      %v1930 = vld [vmem:[%s1922 + $0x1c] sm:$0xf]
      %v1931 = vld [vmem:[%s1922 + $0x20] sm:$0xf]
      %v1932 = vld [vmem:[%s1922 + $0x24] sm:$0xf]
      %v1933 = vld [vmem:[%s1922 + $0x28] sm:$0xf]
      %v1934 = vld [vmem:[%s1922 + $0x2c] sm:$0xf]
      %v1935 = vld [vmem:[%s1922 + $0x30] sm:$0xf]
      %v1936 = vld [vmem:[%s1922 + $0x34] sm:$0xf]
      %v1937 = vld [vmem:[%s1922 + $0x38] sm:$0xf]
      %v1938 = vld [vmem:[%s1922 + $0x3c] sm:$0xf]
      %v1939 = vld [vmem:[%s1922 + $0x40] sm:$0xf]
      %v1940 = vld [vmem:[%s1922 + $0x44] sm:$0xf]
      %v1941 = vld [vmem:[%s1922 + $0x48] sm:$0xf]
      %v1942 = vld [vmem:[%s1922 + $0x4c] sm:$0xf]
      %v1943 = vld [vmem:[%s1922 + $0x50] sm:$0xf]
      %v1944 = vld [vmem:[%s1922 + $0x54] sm:$0xf]
      %v1945 = vld [vmem:[%s1922 + $0x58] sm:$0xf]
      %v1946 = vld [vmem:[%s1922 + $0x5c] sm:$0xf]
      %v1947 = vld [vmem:[%s1922 + $0x60] sm:$0xf]
      %v1948 = vld [vmem:[%s1922 + $0x64] sm:$0xf]
      %v1949 = vld [vmem:[%s1922 + $0x68] sm:$0xf]
      %v1950 = vld [vmem:[%s1922 + $0x6c] sm:$0xf]
      %v1951 = vld [vmem:[%s1922 + $0x70] sm:$0xf]
      %v1952 = vld [vmem:[%s1922 + $0x74] sm:$0xf]
      %v1953 = vld [vmem:[%s1922 + $0x78] sm:$0xf]
      %v1954 = vld [vmem:[%s1922 + $0x7c] sm:$0xf]
      %s1955 = scalar_lea.vmem %s1, 256
      %v1956 = vld [vmem:[%s1955] sm:$0xf]
      %v1957 = vld [vmem:[%s1955 + $0x4] sm:$0xf]
      %v1958 = vld [vmem:[%s1955 + $0x8] sm:$0xf]
      %v1959 = vld [vmem:[%s1955 + $0xc] sm:$0xf]
      %v1960 = vld [vmem:[%s1955 + $0x10] sm:$0xf]
      %v1961 = vld [vmem:[%s1955 + $0x14] sm:$0xf]
      %v1962 = vld [vmem:[%s1955 + $0x18] sm:$0xf]
      %v1963 = vld [vmem:[%s1955 + $0x1c] sm:$0xf]
      %v1964 = vld [vmem:[%s1955 + $0x20] sm:$0xf]
      %v1965 = vld [vmem:[%s1955 + $0x24] sm:$0xf]
      %v1966 = vld [vmem:[%s1955 + $0x28] sm:$0xf]
      %v1967 = vld [vmem:[%s1955 + $0x2c] sm:$0xf]
      %v1968 = vld [vmem:[%s1955 + $0x30] sm:$0xf]
      %v1969 = vld [vmem:[%s1955 + $0x34] sm:$0xf]
      %v1970 = vld [vmem:[%s1955 + $0x38] sm:$0xf]
      %v1971 = vld [vmem:[%s1955 + $0x3c] sm:$0xf]
      %v2004 = vunpack.c.l.b16 %v1923
      %v2005 = vunpack.c.l.b16 %v1924
      %v2006 = vunpack.c.l.b16 %v1925
      %v2007 = vunpack.c.l.b16 %v1926
      %v2008 = vunpack.c.l.b16 %v1927
      %v2009 = vunpack.c.l.b16 %v1928
      %v2010 = vunpack.c.l.b16 %v1929
      %v2011 = vunpack.c.l.b16 %v1930
      %v2012 = vunpack.c.l.b16 %v1931
      %v2013 = vunpack.c.l.b16 %v1932
      %v2014 = vunpack.c.l.b16 %v1933
      %v2015 = vunpack.c.l.b16 %v1934
      %v2016 = vunpack.c.l.b16 %v1935
      %v2017 = vunpack.c.l.b16 %v1936
      %v2018 = vunpack.c.l.b16 %v1937
      %v2019 = vunpack.c.l.b16 %v1938
      %v2020 = vunpack.c.l.b16 %v1939
      %v2021 = vunpack.c.l.b16 %v1940
      %v2022 = vunpack.c.l.b16 %v1941
      %v2023 = vunpack.c.l.b16 %v1942
      %v2024 = vunpack.c.l.b16 %v1943
      %v2025 = vunpack.c.l.b16 %v1944
      %v2026 = vunpack.c.l.b16 %v1945
      %v2027 = vunpack.c.l.b16 %v1946
      %v2028 = vunpack.c.l.b16 %v1947
      %v2029 = vunpack.c.l.b16 %v1948
      %v2030 = vunpack.c.l.b16 %v1949
      %v2031 = vunpack.c.l.b16 %v1950
      %v2032 = vunpack.c.l.b16 %v1951
      %v2033 = vunpack.c.l.b16 %v1952
      %v2034 = vunpack.c.l.b16 %v1953
      %v2035 = vunpack.c.l.b16 %v1954
      %v2036 = vpack.c.b16 %v2005, %v2004
      %v2037 = vpack.c.b16 %v2007, %v2006
      %v2038 = vpack.c.b16 %v2009, %v2008
      %v2039 = vpack.c.b16 %v2011, %v2010
      %v2040 = vpack.c.b16 %v2013, %v2012
      %v2041 = vpack.c.b16 %v2015, %v2014
      %v2042 = vpack.c.b16 %v2017, %v2016
      %v2043 = vpack.c.b16 %v2019, %v2018
      %v2044 = vpack.c.b16 %v2021, %v2020
      %v2045 = vpack.c.b16 %v2023, %v2022
      %v2046 = vpack.c.b16 %v2025, %v2024
      %v2047 = vpack.c.b16 %v2027, %v2026
      %v2048 = vpack.c.b16 %v2029, %v2028
      %v2049 = vpack.c.b16 %v2031, %v2030
      %v2050 = vpack.c.b16 %v2033, %v2032
      %v2051 = vpack.c.b16 %v2035, %v2034
      %v2084 = vunpack.c.l.b16 %v1956
      %v2085 = vunpack.c.l.b16 %v1957
      %v2086 = vunpack.c.l.b16 %v1958
      %v2087 = vunpack.c.l.b16 %v1959
      %v2088 = vunpack.c.l.b16 %v1960
      %v2089 = vunpack.c.l.b16 %v1961
      %v2090 = vunpack.c.l.b16 %v1962
      %v2091 = vunpack.c.l.b16 %v1963
      %v2092 = vunpack.c.l.b16 %v1964
      %v2093 = vunpack.c.l.b16 %v1965
      %v2094 = vunpack.c.l.b16 %v1966
      %v2095 = vunpack.c.l.b16 %v1967
      %v2096 = vunpack.c.l.b16 %v1968
      %v2097 = vunpack.c.l.b16 %v1969
      %v2098 = vunpack.c.l.b16 %v1970
      %v2099 = vunpack.c.l.b16 %v1971
      %v2100 = vpack.c.b16 %v2085, %v2084
      %v2101 = vpack.c.b16 %v2087, %v2086
      %v2102 = vpack.c.b16 %v2089, %v2088
      %v2103 = vpack.c.b16 %v2091, %v2090
      %v2104 = vpack.c.b16 %v2093, %v2092
      %v2105 = vpack.c.b16 %v2095, %v2094
      %v2106 = vpack.c.b16 %v2097, %v2096
      %v2107 = vpack.c.b16 %v2099, %v2098
      %2116 = vmatprep.subr.bf16.mxu0 0
      %2117 = vmatpush1.bf16.msra.mxu0 %v2100
      %2118 = vmatprep.subr.bf16.mxu0 0
      %2119 = vmatpush1.bf16.msra.mxu0 %v2101
      %2120 = vmatprep.subr.bf16.mxu0 0
      %2121 = vmatpush1.bf16.msra.mxu0 %v2102
      %2122 = vmatprep.subr.bf16.mxu0 0
      %2123 = vmatpush1.bf16.msra.mxu0 %v2103
      %2124 = vmatprep.subr.bf16.mxu0 0
      %2125 = vmatpush1.bf16.msra.mxu0 %v2104
      %2126 = vmatprep.subr.bf16.mxu0 0
      %2127 = vmatpush1.bf16.msra.mxu0 %v2105
      %2128 = vmatprep.subr.bf16.mxu0 0
      %2129 = vmatpush1.bf16.msra.mxu0 %v2106
      %2130 = vmatprep.subr.bf16.mxu0 0
      %2131 = vmatpush1.bf16.msra.mxu0 %v2107
      %2132 = vmatprep.subr.bf16.mxu0 0
      %2133 = vmatpush1.bf16.msra.mxu0 0
      %2134 = vmatprep.subr.bf16.mxu0 0
      %2135 = vmatpush1.bf16.msra.mxu0 0
      %2136 = vmatprep.subr.bf16.mxu0 0
      %2137 = vmatpush1.bf16.msra.mxu0 0
      %2138 = vmatprep.subr.bf16.mxu0 0
      %2139 = vmatpush1.bf16.msra.mxu0 0
      %2140 = vmatprep.subr.bf16.mxu0 0
      %2141 = vmatpush1.bf16.msra.mxu0 0
      %2142 = vmatprep.subr.bf16.mxu0 0
      %2143 = vmatpush1.bf16.msra.mxu0 0
      %2144 = vmatprep.subr.bf16.mxu0 0
      %2145 = vmatpush1.bf16.msra.mxu0 0
      %2146 = vmatprep.subr.bf16.mxu0 0
      %2147 = vmatpush1.bf16.msra.mxu0 0
      %2148 = vmatprep.mubr.bf16.mxu0 0
      %2149 = vmatmul.mubr.bf16.gmra.mrb[0].mxu0 %v2036
      %v2150 = vpop.f32.mrb[0].mxu0
      %v2151 = vadd.f32 0.0, %v2150
      %v2152 = vpop.f32.mrb[0].mxu0
      %v2153 = vpop.f32.mrb[0].mxu0
      %v2154 = vadd.f32 0.0, %v2153
      %v2155 = vpop.f32.mrb[0].mxu0
      %2156 = vmatprep.mubr.bf16.mxu0 0
      %2157 = vmatmul.mubr.bf16.gmra.mrb[0].mxu0 %v2037
      %v2158 = vpop.f32.mrb[0].mxu0
      %v2159 = vadd.f32 0.0, %v2158
      %v2160 = vpop.f32.mrb[0].mxu0
      %v2161 = vpop.f32.mrb[0].mxu0
      %v2162 = vadd.f32 0.0, %v2161
      %v2163 = vpop.f32.mrb[0].mxu0
      %2164 = vmatprep.mubr.bf16.mxu0 0
      %2165 = vmatmul.mubr.bf16.gmra.mrb[0].mxu0 %v2038
      %v2166 = vpop.f32.mrb[0].mxu0
      %v2167 = vadd.f32 0.0, %v2166
      %v2168 = vpop.f32.mrb[0].mxu0
      %v2169 = vpop.f32.mrb[0].mxu0
      %v2170 = vadd.f32 0.0, %v2169
      %v2171 = vpop.f32.mrb[0].mxu0
      %2172 = vmatprep.mubr.bf16.mxu0 0
      %2173 = vmatmul.mubr.bf16.gmra.mrb[0].mxu0 %v2039
      %v2174 = vpop.f32.mrb[0].mxu0
      %v2175 = vadd.f32 0.0, %v2174
      %v2176 = vpop.f32.mrb[0].mxu0
      %v2177 = vpop.f32.mrb[0].mxu0
      %v2178 = vadd.f32 0.0, %v2177
      %v2179 = vpop.f32.mrb[0].mxu0
      %2180 = vmatprep.mubr.bf16.mxu0 0
      %2181 = vmatmul.mubr.bf16.gmra.mrb[0].mxu0 %v2040
      %v2182 = vpop.f32.mrb[0].mxu0
      %v2183 = vadd.f32 0.0, %v2182
      %v2184 = vpop.f32.mrb[0].mxu0
      %v2185 = vpop.f32.mrb[0].mxu0
      %v2186 = vadd.f32 0.0, %v2185
      %v2187 = vpop.f32.mrb[0].mxu0
      %2188 = vmatprep.mubr.bf16.mxu0 0
      %2189 = vmatmul.mubr.bf16.gmra.mrb[0].mxu0 %v2041
      %v2190 = vpop.f32.mrb[0].mxu0
      %v2191 = vadd.f32 0.0, %v2190
      %v2192 = vpop.f32.mrb[0].mxu0
      %v2193 = vpop.f32.mrb[0].mxu0
      %v2194 = vadd.f32 0.0, %v2193
      %v2195 = vpop.f32.mrb[0].mxu0
      %2196 = vmatprep.mubr.bf16.mxu0 0
      %2197 = vmatmul.mubr.bf16.gmra.mrb[0].mxu0 %v2042
      %v2198 = vpop.f32.mrb[0].mxu0
      %v2199 = vadd.f32 0.0, %v2198
      %v2200 = vpop.f32.mrb[0].mxu0
      %v2201 = vpop.f32.mrb[0].mxu0
      %v2202 = vadd.f32 0.0, %v2201
      %v2203 = vpop.f32.mrb[0].mxu0
      %2204 = vmatprep.mubr.bf16.mxu0 0
      %2205 = vmatmul.mubr.bf16.gmra.mrb[0].mxu0 %v2043
      %v2206 = vpop.f32.mrb[0].mxu0
      %v2207 = vadd.f32 0.0, %v2206
      %v2208 = vpop.f32.mrb[0].mxu0
      %v2209 = vpop.f32.mrb[0].mxu0
      %v2210 = vadd.f32 0.0, %v2209
      %v2211 = vpop.f32.mrb[0].mxu0
      %2212 = vmatprep.mubr.bf16.mxu0 0
      %2213 = vmatmul.mubr.bf16.gmra.mrb[0].mxu0 %v2044
      %v2214 = vpop.f32.mrb[0].mxu0
      %v2215 = vadd.f32 0.0, %v2214
      %v2216 = vpop.f32.mrb[0].mxu0
      %v2217 = vpop.f32.mrb[0].mxu0
      %v2218 = vadd.f32 0.0, %v2217
      %v2219 = vpop.f32.mrb[0].mxu0
      %2220 = vmatprep.mubr.bf16.mxu0 0
      %2221 = vmatmul.mubr.bf16.gmra.mrb[0].mxu0 %v2045
      %v2222 = vpop.f32.mrb[0].mxu0
      %v2223 = vadd.f32 0.0, %v2222
      %v2224 = vpop.f32.mrb[0].mxu0
      %v2225 = vpop.f32.mrb[0].mxu0
      %v2226 = vadd.f32 0.0, %v2225
      %v2227 = vpop.f32.mrb[0].mxu0
      %2228 = vmatprep.mubr.bf16.mxu0 0
      %2229 = vmatmul.mubr.bf16.gmra.mrb[0].mxu0 %v2046
      %v2230 = vpop.f32.mrb[0].mxu0
      %v2231 = vadd.f32 0.0, %v2230
      %v2232 = vpop.f32.mrb[0].mxu0
      %v2233 = vpop.f32.mrb[0].mxu0
      %v2234 = vadd.f32 0.0, %v2233
      %v2235 = vpop.f32.mrb[0].mxu0
      %2236 = vmatprep.mubr.bf16.mxu0 0
      %2237 = vmatmul.mubr.bf16.gmra.mrb[0].mxu0 %v2047
      %v2238 = vpop.f32.mrb[0].mxu0
      %v2239 = vadd.f32 0.0, %v2238
      %v2240 = vpop.f32.mrb[0].mxu0
      %v2241 = vpop.f32.mrb[0].mxu0
      %v2242 = vadd.f32 0.0, %v2241
      %v2243 = vpop.f32.mrb[0].mxu0
      %2244 = vmatprep.mubr.bf16.mxu0 0
      %2245 = vmatmul.mubr.bf16.gmra.mrb[0].mxu0 %v2048
      %v2246 = vpop.f32.mrb[0].mxu0
      %v2247 = vadd.f32 0.0, %v2246
      %v2248 = vpop.f32.mrb[0].mxu0
      %v2249 = vpop.f32.mrb[0].mxu0
      %v2250 = vadd.f32 0.0, %v2249
      %v2251 = vpop.f32.mrb[0].mxu0
      %2252 = vmatprep.mubr.bf16.mxu0 0
      %2253 = vmatmul.mubr.bf16.gmra.mrb[0].mxu0 %v2049
      %v2254 = vpop.f32.mrb[0].mxu0
      %v2255 = vadd.f32 0.0, %v2254
      %v2256 = vpop.f32.mrb[0].mxu0
      %v2257 = vpop.f32.mrb[0].mxu0
      %v2258 = vadd.f32 0.0, %v2257
      %v2259 = vpop.f32.mrb[0].mxu0
      %2260 = vmatprep.mubr.bf16.mxu0 0
      %2261 = vmatmul.mubr.bf16.gmra.mrb[0].mxu0 %v2050
      %v2262 = vpop.f32.mrb[0].mxu0
      %v2263 = vadd.f32 0.0, %v2262
      %v2264 = vpop.f32.mrb[0].mxu0
      %v2265 = vpop.f32.mrb[0].mxu0
      %v2266 = vadd.f32 0.0, %v2265
      %v2267 = vpop.f32.mrb[0].mxu0
      %2268 = vmatprep.mubr.bf16.mxu0 0
      %2269 = vmatmul.mubr.bf16.gmra.mrb[0].mxu0 %v2051
      %v2270 = vpop.f32.mrb[0].mxu0
      %v2271 = vadd.f32 0.0, %v2270
      %v2272 = vpop.f32.mrb[0].mxu0
      %v2273 = vpop.f32.mrb[0].mxu0
      %v2274 = vadd.f32 0.0, %v2273
      %v2275 = vpop.f32.mrb[0].mxu0
      %2276 = vdwg.mxu0
      %v2277 = vadd.f32 %v1890, %v2151
      %v2278 = vadd.f32 %v1891, %v2154
      %v2279 = vadd.f32 %v1892, %v2159
      %v2280 = vadd.f32 %v1893, %v2162
      %v2281 = vadd.f32 %v1894, %v2167
      %v2282 = vadd.f32 %v1895, %v2170
      %v2283 = vadd.f32 %v1896, %v2175
      %v2284 = vadd.f32 %v1897, %v2178
      %v2285 = vadd.f32 %v1898, %v2183
      %v2286 = vadd.f32 %v1899, %v2186
      %v2287 = vadd.f32 %v1900, %v2191
      %v2288 = vadd.f32 %v1901, %v2194
      %v2289 = vadd.f32 %v1902, %v2199
      %v2290 = vadd.f32 %v1903, %v2202
      %v2291 = vadd.f32 %v1904, %v2207
      %v2292 = vadd.f32 %v1905, %v2210
      %v2293 = vadd.f32 %v1906, %v2215
      %v2294 = vadd.f32 %v1907, %v2218
      %v2295 = vadd.f32 %v1908, %v2223
      %v2296 = vadd.f32 %v1909, %v2226
      %v2297 = vadd.f32 %v1910, %v2231
      %v2298 = vadd.f32 %v1911, %v2234
      %v2299 = vadd.f32 %v1912, %v2239
      %v2300 = vadd.f32 %v1913, %v2242
      %v2301 = vadd.f32 %v1914, %v2247
      %v2302 = vadd.f32 %v1915, %v2250
      %v2303 = vadd.f32 %v1916, %v2255
      %v2304 = vadd.f32 %v1917, %v2258
      %v2305 = vadd.f32 %v1918, %v2263
      %v2306 = vadd.f32 %v1919, %v2266
      %v2307 = vadd.f32 %v1920, %v2271
      %v2308 = vadd.f32 %v1921, %v2274
      %s2309 = scalar_lea.vmem %s434, 296
      %v2310 = vld [vmem:[%s2309] sm:$0xf]
      %v2311 = vld [vmem:[%s2309 + $0x4] sm:$0xf]
      %v2312 = vld [vmem:[%s2309 + $0x8] sm:$0xf]
      %v2313 = vld [vmem:[%s2309 + $0xc] sm:$0xf]
      %v2314 = vld [vmem:[%s2309 + $0x10] sm:$0xf]
      %v2315 = vld [vmem:[%s2309 + $0x14] sm:$0xf]
      %v2316 = vld [vmem:[%s2309 + $0x18] sm:$0xf]
      %v2317 = vld [vmem:[%s2309 + $0x1c] sm:$0xf]
      %v2318 = vld [vmem:[%s2309 + $0x20] sm:$0xf]
      %v2319 = vld [vmem:[%s2309 + $0x24] sm:$0xf]
      %v2320 = vld [vmem:[%s2309 + $0x28] sm:$0xf]
      %v2321 = vld [vmem:[%s2309 + $0x2c] sm:$0xf]
      %v2322 = vld [vmem:[%s2309 + $0x30] sm:$0xf]
      %v2323 = vld [vmem:[%s2309 + $0x34] sm:$0xf]
      %v2324 = vld [vmem:[%s2309 + $0x38] sm:$0xf]
      %v2325 = vld [vmem:[%s2309 + $0x3c] sm:$0xf]
      %v2326 = vld [vmem:[%s2309 + $0x40] sm:$0xf]
      %v2327 = vld [vmem:[%s2309 + $0x44] sm:$0xf]
      %v2328 = vld [vmem:[%s2309 + $0x48] sm:$0xf]
      %v2329 = vld [vmem:[%s2309 + $0x4c] sm:$0xf]
      %v2330 = vld [vmem:[%s2309 + $0x50] sm:$0xf]
      %v2331 = vld [vmem:[%s2309 + $0x54] sm:$0xf]
      %v2332 = vld [vmem:[%s2309 + $0x58] sm:$0xf]
      %v2333 = vld [vmem:[%s2309 + $0x5c] sm:$0xf]
      %v2334 = vld [vmem:[%s2309 + $0x60] sm:$0xf]
      %v2335 = vld [vmem:[%s2309 + $0x64] sm:$0xf]
      %v2336 = vld [vmem:[%s2309 + $0x68] sm:$0xf]
      %v2337 = vld [vmem:[%s2309 + $0x6c] sm:$0xf]
      %v2338 = vld [vmem:[%s2309 + $0x70] sm:$0xf]
      %v2339 = vld [vmem:[%s2309 + $0x74] sm:$0xf]
      %v2340 = vld [vmem:[%s2309 + $0x78] sm:$0xf]
      %v2341 = vld [vmem:[%s2309 + $0x7c] sm:$0xf]
      %s2342 = scalar_lea.vmem %s1, 320
      %v2343 = vld [vmem:[%s2342] sm:$0xf]
      %v2344 = vld [vmem:[%s2342 + $0x4] sm:$0xf]
      %v2345 = vld [vmem:[%s2342 + $0x8] sm:$0xf]
      %v2346 = vld [vmem:[%s2342 + $0xc] sm:$0xf]
      %v2347 = vld [vmem:[%s2342 + $0x10] sm:$0xf]
      %v2348 = vld [vmem:[%s2342 + $0x14] sm:$0xf]
      %v2349 = vld [vmem:[%s2342 + $0x18] sm:$0xf]
      %v2350 = vld [vmem:[%s2342 + $0x1c] sm:$0xf]
      %v2351 = vld [vmem:[%s2342 + $0x20] sm:$0xf]
      %v2352 = vld [vmem:[%s2342 + $0x24] sm:$0xf]
      %v2353 = vld [vmem:[%s2342 + $0x28] sm:$0xf]
      %v2354 = vld [vmem:[%s2342 + $0x2c] sm:$0xf]
      %v2355 = vld [vmem:[%s2342 + $0x30] sm:$0xf]
      %v2356 = vld [vmem:[%s2342 + $0x34] sm:$0xf]
      %v2357 = vld [vmem:[%s2342 + $0x38] sm:$0xf]
      %v2358 = vld [vmem:[%s2342 + $0x3c] sm:$0xf]
      %v2391 = vunpack.c.l.b16 %v2310
      %v2392 = vunpack.c.l.b16 %v2311
      %v2393 = vunpack.c.l.b16 %v2312
      %v2394 = vunpack.c.l.b16 %v2313
      %v2395 = vunpack.c.l.b16 %v2314
      %v2396 = vunpack.c.l.b16 %v2315
      %v2397 = vunpack.c.l.b16 %v2316
      %v2398 = vunpack.c.l.b16 %v2317
      %v2399 = vunpack.c.l.b16 %v2318
      %v2400 = vunpack.c.l.b16 %v2319
      %v2401 = vunpack.c.l.b16 %v2320
      %v2402 = vunpack.c.l.b16 %v2321
      %v2403 = vunpack.c.l.b16 %v2322
      %v2404 = vunpack.c.l.b16 %v2323
      %v2405 = vunpack.c.l.b16 %v2324
      %v2406 = vunpack.c.l.b16 %v2325
      %v2407 = vunpack.c.l.b16 %v2326
      %v2408 = vunpack.c.l.b16 %v2327
      %v2409 = vunpack.c.l.b16 %v2328
      %v2410 = vunpack.c.l.b16 %v2329
      %v2411 = vunpack.c.l.b16 %v2330
      %v2412 = vunpack.c.l.b16 %v2331
      %v2413 = vunpack.c.l.b16 %v2332
      %v2414 = vunpack.c.l.b16 %v2333
      %v2415 = vunpack.c.l.b16 %v2334
      %v2416 = vunpack.c.l.b16 %v2335
      %v2417 = vunpack.c.l.b16 %v2336
      %v2418 = vunpack.c.l.b16 %v2337
      %v2419 = vunpack.c.l.b16 %v2338
      %v2420 = vunpack.c.l.b16 %v2339
      %v2421 = vunpack.c.l.b16 %v2340
      %v2422 = vunpack.c.l.b16 %v2341
      %v2423 = vpack.c.b16 %v2392, %v2391
      %v2424 = vpack.c.b16 %v2394, %v2393
      %v2425 = vpack.c.b16 %v2396, %v2395
      %v2426 = vpack.c.b16 %v2398, %v2397
      %v2427 = vpack.c.b16 %v2400, %v2399
      %v2428 = vpack.c.b16 %v2402, %v2401
      %v2429 = vpack.c.b16 %v2404, %v2403
      %v2430 = vpack.c.b16 %v2406, %v2405
      %v2431 = vpack.c.b16 %v2408, %v2407
      %v2432 = vpack.c.b16 %v2410, %v2409
      %v2433 = vpack.c.b16 %v2412, %v2411
      %v2434 = vpack.c.b16 %v2414, %v2413
      %v2435 = vpack.c.b16 %v2416, %v2415
      %v2436 = vpack.c.b16 %v2418, %v2417
      %v2437 = vpack.c.b16 %v2420, %v2419
      %v2438 = vpack.c.b16 %v2422, %v2421
      %v2471 = vunpack.c.l.b16 %v2343
      %v2472 = vunpack.c.l.b16 %v2344
      %v2473 = vunpack.c.l.b16 %v2345
      %v2474 = vunpack.c.l.b16 %v2346
      %v2475 = vunpack.c.l.b16 %v2347
      %v2476 = vunpack.c.l.b16 %v2348
      %v2477 = vunpack.c.l.b16 %v2349
      %v2478 = vunpack.c.l.b16 %v2350
      %v2479 = vunpack.c.l.b16 %v2351
      %v2480 = vunpack.c.l.b16 %v2352
      %v2481 = vunpack.c.l.b16 %v2353
      %v2482 = vunpack.c.l.b16 %v2354
      %v2483 = vunpack.c.l.b16 %v2355
      %v2484 = vunpack.c.l.b16 %v2356
      %v2485 = vunpack.c.l.b16 %v2357
      %v2486 = vunpack.c.l.b16 %v2358
      %v2487 = vpack.c.b16 %v2472, %v2471
      %v2488 = vpack.c.b16 %v2474, %v2473
      %v2489 = vpack.c.b16 %v2476, %v2475
      %v2490 = vpack.c.b16 %v2478, %v2477
      %v2491 = vpack.c.b16 %v2480, %v2479
      %v2492 = vpack.c.b16 %v2482, %v2481
      %v2493 = vpack.c.b16 %v2484, %v2483
      %v2494 = vpack.c.b16 %v2486, %v2485
      %2503 = vmatprep.subr.bf16.mxu0 0
      %2504 = vmatpush1.bf16.msra.mxu0 %v2487
      %2505 = vmatprep.subr.bf16.mxu0 0
      %2506 = vmatpush1.bf16.msra.mxu0 %v2488
      %2507 = vmatprep.subr.bf16.mxu0 0
      %2508 = vmatpush1.bf16.msra.mxu0 %v2489
      %2509 = vmatprep.subr.bf16.mxu0 0
      %2510 = vmatpush1.bf16.msra.mxu0 %v2490
      %2511 = vmatprep.subr.bf16.mxu0 0
      %2512 = vmatpush1.bf16.msra.mxu0 %v2491
      %2513 = vmatprep.subr.bf16.mxu0 0
      %2514 = vmatpush1.bf16.msra.mxu0 %v2492
      %2515 = vmatprep.subr.bf16.mxu0 0
      %2516 = vmatpush1.bf16.msra.mxu0 %v2493
      %2517 = vmatprep.subr.bf16.mxu0 0
      %2518 = vmatpush1.bf16.msra.mxu0 %v2494
      %2519 = vmatprep.subr.bf16.mxu0 0
      %2520 = vmatpush1.bf16.msra.mxu0 0
      %2521 = vmatprep.subr.bf16.mxu0 0
      %2522 = vmatpush1.bf16.msra.mxu0 0
      %2523 = vmatprep.subr.bf16.mxu0 0
      %2524 = vmatpush1.bf16.msra.mxu0 0
      %2525 = vmatprep.subr.bf16.mxu0 0
      %2526 = vmatpush1.bf16.msra.mxu0 0
      %2527 = vmatprep.subr.bf16.mxu0 0
      %2528 = vmatpush1.bf16.msra.mxu0 0
      %2529 = vmatprep.subr.bf16.mxu0 0
      %2530 = vmatpush1.bf16.msra.mxu0 0
      %2531 = vmatprep.subr.bf16.mxu0 0
      %2532 = vmatpush1.bf16.msra.mxu0 0
      %2533 = vmatprep.subr.bf16.mxu0 0
      %2534 = vmatpush1.bf16.msra.mxu0 0
      %2535 = vmatprep.mubr.bf16.mxu0 0
      %2536 = vmatmul.mubr.bf16.gmra.mrb[0].mxu0 %v2423
      %v2537 = vpop.f32.mrb[0].mxu0
      %v2538 = vadd.f32 0.0, %v2537
      %v2539 = vpop.f32.mrb[0].mxu0
      %v2540 = vpop.f32.mrb[0].mxu0
      %v2541 = vadd.f32 0.0, %v2540
      %v2542 = vpop.f32.mrb[0].mxu0
      %2543 = vmatprep.mubr.bf16.mxu0 0
      %2544 = vmatmul.mubr.bf16.gmra.mrb[0].mxu0 %v2424
      %v2545 = vpop.f32.mrb[0].mxu0
      %v2546 = vadd.f32 0.0, %v2545
      %v2547 = vpop.f32.mrb[0].mxu0
      %v2548 = vpop.f32.mrb[0].mxu0
      %v2549 = vadd.f32 0.0, %v2548
      %v2550 = vpop.f32.mrb[0].mxu0
      %2551 = vmatprep.mubr.bf16.mxu0 0
      %2552 = vmatmul.mubr.bf16.gmra.mrb[0].mxu0 %v2425
      %v2553 = vpop.f32.mrb[0].mxu0
      %v2554 = vadd.f32 0.0, %v2553
      %v2555 = vpop.f32.mrb[0].mxu0
      %v2556 = vpop.f32.mrb[0].mxu0
      %v2557 = vadd.f32 0.0, %v2556
      %v2558 = vpop.f32.mrb[0].mxu0
      %2559 = vmatprep.mubr.bf16.mxu0 0
      %2560 = vmatmul.mubr.bf16.gmra.mrb[0].mxu0 %v2426
      %v2561 = vpop.f32.mrb[0].mxu0
      %v2562 = vadd.f32 0.0, %v2561
      %v2563 = vpop.f32.mrb[0].mxu0
      %v2564 = vpop.f32.mrb[0].mxu0
      %v2565 = vadd.f32 0.0, %v2564
      %v2566 = vpop.f32.mrb[0].mxu0
      %2567 = vmatprep.mubr.bf16.mxu0 0
      %2568 = vmatmul.mubr.bf16.gmra.mrb[0].mxu0 %v2427
      %v2569 = vpop.f32.mrb[0].mxu0
      %v2570 = vadd.f32 0.0, %v2569
      %v2571 = vpop.f32.mrb[0].mxu0
      %v2572 = vpop.f32.mrb[0].mxu0
      %v2573 = vadd.f32 0.0, %v2572
      %v2574 = vpop.f32.mrb[0].mxu0
      %2575 = vmatprep.mubr.bf16.mxu0 0
      %2576 = vmatmul.mubr.bf16.gmra.mrb[0].mxu0 %v2428
      %v2577 = vpop.f32.mrb[0].mxu0
      %v2578 = vadd.f32 0.0, %v2577
      %v2579 = vpop.f32.mrb[0].mxu0
      %v2580 = vpop.f32.mrb[0].mxu0
      %v2581 = vadd.f32 0.0, %v2580
      %v2582 = vpop.f32.mrb[0].mxu0
      %2583 = vmatprep.mubr.bf16.mxu0 0
      %2584 = vmatmul.mubr.bf16.gmra.mrb[0].mxu0 %v2429
      %v2585 = vpop.f32.mrb[0].mxu0
      %v2586 = vadd.f32 0.0, %v2585
      %v2587 = vpop.f32.mrb[0].mxu0
      %v2588 = vpop.f32.mrb[0].mxu0
      %v2589 = vadd.f32 0.0, %v2588
      %v2590 = vpop.f32.mrb[0].mxu0
      %2591 = vmatprep.mubr.bf16.mxu0 0
      %2592 = vmatmul.mubr.bf16.gmra.mrb[0].mxu0 %v2430
      %v2593 = vpop.f32.mrb[0].mxu0
      %v2594 = vadd.f32 0.0, %v2593
      %v2595 = vpop.f32.mrb[0].mxu0
      %v2596 = vpop.f32.mrb[0].mxu0
      %v2597 = vadd.f32 0.0, %v2596
      %v2598 = vpop.f32.mrb[0].mxu0
      %2599 = vmatprep.mubr.bf16.mxu0 0
      %2600 = vmatmul.mubr.bf16.gmra.mrb[0].mxu0 %v2431
      %v2601 = vpop.f32.mrb[0].mxu0
      %v2602 = vadd.f32 0.0, %v2601
      %v2603 = vpop.f32.mrb[0].mxu0
      %v2604 = vpop.f32.mrb[0].mxu0
      %v2605 = vadd.f32 0.0, %v2604
      %v2606 = vpop.f32.mrb[0].mxu0
      %2607 = vmatprep.mubr.bf16.mxu0 0
      %2608 = vmatmul.mubr.bf16.gmra.mrb[0].mxu0 %v2432
      %v2609 = vpop.f32.mrb[0].mxu0
      %v2610 = vadd.f32 0.0, %v2609
      %v2611 = vpop.f32.mrb[0].mxu0
      %v2612 = vpop.f32.mrb[0].mxu0
      %v2613 = vadd.f32 0.0, %v2612
      %v2614 = vpop.f32.mrb[0].mxu0
      %2615 = vmatprep.mubr.bf16.mxu0 0
      %2616 = vmatmul.mubr.bf16.gmra.mrb[0].mxu0 %v2433
      %v2617 = vpop.f32.mrb[0].mxu0
      %v2618 = vadd.f32 0.0, %v2617
      %v2619 = vpop.f32.mrb[0].mxu0
      %v2620 = vpop.f32.mrb[0].mxu0
      %v2621 = vadd.f32 0.0, %v2620
      %v2622 = vpop.f32.mrb[0].mxu0
      %2623 = vmatprep.mubr.bf16.mxu0 0
      %2624 = vmatmul.mubr.bf16.gmra.mrb[0].mxu0 %v2434
      %v2625 = vpop.f32.mrb[0].mxu0
      %v2626 = vadd.f32 0.0, %v2625
      %v2627 = vpop.f32.mrb[0].mxu0
      %v2628 = vpop.f32.mrb[0].mxu0
      %v2629 = vadd.f32 0.0, %v2628
      %v2630 = vpop.f32.mrb[0].mxu0
      %2631 = vmatprep.mubr.bf16.mxu0 0
      %2632 = vmatmul.mubr.bf16.gmra.mrb[0].mxu0 %v2435
      %v2633 = vpop.f32.mrb[0].mxu0
      %v2634 = vadd.f32 0.0, %v2633
      %v2635 = vpop.f32.mrb[0].mxu0
      %v2636 = vpop.f32.mrb[0].mxu0
      %v2637 = vadd.f32 0.0, %v2636
      %v2638 = vpop.f32.mrb[0].mxu0
      %2639 = vmatprep.mubr.bf16.mxu0 0
      %2640 = vmatmul.mubr.bf16.gmra.mrb[0].mxu0 %v2436
      %v2641 = vpop.f32.mrb[0].mxu0
      %v2642 = vadd.f32 0.0, %v2641
      %v2643 = vpop.f32.mrb[0].mxu0
      %v2644 = vpop.f32.mrb[0].mxu0
      %v2645 = vadd.f32 0.0, %v2644
      %v2646 = vpop.f32.mrb[0].mxu0
      %2647 = vmatprep.mubr.bf16.mxu0 0
      %2648 = vmatmul.mubr.bf16.gmra.mrb[0].mxu0 %v2437
      %v2649 = vpop.f32.mrb[0].mxu0
      %v2650 = vadd.f32 0.0, %v2649
      %v2651 = vpop.f32.mrb[0].mxu0
      %v2652 = vpop.f32.mrb[0].mxu0
      %v2653 = vadd.f32 0.0, %v2652
      %v2654 = vpop.f32.mrb[0].mxu0
      %2655 = vmatprep.mubr.bf16.mxu0 0
      %2656 = vmatmul.mubr.bf16.gmra.mrb[0].mxu0 %v2438
      %v2657 = vpop.f32.mrb[0].mxu0
      %v2658 = vadd.f32 0.0, %v2657
      %v2659 = vpop.f32.mrb[0].mxu0
      %v2660 = vpop.f32.mrb[0].mxu0
      %v2661 = vadd.f32 0.0, %v2660
      %v2662 = vpop.f32.mrb[0].mxu0
      %2663 = vdwg.mxu0
      %v2664 = vadd.f32 %v2277, %v2538
      %v2665 = vadd.f32 %v2278, %v2541
      %v2666 = vadd.f32 %v2279, %v2546
      %v2667 = vadd.f32 %v2280, %v2549
      %v2668 = vadd.f32 %v2281, %v2554
      %v2669 = vadd.f32 %v2282, %v2557
      %v2670 = vadd.f32 %v2283, %v2562
      %v2671 = vadd.f32 %v2284, %v2565
      %v2672 = vadd.f32 %v2285, %v2570
      %v2673 = vadd.f32 %v2286, %v2573
      %v2674 = vadd.f32 %v2287, %v2578
      %v2675 = vadd.f32 %v2288, %v2581
      %v2676 = vadd.f32 %v2289, %v2586
      %v2677 = vadd.f32 %v2290, %v2589
      %v2678 = vadd.f32 %v2291, %v2594
      %v2679 = vadd.f32 %v2292, %v2597
      %v2680 = vadd.f32 %v2293, %v2602
      %v2681 = vadd.f32 %v2294, %v2605
      %v2682 = vadd.f32 %v2295, %v2610
      %v2683 = vadd.f32 %v2296, %v2613
      %v2684 = vadd.f32 %v2297, %v2618
      %v2685 = vadd.f32 %v2298, %v2621
      %v2686 = vadd.f32 %v2299, %v2626
      %v2687 = vadd.f32 %v2300, %v2629
      %v2688 = vadd.f32 %v2301, %v2634
      %v2689 = vadd.f32 %v2302, %v2637
      %v2690 = vadd.f32 %v2303, %v2642
      %v2691 = vadd.f32 %v2304, %v2645
      %v2692 = vadd.f32 %v2305, %v2650
      %v2693 = vadd.f32 %v2306, %v2653
      %v2694 = vadd.f32 %v2307, %v2658
      %v2695 = vadd.f32 %v2308, %v2661
      %s2696 = scalar_lea.vmem %s434, 16
      %v2697 = vld [vmem:[%s2696] sm:$0xf]
      %v2698 = vld [vmem:[%s2696 + $0x4] sm:$0xf]
      %v2699 = vld [vmem:[%s2696 + $0x8] sm:$0xf]
      %v2700 = vld [vmem:[%s2696 + $0xc] sm:$0xf]
      %v2701 = vld [vmem:[%s2696 + $0x10] sm:$0xf]
      %v2702 = vld [vmem:[%s2696 + $0x14] sm:$0xf]
      %v2703 = vld [vmem:[%s2696 + $0x18] sm:$0xf]
      %v2704 = vld [vmem:[%s2696 + $0x1c] sm:$0xf]
      %v2705 = vld [vmem:[%s2696 + $0x20] sm:$0xf]
      %v2706 = vld [vmem:[%s2696 + $0x24] sm:$0xf]
      %v2707 = vld [vmem:[%s2696 + $0x28] sm:$0xf]
      %v2708 = vld [vmem:[%s2696 + $0x2c] sm:$0xf]
      %v2709 = vld [vmem:[%s2696 + $0x30] sm:$0xf]
      %v2710 = vld [vmem:[%s2696 + $0x34] sm:$0xf]
      %v2711 = vld [vmem:[%s2696 + $0x38] sm:$0xf]
      %v2712 = vld [vmem:[%s2696 + $0x3c] sm:$0xf]
      %v2713 = vld [vmem:[%s2696 + $0x40] sm:$0xf]
      %v2714 = vld [vmem:[%s2696 + $0x44] sm:$0xf]
      %v2715 = vld [vmem:[%s2696 + $0x48] sm:$0xf]
      %v2716 = vld [vmem:[%s2696 + $0x4c] sm:$0xf]
      %v2717 = vld [vmem:[%s2696 + $0x50] sm:$0xf]
      %v2718 = vld [vmem:[%s2696 + $0x54] sm:$0xf]
      %v2719 = vld [vmem:[%s2696 + $0x58] sm:$0xf]
      %v2720 = vld [vmem:[%s2696 + $0x5c] sm:$0xf]
      %v2721 = vld [vmem:[%s2696 + $0x60] sm:$0xf]
      %v2722 = vld [vmem:[%s2696 + $0x64] sm:$0xf]
      %v2723 = vld [vmem:[%s2696 + $0x68] sm:$0xf]
      %v2724 = vld [vmem:[%s2696 + $0x6c] sm:$0xf]
      %v2725 = vld [vmem:[%s2696 + $0x70] sm:$0xf]
      %v2726 = vld [vmem:[%s2696 + $0x74] sm:$0xf]
      %v2727 = vld [vmem:[%s2696 + $0x78] sm:$0xf]
      %v2728 = vld [vmem:[%s2696 + $0x7c] sm:$0xf]
      %s2729 = scalar_lea.vmem %s1, 384
      %v2730 = vld [vmem:[%s2729] sm:$0xf]
      %v2731 = vld [vmem:[%s2729 + $0x4] sm:$0xf]
      %v2732 = vld [vmem:[%s2729 + $0x8] sm:$0xf]
      %v2733 = vld [vmem:[%s2729 + $0xc] sm:$0xf]
      %v2734 = vld [vmem:[%s2729 + $0x10] sm:$0xf]
      %v2735 = vld [vmem:[%s2729 + $0x14] sm:$0xf]
      %v2736 = vld [vmem:[%s2729 + $0x18] sm:$0xf]
      %v2737 = vld [vmem:[%s2729 + $0x1c] sm:$0xf]
      %v2738 = vld [vmem:[%s2729 + $0x20] sm:$0xf]
      %v2739 = vld [vmem:[%s2729 + $0x24] sm:$0xf]
      %v2740 = vld [vmem:[%s2729 + $0x28] sm:$0xf]
      %v2741 = vld [vmem:[%s2729 + $0x2c] sm:$0xf]
      %v2742 = vld [vmem:[%s2729 + $0x30] sm:$0xf]
      %v2743 = vld [vmem:[%s2729 + $0x34] sm:$0xf]
      %v2744 = vld [vmem:[%s2729 + $0x38] sm:$0xf]
      %v2745 = vld [vmem:[%s2729 + $0x3c] sm:$0xf]
      %v2778 = vunpack.c.l.b16 %v2697
      %v2779 = vunpack.c.l.b16 %v2698
      %v2780 = vunpack.c.l.b16 %v2699
      %v2781 = vunpack.c.l.b16 %v2700
      %v2782 = vunpack.c.l.b16 %v2701
      %v2783 = vunpack.c.l.b16 %v2702
      %v2784 = vunpack.c.l.b16 %v2703
      %v2785 = vunpack.c.l.b16 %v2704
      %v2786 = vunpack.c.l.b16 %v2705
      %v2787 = vunpack.c.l.b16 %v2706
      %v2788 = vunpack.c.l.b16 %v2707
      %v2789 = vunpack.c.l.b16 %v2708
      %v2790 = vunpack.c.l.b16 %v2709
      %v2791 = vunpack.c.l.b16 %v2710
      %v2792 = vunpack.c.l.b16 %v2711
      %v2793 = vunpack.c.l.b16 %v2712
      %v2794 = vunpack.c.l.b16 %v2713
      %v2795 = vunpack.c.l.b16 %v2714
      %v2796 = vunpack.c.l.b16 %v2715
      %v2797 = vunpack.c.l.b16 %v2716
      %v2798 = vunpack.c.l.b16 %v2717
      %v2799 = vunpack.c.l.b16 %v2718
      %v2800 = vunpack.c.l.b16 %v2719
      %v2801 = vunpack.c.l.b16 %v2720
      %v2802 = vunpack.c.l.b16 %v2721
      %v2803 = vunpack.c.l.b16 %v2722
      %v2804 = vunpack.c.l.b16 %v2723
      %v2805 = vunpack.c.l.b16 %v2724
      %v2806 = vunpack.c.l.b16 %v2725
      %v2807 = vunpack.c.l.b16 %v2726
      %v2808 = vunpack.c.l.b16 %v2727
      %v2809 = vunpack.c.l.b16 %v2728
      %v2810 = vpack.c.b16 %v2779, %v2778
      %v2811 = vpack.c.b16 %v2781, %v2780
      %v2812 = vpack.c.b16 %v2783, %v2782
      %v2813 = vpack.c.b16 %v2785, %v2784
      %v2814 = vpack.c.b16 %v2787, %v2786
      %v2815 = vpack.c.b16 %v2789, %v2788
      %v2816 = vpack.c.b16 %v2791, %v2790
      %v2817 = vpack.c.b16 %v2793, %v2792
      %v2818 = vpack.c.b16 %v2795, %v2794
      %v2819 = vpack.c.b16 %v2797, %v2796
      %v2820 = vpack.c.b16 %v2799, %v2798
      %v2821 = vpack.c.b16 %v2801, %v2800
      %v2822 = vpack.c.b16 %v2803, %v2802
      %v2823 = vpack.c.b16 %v2805, %v2804
      %v2824 = vpack.c.b16 %v2807, %v2806
      %v2825 = vpack.c.b16 %v2809, %v2808
      %v2858 = vunpack.c.l.b16 %v2730
      %v2859 = vunpack.c.l.b16 %v2731
      %v2860 = vunpack.c.l.b16 %v2732
      %v2861 = vunpack.c.l.b16 %v2733
      %v2862 = vunpack.c.l.b16 %v2734
      %v2863 = vunpack.c.l.b16 %v2735
      %v2864 = vunpack.c.l.b16 %v2736
      %v2865 = vunpack.c.l.b16 %v2737
      %v2866 = vunpack.c.l.b16 %v2738
      %v2867 = vunpack.c.l.b16 %v2739
      %v2868 = vunpack.c.l.b16 %v2740
      %v2869 = vunpack.c.l.b16 %v2741
      %v2870 = vunpack.c.l.b16 %v2742
      %v2871 = vunpack.c.l.b16 %v2743
      %v2872 = vunpack.c.l.b16 %v2744
      %v2873 = vunpack.c.l.b16 %v2745
      %v2874 = vpack.c.b16 %v2859, %v2858
      %v2875 = vpack.c.b16 %v2861, %v2860
      %v2876 = vpack.c.b16 %v2863, %v2862
      %v2877 = vpack.c.b16 %v2865, %v2864
      %v2878 = vpack.c.b16 %v2867, %v2866
      %v2879 = vpack.c.b16 %v2869, %v2868
      %v2880 = vpack.c.b16 %v2871, %v2870
      %v2881 = vpack.c.b16 %v2873, %v2872
      %2890 = vmatprep.subr.bf16.mxu0 0
      %2891 = vmatpush1.bf16.msra.mxu0 %v2874
      %2892 = vmatprep.subr.bf16.mxu0 0
      %2893 = vmatpush1.bf16.msra.mxu0 %v2875
      %2894 = vmatprep.subr.bf16.mxu0 0
      %2895 = vmatpush1.bf16.msra.mxu0 %v2876
      %2896 = vmatprep.subr.bf16.mxu0 0
      %2897 = vmatpush1.bf16.msra.mxu0 %v2877
      %2898 = vmatprep.subr.bf16.mxu0 0
      %2899 = vmatpush1.bf16.msra.mxu0 %v2878
      %2900 = vmatprep.subr.bf16.mxu0 0
      %2901 = vmatpush1.bf16.msra.mxu0 %v2879
      %2902 = vmatprep.subr.bf16.mxu0 0
      %2903 = vmatpush1.bf16.msra.mxu0 %v2880
      %2904 = vmatprep.subr.bf16.mxu0 0
      %2905 = vmatpush1.bf16.msra.mxu0 %v2881
      %2906 = vmatprep.subr.bf16.mxu0 0
      %2907 = vmatpush1.bf16.msra.mxu0 0
      %2908 = vmatprep.subr.bf16.mxu0 0
      %2909 = vmatpush1.bf16.msra.mxu0 0
      %2910 = vmatprep.subr.bf16.mxu0 0
      %2911 = vmatpush1.bf16.msra.mxu0 0
      %2912 = vmatprep.subr.bf16.mxu0 0
      %2913 = vmatpush1.bf16.msra.mxu0 0
      %2914 = vmatprep.subr.bf16.mxu0 0
      %2915 = vmatpush1.bf16.msra.mxu0 0
      %2916 = vmatprep.subr.bf16.mxu0 0
      %2917 = vmatpush1.bf16.msra.mxu0 0
      %2918 = vmatprep.subr.bf16.mxu0 0
      %2919 = vmatpush1.bf16.msra.mxu0 0
      %2920 = vmatprep.subr.bf16.mxu0 0
      %2921 = vmatpush1.bf16.msra.mxu0 0
      %2922 = vmatprep.mubr.bf16.mxu0 0
      %2923 = vmatmul.mubr.bf16.gmra.mrb[0].mxu0 %v2810
      %v2924 = vpop.f32.mrb[0].mxu0
      %v2925 = vadd.f32 0.0, %v2924
      %v2926 = vpop.f32.mrb[0].mxu0
      %v2927 = vpop.f32.mrb[0].mxu0
      %v2928 = vadd.f32 0.0, %v2927
      %v2929 = vpop.f32.mrb[0].mxu0
      %2930 = vmatprep.mubr.bf16.mxu0 0
      %2931 = vmatmul.mubr.bf16.gmra.mrb[0].mxu0 %v2811
      %v2932 = vpop.f32.mrb[0].mxu0
      %v2933 = vadd.f32 0.0, %v2932
      %v2934 = vpop.f32.mrb[0].mxu0
      %v2935 = vpop.f32.mrb[0].mxu0
      %v2936 = vadd.f32 0.0, %v2935
      %v2937 = vpop.f32.mrb[0].mxu0
      %2938 = vmatprep.mubr.bf16.mxu0 0
      %2939 = vmatmul.mubr.bf16.gmra.mrb[0].mxu0 %v2812
      %v2940 = vpop.f32.mrb[0].mxu0
      %v2941 = vadd.f32 0.0, %v2940
      %v2942 = vpop.f32.mrb[0].mxu0
      %v2943 = vpop.f32.mrb[0].mxu0
      %v2944 = vadd.f32 0.0, %v2943
      %v2945 = vpop.f32.mrb[0].mxu0
      %2946 = vmatprep.mubr.bf16.mxu0 0
      %2947 = vmatmul.mubr.bf16.gmra.mrb[0].mxu0 %v2813
      %v2948 = vpop.f32.mrb[0].mxu0
      %v2949 = vadd.f32 0.0, %v2948
      %v2950 = vpop.f32.mrb[0].mxu0
      %v2951 = vpop.f32.mrb[0].mxu0
      %v2952 = vadd.f32 0.0, %v2951
      %v2953 = vpop.f32.mrb[0].mxu0
      %2954 = vmatprep.mubr.bf16.mxu0 0
      %2955 = vmatmul.mubr.bf16.gmra.mrb[0].mxu0 %v2814
      %v2956 = vpop.f32.mrb[0].mxu0
      %v2957 = vadd.f32 0.0, %v2956
      %v2958 = vpop.f32.mrb[0].mxu0
      %v2959 = vpop.f32.mrb[0].mxu0
      %v2960 = vadd.f32 0.0, %v2959
      %v2961 = vpop.f32.mrb[0].mxu0
      %2962 = vmatprep.mubr.bf16.mxu0 0
      %2963 = vmatmul.mubr.bf16.gmra.mrb[0].mxu0 %v2815
      %v2964 = vpop.f32.mrb[0].mxu0
      %v2965 = vadd.f32 0.0, %v2964
      %v2966 = vpop.f32.mrb[0].mxu0
      %v2967 = vpop.f32.mrb[0].mxu0
      %v2968 = vadd.f32 0.0, %v2967
      %v2969 = vpop.f32.mrb[0].mxu0
      %2970 = vmatprep.mubr.bf16.mxu0 0
      %2971 = vmatmul.mubr.bf16.gmra.mrb[0].mxu0 %v2816
      %v2972 = vpop.f32.mrb[0].mxu0
      %v2973 = vadd.f32 0.0, %v2972
      %v2974 = vpop.f32.mrb[0].mxu0
      %v2975 = vpop.f32.mrb[0].mxu0
      %v2976 = vadd.f32 0.0, %v2975
      %v2977 = vpop.f32.mrb[0].mxu0
      %2978 = vmatprep.mubr.bf16.mxu0 0
      %2979 = vmatmul.mubr.bf16.gmra.mrb[0].mxu0 %v2817
      %v2980 = vpop.f32.mrb[0].mxu0
      %v2981 = vadd.f32 0.0, %v2980
      %v2982 = vpop.f32.mrb[0].mxu0
      %v2983 = vpop.f32.mrb[0].mxu0
      %v2984 = vadd.f32 0.0, %v2983
      %v2985 = vpop.f32.mrb[0].mxu0
      %2986 = vmatprep.mubr.bf16.mxu0 0
      %2987 = vmatmul.mubr.bf16.gmra.mrb[0].mxu0 %v2818
      %v2988 = vpop.f32.mrb[0].mxu0
      %v2989 = vadd.f32 0.0, %v2988
      %v2990 = vpop.f32.mrb[0].mxu0
      %v2991 = vpop.f32.mrb[0].mxu0
      %v2992 = vadd.f32 0.0, %v2991
      %v2993 = vpop.f32.mrb[0].mxu0
      %2994 = vmatprep.mubr.bf16.mxu0 0
      %2995 = vmatmul.mubr.bf16.gmra.mrb[0].mxu0 %v2819
      %v2996 = vpop.f32.mrb[0].mxu0
      %v2997 = vadd.f32 0.0, %v2996
      %v2998 = vpop.f32.mrb[0].mxu0
      %v2999 = vpop.f32.mrb[0].mxu0
      %v3000 = vadd.f32 0.0, %v2999
      %v3001 = vpop.f32.mrb[0].mxu0
      %3002 = vmatprep.mubr.bf16.mxu0 0
      %3003 = vmatmul.mubr.bf16.gmra.mrb[0].mxu0 %v2820
      %v3004 = vpop.f32.mrb[0].mxu0
      %v3005 = vadd.f32 0.0, %v3004
      %v3006 = vpop.f32.mrb[0].mxu0
      %v3007 = vpop.f32.mrb[0].mxu0
      %v3008 = vadd.f32 0.0, %v3007
      %v3009 = vpop.f32.mrb[0].mxu0
      %3010 = vmatprep.mubr.bf16.mxu0 0
      %3011 = vmatmul.mubr.bf16.gmra.mrb[0].mxu0 %v2821
      %v3012 = vpop.f32.mrb[0].mxu0
      %v3013 = vadd.f32 0.0, %v3012
      %v3014 = vpop.f32.mrb[0].mxu0
      %v3015 = vpop.f32.mrb[0].mxu0
      %v3016 = vadd.f32 0.0, %v3015
      %v3017 = vpop.f32.mrb[0].mxu0
      %3018 = vmatprep.mubr.bf16.mxu0 0
      %3019 = vmatmul.mubr.bf16.gmra.mrb[0].mxu0 %v2822
      %v3020 = vpop.f32.mrb[0].mxu0
      %v3021 = vadd.f32 0.0, %v3020
      %v3022 = vpop.f32.mrb[0].mxu0
      %v3023 = vpop.f32.mrb[0].mxu0
      %v3024 = vadd.f32 0.0, %v3023
      %v3025 = vpop.f32.mrb[0].mxu0
      %3026 = vmatprep.mubr.bf16.mxu0 0
      %3027 = vmatmul.mubr.bf16.gmra.mrb[0].mxu0 %v2823
      %v3028 = vpop.f32.mrb[0].mxu0
      %v3029 = vadd.f32 0.0, %v3028
      %v3030 = vpop.f32.mrb[0].mxu0
      %v3031 = vpop.f32.mrb[0].mxu0
      %v3032 = vadd.f32 0.0, %v3031
      %v3033 = vpop.f32.mrb[0].mxu0
      %3034 = vmatprep.mubr.bf16.mxu0 0
      %3035 = vmatmul.mubr.bf16.gmra.mrb[0].mxu0 %v2824
      %v3036 = vpop.f32.mrb[0].mxu0
      %v3037 = vadd.f32 0.0, %v3036
      %v3038 = vpop.f32.mrb[0].mxu0
      %v3039 = vpop.f32.mrb[0].mxu0
      %v3040 = vadd.f32 0.0, %v3039
      %v3041 = vpop.f32.mrb[0].mxu0
      %3042 = vmatprep.mubr.bf16.mxu0 0
      %3043 = vmatmul.mubr.bf16.gmra.mrb[0].mxu0 %v2825
      %v3044 = vpop.f32.mrb[0].mxu0
      %v3045 = vadd.f32 0.0, %v3044
      %v3046 = vpop.f32.mrb[0].mxu0
      %v3047 = vpop.f32.mrb[0].mxu0
      %v3048 = vadd.f32 0.0, %v3047
      %v3049 = vpop.f32.mrb[0].mxu0
      %3050 = vdwg.mxu0
      %v3051 = vadd.f32 %v2664, %v2925
      %v3052 = vadd.f32 %v2665, %v2928
      %v3053 = vadd.f32 %v2666, %v2933
      %v3054 = vadd.f32 %v2667, %v2936
      %v3055 = vadd.f32 %v2668, %v2941
      %v3056 = vadd.f32 %v2669, %v2944
      %v3057 = vadd.f32 %v2670, %v2949
      %v3058 = vadd.f32 %v2671, %v2952
      %v3059 = vadd.f32 %v2672, %v2957
      %v3060 = vadd.f32 %v2673, %v2960
      %v3061 = vadd.f32 %v2674, %v2965
      %v3062 = vadd.f32 %v2675, %v2968
      %v3063 = vadd.f32 %v2676, %v2973
      %v3064 = vadd.f32 %v2677, %v2976
      %v3065 = vadd.f32 %v2678, %v2981
      %v3066 = vadd.f32 %v2679, %v2984
      %v3067 = vadd.f32 %v2680, %v2989
      %v3068 = vadd.f32 %v2681, %v2992
      %v3069 = vadd.f32 %v2682, %v2997
      %v3070 = vadd.f32 %v2683, %v3000
      %v3071 = vadd.f32 %v2684, %v3005
      %v3072 = vadd.f32 %v2685, %v3008
      %v3073 = vadd.f32 %v2686, %v3013
      %v3074 = vadd.f32 %v2687, %v3016
      %v3075 = vadd.f32 %v2688, %v3021
      %v3076 = vadd.f32 %v2689, %v3024
      %v3077 = vadd.f32 %v2690, %v3029
      %v3078 = vadd.f32 %v2691, %v3032
      %v3079 = vadd.f32 %v2692, %v3037
      %v3080 = vadd.f32 %v2693, %v3040
      %v3081 = vadd.f32 %v2694, %v3045
      %v3082 = vadd.f32 %v2695, %v3048
      %s3083 = scalar_lea.vmem %s434, 160
      %v3084 = vld [vmem:[%s3083] sm:$0xf]
      %v3085 = vld [vmem:[%s3083 + $0x4] sm:$0xf]
      %v3086 = vld [vmem:[%s3083 + $0x8] sm:$0xf]
      %v3087 = vld [vmem:[%s3083 + $0xc] sm:$0xf]
      %v3088 = vld [vmem:[%s3083 + $0x10] sm:$0xf]
      %v3089 = vld [vmem:[%s3083 + $0x14] sm:$0xf]
      %v3090 = vld [vmem:[%s3083 + $0x18] sm:$0xf]
      %v3091 = vld [vmem:[%s3083 + $0x1c] sm:$0xf]
      %v3092 = vld [vmem:[%s3083 + $0x20] sm:$0xf]
      %v3093 = vld [vmem:[%s3083 + $0x24] sm:$0xf]
      %v3094 = vld [vmem:[%s3083 + $0x28] sm:$0xf]
      %v3095 = vld [vmem:[%s3083 + $0x2c] sm:$0xf]
      %v3096 = vld [vmem:[%s3083 + $0x30] sm:$0xf]
      %v3097 = vld [vmem:[%s3083 + $0x34] sm:$0xf]
      %v3098 = vld [vmem:[%s3083 + $0x38] sm:$0xf]
      %v3099 = vld [vmem:[%s3083 + $0x3c] sm:$0xf]
      %v3100 = vld [vmem:[%s3083 + $0x40] sm:$0xf]
      %v3101 = vld [vmem:[%s3083 + $0x44] sm:$0xf]
      %v3102 = vld [vmem:[%s3083 + $0x48] sm:$0xf]
      %v3103 = vld [vmem:[%s3083 + $0x4c] sm:$0xf]
      %v3104 = vld [vmem:[%s3083 + $0x50] sm:$0xf]
      %v3105 = vld [vmem:[%s3083 + $0x54] sm:$0xf]
      %v3106 = vld [vmem:[%s3083 + $0x58] sm:$0xf]
      %v3107 = vld [vmem:[%s3083 + $0x5c] sm:$0xf]
      %v3108 = vld [vmem:[%s3083 + $0x60] sm:$0xf]
      %v3109 = vld [vmem:[%s3083 + $0x64] sm:$0xf]
      %v3110 = vld [vmem:[%s3083 + $0x68] sm:$0xf]
      %v3111 = vld [vmem:[%s3083 + $0x6c] sm:$0xf]
      %v3112 = vld [vmem:[%s3083 + $0x70] sm:$0xf]
      %v3113 = vld [vmem:[%s3083 + $0x74] sm:$0xf]
      %v3114 = vld [vmem:[%s3083 + $0x78] sm:$0xf]
      %v3115 = vld [vmem:[%s3083 + $0x7c] sm:$0xf]
      %s3116 = scalar_lea.vmem %s1, 448
      %v3117 = vld [vmem:[%s3116] sm:$0xf]
      %v3118 = vld [vmem:[%s3116 + $0x4] sm:$0xf]
      %v3119 = vld [vmem:[%s3116 + $0x8] sm:$0xf]
      %v3120 = vld [vmem:[%s3116 + $0xc] sm:$0xf]
      %v3121 = vld [vmem:[%s3116 + $0x10] sm:$0xf]
      %v3122 = vld [vmem:[%s3116 + $0x14] sm:$0xf]
      %v3123 = vld [vmem:[%s3116 + $0x18] sm:$0xf]
      %v3124 = vld [vmem:[%s3116 + $0x1c] sm:$0xf]
      %v3125 = vld [vmem:[%s3116 + $0x20] sm:$0xf]
      %v3126 = vld [vmem:[%s3116 + $0x24] sm:$0xf]
      %v3127 = vld [vmem:[%s3116 + $0x28] sm:$0xf]
      %v3128 = vld [vmem:[%s3116 + $0x2c] sm:$0xf]
      %v3129 = vld [vmem:[%s3116 + $0x30] sm:$0xf]
      %v3130 = vld [vmem:[%s3116 + $0x34] sm:$0xf]
      %v3131 = vld [vmem:[%s3116 + $0x38] sm:$0xf]
      %v3132 = vld [vmem:[%s3116 + $0x3c] sm:$0xf]
      %v3165 = vunpack.c.l.b16 %v3084
      %v3166 = vunpack.c.l.b16 %v3085
      %v3167 = vunpack.c.l.b16 %v3086
      %v3168 = vunpack.c.l.b16 %v3087
      %v3169 = vunpack.c.l.b16 %v3088
      %v3170 = vunpack.c.l.b16 %v3089
      %v3171 = vunpack.c.l.b16 %v3090
      %v3172 = vunpack.c.l.b16 %v3091
      %v3173 = vunpack.c.l.b16 %v3092
      %v3174 = vunpack.c.l.b16 %v3093
      %v3175 = vunpack.c.l.b16 %v3094
      %v3176 = vunpack.c.l.b16 %v3095
      %v3177 = vunpack.c.l.b16 %v3096
      %v3178 = vunpack.c.l.b16 %v3097
      %v3179 = vunpack.c.l.b16 %v3098
      %v3180 = vunpack.c.l.b16 %v3099
      %v3181 = vunpack.c.l.b16 %v3100
      %v3182 = vunpack.c.l.b16 %v3101
      %v3183 = vunpack.c.l.b16 %v3102
      %v3184 = vunpack.c.l.b16 %v3103
      %v3185 = vunpack.c.l.b16 %v3104
      %v3186 = vunpack.c.l.b16 %v3105
      %v3187 = vunpack.c.l.b16 %v3106
      %v3188 = vunpack.c.l.b16 %v3107
      %v3189 = vunpack.c.l.b16 %v3108
      %v3190 = vunpack.c.l.b16 %v3109
      %v3191 = vunpack.c.l.b16 %v3110
      %v3192 = vunpack.c.l.b16 %v3111
      %v3193 = vunpack.c.l.b16 %v3112
      %v3194 = vunpack.c.l.b16 %v3113
      %v3195 = vunpack.c.l.b16 %v3114
      %v3196 = vunpack.c.l.b16 %v3115
      %v3197 = vpack.c.b16 %v3166, %v3165
      %v3198 = vpack.c.b16 %v3168, %v3167
      %v3199 = vpack.c.b16 %v3170, %v3169
      %v3200 = vpack.c.b16 %v3172, %v3171
      %v3201 = vpack.c.b16 %v3174, %v3173
      %v3202 = vpack.c.b16 %v3176, %v3175
      %v3203 = vpack.c.b16 %v3178, %v3177
      %v3204 = vpack.c.b16 %v3180, %v3179
      %v3205 = vpack.c.b16 %v3182, %v3181
      %v3206 = vpack.c.b16 %v3184, %v3183
      %v3207 = vpack.c.b16 %v3186, %v3185
      %v3208 = vpack.c.b16 %v3188, %v3187
      %v3209 = vpack.c.b16 %v3190, %v3189
      %v3210 = vpack.c.b16 %v3192, %v3191
      %v3211 = vpack.c.b16 %v3194, %v3193
      %v3212 = vpack.c.b16 %v3196, %v3195
      %v3245 = vunpack.c.l.b16 %v3117
      %v3246 = vunpack.c.l.b16 %v3118
      %v3247 = vunpack.c.l.b16 %v3119
      %v3248 = vunpack.c.l.b16 %v3120
      %v3249 = vunpack.c.l.b16 %v3121
      %v3250 = vunpack.c.l.b16 %v3122
      %v3251 = vunpack.c.l.b16 %v3123
      %v3252 = vunpack.c.l.b16 %v3124
      %v3253 = vunpack.c.l.b16 %v3125
      %v3254 = vunpack.c.l.b16 %v3126
      %v3255 = vunpack.c.l.b16 %v3127
      %v3256 = vunpack.c.l.b16 %v3128
      %v3257 = vunpack.c.l.b16 %v3129
      %v3258 = vunpack.c.l.b16 %v3130
      %v3259 = vunpack.c.l.b16 %v3131
      %v3260 = vunpack.c.l.b16 %v3132
      %v3261 = vpack.c.b16 %v3246, %v3245
      %v3262 = vpack.c.b16 %v3248, %v3247
      %v3263 = vpack.c.b16 %v3250, %v3249
      %v3264 = vpack.c.b16 %v3252, %v3251
      %v3265 = vpack.c.b16 %v3254, %v3253
      %v3266 = vpack.c.b16 %v3256, %v3255
      %v3267 = vpack.c.b16 %v3258, %v3257
      %v3268 = vpack.c.b16 %v3260, %v3259
      %3277 = vmatprep.subr.bf16.mxu0 0
      %3278 = vmatpush1.bf16.msra.mxu0 %v3261
      %3279 = vmatprep.subr.bf16.mxu0 0
      %3280 = vmatpush1.bf16.msra.mxu0 %v3262
      %3281 = vmatprep.subr.bf16.mxu0 0
      %3282 = vmatpush1.bf16.msra.mxu0 %v3263
      %3283 = vmatprep.subr.bf16.mxu0 0
      %3284 = vmatpush1.bf16.msra.mxu0 %v3264
      %3285 = vmatprep.subr.bf16.mxu0 0
      %3286 = vmatpush1.bf16.msra.mxu0 %v3265
      %3287 = vmatprep.subr.bf16.mxu0 0
      %3288 = vmatpush1.bf16.msra.mxu0 %v3266
      %3289 = vmatprep.subr.bf16.mxu0 0
      %3290 = vmatpush1.bf16.msra.mxu0 %v3267
      %3291 = vmatprep.subr.bf16.mxu0 0
      %3292 = vmatpush1.bf16.msra.mxu0 %v3268
      %3293 = vmatprep.subr.bf16.mxu0 0
      %3294 = vmatpush1.bf16.msra.mxu0 0
      %3295 = vmatprep.subr.bf16.mxu0 0
      %3296 = vmatpush1.bf16.msra.mxu0 0
      %3297 = vmatprep.subr.bf16.mxu0 0
      %3298 = vmatpush1.bf16.msra.mxu0 0
      %3299 = vmatprep.subr.bf16.mxu0 0
      %3300 = vmatpush1.bf16.msra.mxu0 0
      %3301 = vmatprep.subr.bf16.mxu0 0
      %3302 = vmatpush1.bf16.msra.mxu0 0
      %3303 = vmatprep.subr.bf16.mxu0 0
      %3304 = vmatpush1.bf16.msra.mxu0 0
      %3305 = vmatprep.subr.bf16.mxu0 0
      %3306 = vmatpush1.bf16.msra.mxu0 0
      %3307 = vmatprep.subr.bf16.mxu0 0
      %3308 = vmatpush1.bf16.msra.mxu0 0
      %3309 = vmatprep.mubr.bf16.mxu0 0
      %3310 = vmatmul.mubr.bf16.gmra.mrb[0].mxu0 %v3197
      %v3311 = vpop.f32.mrb[0].mxu0
      %v3312 = vadd.f32 0.0, %v3311
      %v3313 = vpop.f32.mrb[0].mxu0
      %v3314 = vpop.f32.mrb[0].mxu0
      %v3315 = vadd.f32 0.0, %v3314
      %v3316 = vpop.f32.mrb[0].mxu0
      %3317 = vmatprep.mubr.bf16.mxu0 0
      %3318 = vmatmul.mubr.bf16.gmra.mrb[0].mxu0 %v3198
      %v3319 = vpop.f32.mrb[0].mxu0
      %v3320 = vadd.f32 0.0, %v3319
      %v3321 = vpop.f32.mrb[0].mxu0
      %v3322 = vpop.f32.mrb[0].mxu0
      %v3323 = vadd.f32 0.0, %v3322
      %v3324 = vpop.f32.mrb[0].mxu0
      %3325 = vmatprep.mubr.bf16.mxu0 0
      %3326 = vmatmul.mubr.bf16.gmra.mrb[0].mxu0 %v3199
      %v3327 = vpop.f32.mrb[0].mxu0
      %v3328 = vadd.f32 0.0, %v3327
      %v3329 = vpop.f32.mrb[0].mxu0
      %v3330 = vpop.f32.mrb[0].mxu0
      %v3331 = vadd.f32 0.0, %v3330
      %v3332 = vpop.f32.mrb[0].mxu0
      %3333 = vmatprep.mubr.bf16.mxu0 0
      %3334 = vmatmul.mubr.bf16.gmra.mrb[0].mxu0 %v3200
      %v3335 = vpop.f32.mrb[0].mxu0
      %v3336 = vadd.f32 0.0, %v3335
      %v3337 = vpop.f32.mrb[0].mxu0
      %v3338 = vpop.f32.mrb[0].mxu0
      %v3339 = vadd.f32 0.0, %v3338
      %v3340 = vpop.f32.mrb[0].mxu0
      %3341 = vmatprep.mubr.bf16.mxu0 0
      %3342 = vmatmul.mubr.bf16.gmra.mrb[0].mxu0 %v3201
      %v3343 = vpop.f32.mrb[0].mxu0
      %v3344 = vadd.f32 0.0, %v3343
      %v3345 = vpop.f32.mrb[0].mxu0
      %v3346 = vpop.f32.mrb[0].mxu0
      %v3347 = vadd.f32 0.0, %v3346
      %v3348 = vpop.f32.mrb[0].mxu0
      %3349 = vmatprep.mubr.bf16.mxu0 0
      %3350 = vmatmul.mubr.bf16.gmra.mrb[0].mxu0 %v3202
      %v3351 = vpop.f32.mrb[0].mxu0
      %v3352 = vadd.f32 0.0, %v3351
      %v3353 = vpop.f32.mrb[0].mxu0
      %v3354 = vpop.f32.mrb[0].mxu0
      %v3355 = vadd.f32 0.0, %v3354
      %v3356 = vpop.f32.mrb[0].mxu0
      %3357 = vmatprep.mubr.bf16.mxu0 0
      %3358 = vmatmul.mubr.bf16.gmra.mrb[0].mxu0 %v3203
      %v3359 = vpop.f32.mrb[0].mxu0
      %v3360 = vadd.f32 0.0, %v3359
      %v3361 = vpop.f32.mrb[0].mxu0
      %v3362 = vpop.f32.mrb[0].mxu0
      %v3363 = vadd.f32 0.0, %v3362
      %v3364 = vpop.f32.mrb[0].mxu0
      %3365 = vmatprep.mubr.bf16.mxu0 0
      %3366 = vmatmul.mubr.bf16.gmra.mrb[0].mxu0 %v3204
      %v3367 = vpop.f32.mrb[0].mxu0
      %v3368 = vadd.f32 0.0, %v3367
      %v3369 = vpop.f32.mrb[0].mxu0
      %v3370 = vpop.f32.mrb[0].mxu0
      %v3371 = vadd.f32 0.0, %v3370
      %v3372 = vpop.f32.mrb[0].mxu0
      %3373 = vmatprep.mubr.bf16.mxu0 0
      %3374 = vmatmul.mubr.bf16.gmra.mrb[0].mxu0 %v3205
      %v3375 = vpop.f32.mrb[0].mxu0
      %v3376 = vadd.f32 0.0, %v3375
      %v3377 = vpop.f32.mrb[0].mxu0
      %v3378 = vpop.f32.mrb[0].mxu0
      %v3379 = vadd.f32 0.0, %v3378
      %v3380 = vpop.f32.mrb[0].mxu0
      %3381 = vmatprep.mubr.bf16.mxu0 0
      %3382 = vmatmul.mubr.bf16.gmra.mrb[0].mxu0 %v3206
      %v3383 = vpop.f32.mrb[0].mxu0
      %v3384 = vadd.f32 0.0, %v3383
      %v3385 = vpop.f32.mrb[0].mxu0
      %v3386 = vpop.f32.mrb[0].mxu0
      %v3387 = vadd.f32 0.0, %v3386
      %v3388 = vpop.f32.mrb[0].mxu0
      %3389 = vmatprep.mubr.bf16.mxu0 0
      %3390 = vmatmul.mubr.bf16.gmra.mrb[0].mxu0 %v3207
      %v3391 = vpop.f32.mrb[0].mxu0
      %v3392 = vadd.f32 0.0, %v3391
      %v3393 = vpop.f32.mrb[0].mxu0
      %v3394 = vpop.f32.mrb[0].mxu0
      %v3395 = vadd.f32 0.0, %v3394
      %v3396 = vpop.f32.mrb[0].mxu0
      %3397 = vmatprep.mubr.bf16.mxu0 0
      %3398 = vmatmul.mubr.bf16.gmra.mrb[0].mxu0 %v3208
      %v3399 = vpop.f32.mrb[0].mxu0
      %v3400 = vadd.f32 0.0, %v3399
      %v3401 = vpop.f32.mrb[0].mxu0
      %v3402 = vpop.f32.mrb[0].mxu0
      %v3403 = vadd.f32 0.0, %v3402
      %v3404 = vpop.f32.mrb[0].mxu0
      %3405 = vmatprep.mubr.bf16.mxu0 0
      %3406 = vmatmul.mubr.bf16.gmra.mrb[0].mxu0 %v3209
      %v3407 = vpop.f32.mrb[0].mxu0
      %v3408 = vadd.f32 0.0, %v3407
      %v3409 = vpop.f32.mrb[0].mxu0
      %v3410 = vpop.f32.mrb[0].mxu0
      %v3411 = vadd.f32 0.0, %v3410
      %v3412 = vpop.f32.mrb[0].mxu0
      %3413 = vmatprep.mubr.bf16.mxu0 0
      %3414 = vmatmul.mubr.bf16.gmra.mrb[0].mxu0 %v3210
      %v3415 = vpop.f32.mrb[0].mxu0
      %v3416 = vadd.f32 0.0, %v3415
      %v3417 = vpop.f32.mrb[0].mxu0
      %v3418 = vpop.f32.mrb[0].mxu0
      %v3419 = vadd.f32 0.0, %v3418
      %v3420 = vpop.f32.mrb[0].mxu0
      %3421 = vmatprep.mubr.bf16.mxu0 0
      %3422 = vmatmul.mubr.bf16.gmra.mrb[0].mxu0 %v3211
      %v3423 = vpop.f32.mrb[0].mxu0
      %v3424 = vadd.f32 0.0, %v3423
      %v3425 = vpop.f32.mrb[0].mxu0
      %v3426 = vpop.f32.mrb[0].mxu0
      %v3427 = vadd.f32 0.0, %v3426
      %v3428 = vpop.f32.mrb[0].mxu0
      %3429 = vmatprep.mubr.bf16.mxu0 0
      %3430 = vmatmul.mubr.bf16.gmra.mrb[0].mxu0 %v3212
      %v3431 = vpop.f32.mrb[0].mxu0
      %v3432 = vadd.f32 0.0, %v3431
      %v3433 = vpop.f32.mrb[0].mxu0
      %v3434 = vpop.f32.mrb[0].mxu0
      %v3435 = vadd.f32 0.0, %v3434
      %v3436 = vpop.f32.mrb[0].mxu0
      %3437 = vdwg.mxu0
      %v3438 = vadd.f32 %v3051, %v3312
      %v3439 = vadd.f32 %v3052, %v3315
      %v3440 = vadd.f32 %v3053, %v3320
      %v3441 = vadd.f32 %v3054, %v3323
      %v3442 = vadd.f32 %v3055, %v3328
      %v3443 = vadd.f32 %v3056, %v3331
      %v3444 = vadd.f32 %v3057, %v3336
      %v3445 = vadd.f32 %v3058, %v3339
      %v3446 = vadd.f32 %v3059, %v3344
      %v3447 = vadd.f32 %v3060, %v3347
      %v3448 = vadd.f32 %v3061, %v3352
      %v3449 = vadd.f32 %v3062, %v3355
      %v3450 = vadd.f32 %v3063, %v3360
      %v3451 = vadd.f32 %v3064, %v3363
      %v3452 = vadd.f32 %v3065, %v3368
      %v3453 = vadd.f32 %v3066, %v3371
      %v3454 = vadd.f32 %v3067, %v3376
      %v3455 = vadd.f32 %v3068, %v3379
      %v3456 = vadd.f32 %v3069, %v3384
      %v3457 = vadd.f32 %v3070, %v3387
      %v3458 = vadd.f32 %v3071, %v3392
      %v3459 = vadd.f32 %v3072, %v3395
      %v3460 = vadd.f32 %v3073, %v3400
      %v3461 = vadd.f32 %v3074, %v3403
      %v3462 = vadd.f32 %v3075, %v3408
      %v3463 = vadd.f32 %v3076, %v3411
      %v3464 = vadd.f32 %v3077, %v3416
      %v3465 = vadd.f32 %v3078, %v3419
      %v3466 = vadd.f32 %v3079, %v3424
      %v3467 = vadd.f32 %v3080, %v3427
      %v3468 = vadd.f32 %v3081, %v3432
      %v3469 = vadd.f32 %v3082, %v3435
      %s3470 = scalar_lea.vmem %s434, 304
      %v3471 = vld [vmem:[%s3470] sm:$0xf]
      %v3472 = vld [vmem:[%s3470 + $0x4] sm:$0xf]
      %v3473 = vld [vmem:[%s3470 + $0x8] sm:$0xf]
      %v3474 = vld [vmem:[%s3470 + $0xc] sm:$0xf]
      %v3475 = vld [vmem:[%s3470 + $0x10] sm:$0xf]
      %v3476 = vld [vmem:[%s3470 + $0x14] sm:$0xf]
      %v3477 = vld [vmem:[%s3470 + $0x18] sm:$0xf]
      %v3478 = vld [vmem:[%s3470 + $0x1c] sm:$0xf]
      %v3479 = vld [vmem:[%s3470 + $0x20] sm:$0xf]
      %v3480 = vld [vmem:[%s3470 + $0x24] sm:$0xf]
      %v3481 = vld [vmem:[%s3470 + $0x28] sm:$0xf]
      %v3482 = vld [vmem:[%s3470 + $0x2c] sm:$0xf]
      %v3483 = vld [vmem:[%s3470 + $0x30] sm:$0xf]
      %v3484 = vld [vmem:[%s3470 + $0x34] sm:$0xf]
      %v3485 = vld [vmem:[%s3470 + $0x38] sm:$0xf]
      %v3486 = vld [vmem:[%s3470 + $0x3c] sm:$0xf]
      %v3487 = vld [vmem:[%s3470 + $0x40] sm:$0xf]
      %v3488 = vld [vmem:[%s3470 + $0x44] sm:$0xf]
      %v3489 = vld [vmem:[%s3470 + $0x48] sm:$0xf]
      %v3490 = vld [vmem:[%s3470 + $0x4c] sm:$0xf]
      %v3491 = vld [vmem:[%s3470 + $0x50] sm:$0xf]
      %v3492 = vld [vmem:[%s3470 + $0x54] sm:$0xf]
      %v3493 = vld [vmem:[%s3470 + $0x58] sm:$0xf]
      %v3494 = vld [vmem:[%s3470 + $0x5c] sm:$0xf]
      %v3495 = vld [vmem:[%s3470 + $0x60] sm:$0xf]
      %v3496 = vld [vmem:[%s3470 + $0x64] sm:$0xf]
      %v3497 = vld [vmem:[%s3470 + $0x68] sm:$0xf]
      %v3498 = vld [vmem:[%s3470 + $0x6c] sm:$0xf]
      %v3499 = vld [vmem:[%s3470 + $0x70] sm:$0xf]
      %v3500 = vld [vmem:[%s3470 + $0x74] sm:$0xf]
      %v3501 = vld [vmem:[%s3470 + $0x78] sm:$0xf]
      %v3502 = vld [vmem:[%s3470 + $0x7c] sm:$0xf]
      %s3503 = scalar_lea.vmem %s1, 512
      %v3504 = vld [vmem:[%s3503] sm:$0xf]
      %v3505 = vld [vmem:[%s3503 + $0x4] sm:$0xf]
      %v3506 = vld [vmem:[%s3503 + $0x8] sm:$0xf]
      %v3507 = vld [vmem:[%s3503 + $0xc] sm:$0xf]
      %v3508 = vld [vmem:[%s3503 + $0x10] sm:$0xf]
      %v3509 = vld [vmem:[%s3503 + $0x14] sm:$0xf]
      %v3510 = vld [vmem:[%s3503 + $0x18] sm:$0xf]
      %v3511 = vld [vmem:[%s3503 + $0x1c] sm:$0xf]
      %v3512 = vld [vmem:[%s3503 + $0x20] sm:$0xf]
      %v3513 = vld [vmem:[%s3503 + $0x24] sm:$0xf]
      %v3514 = vld [vmem:[%s3503 + $0x28] sm:$0xf]
      %v3515 = vld [vmem:[%s3503 + $0x2c] sm:$0xf]
      %v3516 = vld [vmem:[%s3503 + $0x30] sm:$0xf]
      %v3517 = vld [vmem:[%s3503 + $0x34] sm:$0xf]
      %v3518 = vld [vmem:[%s3503 + $0x38] sm:$0xf]
      %v3519 = vld [vmem:[%s3503 + $0x3c] sm:$0xf]
      %v3552 = vunpack.c.l.b16 %v3471
      %v3553 = vunpack.c.l.b16 %v3472
      %v3554 = vunpack.c.l.b16 %v3473
      %v3555 = vunpack.c.l.b16 %v3474
      %v3556 = vunpack.c.l.b16 %v3475
      %v3557 = vunpack.c.l.b16 %v3476
      %v3558 = vunpack.c.l.b16 %v3477
      %v3559 = vunpack.c.l.b16 %v3478
      %v3560 = vunpack.c.l.b16 %v3479
      %v3561 = vunpack.c.l.b16 %v3480
      %v3562 = vunpack.c.l.b16 %v3481
      %v3563 = vunpack.c.l.b16 %v3482
      %v3564 = vunpack.c.l.b16 %v3483
      %v3565 = vunpack.c.l.b16 %v3484
      %v3566 = vunpack.c.l.b16 %v3485
      %v3567 = vunpack.c.l.b16 %v3486
      %v3568 = vunpack.c.l.b16 %v3487
      %v3569 = vunpack.c.l.b16 %v3488
      %v3570 = vunpack.c.l.b16 %v3489
      %v3571 = vunpack.c.l.b16 %v3490
      %v3572 = vunpack.c.l.b16 %v3491
      %v3573 = vunpack.c.l.b16 %v3492
      %v3574 = vunpack.c.l.b16 %v3493
      %v3575 = vunpack.c.l.b16 %v3494
      %v3576 = vunpack.c.l.b16 %v3495
      %v3577 = vunpack.c.l.b16 %v3496
      %v3578 = vunpack.c.l.b16 %v3497
      %v3579 = vunpack.c.l.b16 %v3498
      %v3580 = vunpack.c.l.b16 %v3499
      %v3581 = vunpack.c.l.b16 %v3500
      %v3582 = vunpack.c.l.b16 %v3501
      %v3583 = vunpack.c.l.b16 %v3502
      %v3584 = vpack.c.b16 %v3553, %v3552
      %v3585 = vpack.c.b16 %v3555, %v3554
      %v3586 = vpack.c.b16 %v3557, %v3556
      %v3587 = vpack.c.b16 %v3559, %v3558
      %v3588 = vpack.c.b16 %v3561, %v3560
      %v3589 = vpack.c.b16 %v3563, %v3562
      %v3590 = vpack.c.b16 %v3565, %v3564
      %v3591 = vpack.c.b16 %v3567, %v3566
      %v3592 = vpack.c.b16 %v3569, %v3568
      %v3593 = vpack.c.b16 %v3571, %v3570
      %v3594 = vpack.c.b16 %v3573, %v3572
      %v3595 = vpack.c.b16 %v3575, %v3574
      %v3596 = vpack.c.b16 %v3577, %v3576
      %v3597 = vpack.c.b16 %v3579, %v3578
      %v3598 = vpack.c.b16 %v3581, %v3580
      %v3599 = vpack.c.b16 %v3583, %v3582
      %v3632 = vunpack.c.l.b16 %v3504
      %v3633 = vunpack.c.l.b16 %v3505
      %v3634 = vunpack.c.l.b16 %v3506
      %v3635 = vunpack.c.l.b16 %v3507
      %v3636 = vunpack.c.l.b16 %v3508
      %v3637 = vunpack.c.l.b16 %v3509
      %v3638 = vunpack.c.l.b16 %v3510
      %v3639 = vunpack.c.l.b16 %v3511
      %v3640 = vunpack.c.l.b16 %v3512
      %v3641 = vunpack.c.l.b16 %v3513
      %v3642 = vunpack.c.l.b16 %v3514
      %v3643 = vunpack.c.l.b16 %v3515
      %v3644 = vunpack.c.l.b16 %v3516
      %v3645 = vunpack.c.l.b16 %v3517
      %v3646 = vunpack.c.l.b16 %v3518
      %v3647 = vunpack.c.l.b16 %v3519
      %v3648 = vpack.c.b16 %v3633, %v3632
      %v3649 = vpack.c.b16 %v3635, %v3634
      %v3650 = vpack.c.b16 %v3637, %v3636
      %v3651 = vpack.c.b16 %v3639, %v3638
      %v3652 = vpack.c.b16 %v3641, %v3640
      %v3653 = vpack.c.b16 %v3643, %v3642
      %v3654 = vpack.c.b16 %v3645, %v3644
      %v3655 = vpack.c.b16 %v3647, %v3646
      %3664 = vmatprep.subr.bf16.mxu0 0
      %3665 = vmatpush1.bf16.msra.mxu0 %v3648
      %3666 = vmatprep.subr.bf16.mxu0 0
      %3667 = vmatpush1.bf16.msra.mxu0 %v3649
      %3668 = vmatprep.subr.bf16.mxu0 0
      %3669 = vmatpush1.bf16.msra.mxu0 %v3650
      %3670 = vmatprep.subr.bf16.mxu0 0
      %3671 = vmatpush1.bf16.msra.mxu0 %v3651
      %3672 = vmatprep.subr.bf16.mxu0 0
      %3673 = vmatpush1.bf16.msra.mxu0 %v3652
      %3674 = vmatprep.subr.bf16.mxu0 0
      %3675 = vmatpush1.bf16.msra.mxu0 %v3653
      %3676 = vmatprep.subr.bf16.mxu0 0
      %3677 = vmatpush1.bf16.msra.mxu0 %v3654
      %3678 = vmatprep.subr.bf16.mxu0 0
      %3679 = vmatpush1.bf16.msra.mxu0 %v3655
      %3680 = vmatprep.subr.bf16.mxu0 0
      %3681 = vmatpush1.bf16.msra.mxu0 0
      %3682 = vmatprep.subr.bf16.mxu0 0
      %3683 = vmatpush1.bf16.msra.mxu0 0
      %3684 = vmatprep.subr.bf16.mxu0 0
      %3685 = vmatpush1.bf16.msra.mxu0 0
      %3686 = vmatprep.subr.bf16.mxu0 0
      %3687 = vmatpush1.bf16.msra.mxu0 0
      %3688 = vmatprep.subr.bf16.mxu0 0
      %3689 = vmatpush1.bf16.msra.mxu0 0
      %3690 = vmatprep.subr.bf16.mxu0 0
      %3691 = vmatpush1.bf16.msra.mxu0 0
      %3692 = vmatprep.subr.bf16.mxu0 0
      %3693 = vmatpush1.bf16.msra.mxu0 0
      %3694 = vmatprep.subr.bf16.mxu0 0
      %3695 = vmatpush1.bf16.msra.mxu0 0
      %3696 = vmatprep.mubr.bf16.mxu0 0
      %3697 = vmatmul.mubr.bf16.gmra.mrb[0].mxu0 %v3584
      %v3698 = vpop.f32.mrb[0].mxu0
      %v3699 = vadd.f32 0.0, %v3698
      %v3700 = vpop.f32.mrb[0].mxu0
      %v3701 = vpop.f32.mrb[0].mxu0
      %v3702 = vadd.f32 0.0, %v3701
      %v3703 = vpop.f32.mrb[0].mxu0
      %3704 = vmatprep.mubr.bf16.mxu0 0
      %3705 = vmatmul.mubr.bf16.gmra.mrb[0].mxu0 %v3585
      %v3706 = vpop.f32.mrb[0].mxu0
      %v3707 = vadd.f32 0.0, %v3706
      %v3708 = vpop.f32.mrb[0].mxu0
      %v3709 = vpop.f32.mrb[0].mxu0
      %v3710 = vadd.f32 0.0, %v3709
      %v3711 = vpop.f32.mrb[0].mxu0
      %3712 = vmatprep.mubr.bf16.mxu0 0
      %3713 = vmatmul.mubr.bf16.gmra.mrb[0].mxu0 %v3586
      %v3714 = vpop.f32.mrb[0].mxu0
      %v3715 = vadd.f32 0.0, %v3714
      %v3716 = vpop.f32.mrb[0].mxu0
      %v3717 = vpop.f32.mrb[0].mxu0
      %v3718 = vadd.f32 0.0, %v3717
      %v3719 = vpop.f32.mrb[0].mxu0
      %3720 = vmatprep.mubr.bf16.mxu0 0
      %3721 = vmatmul.mubr.bf16.gmra.mrb[0].mxu0 %v3587
      %v3722 = vpop.f32.mrb[0].mxu0
      %v3723 = vadd.f32 0.0, %v3722
      %v3724 = vpop.f32.mrb[0].mxu0
      %v3725 = vpop.f32.mrb[0].mxu0
      %v3726 = vadd.f32 0.0, %v3725
      %v3727 = vpop.f32.mrb[0].mxu0
      %3728 = vmatprep.mubr.bf16.mxu0 0
      %3729 = vmatmul.mubr.bf16.gmra.mrb[0].mxu0 %v3588
      %v3730 = vpop.f32.mrb[0].mxu0
      %v3731 = vadd.f32 0.0, %v3730
      %v3732 = vpop.f32.mrb[0].mxu0
      %v3733 = vpop.f32.mrb[0].mxu0
      %v3734 = vadd.f32 0.0, %v3733
      %v3735 = vpop.f32.mrb[0].mxu0
      %3736 = vmatprep.mubr.bf16.mxu0 0
      %3737 = vmatmul.mubr.bf16.gmra.mrb[0].mxu0 %v3589
      %v3738 = vpop.f32.mrb[0].mxu0
      %v3739 = vadd.f32 0.0, %v3738
      %v3740 = vpop.f32.mrb[0].mxu0
      %v3741 = vpop.f32.mrb[0].mxu0
      %v3742 = vadd.f32 0.0, %v3741
      %v3743 = vpop.f32.mrb[0].mxu0
      %3744 = vmatprep.mubr.bf16.mxu0 0
      %3745 = vmatmul.mubr.bf16.gmra.mrb[0].mxu0 %v3590
      %v3746 = vpop.f32.mrb[0].mxu0
      %v3747 = vadd.f32 0.0, %v3746
      %v3748 = vpop.f32.mrb[0].mxu0
      %v3749 = vpop.f32.mrb[0].mxu0
      %v3750 = vadd.f32 0.0, %v3749
      %v3751 = vpop.f32.mrb[0].mxu0
      %3752 = vmatprep.mubr.bf16.mxu0 0
      %3753 = vmatmul.mubr.bf16.gmra.mrb[0].mxu0 %v3591
      %v3754 = vpop.f32.mrb[0].mxu0
      %v3755 = vadd.f32 0.0, %v3754
      %v3756 = vpop.f32.mrb[0].mxu0
      %v3757 = vpop.f32.mrb[0].mxu0
      %v3758 = vadd.f32 0.0, %v3757
      %v3759 = vpop.f32.mrb[0].mxu0
      %3760 = vmatprep.mubr.bf16.mxu0 0
      %3761 = vmatmul.mubr.bf16.gmra.mrb[0].mxu0 %v3592
      %v3762 = vpop.f32.mrb[0].mxu0
      %v3763 = vadd.f32 0.0, %v3762
      %v3764 = vpop.f32.mrb[0].mxu0
      %v3765 = vpop.f32.mrb[0].mxu0
      %v3766 = vadd.f32 0.0, %v3765
      %v3767 = vpop.f32.mrb[0].mxu0
      %3768 = vmatprep.mubr.bf16.mxu0 0
      %3769 = vmatmul.mubr.bf16.gmra.mrb[0].mxu0 %v3593
      %v3770 = vpop.f32.mrb[0].mxu0
      %v3771 = vadd.f32 0.0, %v3770
      %v3772 = vpop.f32.mrb[0].mxu0
      %v3773 = vpop.f32.mrb[0].mxu0
      %v3774 = vadd.f32 0.0, %v3773
      %v3775 = vpop.f32.mrb[0].mxu0
      %3776 = vmatprep.mubr.bf16.mxu0 0
      %3777 = vmatmul.mubr.bf16.gmra.mrb[0].mxu0 %v3594
      %v3778 = vpop.f32.mrb[0].mxu0
      %v3779 = vadd.f32 0.0, %v3778
      %v3780 = vpop.f32.mrb[0].mxu0
      %v3781 = vpop.f32.mrb[0].mxu0
      %v3782 = vadd.f32 0.0, %v3781
      %v3783 = vpop.f32.mrb[0].mxu0
      %3784 = vmatprep.mubr.bf16.mxu0 0
      %3785 = vmatmul.mubr.bf16.gmra.mrb[0].mxu0 %v3595
      %v3786 = vpop.f32.mrb[0].mxu0
      %v3787 = vadd.f32 0.0, %v3786
      %v3788 = vpop.f32.mrb[0].mxu0
      %v3789 = vpop.f32.mrb[0].mxu0
      %v3790 = vadd.f32 0.0, %v3789
      %v3791 = vpop.f32.mrb[0].mxu0
      %3792 = vmatprep.mubr.bf16.mxu0 0
      %3793 = vmatmul.mubr.bf16.gmra.mrb[0].mxu0 %v3596
      %v3794 = vpop.f32.mrb[0].mxu0
      %v3795 = vadd.f32 0.0, %v3794
      %v3796 = vpop.f32.mrb[0].mxu0
      %v3797 = vpop.f32.mrb[0].mxu0
      %v3798 = vadd.f32 0.0, %v3797
      %v3799 = vpop.f32.mrb[0].mxu0
      %3800 = vmatprep.mubr.bf16.mxu0 0
      %3801 = vmatmul.mubr.bf16.gmra.mrb[0].mxu0 %v3597
      %v3802 = vpop.f32.mrb[0].mxu0
      %v3803 = vadd.f32 0.0, %v3802
      %v3804 = vpop.f32.mrb[0].mxu0
      %v3805 = vpop.f32.mrb[0].mxu0
      %v3806 = vadd.f32 0.0, %v3805
      %v3807 = vpop.f32.mrb[0].mxu0
      %3808 = vmatprep.mubr.bf16.mxu0 0
      %3809 = vmatmul.mubr.bf16.gmra.mrb[0].mxu0 %v3598
      %v3810 = vpop.f32.mrb[0].mxu0
      %v3811 = vadd.f32 0.0, %v3810
      %v3812 = vpop.f32.mrb[0].mxu0
      %v3813 = vpop.f32.mrb[0].mxu0
      %v3814 = vadd.f32 0.0, %v3813
      %v3815 = vpop.f32.mrb[0].mxu0
      %3816 = vmatprep.mubr.bf16.mxu0 0
      %3817 = vmatmul.mubr.bf16.gmra.mrb[0].mxu0 %v3599
      %v3818 = vpop.f32.mrb[0].mxu0
      %v3819 = vadd.f32 0.0, %v3818
      %v3820 = vpop.f32.mrb[0].mxu0
      %v3821 = vpop.f32.mrb[0].mxu0
      %v3822 = vadd.f32 0.0, %v3821
      %v3823 = vpop.f32.mrb[0].mxu0
      %3824 = vdwg.mxu0
      %v3825 = vadd.f32 %v3438, %v3699
      %v3826 = vadd.f32 %v3439, %v3702
      %v3827 = vadd.f32 %v3440, %v3707
      %v3828 = vadd.f32 %v3441, %v3710
      %v3829 = vadd.f32 %v3442, %v3715
      %v3830 = vadd.f32 %v3443, %v3718
      %v3831 = vadd.f32 %v3444, %v3723
      %v3832 = vadd.f32 %v3445, %v3726
      %v3833 = vadd.f32 %v3446, %v3731
      %v3834 = vadd.f32 %v3447, %v3734
      %v3835 = vadd.f32 %v3448, %v3739
      %v3836 = vadd.f32 %v3449, %v3742
      %v3837 = vadd.f32 %v3450, %v3747
      %v3838 = vadd.f32 %v3451, %v3750
      %v3839 = vadd.f32 %v3452, %v3755
      %v3840 = vadd.f32 %v3453, %v3758
      %v3841 = vadd.f32 %v3454, %v3763
      %v3842 = vadd.f32 %v3455, %v3766
      %v3843 = vadd.f32 %v3456, %v3771
      %v3844 = vadd.f32 %v3457, %v3774
      %v3845 = vadd.f32 %v3458, %v3779
      %v3846 = vadd.f32 %v3459, %v3782
      %v3847 = vadd.f32 %v3460, %v3787
      %v3848 = vadd.f32 %v3461, %v3790
      %v3849 = vadd.f32 %v3462, %v3795
      %v3850 = vadd.f32 %v3463, %v3798
      %v3851 = vadd.f32 %v3464, %v3803
      %v3852 = vadd.f32 %v3465, %v3806
      %v3853 = vadd.f32 %v3466, %v3811
      %v3854 = vadd.f32 %v3467, %v3814
      %v3855 = vadd.f32 %v3468, %v3819
      %v3856 = vadd.f32 %v3469, %v3822
      %v3857 = vld [vmem:[%s2] sm:$0x1]
      %v3859 = vlaneseq
      %v3860 = vshrl.u32 %v3859, 7
      %v3861 = vsub.s32 0, %v3860
      %v3862 = vrot.slane %v3857, %v3861
      %v3864 = vmul.f32 %v3825, %v3862
      %v3865 = vmul.f32 %v3826, %v3862
      %v3866 = vmul.f32 %v3827, %v3862
      %v3867 = vmul.f32 %v3828, %v3862
      %v3868 = vmul.f32 %v3829, %v3862
      %v3869 = vmul.f32 %v3830, %v3862
      %v3870 = vmul.f32 %v3831, %v3862
      %v3871 = vmul.f32 %v3832, %v3862
      %v3872 = vmul.f32 %v3833, %v3862
      %v3873 = vmul.f32 %v3834, %v3862
      %v3874 = vmul.f32 %v3835, %v3862
      %v3875 = vmul.f32 %v3836, %v3862
      %v3876 = vmul.f32 %v3837, %v3862
      %v3877 = vmul.f32 %v3838, %v3862
      %v3878 = vmul.f32 %v3839, %v3862
      %v3879 = vmul.f32 %v3840, %v3862
      %v3880 = vmul.f32 %v3841, %v3862
      %v3881 = vmul.f32 %v3842, %v3862
      %v3882 = vmul.f32 %v3843, %v3862
      %v3883 = vmul.f32 %v3844, %v3862
      %v3884 = vmul.f32 %v3845, %v3862
      %v3885 = vmul.f32 %v3846, %v3862
      %v3886 = vmul.f32 %v3847, %v3862
      %v3887 = vmul.f32 %v3848, %v3862
      %v3888 = vmul.f32 %v3849, %v3862
      %v3889 = vmul.f32 %v3850, %v3862
      %v3890 = vmul.f32 %v3851, %v3862
      %v3891 = vmul.f32 %v3852, %v3862
      %v3892 = vmul.f32 %v3853, %v3862
      %v3893 = vmul.f32 %v3854, %v3862
      %v3894 = vmul.f32 %v3855, %v3862
      %v3895 = vmul.f32 %v3856, %v3862
      %v3896 = vld [vmem:[%s3] sm:$0x1]
      %v3898 = vlaneseq
      %v3899 = vshrl.u32 %v3898, 7
      %v3900 = vsub.s32 0, %v3899
      %v3901 = vrot.slane %v3896, %v3900
      %v3903 = vadd.f32 %v3864, %v3901
      %v3904 = vadd.f32 %v3865, %v3901
      %v3905 = vadd.f32 %v3866, %v3901
      %v3906 = vadd.f32 %v3867, %v3901
      %v3907 = vadd.f32 %v3868, %v3901
      %v3908 = vadd.f32 %v3869, %v3901
      %v3909 = vadd.f32 %v3870, %v3901
      %v3910 = vadd.f32 %v3871, %v3901
      %v3911 = vadd.f32 %v3872, %v3901
      %v3912 = vadd.f32 %v3873, %v3901
      %v3913 = vadd.f32 %v3874, %v3901
      %v3914 = vadd.f32 %v3875, %v3901
      %v3915 = vadd.f32 %v3876, %v3901
      %v3916 = vadd.f32 %v3877, %v3901
      %v3917 = vadd.f32 %v3878, %v3901
      %v3918 = vadd.f32 %v3879, %v3901
      %v3919 = vadd.f32 %v3880, %v3901
      %v3920 = vadd.f32 %v3881, %v3901
      %v3921 = vadd.f32 %v3882, %v3901
      %v3922 = vadd.f32 %v3883, %v3901
      %v3923 = vadd.f32 %v3884, %v3901
      %v3924 = vadd.f32 %v3885, %v3901
      %v3925 = vadd.f32 %v3886, %v3901
      %v3926 = vadd.f32 %v3887, %v3901
      %v3927 = vadd.f32 %v3888, %v3901
      %v3928 = vadd.f32 %v3889, %v3901
      %v3929 = vadd.f32 %v3890, %v3901
      %v3930 = vadd.f32 %v3891, %v3901
      %v3931 = vadd.f32 %v3892, %v3901
      %v3932 = vadd.f32 %v3893, %v3901
      %v3933 = vadd.f32 %v3894, %v3901
      %v3934 = vadd.f32 %v3895, %v3901
      %v3935 = vmax.f32 %v3903, 0.0
      %v3936 = vmax.f32 %v3904, 0.0
      %v3937 = vmax.f32 %v3905, 0.0
      %v3938 = vmax.f32 %v3906, 0.0
      %v3939 = vmax.f32 %v3907, 0.0
      %v3940 = vmax.f32 %v3908, 0.0
      %v3941 = vmax.f32 %v3909, 0.0
      %v3942 = vmax.f32 %v3910, 0.0
      %v3943 = vmax.f32 %v3911, 0.0
      %v3944 = vmax.f32 %v3912, 0.0
      %v3945 = vmax.f32 %v3913, 0.0
      %v3946 = vmax.f32 %v3914, 0.0
      %v3947 = vmax.f32 %v3915, 0.0
      %v3948 = vmax.f32 %v3916, 0.0
      %v3949 = vmax.f32 %v3917, 0.0
      %v3950 = vmax.f32 %v3918, 0.0
      %v3951 = vmax.f32 %v3919, 0.0
      %v3952 = vmax.f32 %v3920, 0.0
      %v3953 = vmax.f32 %v3921, 0.0
      %v3954 = vmax.f32 %v3922, 0.0
      %v3955 = vmax.f32 %v3923, 0.0
      %v3956 = vmax.f32 %v3924, 0.0
      %v3957 = vmax.f32 %v3925, 0.0
      %v3958 = vmax.f32 %v3926, 0.0
      %v3959 = vmax.f32 %v3927, 0.0
      %v3960 = vmax.f32 %v3928, 0.0
      %v3961 = vmax.f32 %v3929, 0.0
      %v3962 = vmax.f32 %v3930, 0.0
      %v3963 = vmax.f32 %v3931, 0.0
      %v3964 = vmax.f32 %v3932, 0.0
      %v3965 = vmax.f32 %v3933, 0.0
      %v3966 = vmax.f32 %v3934, 0.0
      %v3967 = vpack.c.bf16 %v3936, %v3935
      %v3968 = vpack.c.bf16 %v3938, %v3937
      %v3969 = vpack.c.bf16 %v3940, %v3939
      %v3970 = vpack.c.bf16 %v3942, %v3941
      %v3971 = vpack.c.bf16 %v3944, %v3943
      %v3972 = vpack.c.bf16 %v3946, %v3945
      %v3973 = vpack.c.bf16 %v3948, %v3947
      %v3974 = vpack.c.bf16 %v3950, %v3949
      %v3975 = vpack.c.bf16 %v3952, %v3951
      %v3976 = vpack.c.bf16 %v3954, %v3953
      %v3977 = vpack.c.bf16 %v3956, %v3955
      %v3978 = vpack.c.bf16 %v3958, %v3957
      %v3979 = vpack.c.bf16 %v3960, %v3959
      %v3980 = vpack.c.bf16 %v3962, %v3961
      %v3981 = vpack.c.bf16 %v3964, %v3963
      %v3982 = vpack.c.bf16 %v3966, %v3965
      %s3983 = scalar_lea.vmem [#allocation2], 152
      %3984 = vst [vmem:[%s3983] sm:$0xff] %v3967
      %3985 = vst [vmem:[%s3983 + $0x8] sm:$0xff] %v3968
      %3986 = vst [vmem:[%s3983 + $0x10] sm:$0xff] %v3969
      %3987 = vst [vmem:[%s3983 + $0x18] sm:$0xff] %v3970
      %3988 = vst [vmem:[%s3983 + $0x20] sm:$0xff] %v3971
      %3989 = vst [vmem:[%s3983 + $0x28] sm:$0xff] %v3972
      %3990 = vst [vmem:[%s3983 + $0x30] sm:$0xff] %v3973
      %3991 = vst [vmem:[%s3983 + $0x38] sm:$0xff] %v3974
      %3992 = vst [vmem:[%s3983 + $0x40] sm:$0xff] %v3975
      %3993 = vst [vmem:[%s3983 + $0x48] sm:$0xff] %v3976
      %3994 = vst [vmem:[%s3983 + $0x50] sm:$0xff] %v3977
      %3995 = vst [vmem:[%s3983 + $0x58] sm:$0xff] %v3978
      %3996 = vst [vmem:[%s3983 + $0x60] sm:$0xff] %v3979
      %3997 = vst [vmem:[%s3983 + $0x68] sm:$0xff] %v3980
      %3998 = vst [vmem:[%s3983 + $0x70] sm:$0xff] %v3981
      %3999 = vst [vmem:[%s3983 + $0x78] sm:$0xff] %v3982
      %v4001 = vshrl.u32 %v3967, 16
      %v4003 = vrot.slane %v4001, 7
      %v4004 = vshll.u32 %v3967, 16
      %v4006 = vor.u32 %v4003, %v4004
      %v4008 = vshrl.u32 %v3968, 16
      %v4010 = vrot.slane %v4008, 7
      %v4011 = vshll.u32 %v3968, 16
      %v4013 = vor.u32 %v4010, %v4011
      %v4015 = vshrl.u32 %v3969, 16
      %v4017 = vrot.slane %v4015, 7
      %v4018 = vshll.u32 %v3969, 16
      %v4020 = vor.u32 %v4017, %v4018
      %v4022 = vshrl.u32 %v3970, 16
      %v4024 = vrot.slane %v4022, 7
      %v4025 = vshll.u32 %v3970, 16
      %v4027 = vor.u32 %v4024, %v4025
      %v4029 = vshrl.u32 %v3971, 16
      %v4031 = vrot.slane %v4029, 7
      %v4032 = vshll.u32 %v3971, 16
      %v4034 = vor.u32 %v4031, %v4032
      %v4036 = vshrl.u32 %v3972, 16
      %v4038 = vrot.slane %v4036, 7
      %v4039 = vshll.u32 %v3972, 16
      %v4041 = vor.u32 %v4038, %v4039
      %v4043 = vshrl.u32 %v3973, 16
      %v4045 = vrot.slane %v4043, 7
      %v4046 = vshll.u32 %v3973, 16
      %v4048 = vor.u32 %v4045, %v4046
      %v4050 = vshrl.u32 %v3974, 16
      %v4052 = vrot.slane %v4050, 7
      %v4053 = vshll.u32 %v3974, 16
      %v4055 = vor.u32 %v4052, %v4053
      %v4057 = vshrl.u32 %v3975, 16
      %v4059 = vrot.slane %v4057, 7
      %v4060 = vshll.u32 %v3975, 16
      %v4062 = vor.u32 %v4059, %v4060
      %v4064 = vshrl.u32 %v3976, 16
      %v4066 = vrot.slane %v4064, 7
      %v4067 = vshll.u32 %v3976, 16
      %v4069 = vor.u32 %v4066, %v4067
      %v4071 = vshrl.u32 %v3977, 16
      %v4073 = vrot.slane %v4071, 7
      %v4074 = vshll.u32 %v3977, 16
      %v4076 = vor.u32 %v4073, %v4074
      %v4078 = vshrl.u32 %v3978, 16
      %v4080 = vrot.slane %v4078, 7
      %v4081 = vshll.u32 %v3978, 16
      %v4083 = vor.u32 %v4080, %v4081
      %v4085 = vshrl.u32 %v3979, 16
      %v4087 = vrot.slane %v4085, 7
      %v4088 = vshll.u32 %v3979, 16
      %v4090 = vor.u32 %v4087, %v4088
      %v4092 = vshrl.u32 %v3980, 16
      %v4094 = vrot.slane %v4092, 7
      %v4095 = vshll.u32 %v3980, 16
      %v4097 = vor.u32 %v4094, %v4095
      %v4099 = vshrl.u32 %v3981, 16
      %v4101 = vrot.slane %v4099, 7
      %v4102 = vshll.u32 %v3981, 16
      %v4104 = vor.u32 %v4101, %v4102
      %v4106 = vshrl.u32 %v3982, 16
      %v4108 = vrot.slane %v4106, 7
      %v4109 = vshll.u32 %v3982, 16
      %v4111 = vor.u32 %v4108, %v4109
      %s4128 = scalar_lea.vmem [#allocation2], 8
      %vm4129 = vcmask 1047552
      %vm4130 = vsmask.f32 7938
      %vm4131 = vmand %vm4129, %vm4130
      %v4132 = vld [vmem:[%s4128] sm:$0xff]
      %v4133 = vsel %vm4131, %v4006, %v4132
      %4134 = vst [vmem:[%s4128] sm:$0xff] %v4133
      %v4135 = vld [vmem:[%s4128 + $0x8] sm:$0xff]
      %v4136 = vsel %vm4131, %v4013, %v4135
      %4137 = vst [vmem:[%s4128 + $0x8] sm:$0xff] %v4136
      %v4138 = vld [vmem:[%s4128 + $0x10] sm:$0xff]
      %v4139 = vsel %vm4131, %v4020, %v4138
      %4140 = vst [vmem:[%s4128 + $0x10] sm:$0xff] %v4139
      %v4141 = vld [vmem:[%s4128 + $0x18] sm:$0xff]
      %v4142 = vsel %vm4131, %v4027, %v4141
      %4143 = vst [vmem:[%s4128 + $0x18] sm:$0xff] %v4142
      %v4144 = vld [vmem:[%s4128 + $0x20] sm:$0xff]
      %v4145 = vsel %vm4131, %v4034, %v4144
      %4146 = vst [vmem:[%s4128 + $0x20] sm:$0xff] %v4145
      %v4147 = vld [vmem:[%s4128 + $0x28] sm:$0xff]
      %v4148 = vsel %vm4131, %v4041, %v4147
      %4149 = vst [vmem:[%s4128 + $0x28] sm:$0xff] %v4148
      %v4150 = vld [vmem:[%s4128 + $0x30] sm:$0xff]
      %v4151 = vsel %vm4131, %v4048, %v4150
      %4152 = vst [vmem:[%s4128 + $0x30] sm:$0xff] %v4151
      %v4153 = vld [vmem:[%s4128 + $0x38] sm:$0xff]
      %v4154 = vsel %vm4131, %v4055, %v4153
      %4155 = vst [vmem:[%s4128 + $0x38] sm:$0xff] %v4154
      %v4156 = vld [vmem:[%s4128 + $0x40] sm:$0xff]
      %v4157 = vsel %vm4131, %v4062, %v4156
      %4158 = vst [vmem:[%s4128 + $0x40] sm:$0xff] %v4157
      %v4159 = vld [vmem:[%s4128 + $0x48] sm:$0xff]
      %v4160 = vsel %vm4131, %v4069, %v4159
      %4161 = vst [vmem:[%s4128 + $0x48] sm:$0xff] %v4160
      %v4162 = vld [vmem:[%s4128 + $0x50] sm:$0xff]
      %v4163 = vsel %vm4131, %v4076, %v4162
      %4164 = vst [vmem:[%s4128 + $0x50] sm:$0xff] %v4163
      %v4165 = vld [vmem:[%s4128 + $0x58] sm:$0xff]
      %v4166 = vsel %vm4131, %v4083, %v4165
      %4167 = vst [vmem:[%s4128 + $0x58] sm:$0xff] %v4166
      %v4168 = vld [vmem:[%s4128 + $0x60] sm:$0xff]
      %v4169 = vsel %vm4131, %v4090, %v4168
      %4170 = vst [vmem:[%s4128 + $0x60] sm:$0xff] %v4169
      %v4171 = vld [vmem:[%s4128 + $0x68] sm:$0xff]
      %v4172 = vsel %vm4131, %v4097, %v4171
      %4173 = vst [vmem:[%s4128 + $0x68] sm:$0xff] %v4172
      %v4174 = vld [vmem:[%s4128 + $0x70] sm:$0xff]
      %v4175 = vsel %vm4131, %v4104, %v4174
      %4176 = vst [vmem:[%s4128 + $0x70] sm:$0xff] %v4175
      %v4177 = vld [vmem:[%s4128 + $0x78] sm:$0xff]
      %v4178 = vsel %vm4131, %v4111, %v4177
      %4179 = vst [vmem:[%s4128 + $0x78] sm:$0xff] %v4178
      %vm4180 = vcmask 1040384
      %vm4181 = vsmask.f32 256
      %vm4182 = vmand %vm4180, %vm4181
      %v4183 = vld [vmem:[%s4128] sm:$0x1]
      %v4184 = vsel %vm4182, 0, %v4183
      %4185 = vst [vmem:[%s4128] sm:$0x1] %v4184
      %v4186 = vld [vmem:[%s4128 + $0x8] sm:$0x1]
      %v4187 = vsel %vm4182, 0, %v4186
      %4188 = vst [vmem:[%s4128 + $0x8] sm:$0x1] %v4187
      %v4189 = vld [vmem:[%s4128 + $0x10] sm:$0x1]
      %v4190 = vsel %vm4182, 0, %v4189
      %4191 = vst [vmem:[%s4128 + $0x10] sm:$0x1] %v4190
      %v4192 = vld [vmem:[%s4128 + $0x18] sm:$0x1]
      %v4193 = vsel %vm4182, 0, %v4192
      %4194 = vst [vmem:[%s4128 + $0x18] sm:$0x1] %v4193
      %v4195 = vld [vmem:[%s4128 + $0x20] sm:$0x1]
      %v4196 = vsel %vm4182, 0, %v4195
      %4197 = vst [vmem:[%s4128 + $0x20] sm:$0x1] %v4196
      %v4198 = vld [vmem:[%s4128 + $0x28] sm:$0x1]
      %v4199 = vsel %vm4182, 0, %v4198
      %4200 = vst [vmem:[%s4128 + $0x28] sm:$0x1] %v4199
      %v4201 = vld [vmem:[%s4128 + $0x30] sm:$0x1]
      %v4202 = vsel %vm4182, 0, %v4201
      %4203 = vst [vmem:[%s4128 + $0x30] sm:$0x1] %v4202
      %v4204 = vld [vmem:[%s4128 + $0x38] sm:$0x1]
      %v4205 = vsel %vm4182, 0, %v4204
      %4206 = vst [vmem:[%s4128 + $0x38] sm:$0x1] %v4205
      %v4207 = vld [vmem:[%s4128 + $0x40] sm:$0x1]
      %v4208 = vsel %vm4182, 0, %v4207
      %4209 = vst [vmem:[%s4128 + $0x40] sm:$0x1] %v4208
      %v4210 = vld [vmem:[%s4128 + $0x48] sm:$0x1]
      %v4211 = vsel %vm4182, 0, %v4210
      %4212 = vst [vmem:[%s4128 + $0x48] sm:$0x1] %v4211
      %v4213 = vld [vmem:[%s4128 + $0x50] sm:$0x1]
      %v4214 = vsel %vm4182, 0, %v4213
      %4215 = vst [vmem:[%s4128 + $0x50] sm:$0x1] %v4214
      %v4216 = vld [vmem:[%s4128 + $0x58] sm:$0x1]
      %v4217 = vsel %vm4182, 0, %v4216
      %4218 = vst [vmem:[%s4128 + $0x58] sm:$0x1] %v4217
      %v4219 = vld [vmem:[%s4128 + $0x60] sm:$0x1]
      %v4220 = vsel %vm4182, 0, %v4219
      %4221 = vst [vmem:[%s4128 + $0x60] sm:$0x1] %v4220
      %v4222 = vld [vmem:[%s4128 + $0x68] sm:$0x1]
      %v4223 = vsel %vm4182, 0, %v4222
      %4224 = vst [vmem:[%s4128 + $0x68] sm:$0x1] %v4223
      %v4225 = vld [vmem:[%s4128 + $0x70] sm:$0x1]
      %v4226 = vsel %vm4182, 0, %v4225
      %4227 = vst [vmem:[%s4128 + $0x70] sm:$0x1] %v4226
      %v4228 = vld [vmem:[%s4128 + $0x78] sm:$0x1]
      %v4229 = vsel %vm4182, 0, %v4228
      %4230 = vst [vmem:[%s4128 + $0x78] sm:$0x1] %v4229
      %v4231 = vrot.slane %v4004, 1
      %v4232 = vor.u32 %v4001, %v4231
      %v4233 = vrot.slane %v4011, 1
      %v4234 = vor.u32 %v4008, %v4233
      %v4235 = vrot.slane %v4018, 1
      %v4236 = vor.u32 %v4015, %v4235
      %v4237 = vrot.slane %v4025, 1
      %v4238 = vor.u32 %v4022, %v4237
      %v4239 = vrot.slane %v4032, 1
      %v4240 = vor.u32 %v4029, %v4239
      %v4241 = vrot.slane %v4039, 1
      %v4242 = vor.u32 %v4036, %v4241
      %v4243 = vrot.slane %v4046, 1
      %v4244 = vor.u32 %v4043, %v4243
      %v4245 = vrot.slane %v4053, 1
      %v4246 = vor.u32 %v4050, %v4245
      %v4247 = vrot.slane %v4060, 1
      %v4248 = vor.u32 %v4057, %v4247
      %v4249 = vrot.slane %v4067, 1
      %v4250 = vor.u32 %v4064, %v4249
      %v4251 = vrot.slane %v4074, 1
      %v4252 = vor.u32 %v4071, %v4251
      %v4253 = vrot.slane %v4081, 1
      %v4254 = vor.u32 %v4078, %v4253
      %v4255 = vrot.slane %v4088, 1
      %v4256 = vor.u32 %v4085, %v4255
      %v4257 = vrot.slane %v4095, 1
      %v4258 = vor.u32 %v4092, %v4257
      %v4259 = vrot.slane %v4102, 1
      %v4260 = vor.u32 %v4099, %v4259
      %v4261 = vrot.slane %v4109, 1
      %v4262 = vor.u32 %v4106, %v4261
      %s4279 = scalar_lea.vmem [#allocation2], 296
      %vm4280 = vsmask.f32 7424
      %vm4281 = vmand %vm4129, %vm4280
      %v4282 = vld [vmem:[%s4279] sm:$0xff]
      %v4283 = vsel %vm4281, %v4232, %v4282
      %4284 = vst [vmem:[%s4279] sm:$0xff] %v4283
      %v4285 = vld [vmem:[%s4279 + $0x8] sm:$0xff]
      %v4286 = vsel %vm4281, %v4234, %v4285
      %4287 = vst [vmem:[%s4279 + $0x8] sm:$0xff] %v4286
      %v4288 = vld [vmem:[%s4279 + $0x10] sm:$0xff]
      %v4289 = vsel %vm4281, %v4236, %v4288
      %4290 = vst [vmem:[%s4279 + $0x10] sm:$0xff] %v4289
      %v4291 = vld [vmem:[%s4279 + $0x18] sm:$0xff]
      %v4292 = vsel %vm4281, %v4238, %v4291
      %4293 = vst [vmem:[%s4279 + $0x18] sm:$0xff] %v4292
      %v4294 = vld [vmem:[%s4279 + $0x20] sm:$0xff]
      %v4295 = vsel %vm4281, %v4240, %v4294
      %4296 = vst [vmem:[%s4279 + $0x20] sm:$0xff] %v4295
      %v4297 = vld [vmem:[%s4279 + $0x28] sm:$0xff]
      %v4298 = vsel %vm4281, %v4242, %v4297
      %4299 = vst [vmem:[%s4279 + $0x28] sm:$0xff] %v4298
      %v4300 = vld [vmem:[%s4279 + $0x30] sm:$0xff]
      %v4301 = vsel %vm4281, %v4244, %v4300
      %4302 = vst [vmem:[%s4279 + $0x30] sm:$0xff] %v4301
      %v4303 = vld [vmem:[%s4279 + $0x38] sm:$0xff]
      %v4304 = vsel %vm4281, %v4246, %v4303
      %4305 = vst [vmem:[%s4279 + $0x38] sm:$0xff] %v4304
      %v4306 = vld [vmem:[%s4279 + $0x40] sm:$0xff]
      %v4307 = vsel %vm4281, %v4248, %v4306
      %4308 = vst [vmem:[%s4279 + $0x40] sm:$0xff] %v4307
      %v4309 = vld [vmem:[%s4279 + $0x48] sm:$0xff]
      %v4310 = vsel %vm4281, %v4250, %v4309
      %4311 = vst [vmem:[%s4279 + $0x48] sm:$0xff] %v4310
      %v4312 = vld [vmem:[%s4279 + $0x50] sm:$0xff]
      %v4313 = vsel %vm4281, %v4252, %v4312
      %4314 = vst [vmem:[%s4279 + $0x50] sm:$0xff] %v4313
      %v4315 = vld [vmem:[%s4279 + $0x58] sm:$0xff]
      %v4316 = vsel %vm4281, %v4254, %v4315
      %4317 = vst [vmem:[%s4279 + $0x58] sm:$0xff] %v4316
      %v4318 = vld [vmem:[%s4279 + $0x60] sm:$0xff]
      %v4319 = vsel %vm4281, %v4256, %v4318
      %4320 = vst [vmem:[%s4279 + $0x60] sm:$0xff] %v4319
      %v4321 = vld [vmem:[%s4279 + $0x68] sm:$0xff]
      %v4322 = vsel %vm4281, %v4258, %v4321
      %4323 = vst [vmem:[%s4279 + $0x68] sm:$0xff] %v4322
      %v4324 = vld [vmem:[%s4279 + $0x70] sm:$0xff]
      %v4325 = vsel %vm4281, %v4260, %v4324
      %4326 = vst [vmem:[%s4279 + $0x70] sm:$0xff] %v4325
      %v4327 = vld [vmem:[%s4279 + $0x78] sm:$0xff]
      %v4328 = vsel %vm4281, %v4262, %v4327
      %4329 = vst [vmem:[%s4279 + $0x78] sm:$0xff] %v4328
      %vm4330 = vcmask 1047559
      %vm4331 = vsmask.f32 7966
      %vm4332 = vmand %vm4330, %vm4331
      %v4333 = vld [vmem:[%s4279] sm:$0x80]
      %v4334 = vsel %vm4332, 0, %v4333
      %4335 = vst [vmem:[%s4279] sm:$0x80] %v4334
      %v4336 = vld [vmem:[%s4279 + $0x8] sm:$0x80]
      %v4337 = vsel %vm4332, 0, %v4336
      %4338 = vst [vmem:[%s4279 + $0x8] sm:$0x80] %v4337
      %v4339 = vld [vmem:[%s4279 + $0x10] sm:$0x80]
      %v4340 = vsel %vm4332, 0, %v4339
      %4341 = vst [vmem:[%s4279 + $0x10] sm:$0x80] %v4340
      %v4342 = vld [vmem:[%s4279 + $0x18] sm:$0x80]
      %v4343 = vsel %vm4332, 0, %v4342
      %4344 = vst [vmem:[%s4279 + $0x18] sm:$0x80] %v4343
      %v4345 = vld [vmem:[%s4279 + $0x20] sm:$0x80]
      %v4346 = vsel %vm4332, 0, %v4345
      %4347 = vst [vmem:[%s4279 + $0x20] sm:$0x80] %v4346
      %v4348 = vld [vmem:[%s4279 + $0x28] sm:$0x80]
      %v4349 = vsel %vm4332, 0, %v4348
      %4350 = vst [vmem:[%s4279 + $0x28] sm:$0x80] %v4349
      %v4351 = vld [vmem:[%s4279 + $0x30] sm:$0x80]
      %v4352 = vsel %vm4332, 0, %v4351
      %4353 = vst [vmem:[%s4279 + $0x30] sm:$0x80] %v4352
      %v4354 = vld [vmem:[%s4279 + $0x38] sm:$0x80]
      %v4355 = vsel %vm4332, 0, %v4354
      %4356 = vst [vmem:[%s4279 + $0x38] sm:$0x80] %v4355
      %v4357 = vld [vmem:[%s4279 + $0x40] sm:$0x80]
      %v4358 = vsel %vm4332, 0, %v4357
      %4359 = vst [vmem:[%s4279 + $0x40] sm:$0x80] %v4358
      %v4360 = vld [vmem:[%s4279 + $0x48] sm:$0x80]
      %v4361 = vsel %vm4332, 0, %v4360
      %4362 = vst [vmem:[%s4279 + $0x48] sm:$0x80] %v4361
      %v4363 = vld [vmem:[%s4279 + $0x50] sm:$0x80]
      %v4364 = vsel %vm4332, 0, %v4363
      %4365 = vst [vmem:[%s4279 + $0x50] sm:$0x80] %v4364
      %v4366 = vld [vmem:[%s4279 + $0x58] sm:$0x80]
      %v4367 = vsel %vm4332, 0, %v4366
      %4368 = vst [vmem:[%s4279 + $0x58] sm:$0x80] %v4367
      %v4369 = vld [vmem:[%s4279 + $0x60] sm:$0x80]
      %v4370 = vsel %vm4332, 0, %v4369
      %4371 = vst [vmem:[%s4279 + $0x60] sm:$0x80] %v4370
      %v4372 = vld [vmem:[%s4279 + $0x68] sm:$0x80]
      %v4373 = vsel %vm4332, 0, %v4372
      %4374 = vst [vmem:[%s4279 + $0x68] sm:$0x80] %v4373
      %v4375 = vld [vmem:[%s4279 + $0x70] sm:$0x80]
      %v4376 = vsel %vm4332, 0, %v4375
      %4377 = vst [vmem:[%s4279 + $0x70] sm:$0x80] %v4376
      %v4378 = vld [vmem:[%s4279 + $0x78] sm:$0x80]
      %v4379 = vsel %vm4332, 0, %v4378
      %4380 = vst [vmem:[%s4279 + $0x78] sm:$0x80] %v4379
      %4381 = vst [vmem:[#allocation2] sm:$0xff] 0
      %s4382 = scalar_lea.vmem [#allocation2], 136
      %4383 = vst [vmem:[%s4382] sm:$0xff] 0
      %s4384 = scalar_lea.vmem [#allocation2], 144
      %4385 = vst [vmem:[%s4384] sm:$0xff] 0
      %s4386 = scalar_lea.vmem [#allocation2], 280
      %4387 = vst [vmem:[%s4386] sm:$0xff] 0
      %s4388 = scalar_lea.vmem [#allocation2], 288
      %4389 = vst [vmem:[%s4388] sm:$0xff] 0
      %s4390 = scalar_lea.vmem [#allocation2], 424
      %4391 = vst [vmem:[%s4390] sm:$0xff] 0
      %v4392 = vld [vmem:[#allocation2] sm:$0xff]
      %v4393 = vld [vmem:[#allocation2 + $0x8] sm:$0xff]
      %v4394 = vld [vmem:[#allocation2 + $0x10] sm:$0xff]
      %v4395 = vld [vmem:[#allocation2 + $0x18] sm:$0xff]
      %v4396 = vld [vmem:[#allocation2 + $0x20] sm:$0xff]
      %v4397 = vld [vmem:[#allocation2 + $0x28] sm:$0xff]
      %v4398 = vld [vmem:[#allocation2 + $0x30] sm:$0xff]
      %v4399 = vld [vmem:[#allocation2 + $0x38] sm:$0xff]
      %v4400 = vld [vmem:[#allocation2 + $0x40] sm:$0xff]
      %v4401 = vld [vmem:[#allocation2 + $0x48] sm:$0xff]
      %v4402 = vld [vmem:[#allocation2 + $0x50] sm:$0xff]
      %v4403 = vld [vmem:[#allocation2 + $0x58] sm:$0xff]
      %v4404 = vld [vmem:[#allocation2 + $0x60] sm:$0xff]
      %v4405 = vld [vmem:[#allocation2 + $0x68] sm:$0xff]
      %v4406 = vld [vmem:[#allocation2 + $0x70] sm:$0xff]
      %v4407 = vld [vmem:[#allocation2 + $0x78] sm:$0xff]
      %v4408 = vld [vmem:[%s4] sm:$0xf]
      %v4409 = vld [vmem:[%s4 + $0x4] sm:$0xf]
      %v4410 = vld [vmem:[%s4 + $0x8] sm:$0xf]
      %v4411 = vld [vmem:[%s4 + $0xc] sm:$0xf]
      %v4412 = vld [vmem:[%s4 + $0x10] sm:$0xf]
      %v4413 = vld [vmem:[%s4 + $0x14] sm:$0xf]
      %v4414 = vld [vmem:[%s4 + $0x18] sm:$0xf]
      %v4415 = vld [vmem:[%s4 + $0x1c] sm:$0xf]
      %v4416 = vld [vmem:[%s4 + $0x20] sm:$0xf]
      %v4417 = vld [vmem:[%s4 + $0x24] sm:$0xf]
      %v4418 = vld [vmem:[%s4 + $0x28] sm:$0xf]
      %v4419 = vld [vmem:[%s4 + $0x2c] sm:$0xf]
      %v4420 = vld [vmem:[%s4 + $0x30] sm:$0xf]
      %v4421 = vld [vmem:[%s4 + $0x34] sm:$0xf]
      %v4422 = vld [vmem:[%s4 + $0x38] sm:$0xf]
      %v4423 = vld [vmem:[%s4 + $0x3c] sm:$0xf]
      %v4424 = vld [vmem:[%s4384] sm:$0xff]
      %v4425 = vld [vmem:[%s4384 + $0x8] sm:$0xff]
      %v4426 = vld [vmem:[%s4384 + $0x10] sm:$0xff]
      %v4427 = vld [vmem:[%s4384 + $0x18] sm:$0xff]
      %v4428 = vld [vmem:[%s4384 + $0x20] sm:$0xff]
      %v4429 = vld [vmem:[%s4384 + $0x28] sm:$0xff]
      %v4430 = vld [vmem:[%s4384 + $0x30] sm:$0xff]
      %v4431 = vld [vmem:[%s4384 + $0x38] sm:$0xff]
      %v4432 = vld [vmem:[%s4384 + $0x40] sm:$0xff]
      %v4433 = vld [vmem:[%s4384 + $0x48] sm:$0xff]
      %v4434 = vld [vmem:[%s4384 + $0x50] sm:$0xff]
      %v4435 = vld [vmem:[%s4384 + $0x58] sm:$0xff]
      %v4436 = vld [vmem:[%s4384 + $0x60] sm:$0xff]
      %v4437 = vld [vmem:[%s4384 + $0x68] sm:$0xff]
      %v4438 = vld [vmem:[%s4384 + $0x70] sm:$0xff]
      %v4439 = vld [vmem:[%s4384 + $0x78] sm:$0xff]
      %s4440 = scalar_lea.vmem %s4, 64
      %v4441 = vld [vmem:[%s4440] sm:$0xf]
      %v4442 = vld [vmem:[%s4440 + $0x4] sm:$0xf]
      %v4443 = vld [vmem:[%s4440 + $0x8] sm:$0xf]
      %v4444 = vld [vmem:[%s4440 + $0xc] sm:$0xf]
      %v4445 = vld [vmem:[%s4440 + $0x10] sm:$0xf]
      %v4446 = vld [vmem:[%s4440 + $0x14] sm:$0xf]
      %v4447 = vld [vmem:[%s4440 + $0x18] sm:$0xf]
      %v4448 = vld [vmem:[%s4440 + $0x1c] sm:$0xf]
      %v4449 = vld [vmem:[%s4440 + $0x20] sm:$0xf]
      %v4450 = vld [vmem:[%s4440 + $0x24] sm:$0xf]
      %v4451 = vld [vmem:[%s4440 + $0x28] sm:$0xf]
      %v4452 = vld [vmem:[%s4440 + $0x2c] sm:$0xf]
      %v4453 = vld [vmem:[%s4440 + $0x30] sm:$0xf]
      %v4454 = vld [vmem:[%s4440 + $0x34] sm:$0xf]
      %v4455 = vld [vmem:[%s4440 + $0x38] sm:$0xf]
      %v4456 = vld [vmem:[%s4440 + $0x3c] sm:$0xf]
      %v4473 = vunpack.c.l.b16 %v4441
      %v4474 = vunpack.c.l.b16 %v4442
      %v4475 = vunpack.c.l.b16 %v4443
      %v4476 = vunpack.c.l.b16 %v4444
      %v4477 = vunpack.c.l.b16 %v4445
      %v4478 = vunpack.c.l.b16 %v4446
      %v4479 = vunpack.c.l.b16 %v4447
      %v4480 = vunpack.c.l.b16 %v4448
      %v4481 = vunpack.c.l.b16 %v4449
      %v4482 = vunpack.c.l.b16 %v4450
      %v4483 = vunpack.c.l.b16 %v4451
      %v4484 = vunpack.c.l.b16 %v4452
      %v4485 = vunpack.c.l.b16 %v4453
      %v4486 = vunpack.c.l.b16 %v4454
      %v4487 = vunpack.c.l.b16 %v4455
      %v4488 = vunpack.c.l.b16 %v4456
      %v4489 = vpack.c.b16 %v4474, %v4473
      %v4490 = vpack.c.b16 %v4476, %v4475
      %v4491 = vpack.c.b16 %v4478, %v4477
      %v4492 = vpack.c.b16 %v4480, %v4479
      %v4493 = vpack.c.b16 %v4482, %v4481
      %v4494 = vpack.c.b16 %v4484, %v4483
      %v4495 = vpack.c.b16 %v4486, %v4485
      %v4496 = vpack.c.b16 %v4488, %v4487
      %4505 = vmatprep.subr.bf16.mxu0 0
      %4506 = vmatpush1.bf16.msra.mxu0 %v4489
      %4507 = vmatprep.subr.bf16.mxu0 0
      %4508 = vmatpush1.bf16.msra.mxu0 %v4490
      %4509 = vmatprep.subr.bf16.mxu0 0
      %4510 = vmatpush1.bf16.msra.mxu0 %v4491
      %4511 = vmatprep.subr.bf16.mxu0 0
      %4512 = vmatpush1.bf16.msra.mxu0 %v4492
      %4513 = vmatprep.subr.bf16.mxu0 0
      %4514 = vmatpush1.bf16.msra.mxu0 %v4493
      %4515 = vmatprep.subr.bf16.mxu0 0
      %4516 = vmatpush1.bf16.msra.mxu0 %v4494
      %4517 = vmatprep.subr.bf16.mxu0 0
      %4518 = vmatpush1.bf16.msra.mxu0 %v4495
      %4519 = vmatprep.subr.bf16.mxu0 0
      %4520 = vmatpush1.bf16.msra.mxu0 %v4496
      %4521 = vmatprep.subr.bf16.mxu0 0
      %4522 = vmatpush1.bf16.msra.mxu0 0
      %4523 = vmatprep.subr.bf16.mxu0 0
      %4524 = vmatpush1.bf16.msra.mxu0 0
      %4525 = vmatprep.subr.bf16.mxu0 0
      %4526 = vmatpush1.bf16.msra.mxu0 0
      %4527 = vmatprep.subr.bf16.mxu0 0
      %4528 = vmatpush1.bf16.msra.mxu0 0
      %4529 = vmatprep.subr.bf16.mxu0 0
      %4530 = vmatpush1.bf16.msra.mxu0 0
      %4531 = vmatprep.subr.bf16.mxu0 0
      %4532 = vmatpush1.bf16.msra.mxu0 0
      %4533 = vmatprep.subr.bf16.mxu0 0
      %4534 = vmatpush1.bf16.msra.mxu0 0
      %4535 = vmatprep.subr.bf16.mxu0 0
      %4536 = vmatpush1.bf16.msra.mxu0 0
      %4537 = vmatprep.mubr.bf16.mxu0 0
      %4538 = vmatmul.mubr.bf16.gmra.mrb[0].mxu0 %v4424
      %v4539 = vpop.f32.mrb[0].mxu0
      %v4540 = vadd.f32 0.0, %v4539
      %v4541 = vpop.f32.mrb[0].mxu0
      %v4542 = vpop.f32.mrb[0].mxu0
      %v4543 = vadd.f32 0.0, %v4542
      %v4544 = vpop.f32.mrb[0].mxu0
      %4545 = vmatprep.mubr.bf16.mxu0 0
      %4546 = vmatmul.mubr.bf16.gmra.mrb[0].mxu0 %v4425
      %v4547 = vpop.f32.mrb[0].mxu0
      %v4548 = vadd.f32 0.0, %v4547
      %v4549 = vpop.f32.mrb[0].mxu0
      %v4550 = vpop.f32.mrb[0].mxu0
      %v4551 = vadd.f32 0.0, %v4550
      %v4552 = vpop.f32.mrb[0].mxu0
      %4553 = vmatprep.mubr.bf16.mxu0 0
      %4554 = vmatmul.mubr.bf16.gmra.mrb[0].mxu0 %v4426
      %v4555 = vpop.f32.mrb[0].mxu0
      %v4556 = vadd.f32 0.0, %v4555
      %v4557 = vpop.f32.mrb[0].mxu0
      %v4558 = vpop.f32.mrb[0].mxu0
      %v4559 = vadd.f32 0.0, %v4558
      %v4560 = vpop.f32.mrb[0].mxu0
      %4561 = vmatprep.mubr.bf16.mxu0 0
      %4562 = vmatmul.mubr.bf16.gmra.mrb[0].mxu0 %v4427
      %v4563 = vpop.f32.mrb[0].mxu0
      %v4564 = vadd.f32 0.0, %v4563
      %v4565 = vpop.f32.mrb[0].mxu0
      %v4566 = vpop.f32.mrb[0].mxu0
      %v4567 = vadd.f32 0.0, %v4566
      %v4568 = vpop.f32.mrb[0].mxu0
      %4569 = vmatprep.mubr.bf16.mxu0 0
      %4570 = vmatmul.mubr.bf16.gmra.mrb[0].mxu0 %v4428
      %v4571 = vpop.f32.mrb[0].mxu0
      %v4572 = vadd.f32 0.0, %v4571
      %v4573 = vpop.f32.mrb[0].mxu0
      %v4574 = vpop.f32.mrb[0].mxu0
      %v4575 = vadd.f32 0.0, %v4574
      %v4576 = vpop.f32.mrb[0].mxu0
      %4577 = vmatprep.mubr.bf16.mxu0 0
      %4578 = vmatmul.mubr.bf16.gmra.mrb[0].mxu0 %v4429
      %v4579 = vpop.f32.mrb[0].mxu0
      %v4580 = vadd.f32 0.0, %v4579
      %v4581 = vpop.f32.mrb[0].mxu0
      %v4582 = vpop.f32.mrb[0].mxu0
      %v4583 = vadd.f32 0.0, %v4582
      %v4584 = vpop.f32.mrb[0].mxu0
      %4585 = vmatprep.mubr.bf16.mxu0 0
      %4586 = vmatmul.mubr.bf16.gmra.mrb[0].mxu0 %v4430
      %v4587 = vpop.f32.mrb[0].mxu0
      %v4588 = vadd.f32 0.0, %v4587
      %v4589 = vpop.f32.mrb[0].mxu0
      %v4590 = vpop.f32.mrb[0].mxu0
      %v4591 = vadd.f32 0.0, %v4590
      %v4592 = vpop.f32.mrb[0].mxu0
      %4593 = vmatprep.mubr.bf16.mxu0 0
      %4594 = vmatmul.mubr.bf16.gmra.mrb[0].mxu0 %v4431
      %v4595 = vpop.f32.mrb[0].mxu0
      %v4596 = vadd.f32 0.0, %v4595
      %v4597 = vpop.f32.mrb[0].mxu0
      %v4598 = vpop.f32.mrb[0].mxu0
      %v4599 = vadd.f32 0.0, %v4598
      %v4600 = vpop.f32.mrb[0].mxu0
      %4601 = vmatprep.mubr.bf16.mxu0 0
      %4602 = vmatmul.mubr.bf16.gmra.mrb[0].mxu0 %v4432
      %v4603 = vpop.f32.mrb[0].mxu0
      %v4604 = vadd.f32 0.0, %v4603
      %v4605 = vpop.f32.mrb[0].mxu0
      %v4606 = vpop.f32.mrb[0].mxu0
      %v4607 = vadd.f32 0.0, %v4606
      %v4608 = vpop.f32.mrb[0].mxu0
      %4609 = vmatprep.mubr.bf16.mxu0 0
      %4610 = vmatmul.mubr.bf16.gmra.mrb[0].mxu0 %v4433
      %v4611 = vpop.f32.mrb[0].mxu0
      %v4612 = vadd.f32 0.0, %v4611
      %v4613 = vpop.f32.mrb[0].mxu0
      %v4614 = vpop.f32.mrb[0].mxu0
      %v4615 = vadd.f32 0.0, %v4614
      %v4616 = vpop.f32.mrb[0].mxu0
      %4617 = vmatprep.mubr.bf16.mxu0 0
      %4618 = vmatmul.mubr.bf16.gmra.mrb[0].mxu0 %v4434
      %v4619 = vpop.f32.mrb[0].mxu0
      %v4620 = vadd.f32 0.0, %v4619
      %v4621 = vpop.f32.mrb[0].mxu0
      %v4622 = vpop.f32.mrb[0].mxu0
      %v4623 = vadd.f32 0.0, %v4622
      %v4624 = vpop.f32.mrb[0].mxu0
      %4625 = vmatprep.mubr.bf16.mxu0 0
      %4626 = vmatmul.mubr.bf16.gmra.mrb[0].mxu0 %v4435
      %v4627 = vpop.f32.mrb[0].mxu0
      %v4628 = vadd.f32 0.0, %v4627
      %v4629 = vpop.f32.mrb[0].mxu0
      %v4630 = vpop.f32.mrb[0].mxu0
      %v4631 = vadd.f32 0.0, %v4630
      %v4632 = vpop.f32.mrb[0].mxu0
      %4633 = vmatprep.mubr.bf16.mxu0 0
      %4634 = vmatmul.mubr.bf16.gmra.mrb[0].mxu0 %v4436
      %v4635 = vpop.f32.mrb[0].mxu0
      %v4636 = vadd.f32 0.0, %v4635
      %v4637 = vpop.f32.mrb[0].mxu0
      %v4638 = vpop.f32.mrb[0].mxu0
      %v4639 = vadd.f32 0.0, %v4638
      %v4640 = vpop.f32.mrb[0].mxu0
      %4641 = vmatprep.mubr.bf16.mxu0 0
      %4642 = vmatmul.mubr.bf16.gmra.mrb[0].mxu0 %v4437
      %v4643 = vpop.f32.mrb[0].mxu0
      %v4644 = vadd.f32 0.0, %v4643
      %v4645 = vpop.f32.mrb[0].mxu0
      %v4646 = vpop.f32.mrb[0].mxu0
      %v4647 = vadd.f32 0.0, %v4646
      %v4648 = vpop.f32.mrb[0].mxu0
      %4649 = vmatprep.mubr.bf16.mxu0 0
      %4650 = vmatmul.mubr.bf16.gmra.mrb[0].mxu0 %v4438
      %v4651 = vpop.f32.mrb[0].mxu0
      %v4652 = vadd.f32 0.0, %v4651
      %v4653 = vpop.f32.mrb[0].mxu0
      %v4654 = vpop.f32.mrb[0].mxu0
      %v4655 = vadd.f32 0.0, %v4654
      %v4656 = vpop.f32.mrb[0].mxu0
      %4657 = vmatprep.mubr.bf16.mxu0 0
      %4658 = vmatmul.mubr.bf16.gmra.mrb[0].mxu0 %v4439
      %v4659 = vpop.f32.mrb[0].mxu0
      %v4660 = vadd.f32 0.0, %v4659
      %v4661 = vpop.f32.mrb[0].mxu0
      %v4662 = vpop.f32.mrb[0].mxu0
      %v4663 = vadd.f32 0.0, %v4662
      %v4664 = vpop.f32.mrb[0].mxu0
      %4665 = vdwg.mxu0
      %v4682 = vunpack.c.l.b16 %v4408
      %v4683 = vunpack.c.l.b16 %v4409
      %v4684 = vunpack.c.l.b16 %v4410
      %v4685 = vunpack.c.l.b16 %v4411
      %v4686 = vunpack.c.l.b16 %v4412
      %v4687 = vunpack.c.l.b16 %v4413
      %v4688 = vunpack.c.l.b16 %v4414
      %v4689 = vunpack.c.l.b16 %v4415
      %v4690 = vunpack.c.l.b16 %v4416
      %v4691 = vunpack.c.l.b16 %v4417
      %v4692 = vunpack.c.l.b16 %v4418
      %v4693 = vunpack.c.l.b16 %v4419
      %v4694 = vunpack.c.l.b16 %v4420
      %v4695 = vunpack.c.l.b16 %v4421
      %v4696 = vunpack.c.l.b16 %v4422
      %v4697 = vunpack.c.l.b16 %v4423
      %v4698 = vpack.c.b16 %v4683, %v4682
      %v4699 = vpack.c.b16 %v4685, %v4684
      %v4700 = vpack.c.b16 %v4687, %v4686
      %v4701 = vpack.c.b16 %v4689, %v4688
      %v4702 = vpack.c.b16 %v4691, %v4690
      %v4703 = vpack.c.b16 %v4693, %v4692
      %v4704 = vpack.c.b16 %v4695, %v4694
      %v4705 = vpack.c.b16 %v4697, %v4696
      %4714 = vmatprep.subr.bf16.mxu0 0
      %4715 = vmatpush1.bf16.msra.mxu0 %v4698
      %4716 = vmatprep.subr.bf16.mxu0 0
      %4717 = vmatpush1.bf16.msra.mxu0 %v4699
      %4718 = vmatprep.subr.bf16.mxu0 0
      %4719 = vmatpush1.bf16.msra.mxu0 %v4700
      %4720 = vmatprep.subr.bf16.mxu0 0
      %4721 = vmatpush1.bf16.msra.mxu0 %v4701
      %4722 = vmatprep.subr.bf16.mxu0 0
      %4723 = vmatpush1.bf16.msra.mxu0 %v4702
      %4724 = vmatprep.subr.bf16.mxu0 0
      %4725 = vmatpush1.bf16.msra.mxu0 %v4703
      %4726 = vmatprep.subr.bf16.mxu0 0
      %4727 = vmatpush1.bf16.msra.mxu0 %v4704
      %4728 = vmatprep.subr.bf16.mxu0 0
      %4729 = vmatpush1.bf16.msra.mxu0 %v4705
      %4730 = vmatprep.subr.bf16.mxu0 0
      %4731 = vmatpush1.bf16.msra.mxu0 0
      %4732 = vmatprep.subr.bf16.mxu0 0
      %4733 = vmatpush1.bf16.msra.mxu0 0
      %4734 = vmatprep.subr.bf16.mxu0 0
      %4735 = vmatpush1.bf16.msra.mxu0 0
      %4736 = vmatprep.subr.bf16.mxu0 0
      %4737 = vmatpush1.bf16.msra.mxu0 0
      %4738 = vmatprep.subr.bf16.mxu0 0
      %4739 = vmatpush1.bf16.msra.mxu0 0
      %4740 = vmatprep.subr.bf16.mxu0 0
      %4741 = vmatpush1.bf16.msra.mxu0 0
      %4742 = vmatprep.subr.bf16.mxu0 0
      %4743 = vmatpush1.bf16.msra.mxu0 0
      %4744 = vmatprep.subr.bf16.mxu0 0
      %4745 = vmatpush1.bf16.msra.mxu0 0
      %4746 = vmatprep.mubr.bf16.mxu0 0
      %4747 = vmatmul.mubr.bf16.gmra.mrb[0].mxu0 %v4392
      %v4748 = vpop.f32.mrb[0].mxu0
      %v4749 = vadd.f32 %v4540, %v4748
      %v4750 = vpop.f32.mrb[0].mxu0
      %v4751 = vpop.f32.mrb[0].mxu0
      %v4752 = vadd.f32 %v4543, %v4751
      %v4753 = vpop.f32.mrb[0].mxu0
      %4754 = vmatprep.mubr.bf16.mxu0 0
      %4755 = vmatmul.mubr.bf16.gmra.mrb[0].mxu0 %v4393
      %v4756 = vpop.f32.mrb[0].mxu0
      %v4757 = vadd.f32 %v4548, %v4756
      %v4758 = vpop.f32.mrb[0].mxu0
      %v4759 = vpop.f32.mrb[0].mxu0
      %v4760 = vadd.f32 %v4551, %v4759
      %v4761 = vpop.f32.mrb[0].mxu0
      %4762 = vmatprep.mubr.bf16.mxu0 0
      %4763 = vmatmul.mubr.bf16.gmra.mrb[0].mxu0 %v4394
      %v4764 = vpop.f32.mrb[0].mxu0
      %v4765 = vadd.f32 %v4556, %v4764
      %v4766 = vpop.f32.mrb[0].mxu0
      %v4767 = vpop.f32.mrb[0].mxu0
      %v4768 = vadd.f32 %v4559, %v4767
      %v4769 = vpop.f32.mrb[0].mxu0
      %4770 = vmatprep.mubr.bf16.mxu0 0
      %4771 = vmatmul.mubr.bf16.gmra.mrb[0].mxu0 %v4395
      %v4772 = vpop.f32.mrb[0].mxu0
      %v4773 = vadd.f32 %v4564, %v4772
      %v4774 = vpop.f32.mrb[0].mxu0
      %v4775 = vpop.f32.mrb[0].mxu0
      %v4776 = vadd.f32 %v4567, %v4775
      %v4777 = vpop.f32.mrb[0].mxu0
      %4778 = vmatprep.mubr.bf16.mxu0 0
      %4779 = vmatmul.mubr.bf16.gmra.mrb[0].mxu0 %v4396
      %v4780 = vpop.f32.mrb[0].mxu0
      %v4781 = vadd.f32 %v4572, %v4780
      %v4782 = vpop.f32.mrb[0].mxu0
      %v4783 = vpop.f32.mrb[0].mxu0
      %v4784 = vadd.f32 %v4575, %v4783
      %v4785 = vpop.f32.mrb[0].mxu0
      %4786 = vmatprep.mubr.bf16.mxu0 0
      %4787 = vmatmul.mubr.bf16.gmra.mrb[0].mxu0 %v4397
      %v4788 = vpop.f32.mrb[0].mxu0
      %v4789 = vadd.f32 %v4580, %v4788
      %v4790 = vpop.f32.mrb[0].mxu0
      %v4791 = vpop.f32.mrb[0].mxu0
      %v4792 = vadd.f32 %v4583, %v4791
      %v4793 = vpop.f32.mrb[0].mxu0
      %4794 = vmatprep.mubr.bf16.mxu0 0
      %4795 = vmatmul.mubr.bf16.gmra.mrb[0].mxu0 %v4398
      %v4796 = vpop.f32.mrb[0].mxu0
      %v4797 = vadd.f32 %v4588, %v4796
      %v4798 = vpop.f32.mrb[0].mxu0
      %v4799 = vpop.f32.mrb[0].mxu0
      %v4800 = vadd.f32 %v4591, %v4799
      %v4801 = vpop.f32.mrb[0].mxu0
      %4802 = vmatprep.mubr.bf16.mxu0 0
      %4803 = vmatmul.mubr.bf16.gmra.mrb[0].mxu0 %v4399
      %v4804 = vpop.f32.mrb[0].mxu0
      %v4805 = vadd.f32 %v4596, %v4804
      %v4806 = vpop.f32.mrb[0].mxu0
      %v4807 = vpop.f32.mrb[0].mxu0
      %v4808 = vadd.f32 %v4599, %v4807
      %v4809 = vpop.f32.mrb[0].mxu0
      %4810 = vmatprep.mubr.bf16.mxu0 0
      %4811 = vmatmul.mubr.bf16.gmra.mrb[0].mxu0 %v4400
      %v4812 = vpop.f32.mrb[0].mxu0
      %v4813 = vadd.f32 %v4604, %v4812
      %v4814 = vpop.f32.mrb[0].mxu0
      %v4815 = vpop.f32.mrb[0].mxu0
      %v4816 = vadd.f32 %v4607, %v4815
      %v4817 = vpop.f32.mrb[0].mxu0
      %4818 = vmatprep.mubr.bf16.mxu0 0
      %4819 = vmatmul.mubr.bf16.gmra.mrb[0].mxu0 %v4401
      %v4820 = vpop.f32.mrb[0].mxu0
      %v4821 = vadd.f32 %v4612, %v4820
      %v4822 = vpop.f32.mrb[0].mxu0
      %v4823 = vpop.f32.mrb[0].mxu0
      %v4824 = vadd.f32 %v4615, %v4823
      %v4825 = vpop.f32.mrb[0].mxu0
      %4826 = vmatprep.mubr.bf16.mxu0 0
      %4827 = vmatmul.mubr.bf16.gmra.mrb[0].mxu0 %v4402
      %v4828 = vpop.f32.mrb[0].mxu0
      %v4829 = vadd.f32 %v4620, %v4828
      %v4830 = vpop.f32.mrb[0].mxu0
      %v4831 = vpop.f32.mrb[0].mxu0
      %v4832 = vadd.f32 %v4623, %v4831
      %v4833 = vpop.f32.mrb[0].mxu0
      %4834 = vmatprep.mubr.bf16.mxu0 0
      %4835 = vmatmul.mubr.bf16.gmra.mrb[0].mxu0 %v4403
      %v4836 = vpop.f32.mrb[0].mxu0
      %v4837 = vadd.f32 %v4628, %v4836
      %v4838 = vpop.f32.mrb[0].mxu0
      %v4839 = vpop.f32.mrb[0].mxu0
      %v4840 = vadd.f32 %v4631, %v4839
      %v4841 = vpop.f32.mrb[0].mxu0
      %4842 = vmatprep.mubr.bf16.mxu0 0
      %4843 = vmatmul.mubr.bf16.gmra.mrb[0].mxu0 %v4404
      %v4844 = vpop.f32.mrb[0].mxu0
      %v4845 = vadd.f32 %v4636, %v4844
      %v4846 = vpop.f32.mrb[0].mxu0
      %v4847 = vpop.f32.mrb[0].mxu0
      %v4848 = vadd.f32 %v4639, %v4847
      %v4849 = vpop.f32.mrb[0].mxu0
      %4850 = vmatprep.mubr.bf16.mxu0 0
      %4851 = vmatmul.mubr.bf16.gmra.mrb[0].mxu0 %v4405
      %v4852 = vpop.f32.mrb[0].mxu0
      %v4853 = vadd.f32 %v4644, %v4852
      %v4854 = vpop.f32.mrb[0].mxu0
      %v4855 = vpop.f32.mrb[0].mxu0
      %v4856 = vadd.f32 %v4647, %v4855
      %v4857 = vpop.f32.mrb[0].mxu0
      %4858 = vmatprep.mubr.bf16.mxu0 0
      %4859 = vmatmul.mubr.bf16.gmra.mrb[0].mxu0 %v4406
      %v4860 = vpop.f32.mrb[0].mxu0
      %v4861 = vadd.f32 %v4652, %v4860
      %v4862 = vpop.f32.mrb[0].mxu0
      %v4863 = vpop.f32.mrb[0].mxu0
      %v4864 = vadd.f32 %v4655, %v4863
      %v4865 = vpop.f32.mrb[0].mxu0
      %4866 = vmatprep.mubr.bf16.mxu0 0
      %4867 = vmatmul.mubr.bf16.gmra.mrb[0].mxu0 %v4407
      %v4868 = vpop.f32.mrb[0].mxu0
      %v4869 = vadd.f32 %v4660, %v4868
      %v4870 = vpop.f32.mrb[0].mxu0
      %v4871 = vpop.f32.mrb[0].mxu0
      %v4872 = vadd.f32 %v4663, %v4871
      %v4873 = vpop.f32.mrb[0].mxu0
      %4874 = vdwg.mxu0
      %v4875 = vld [vmem:[%s4388] sm:$0xff]
      %v4876 = vld [vmem:[%s4388 + $0x8] sm:$0xff]
      %v4877 = vld [vmem:[%s4388 + $0x10] sm:$0xff]
      %v4878 = vld [vmem:[%s4388 + $0x18] sm:$0xff]
      %v4879 = vld [vmem:[%s4388 + $0x20] sm:$0xff]
      %v4880 = vld [vmem:[%s4388 + $0x28] sm:$0xff]
      %v4881 = vld [vmem:[%s4388 + $0x30] sm:$0xff]
      %v4882 = vld [vmem:[%s4388 + $0x38] sm:$0xff]
      %v4883 = vld [vmem:[%s4388 + $0x40] sm:$0xff]
      %v4884 = vld [vmem:[%s4388 + $0x48] sm:$0xff]
      %v4885 = vld [vmem:[%s4388 + $0x50] sm:$0xff]
      %v4886 = vld [vmem:[%s4388 + $0x58] sm:$0xff]
      %v4887 = vld [vmem:[%s4388 + $0x60] sm:$0xff]
      %v4888 = vld [vmem:[%s4388 + $0x68] sm:$0xff]
      %v4889 = vld [vmem:[%s4388 + $0x70] sm:$0xff]
      %v4890 = vld [vmem:[%s4388 + $0x78] sm:$0xff]
      %s4891 = scalar_lea.vmem %s4, 128
      %v4892 = vld [vmem:[%s4891] sm:$0xf]
      %v4893 = vld [vmem:[%s4891 + $0x4] sm:$0xf]
      %v4894 = vld [vmem:[%s4891 + $0x8] sm:$0xf]
      %v4895 = vld [vmem:[%s4891 + $0xc] sm:$0xf]
      %v4896 = vld [vmem:[%s4891 + $0x10] sm:$0xf]
      %v4897 = vld [vmem:[%s4891 + $0x14] sm:$0xf]
      %v4898 = vld [vmem:[%s4891 + $0x18] sm:$0xf]
      %v4899 = vld [vmem:[%s4891 + $0x1c] sm:$0xf]
      %v4900 = vld [vmem:[%s4891 + $0x20] sm:$0xf]
      %v4901 = vld [vmem:[%s4891 + $0x24] sm:$0xf]
      %v4902 = vld [vmem:[%s4891 + $0x28] sm:$0xf]
      %v4903 = vld [vmem:[%s4891 + $0x2c] sm:$0xf]
      %v4904 = vld [vmem:[%s4891 + $0x30] sm:$0xf]
      %v4905 = vld [vmem:[%s4891 + $0x34] sm:$0xf]
      %v4906 = vld [vmem:[%s4891 + $0x38] sm:$0xf]
      %v4907 = vld [vmem:[%s4891 + $0x3c] sm:$0xf]
      %v4924 = vunpack.c.l.b16 %v4892
      %v4925 = vunpack.c.l.b16 %v4893
      %v4926 = vunpack.c.l.b16 %v4894
      %v4927 = vunpack.c.l.b16 %v4895
      %v4928 = vunpack.c.l.b16 %v4896
      %v4929 = vunpack.c.l.b16 %v4897
      %v4930 = vunpack.c.l.b16 %v4898
      %v4931 = vunpack.c.l.b16 %v4899
      %v4932 = vunpack.c.l.b16 %v4900
      %v4933 = vunpack.c.l.b16 %v4901
      %v4934 = vunpack.c.l.b16 %v4902
      %v4935 = vunpack.c.l.b16 %v4903
      %v4936 = vunpack.c.l.b16 %v4904
      %v4937 = vunpack.c.l.b16 %v4905
      %v4938 = vunpack.c.l.b16 %v4906
      %v4939 = vunpack.c.l.b16 %v4907
      %v4940 = vpack.c.b16 %v4925, %v4924
      %v4941 = vpack.c.b16 %v4927, %v4926
      %v4942 = vpack.c.b16 %v4929, %v4928
      %v4943 = vpack.c.b16 %v4931, %v4930
      %v4944 = vpack.c.b16 %v4933, %v4932
      %v4945 = vpack.c.b16 %v4935, %v4934
      %v4946 = vpack.c.b16 %v4937, %v4936
      %v4947 = vpack.c.b16 %v4939, %v4938
      %4956 = vmatprep.subr.bf16.mxu0 0
      %4957 = vmatpush1.bf16.msra.mxu0 %v4940
      %4958 = vmatprep.subr.bf16.mxu0 0
      %4959 = vmatpush1.bf16.msra.mxu0 %v4941
      %4960 = vmatprep.subr.bf16.mxu0 0
      %4961 = vmatpush1.bf16.msra.mxu0 %v4942
      %4962 = vmatprep.subr.bf16.mxu0 0
      %4963 = vmatpush1.bf16.msra.mxu0 %v4943
      %4964 = vmatprep.subr.bf16.mxu0 0
      %4965 = vmatpush1.bf16.msra.mxu0 %v4944
      %4966 = vmatprep.subr.bf16.mxu0 0
      %4967 = vmatpush1.bf16.msra.mxu0 %v4945
      %4968 = vmatprep.subr.bf16.mxu0 0
      %4969 = vmatpush1.bf16.msra.mxu0 %v4946
      %4970 = vmatprep.subr.bf16.mxu0 0
      %4971 = vmatpush1.bf16.msra.mxu0 %v4947
      %4972 = vmatprep.subr.bf16.mxu0 0
      %4973 = vmatpush1.bf16.msra.mxu0 0
      %4974 = vmatprep.subr.bf16.mxu0 0
      %4975 = vmatpush1.bf16.msra.mxu0 0
      %4976 = vmatprep.subr.bf16.mxu0 0
      %4977 = vmatpush1.bf16.msra.mxu0 0
      %4978 = vmatprep.subr.bf16.mxu0 0
      %4979 = vmatpush1.bf16.msra.mxu0 0
      %4980 = vmatprep.subr.bf16.mxu0 0
      %4981 = vmatpush1.bf16.msra.mxu0 0
      %4982 = vmatprep.subr.bf16.mxu0 0
      %4983 = vmatpush1.bf16.msra.mxu0 0
      %4984 = vmatprep.subr.bf16.mxu0 0
      %4985 = vmatpush1.bf16.msra.mxu0 0
      %4986 = vmatprep.subr.bf16.mxu0 0
      %4987 = vmatpush1.bf16.msra.mxu0 0
      %4988 = vmatprep.mubr.bf16.mxu0 0
      %4989 = vmatmul.mubr.bf16.gmra.mrb[0].mxu0 %v4875
      %v4990 = vpop.f32.mrb[0].mxu0
      %v4991 = vadd.f32 0.0, %v4990
      %v4992 = vpop.f32.mrb[0].mxu0
      %v4993 = vpop.f32.mrb[0].mxu0
      %v4994 = vadd.f32 0.0, %v4993
      %v4995 = vpop.f32.mrb[0].mxu0
      %4996 = vmatprep.mubr.bf16.mxu0 0
      %4997 = vmatmul.mubr.bf16.gmra.mrb[0].mxu0 %v4876
      %v4998 = vpop.f32.mrb[0].mxu0
      %v4999 = vadd.f32 0.0, %v4998
      %v5000 = vpop.f32.mrb[0].mxu0
      %v5001 = vpop.f32.mrb[0].mxu0
      %v5002 = vadd.f32 0.0, %v5001
      %v5003 = vpop.f32.mrb[0].mxu0
      %5004 = vmatprep.mubr.bf16.mxu0 0
      %5005 = vmatmul.mubr.bf16.gmra.mrb[0].mxu0 %v4877
      %v5006 = vpop.f32.mrb[0].mxu0
      %v5007 = vadd.f32 0.0, %v5006
      %v5008 = vpop.f32.mrb[0].mxu0
      %v5009 = vpop.f32.mrb[0].mxu0
      %v5010 = vadd.f32 0.0, %v5009
      %v5011 = vpop.f32.mrb[0].mxu0
      %5012 = vmatprep.mubr.bf16.mxu0 0
      %5013 = vmatmul.mubr.bf16.gmra.mrb[0].mxu0 %v4878
      %v5014 = vpop.f32.mrb[0].mxu0
      %v5015 = vadd.f32 0.0, %v5014
      %v5016 = vpop.f32.mrb[0].mxu0
      %v5017 = vpop.f32.mrb[0].mxu0
      %v5018 = vadd.f32 0.0, %v5017
      %v5019 = vpop.f32.mrb[0].mxu0
      %5020 = vmatprep.mubr.bf16.mxu0 0
      %5021 = vmatmul.mubr.bf16.gmra.mrb[0].mxu0 %v4879
      %v5022 = vpop.f32.mrb[0].mxu0
      %v5023 = vadd.f32 0.0, %v5022
      %v5024 = vpop.f32.mrb[0].mxu0
      %v5025 = vpop.f32.mrb[0].mxu0
      %v5026 = vadd.f32 0.0, %v5025
      %v5027 = vpop.f32.mrb[0].mxu0
      %5028 = vmatprep.mubr.bf16.mxu0 0
      %5029 = vmatmul.mubr.bf16.gmra.mrb[0].mxu0 %v4880
      %v5030 = vpop.f32.mrb[0].mxu0
      %v5031 = vadd.f32 0.0, %v5030
      %v5032 = vpop.f32.mrb[0].mxu0
      %v5033 = vpop.f32.mrb[0].mxu0
      %v5034 = vadd.f32 0.0, %v5033
      %v5035 = vpop.f32.mrb[0].mxu0
      %5036 = vmatprep.mubr.bf16.mxu0 0
      %5037 = vmatmul.mubr.bf16.gmra.mrb[0].mxu0 %v4881
      %v5038 = vpop.f32.mrb[0].mxu0
      %v5039 = vadd.f32 0.0, %v5038
      %v5040 = vpop.f32.mrb[0].mxu0
      %v5041 = vpop.f32.mrb[0].mxu0
      %v5042 = vadd.f32 0.0, %v5041
      %v5043 = vpop.f32.mrb[0].mxu0
      %5044 = vmatprep.mubr.bf16.mxu0 0
      %5045 = vmatmul.mubr.bf16.gmra.mrb[0].mxu0 %v4882
      %v5046 = vpop.f32.mrb[0].mxu0
      %v5047 = vadd.f32 0.0, %v5046
      %v5048 = vpop.f32.mrb[0].mxu0
      %v5049 = vpop.f32.mrb[0].mxu0
      %v5050 = vadd.f32 0.0, %v5049
      %v5051 = vpop.f32.mrb[0].mxu0
      %5052 = vmatprep.mubr.bf16.mxu0 0
      %5053 = vmatmul.mubr.bf16.gmra.mrb[0].mxu0 %v4883
      %v5054 = vpop.f32.mrb[0].mxu0
      %v5055 = vadd.f32 0.0, %v5054
      %v5056 = vpop.f32.mrb[0].mxu0
      %v5057 = vpop.f32.mrb[0].mxu0
      %v5058 = vadd.f32 0.0, %v5057
      %v5059 = vpop.f32.mrb[0].mxu0
      %5060 = vmatprep.mubr.bf16.mxu0 0
      %5061 = vmatmul.mubr.bf16.gmra.mrb[0].mxu0 %v4884
      %v5062 = vpop.f32.mrb[0].mxu0
      %v5063 = vadd.f32 0.0, %v5062
      %v5064 = vpop.f32.mrb[0].mxu0
      %v5065 = vpop.f32.mrb[0].mxu0
      %v5066 = vadd.f32 0.0, %v5065
      %v5067 = vpop.f32.mrb[0].mxu0
      %5068 = vmatprep.mubr.bf16.mxu0 0
      %5069 = vmatmul.mubr.bf16.gmra.mrb[0].mxu0 %v4885
      %v5070 = vpop.f32.mrb[0].mxu0
      %v5071 = vadd.f32 0.0, %v5070
      %v5072 = vpop.f32.mrb[0].mxu0
      %v5073 = vpop.f32.mrb[0].mxu0
      %v5074 = vadd.f32 0.0, %v5073
      %v5075 = vpop.f32.mrb[0].mxu0
      %5076 = vmatprep.mubr.bf16.mxu0 0
      %5077 = vmatmul.mubr.bf16.gmra.mrb[0].mxu0 %v4886
      %v5078 = vpop.f32.mrb[0].mxu0
      %v5079 = vadd.f32 0.0, %v5078
      %v5080 = vpop.f32.mrb[0].mxu0
      %v5081 = vpop.f32.mrb[0].mxu0
      %v5082 = vadd.f32 0.0, %v5081
      %v5083 = vpop.f32.mrb[0].mxu0
      %5084 = vmatprep.mubr.bf16.mxu0 0
      %5085 = vmatmul.mubr.bf16.gmra.mrb[0].mxu0 %v4887
      %v5086 = vpop.f32.mrb[0].mxu0
      %v5087 = vadd.f32 0.0, %v5086
      %v5088 = vpop.f32.mrb[0].mxu0
      %v5089 = vpop.f32.mrb[0].mxu0
      %v5090 = vadd.f32 0.0, %v5089
      %v5091 = vpop.f32.mrb[0].mxu0
      %5092 = vmatprep.mubr.bf16.mxu0 0
      %5093 = vmatmul.mubr.bf16.gmra.mrb[0].mxu0 %v4888
      %v5094 = vpop.f32.mrb[0].mxu0
      %v5095 = vadd.f32 0.0, %v5094
      %v5096 = vpop.f32.mrb[0].mxu0
      %v5097 = vpop.f32.mrb[0].mxu0
      %v5098 = vadd.f32 0.0, %v5097
      %v5099 = vpop.f32.mrb[0].mxu0
      %5100 = vmatprep.mubr.bf16.mxu0 0
      %5101 = vmatmul.mubr.bf16.gmra.mrb[0].mxu0 %v4889
      %v5102 = vpop.f32.mrb[0].mxu0
      %v5103 = vadd.f32 0.0, %v5102
      %v5104 = vpop.f32.mrb[0].mxu0
      %v5105 = vpop.f32.mrb[0].mxu0
      %v5106 = vadd.f32 0.0, %v5105
      %v5107 = vpop.f32.mrb[0].mxu0
      %5108 = vmatprep.mubr.bf16.mxu0 0
      %5109 = vmatmul.mubr.bf16.gmra.mrb[0].mxu0 %v4890
      %v5110 = vpop.f32.mrb[0].mxu0
      %v5111 = vadd.f32 0.0, %v5110
      %v5112 = vpop.f32.mrb[0].mxu0
      %v5113 = vpop.f32.mrb[0].mxu0
      %v5114 = vadd.f32 0.0, %v5113
      %v5115 = vpop.f32.mrb[0].mxu0
      %5116 = vdwg.mxu0
      %v5117 = vadd.f32 %v4749, %v4991
      %v5118 = vadd.f32 %v4752, %v4994
      %v5119 = vadd.f32 %v4757, %v4999
      %v5120 = vadd.f32 %v4760, %v5002
      %v5121 = vadd.f32 %v4765, %v5007
      %v5122 = vadd.f32 %v4768, %v5010
      %v5123 = vadd.f32 %v4773, %v5015
      %v5124 = vadd.f32 %v4776, %v5018
      %v5125 = vadd.f32 %v4781, %v5023
      %v5126 = vadd.f32 %v4784, %v5026
      %v5127 = vadd.f32 %v4789, %v5031
      %v5128 = vadd.f32 %v4792, %v5034
      %v5129 = vadd.f32 %v4797, %v5039
      %v5130 = vadd.f32 %v4800, %v5042
      %v5131 = vadd.f32 %v4805, %v5047
      %v5132 = vadd.f32 %v4808, %v5050
      %v5133 = vadd.f32 %v4813, %v5055
      %v5134 = vadd.f32 %v4816, %v5058
      %v5135 = vadd.f32 %v4821, %v5063
      %v5136 = vadd.f32 %v4824, %v5066
      %v5137 = vadd.f32 %v4829, %v5071
      %v5138 = vadd.f32 %v4832, %v5074
      %v5139 = vadd.f32 %v4837, %v5079
      %v5140 = vadd.f32 %v4840, %v5082
      %v5141 = vadd.f32 %v4845, %v5087
      %v5142 = vadd.f32 %v4848, %v5090
      %v5143 = vadd.f32 %v4853, %v5095
      %v5144 = vadd.f32 %v4856, %v5098
      %v5145 = vadd.f32 %v4861, %v5103
      %v5146 = vadd.f32 %v4864, %v5106
      %v5147 = vadd.f32 %v4869, %v5111
      %v5148 = vadd.f32 %v4872, %v5114
      %v5149 = vld [vmem:[%s4128] sm:$0xff]
      %v5150 = vld [vmem:[%s4128 + $0x8] sm:$0xff]
      %v5151 = vld [vmem:[%s4128 + $0x10] sm:$0xff]
      %v5152 = vld [vmem:[%s4128 + $0x18] sm:$0xff]
      %v5153 = vld [vmem:[%s4128 + $0x20] sm:$0xff]
      %v5154 = vld [vmem:[%s4128 + $0x28] sm:$0xff]
      %v5155 = vld [vmem:[%s4128 + $0x30] sm:$0xff]
      %v5156 = vld [vmem:[%s4128 + $0x38] sm:$0xff]
      %v5157 = vld [vmem:[%s4128 + $0x40] sm:$0xff]
      %v5158 = vld [vmem:[%s4128 + $0x48] sm:$0xff]
      %v5159 = vld [vmem:[%s4128 + $0x50] sm:$0xff]
      %v5160 = vld [vmem:[%s4128 + $0x58] sm:$0xff]
      %v5161 = vld [vmem:[%s4128 + $0x60] sm:$0xff]
      %v5162 = vld [vmem:[%s4128 + $0x68] sm:$0xff]
      %v5163 = vld [vmem:[%s4128 + $0x70] sm:$0xff]
      %v5164 = vld [vmem:[%s4128 + $0x78] sm:$0xff]
      %s5165 = scalar_lea.vmem %s4, 192
      %v5166 = vld [vmem:[%s5165] sm:$0xf]
      %v5167 = vld [vmem:[%s5165 + $0x4] sm:$0xf]
      %v5168 = vld [vmem:[%s5165 + $0x8] sm:$0xf]
      %v5169 = vld [vmem:[%s5165 + $0xc] sm:$0xf]
      %v5170 = vld [vmem:[%s5165 + $0x10] sm:$0xf]
      %v5171 = vld [vmem:[%s5165 + $0x14] sm:$0xf]
      %v5172 = vld [vmem:[%s5165 + $0x18] sm:$0xf]
      %v5173 = vld [vmem:[%s5165 + $0x1c] sm:$0xf]
      %v5174 = vld [vmem:[%s5165 + $0x20] sm:$0xf]
      %v5175 = vld [vmem:[%s5165 + $0x24] sm:$0xf]
      %v5176 = vld [vmem:[%s5165 + $0x28] sm:$0xf]
      %v5177 = vld [vmem:[%s5165 + $0x2c] sm:$0xf]
      %v5178 = vld [vmem:[%s5165 + $0x30] sm:$0xf]
      %v5179 = vld [vmem:[%s5165 + $0x34] sm:$0xf]
      %v5180 = vld [vmem:[%s5165 + $0x38] sm:$0xf]
      %v5181 = vld [vmem:[%s5165 + $0x3c] sm:$0xf]
      %v5198 = vunpack.c.l.b16 %v5166
      %v5199 = vunpack.c.l.b16 %v5167
      %v5200 = vunpack.c.l.b16 %v5168
      %v5201 = vunpack.c.l.b16 %v5169
      %v5202 = vunpack.c.l.b16 %v5170
      %v5203 = vunpack.c.l.b16 %v5171
      %v5204 = vunpack.c.l.b16 %v5172
      %v5205 = vunpack.c.l.b16 %v5173
      %v5206 = vunpack.c.l.b16 %v5174
      %v5207 = vunpack.c.l.b16 %v5175
      %v5208 = vunpack.c.l.b16 %v5176
      %v5209 = vunpack.c.l.b16 %v5177
      %v5210 = vunpack.c.l.b16 %v5178
      %v5211 = vunpack.c.l.b16 %v5179
      %v5212 = vunpack.c.l.b16 %v5180
      %v5213 = vunpack.c.l.b16 %v5181
      %v5214 = vpack.c.b16 %v5199, %v5198
      %v5215 = vpack.c.b16 %v5201, %v5200
      %v5216 = vpack.c.b16 %v5203, %v5202
      %v5217 = vpack.c.b16 %v5205, %v5204
      %v5218 = vpack.c.b16 %v5207, %v5206
      %v5219 = vpack.c.b16 %v5209, %v5208
      %v5220 = vpack.c.b16 %v5211, %v5210
      %v5221 = vpack.c.b16 %v5213, %v5212
      %5230 = vmatprep.subr.bf16.mxu0 0
      %5231 = vmatpush1.bf16.msra.mxu0 %v5214
      %5232 = vmatprep.subr.bf16.mxu0 0
      %5233 = vmatpush1.bf16.msra.mxu0 %v5215
      %5234 = vmatprep.subr.bf16.mxu0 0
      %5235 = vmatpush1.bf16.msra.mxu0 %v5216
      %5236 = vmatprep.subr.bf16.mxu0 0
      %5237 = vmatpush1.bf16.msra.mxu0 %v5217
      %5238 = vmatprep.subr.bf16.mxu0 0
      %5239 = vmatpush1.bf16.msra.mxu0 %v5218
      %5240 = vmatprep.subr.bf16.mxu0 0
      %5241 = vmatpush1.bf16.msra.mxu0 %v5219
      %5242 = vmatprep.subr.bf16.mxu0 0
      %5243 = vmatpush1.bf16.msra.mxu0 %v5220
      %5244 = vmatprep.subr.bf16.mxu0 0
      %5245 = vmatpush1.bf16.msra.mxu0 %v5221
      %5246 = vmatprep.subr.bf16.mxu0 0
      %5247 = vmatpush1.bf16.msra.mxu0 0
      %5248 = vmatprep.subr.bf16.mxu0 0
      %5249 = vmatpush1.bf16.msra.mxu0 0
      %5250 = vmatprep.subr.bf16.mxu0 0
      %5251 = vmatpush1.bf16.msra.mxu0 0
      %5252 = vmatprep.subr.bf16.mxu0 0
      %5253 = vmatpush1.bf16.msra.mxu0 0
      %5254 = vmatprep.subr.bf16.mxu0 0
      %5255 = vmatpush1.bf16.msra.mxu0 0
      %5256 = vmatprep.subr.bf16.mxu0 0
      %5257 = vmatpush1.bf16.msra.mxu0 0
      %5258 = vmatprep.subr.bf16.mxu0 0
      %5259 = vmatpush1.bf16.msra.mxu0 0
      %5260 = vmatprep.subr.bf16.mxu0 0
      %5261 = vmatpush1.bf16.msra.mxu0 0
      %5262 = vmatprep.mubr.bf16.mxu0 0
      %5263 = vmatmul.mubr.bf16.gmra.mrb[0].mxu0 %v5149
      %v5264 = vpop.f32.mrb[0].mxu0
      %v5265 = vadd.f32 0.0, %v5264
      %v5266 = vpop.f32.mrb[0].mxu0
      %v5267 = vpop.f32.mrb[0].mxu0
      %v5268 = vadd.f32 0.0, %v5267
      %v5269 = vpop.f32.mrb[0].mxu0
      %5270 = vmatprep.mubr.bf16.mxu0 0
      %5271 = vmatmul.mubr.bf16.gmra.mrb[0].mxu0 %v5150
      %v5272 = vpop.f32.mrb[0].mxu0
      %v5273 = vadd.f32 0.0, %v5272
      %v5274 = vpop.f32.mrb[0].mxu0
      %v5275 = vpop.f32.mrb[0].mxu0
      %v5276 = vadd.f32 0.0, %v5275
      %v5277 = vpop.f32.mrb[0].mxu0
      %5278 = vmatprep.mubr.bf16.mxu0 0
      %5279 = vmatmul.mubr.bf16.gmra.mrb[0].mxu0 %v5151
      %v5280 = vpop.f32.mrb[0].mxu0
      %v5281 = vadd.f32 0.0, %v5280
      %v5282 = vpop.f32.mrb[0].mxu0
      %v5283 = vpop.f32.mrb[0].mxu0
      %v5284 = vadd.f32 0.0, %v5283
      %v5285 = vpop.f32.mrb[0].mxu0
      %5286 = vmatprep.mubr.bf16.mxu0 0
      %5287 = vmatmul.mubr.bf16.gmra.mrb[0].mxu0 %v5152
      %v5288 = vpop.f32.mrb[0].mxu0
      %v5289 = vadd.f32 0.0, %v5288
      %v5290 = vpop.f32.mrb[0].mxu0
      %v5291 = vpop.f32.mrb[0].mxu0
      %v5292 = vadd.f32 0.0, %v5291
      %v5293 = vpop.f32.mrb[0].mxu0
      %5294 = vmatprep.mubr.bf16.mxu0 0
      %5295 = vmatmul.mubr.bf16.gmra.mrb[0].mxu0 %v5153
      %v5296 = vpop.f32.mrb[0].mxu0
      %v5297 = vadd.f32 0.0, %v5296
      %v5298 = vpop.f32.mrb[0].mxu0
      %v5299 = vpop.f32.mrb[0].mxu0
      %v5300 = vadd.f32 0.0, %v5299
      %v5301 = vpop.f32.mrb[0].mxu0
      %5302 = vmatprep.mubr.bf16.mxu0 0
      %5303 = vmatmul.mubr.bf16.gmra.mrb[0].mxu0 %v5154
      %v5304 = vpop.f32.mrb[0].mxu0
      %v5305 = vadd.f32 0.0, %v5304
      %v5306 = vpop.f32.mrb[0].mxu0
      %v5307 = vpop.f32.mrb[0].mxu0
      %v5308 = vadd.f32 0.0, %v5307
      %v5309 = vpop.f32.mrb[0].mxu0
      %5310 = vmatprep.mubr.bf16.mxu0 0
      %5311 = vmatmul.mubr.bf16.gmra.mrb[0].mxu0 %v5155
      %v5312 = vpop.f32.mrb[0].mxu0
      %v5313 = vadd.f32 0.0, %v5312
      %v5314 = vpop.f32.mrb[0].mxu0
      %v5315 = vpop.f32.mrb[0].mxu0
      %v5316 = vadd.f32 0.0, %v5315
      %v5317 = vpop.f32.mrb[0].mxu0
      %5318 = vmatprep.mubr.bf16.mxu0 0
      %5319 = vmatmul.mubr.bf16.gmra.mrb[0].mxu0 %v5156
      %v5320 = vpop.f32.mrb[0].mxu0
      %v5321 = vadd.f32 0.0, %v5320
      %v5322 = vpop.f32.mrb[0].mxu0
      %v5323 = vpop.f32.mrb[0].mxu0
      %v5324 = vadd.f32 0.0, %v5323
      %v5325 = vpop.f32.mrb[0].mxu0
      %5326 = vmatprep.mubr.bf16.mxu0 0
      %5327 = vmatmul.mubr.bf16.gmra.mrb[0].mxu0 %v5157
      %v5328 = vpop.f32.mrb[0].mxu0
      %v5329 = vadd.f32 0.0, %v5328
      %v5330 = vpop.f32.mrb[0].mxu0
      %v5331 = vpop.f32.mrb[0].mxu0
      %v5332 = vadd.f32 0.0, %v5331
      %v5333 = vpop.f32.mrb[0].mxu0
      %5334 = vmatprep.mubr.bf16.mxu0 0
      %5335 = vmatmul.mubr.bf16.gmra.mrb[0].mxu0 %v5158
      %v5336 = vpop.f32.mrb[0].mxu0
      %v5337 = vadd.f32 0.0, %v5336
      %v5338 = vpop.f32.mrb[0].mxu0
      %v5339 = vpop.f32.mrb[0].mxu0
      %v5340 = vadd.f32 0.0, %v5339
      %v5341 = vpop.f32.mrb[0].mxu0
      %5342 = vmatprep.mubr.bf16.mxu0 0
      %5343 = vmatmul.mubr.bf16.gmra.mrb[0].mxu0 %v5159
      %v5344 = vpop.f32.mrb[0].mxu0
      %v5345 = vadd.f32 0.0, %v5344
      %v5346 = vpop.f32.mrb[0].mxu0
      %v5347 = vpop.f32.mrb[0].mxu0
      %v5348 = vadd.f32 0.0, %v5347
      %v5349 = vpop.f32.mrb[0].mxu0
      %5350 = vmatprep.mubr.bf16.mxu0 0
      %5351 = vmatmul.mubr.bf16.gmra.mrb[0].mxu0 %v5160
      %v5352 = vpop.f32.mrb[0].mxu0
      %v5353 = vadd.f32 0.0, %v5352
      %v5354 = vpop.f32.mrb[0].mxu0
      %v5355 = vpop.f32.mrb[0].mxu0
      %v5356 = vadd.f32 0.0, %v5355
      %v5357 = vpop.f32.mrb[0].mxu0
      %5358 = vmatprep.mubr.bf16.mxu0 0
      %5359 = vmatmul.mubr.bf16.gmra.mrb[0].mxu0 %v5161
      %v5360 = vpop.f32.mrb[0].mxu0
      %v5361 = vadd.f32 0.0, %v5360
      %v5362 = vpop.f32.mrb[0].mxu0
      %v5363 = vpop.f32.mrb[0].mxu0
      %v5364 = vadd.f32 0.0, %v5363
      %v5365 = vpop.f32.mrb[0].mxu0
      %5366 = vmatprep.mubr.bf16.mxu0 0
      %5367 = vmatmul.mubr.bf16.gmra.mrb[0].mxu0 %v5162
      %v5368 = vpop.f32.mrb[0].mxu0
      %v5369 = vadd.f32 0.0, %v5368
      %v5370 = vpop.f32.mrb[0].mxu0
      %v5371 = vpop.f32.mrb[0].mxu0
      %v5372 = vadd.f32 0.0, %v5371
      %v5373 = vpop.f32.mrb[0].mxu0
      %5374 = vmatprep.mubr.bf16.mxu0 0
      %5375 = vmatmul.mubr.bf16.gmra.mrb[0].mxu0 %v5163
      %v5376 = vpop.f32.mrb[0].mxu0
      %v5377 = vadd.f32 0.0, %v5376
      %v5378 = vpop.f32.mrb[0].mxu0
      %v5379 = vpop.f32.mrb[0].mxu0
      %v5380 = vadd.f32 0.0, %v5379
      %v5381 = vpop.f32.mrb[0].mxu0
      %5382 = vmatprep.mubr.bf16.mxu0 0
      %5383 = vmatmul.mubr.bf16.gmra.mrb[0].mxu0 %v5164
      %v5384 = vpop.f32.mrb[0].mxu0
      %v5385 = vadd.f32 0.0, %v5384
      %v5386 = vpop.f32.mrb[0].mxu0
      %v5387 = vpop.f32.mrb[0].mxu0
      %v5388 = vadd.f32 0.0, %v5387
      %v5389 = vpop.f32.mrb[0].mxu0
      %5390 = vdwg.mxu0
      %v5391 = vadd.f32 %v5117, %v5265
      %v5392 = vadd.f32 %v5118, %v5268
      %v5393 = vadd.f32 %v5119, %v5273
      %v5394 = vadd.f32 %v5120, %v5276
      %v5395 = vadd.f32 %v5121, %v5281
      %v5396 = vadd.f32 %v5122, %v5284
      %v5397 = vadd.f32 %v5123, %v5289
      %v5398 = vadd.f32 %v5124, %v5292
      %v5399 = vadd.f32 %v5125, %v5297
      %v5400 = vadd.f32 %v5126, %v5300
      %v5401 = vadd.f32 %v5127, %v5305
      %v5402 = vadd.f32 %v5128, %v5308
      %v5403 = vadd.f32 %v5129, %v5313
      %v5404 = vadd.f32 %v5130, %v5316
      %v5405 = vadd.f32 %v5131, %v5321
      %v5406 = vadd.f32 %v5132, %v5324
      %v5407 = vadd.f32 %v5133, %v5329
      %v5408 = vadd.f32 %v5134, %v5332
      %v5409 = vadd.f32 %v5135, %v5337
      %v5410 = vadd.f32 %v5136, %v5340
      %v5411 = vadd.f32 %v5137, %v5345
      %v5412 = vadd.f32 %v5138, %v5348
      %v5413 = vadd.f32 %v5139, %v5353
      %v5414 = vadd.f32 %v5140, %v5356
      %v5415 = vadd.f32 %v5141, %v5361
      %v5416 = vadd.f32 %v5142, %v5364
      %v5417 = vadd.f32 %v5143, %v5369
      %v5418 = vadd.f32 %v5144, %v5372
      %v5419 = vadd.f32 %v5145, %v5377
      %v5420 = vadd.f32 %v5146, %v5380
      %v5421 = vadd.f32 %v5147, %v5385
      %v5422 = vadd.f32 %v5148, %v5388
      %v5423 = vld [vmem:[%s3983] sm:$0xff]
      %v5424 = vld [vmem:[%s3983 + $0x8] sm:$0xff]
      %v5425 = vld [vmem:[%s3983 + $0x10] sm:$0xff]
      %v5426 = vld [vmem:[%s3983 + $0x18] sm:$0xff]
      %v5427 = vld [vmem:[%s3983 + $0x20] sm:$0xff]
      %v5428 = vld [vmem:[%s3983 + $0x28] sm:$0xff]
      %v5429 = vld [vmem:[%s3983 + $0x30] sm:$0xff]
      %v5430 = vld [vmem:[%s3983 + $0x38] sm:$0xff]
      %v5431 = vld [vmem:[%s3983 + $0x40] sm:$0xff]
      %v5432 = vld [vmem:[%s3983 + $0x48] sm:$0xff]
      %v5433 = vld [vmem:[%s3983 + $0x50] sm:$0xff]
      %v5434 = vld [vmem:[%s3983 + $0x58] sm:$0xff]
      %v5435 = vld [vmem:[%s3983 + $0x60] sm:$0xff]
      %v5436 = vld [vmem:[%s3983 + $0x68] sm:$0xff]
      %v5437 = vld [vmem:[%s3983 + $0x70] sm:$0xff]
      %v5438 = vld [vmem:[%s3983 + $0x78] sm:$0xff]
      %s5439 = scalar_lea.vmem %s4, 256
      %v5440 = vld [vmem:[%s5439] sm:$0xf]
      %v5441 = vld [vmem:[%s5439 + $0x4] sm:$0xf]
      %v5442 = vld [vmem:[%s5439 + $0x8] sm:$0xf]
      %v5443 = vld [vmem:[%s5439 + $0xc] sm:$0xf]
      %v5444 = vld [vmem:[%s5439 + $0x10] sm:$0xf]
      %v5445 = vld [vmem:[%s5439 + $0x14] sm:$0xf]
      %v5446 = vld [vmem:[%s5439 + $0x18] sm:$0xf]
      %v5447 = vld [vmem:[%s5439 + $0x1c] sm:$0xf]
      %v5448 = vld [vmem:[%s5439 + $0x20] sm:$0xf]
      %v5449 = vld [vmem:[%s5439 + $0x24] sm:$0xf]
      %v5450 = vld [vmem:[%s5439 + $0x28] sm:$0xf]
      %v5451 = vld [vmem:[%s5439 + $0x2c] sm:$0xf]
      %v5452 = vld [vmem:[%s5439 + $0x30] sm:$0xf]
      %v5453 = vld [vmem:[%s5439 + $0x34] sm:$0xf]
      %v5454 = vld [vmem:[%s5439 + $0x38] sm:$0xf]
      %v5455 = vld [vmem:[%s5439 + $0x3c] sm:$0xf]
      %v5472 = vunpack.c.l.b16 %v5440
      %v5473 = vunpack.c.l.b16 %v5441
      %v5474 = vunpack.c.l.b16 %v5442
      %v5475 = vunpack.c.l.b16 %v5443
      %v5476 = vunpack.c.l.b16 %v5444
      %v5477 = vunpack.c.l.b16 %v5445
      %v5478 = vunpack.c.l.b16 %v5446
      %v5479 = vunpack.c.l.b16 %v5447
      %v5480 = vunpack.c.l.b16 %v5448
      %v5481 = vunpack.c.l.b16 %v5449
      %v5482 = vunpack.c.l.b16 %v5450
      %v5483 = vunpack.c.l.b16 %v5451
      %v5484 = vunpack.c.l.b16 %v5452
      %v5485 = vunpack.c.l.b16 %v5453
      %v5486 = vunpack.c.l.b16 %v5454
      %v5487 = vunpack.c.l.b16 %v5455
      %v5488 = vpack.c.b16 %v5473, %v5472
      %v5489 = vpack.c.b16 %v5475, %v5474
      %v5490 = vpack.c.b16 %v5477, %v5476
      %v5491 = vpack.c.b16 %v5479, %v5478
      %v5492 = vpack.c.b16 %v5481, %v5480
      %v5493 = vpack.c.b16 %v5483, %v5482
      %v5494 = vpack.c.b16 %v5485, %v5484
      %v5495 = vpack.c.b16 %v5487, %v5486
      %5504 = vmatprep.subr.bf16.mxu0 0
      %5505 = vmatpush1.bf16.msra.mxu0 %v5488
      %5506 = vmatprep.subr.bf16.mxu0 0
      %5507 = vmatpush1.bf16.msra.mxu0 %v5489
      %5508 = vmatprep.subr.bf16.mxu0 0
      %5509 = vmatpush1.bf16.msra.mxu0 %v5490
      %5510 = vmatprep.subr.bf16.mxu0 0
      %5511 = vmatpush1.bf16.msra.mxu0 %v5491
      %5512 = vmatprep.subr.bf16.mxu0 0
      %5513 = vmatpush1.bf16.msra.mxu0 %v5492
      %5514 = vmatprep.subr.bf16.mxu0 0
      %5515 = vmatpush1.bf16.msra.mxu0 %v5493
      %5516 = vmatprep.subr.bf16.mxu0 0
      %5517 = vmatpush1.bf16.msra.mxu0 %v5494
      %5518 = vmatprep.subr.bf16.mxu0 0
      %5519 = vmatpush1.bf16.msra.mxu0 %v5495
      %5520 = vmatprep.subr.bf16.mxu0 0
      %5521 = vmatpush1.bf16.msra.mxu0 0
      %5522 = vmatprep.subr.bf16.mxu0 0
      %5523 = vmatpush1.bf16.msra.mxu0 0
      %5524 = vmatprep.subr.bf16.mxu0 0
      %5525 = vmatpush1.bf16.msra.mxu0 0
      %5526 = vmatprep.subr.bf16.mxu0 0
      %5527 = vmatpush1.bf16.msra.mxu0 0
      %5528 = vmatprep.subr.bf16.mxu0 0
      %5529 = vmatpush1.bf16.msra.mxu0 0
      %5530 = vmatprep.subr.bf16.mxu0 0
      %5531 = vmatpush1.bf16.msra.mxu0 0
      %5532 = vmatprep.subr.bf16.mxu0 0
      %5533 = vmatpush1.bf16.msra.mxu0 0
      %5534 = vmatprep.subr.bf16.mxu0 0
      %5535 = vmatpush1.bf16.msra.mxu0 0
      %5536 = vmatprep.mubr.bf16.mxu0 0
      %5537 = vmatmul.mubr.bf16.gmra.mrb[0].mxu0 %v5423
      %v5538 = vpop.f32.mrb[0].mxu0
      %v5539 = vadd.f32 0.0, %v5538
      %v5540 = vpop.f32.mrb[0].mxu0
      %v5541 = vpop.f32.mrb[0].mxu0
      %v5542 = vadd.f32 0.0, %v5541
      %v5543 = vpop.f32.mrb[0].mxu0
      %5544 = vmatprep.mubr.bf16.mxu0 0
      %5545 = vmatmul.mubr.bf16.gmra.mrb[0].mxu0 %v5424
      %v5546 = vpop.f32.mrb[0].mxu0
      %v5547 = vadd.f32 0.0, %v5546
      %v5548 = vpop.f32.mrb[0].mxu0
      %v5549 = vpop.f32.mrb[0].mxu0
      %v5550 = vadd.f32 0.0, %v5549
      %v5551 = vpop.f32.mrb[0].mxu0
      %5552 = vmatprep.mubr.bf16.mxu0 0
      %5553 = vmatmul.mubr.bf16.gmra.mrb[0].mxu0 %v5425
      %v5554 = vpop.f32.mrb[0].mxu0
      %v5555 = vadd.f32 0.0, %v5554
      %v5556 = vpop.f32.mrb[0].mxu0
      %v5557 = vpop.f32.mrb[0].mxu0
      %v5558 = vadd.f32 0.0, %v5557
      %v5559 = vpop.f32.mrb[0].mxu0
      %5560 = vmatprep.mubr.bf16.mxu0 0
      %5561 = vmatmul.mubr.bf16.gmra.mrb[0].mxu0 %v5426
      %v5562 = vpop.f32.mrb[0].mxu0
      %v5563 = vadd.f32 0.0, %v5562
      %v5564 = vpop.f32.mrb[0].mxu0
      %v5565 = vpop.f32.mrb[0].mxu0
      %v5566 = vadd.f32 0.0, %v5565
      %v5567 = vpop.f32.mrb[0].mxu0
      %5568 = vmatprep.mubr.bf16.mxu0 0
      %5569 = vmatmul.mubr.bf16.gmra.mrb[0].mxu0 %v5427
      %v5570 = vpop.f32.mrb[0].mxu0
      %v5571 = vadd.f32 0.0, %v5570
      %v5572 = vpop.f32.mrb[0].mxu0
      %v5573 = vpop.f32.mrb[0].mxu0
      %v5574 = vadd.f32 0.0, %v5573
      %v5575 = vpop.f32.mrb[0].mxu0
      %5576 = vmatprep.mubr.bf16.mxu0 0
      %5577 = vmatmul.mubr.bf16.gmra.mrb[0].mxu0 %v5428
      %v5578 = vpop.f32.mrb[0].mxu0
      %v5579 = vadd.f32 0.0, %v5578
      %v5580 = vpop.f32.mrb[0].mxu0
      %v5581 = vpop.f32.mrb[0].mxu0
      %v5582 = vadd.f32 0.0, %v5581
      %v5583 = vpop.f32.mrb[0].mxu0
      %5584 = vmatprep.mubr.bf16.mxu0 0
      %5585 = vmatmul.mubr.bf16.gmra.mrb[0].mxu0 %v5429
      %v5586 = vpop.f32.mrb[0].mxu0
      %v5587 = vadd.f32 0.0, %v5586
      %v5588 = vpop.f32.mrb[0].mxu0
      %v5589 = vpop.f32.mrb[0].mxu0
      %v5590 = vadd.f32 0.0, %v5589
      %v5591 = vpop.f32.mrb[0].mxu0
      %5592 = vmatprep.mubr.bf16.mxu0 0
      %5593 = vmatmul.mubr.bf16.gmra.mrb[0].mxu0 %v5430
      %v5594 = vpop.f32.mrb[0].mxu0
      %v5595 = vadd.f32 0.0, %v5594
      %v5596 = vpop.f32.mrb[0].mxu0
      %v5597 = vpop.f32.mrb[0].mxu0
      %v5598 = vadd.f32 0.0, %v5597
      %v5599 = vpop.f32.mrb[0].mxu0
      %5600 = vmatprep.mubr.bf16.mxu0 0
      %5601 = vmatmul.mubr.bf16.gmra.mrb[0].mxu0 %v5431
      %v5602 = vpop.f32.mrb[0].mxu0
      %v5603 = vadd.f32 0.0, %v5602
      %v5604 = vpop.f32.mrb[0].mxu0
      %v5605 = vpop.f32.mrb[0].mxu0
      %v5606 = vadd.f32 0.0, %v5605
      %v5607 = vpop.f32.mrb[0].mxu0
      %5608 = vmatprep.mubr.bf16.mxu0 0
      %5609 = vmatmul.mubr.bf16.gmra.mrb[0].mxu0 %v5432
      %v5610 = vpop.f32.mrb[0].mxu0
      %v5611 = vadd.f32 0.0, %v5610
      %v5612 = vpop.f32.mrb[0].mxu0
      %v5613 = vpop.f32.mrb[0].mxu0
      %v5614 = vadd.f32 0.0, %v5613
      %v5615 = vpop.f32.mrb[0].mxu0
      %5616 = vmatprep.mubr.bf16.mxu0 0
      %5617 = vmatmul.mubr.bf16.gmra.mrb[0].mxu0 %v5433
      %v5618 = vpop.f32.mrb[0].mxu0
      %v5619 = vadd.f32 0.0, %v5618
      %v5620 = vpop.f32.mrb[0].mxu0
      %v5621 = vpop.f32.mrb[0].mxu0
      %v5622 = vadd.f32 0.0, %v5621
      %v5623 = vpop.f32.mrb[0].mxu0
      %5624 = vmatprep.mubr.bf16.mxu0 0
      %5625 = vmatmul.mubr.bf16.gmra.mrb[0].mxu0 %v5434
      %v5626 = vpop.f32.mrb[0].mxu0
      %v5627 = vadd.f32 0.0, %v5626
      %v5628 = vpop.f32.mrb[0].mxu0
      %v5629 = vpop.f32.mrb[0].mxu0
      %v5630 = vadd.f32 0.0, %v5629
      %v5631 = vpop.f32.mrb[0].mxu0
      %5632 = vmatprep.mubr.bf16.mxu0 0
      %5633 = vmatmul.mubr.bf16.gmra.mrb[0].mxu0 %v5435
      %v5634 = vpop.f32.mrb[0].mxu0
      %v5635 = vadd.f32 0.0, %v5634
      %v5636 = vpop.f32.mrb[0].mxu0
      %v5637 = vpop.f32.mrb[0].mxu0
      %v5638 = vadd.f32 0.0, %v5637
      %v5639 = vpop.f32.mrb[0].mxu0
      %5640 = vmatprep.mubr.bf16.mxu0 0
      %5641 = vmatmul.mubr.bf16.gmra.mrb[0].mxu0 %v5436
      %v5642 = vpop.f32.mrb[0].mxu0
      %v5643 = vadd.f32 0.0, %v5642
      %v5644 = vpop.f32.mrb[0].mxu0
      %v5645 = vpop.f32.mrb[0].mxu0
      %v5646 = vadd.f32 0.0, %v5645
      %v5647 = vpop.f32.mrb[0].mxu0
      %5648 = vmatprep.mubr.bf16.mxu0 0
      %5649 = vmatmul.mubr.bf16.gmra.mrb[0].mxu0 %v5437
      %v5650 = vpop.f32.mrb[0].mxu0
      %v5651 = vadd.f32 0.0, %v5650
      %v5652 = vpop.f32.mrb[0].mxu0
      %v5653 = vpop.f32.mrb[0].mxu0
      %v5654 = vadd.f32 0.0, %v5653
      %v5655 = vpop.f32.mrb[0].mxu0
      %5656 = vmatprep.mubr.bf16.mxu0 0
      %5657 = vmatmul.mubr.bf16.gmra.mrb[0].mxu0 %v5438
      %v5658 = vpop.f32.mrb[0].mxu0
      %v5659 = vadd.f32 0.0, %v5658
      %v5660 = vpop.f32.mrb[0].mxu0
      %v5661 = vpop.f32.mrb[0].mxu0
      %v5662 = vadd.f32 0.0, %v5661
      %v5663 = vpop.f32.mrb[0].mxu0
      %5664 = vdwg.mxu0
      %v5665 = vadd.f32 %v5391, %v5539
      %v5666 = vadd.f32 %v5392, %v5542
      %v5667 = vadd.f32 %v5393, %v5547
      %v5668 = vadd.f32 %v5394, %v5550
      %v5669 = vadd.f32 %v5395, %v5555
      %v5670 = vadd.f32 %v5396, %v5558
      %v5671 = vadd.f32 %v5397, %v5563
      %v5672 = vadd.f32 %v5398, %v5566
      %v5673 = vadd.f32 %v5399, %v5571
      %v5674 = vadd.f32 %v5400, %v5574
      %v5675 = vadd.f32 %v5401, %v5579
      %v5676 = vadd.f32 %v5402, %v5582
      %v5677 = vadd.f32 %v5403, %v5587
      %v5678 = vadd.f32 %v5404, %v5590
      %v5679 = vadd.f32 %v5405, %v5595
      %v5680 = vadd.f32 %v5406, %v5598
      %v5681 = vadd.f32 %v5407, %v5603
      %v5682 = vadd.f32 %v5408, %v5606
      %v5683 = vadd.f32 %v5409, %v5611
      %v5684 = vadd.f32 %v5410, %v5614
      %v5685 = vadd.f32 %v5411, %v5619
      %v5686 = vadd.f32 %v5412, %v5622
      %v5687 = vadd.f32 %v5413, %v5627
      %v5688 = vadd.f32 %v5414, %v5630
      %v5689 = vadd.f32 %v5415, %v5635
      %v5690 = vadd.f32 %v5416, %v5638
      %v5691 = vadd.f32 %v5417, %v5643
      %v5692 = vadd.f32 %v5418, %v5646
      %v5693 = vadd.f32 %v5419, %v5651
      %v5694 = vadd.f32 %v5420, %v5654
      %v5695 = vadd.f32 %v5421, %v5659
      %v5696 = vadd.f32 %v5422, %v5662
      %v5697 = vld [vmem:[%s4279] sm:$0xff]
      %v5698 = vld [vmem:[%s4279 + $0x8] sm:$0xff]
      %v5699 = vld [vmem:[%s4279 + $0x10] sm:$0xff]
      %v5700 = vld [vmem:[%s4279 + $0x18] sm:$0xff]
      %v5701 = vld [vmem:[%s4279 + $0x20] sm:$0xff]
      %v5702 = vld [vmem:[%s4279 + $0x28] sm:$0xff]
      %v5703 = vld [vmem:[%s4279 + $0x30] sm:$0xff]
      %v5704 = vld [vmem:[%s4279 + $0x38] sm:$0xff]
      %v5705 = vld [vmem:[%s4279 + $0x40] sm:$0xff]
      %v5706 = vld [vmem:[%s4279 + $0x48] sm:$0xff]
      %v5707 = vld [vmem:[%s4279 + $0x50] sm:$0xff]
      %v5708 = vld [vmem:[%s4279 + $0x58] sm:$0xff]
      %v5709 = vld [vmem:[%s4279 + $0x60] sm:$0xff]
      %v5710 = vld [vmem:[%s4279 + $0x68] sm:$0xff]
      %v5711 = vld [vmem:[%s4279 + $0x70] sm:$0xff]
      %v5712 = vld [vmem:[%s4279 + $0x78] sm:$0xff]
      %s5713 = scalar_lea.vmem %s4, 320
      %v5714 = vld [vmem:[%s5713] sm:$0xf]
      %v5715 = vld [vmem:[%s5713 + $0x4] sm:$0xf]
      %v5716 = vld [vmem:[%s5713 + $0x8] sm:$0xf]
      %v5717 = vld [vmem:[%s5713 + $0xc] sm:$0xf]
      %v5718 = vld [vmem:[%s5713 + $0x10] sm:$0xf]
      %v5719 = vld [vmem:[%s5713 + $0x14] sm:$0xf]
      %v5720 = vld [vmem:[%s5713 + $0x18] sm:$0xf]
      %v5721 = vld [vmem:[%s5713 + $0x1c] sm:$0xf]
      %v5722 = vld [vmem:[%s5713 + $0x20] sm:$0xf]
      %v5723 = vld [vmem:[%s5713 + $0x24] sm:$0xf]
      %v5724 = vld [vmem:[%s5713 + $0x28] sm:$0xf]
      %v5725 = vld [vmem:[%s5713 + $0x2c] sm:$0xf]
      %v5726 = vld [vmem:[%s5713 + $0x30] sm:$0xf]
      %v5727 = vld [vmem:[%s5713 + $0x34] sm:$0xf]
      %v5728 = vld [vmem:[%s5713 + $0x38] sm:$0xf]
      %v5729 = vld [vmem:[%s5713 + $0x3c] sm:$0xf]
      %v5746 = vunpack.c.l.b16 %v5714
      %v5747 = vunpack.c.l.b16 %v5715
      %v5748 = vunpack.c.l.b16 %v5716
      %v5749 = vunpack.c.l.b16 %v5717
      %v5750 = vunpack.c.l.b16 %v5718
      %v5751 = vunpack.c.l.b16 %v5719
      %v5752 = vunpack.c.l.b16 %v5720
      %v5753 = vunpack.c.l.b16 %v5721
      %v5754 = vunpack.c.l.b16 %v5722
      %v5755 = vunpack.c.l.b16 %v5723
      %v5756 = vunpack.c.l.b16 %v5724
      %v5757 = vunpack.c.l.b16 %v5725
      %v5758 = vunpack.c.l.b16 %v5726
      %v5759 = vunpack.c.l.b16 %v5727
      %v5760 = vunpack.c.l.b16 %v5728
      %v5761 = vunpack.c.l.b16 %v5729
      %v5762 = vpack.c.b16 %v5747, %v5746
      %v5763 = vpack.c.b16 %v5749, %v5748
      %v5764 = vpack.c.b16 %v5751, %v5750
      %v5765 = vpack.c.b16 %v5753, %v5752
      %v5766 = vpack.c.b16 %v5755, %v5754
      %v5767 = vpack.c.b16 %v5757, %v5756
      %v5768 = vpack.c.b16 %v5759, %v5758
      %v5769 = vpack.c.b16 %v5761, %v5760
      %5778 = vmatprep.subr.bf16.mxu0 0
      %5779 = vmatpush1.bf16.msra.mxu0 %v5762
      %5780 = vmatprep.subr.bf16.mxu0 0
      %5781 = vmatpush1.bf16.msra.mxu0 %v5763
      %5782 = vmatprep.subr.bf16.mxu0 0
      %5783 = vmatpush1.bf16.msra.mxu0 %v5764
      %5784 = vmatprep.subr.bf16.mxu0 0
      %5785 = vmatpush1.bf16.msra.mxu0 %v5765
      %5786 = vmatprep.subr.bf16.mxu0 0
      %5787 = vmatpush1.bf16.msra.mxu0 %v5766
      %5788 = vmatprep.subr.bf16.mxu0 0
      %5789 = vmatpush1.bf16.msra.mxu0 %v5767
      %5790 = vmatprep.subr.bf16.mxu0 0
      %5791 = vmatpush1.bf16.msra.mxu0 %v5768
      %5792 = vmatprep.subr.bf16.mxu0 0
      %5793 = vmatpush1.bf16.msra.mxu0 %v5769
      %5794 = vmatprep.subr.bf16.mxu0 0
      %5795 = vmatpush1.bf16.msra.mxu0 0
      %5796 = vmatprep.subr.bf16.mxu0 0
      %5797 = vmatpush1.bf16.msra.mxu0 0
      %5798 = vmatprep.subr.bf16.mxu0 0
      %5799 = vmatpush1.bf16.msra.mxu0 0
      %5800 = vmatprep.subr.bf16.mxu0 0
      %5801 = vmatpush1.bf16.msra.mxu0 0
      %5802 = vmatprep.subr.bf16.mxu0 0
      %5803 = vmatpush1.bf16.msra.mxu0 0
      %5804 = vmatprep.subr.bf16.mxu0 0
      %5805 = vmatpush1.bf16.msra.mxu0 0
      %5806 = vmatprep.subr.bf16.mxu0 0
      %5807 = vmatpush1.bf16.msra.mxu0 0
      %5808 = vmatprep.subr.bf16.mxu0 0
      %5809 = vmatpush1.bf16.msra.mxu0 0
      %5810 = vmatprep.mubr.bf16.mxu0 0
      %5811 = vmatmul.mubr.bf16.gmra.mrb[0].mxu0 %v5697
      %v5812 = vpop.f32.mrb[0].mxu0
      %v5813 = vadd.f32 0.0, %v5812
      %v5814 = vpop.f32.mrb[0].mxu0
      %v5815 = vpop.f32.mrb[0].mxu0
      %v5816 = vadd.f32 0.0, %v5815
      %v5817 = vpop.f32.mrb[0].mxu0
      %5818 = vmatprep.mubr.bf16.mxu0 0
      %5819 = vmatmul.mubr.bf16.gmra.mrb[0].mxu0 %v5698
      %v5820 = vpop.f32.mrb[0].mxu0
      %v5821 = vadd.f32 0.0, %v5820
      %v5822 = vpop.f32.mrb[0].mxu0
      %v5823 = vpop.f32.mrb[0].mxu0
      %v5824 = vadd.f32 0.0, %v5823
      %v5825 = vpop.f32.mrb[0].mxu0
      %5826 = vmatprep.mubr.bf16.mxu0 0
      %5827 = vmatmul.mubr.bf16.gmra.mrb[0].mxu0 %v5699
      %v5828 = vpop.f32.mrb[0].mxu0
      %v5829 = vadd.f32 0.0, %v5828
      %v5830 = vpop.f32.mrb[0].mxu0
      %v5831 = vpop.f32.mrb[0].mxu0
      %v5832 = vadd.f32 0.0, %v5831
      %v5833 = vpop.f32.mrb[0].mxu0
      %5834 = vmatprep.mubr.bf16.mxu0 0
      %5835 = vmatmul.mubr.bf16.gmra.mrb[0].mxu0 %v5700
      %v5836 = vpop.f32.mrb[0].mxu0
      %v5837 = vadd.f32 0.0, %v5836
      %v5838 = vpop.f32.mrb[0].mxu0
      %v5839 = vpop.f32.mrb[0].mxu0
      %v5840 = vadd.f32 0.0, %v5839
      %v5841 = vpop.f32.mrb[0].mxu0
      %5842 = vmatprep.mubr.bf16.mxu0 0
      %5843 = vmatmul.mubr.bf16.gmra.mrb[0].mxu0 %v5701
      %v5844 = vpop.f32.mrb[0].mxu0
      %v5845 = vadd.f32 0.0, %v5844
      %v5846 = vpop.f32.mrb[0].mxu0
      %v5847 = vpop.f32.mrb[0].mxu0
      %v5848 = vadd.f32 0.0, %v5847
      %v5849 = vpop.f32.mrb[0].mxu0
      %5850 = vmatprep.mubr.bf16.mxu0 0
      %5851 = vmatmul.mubr.bf16.gmra.mrb[0].mxu0 %v5702
      %v5852 = vpop.f32.mrb[0].mxu0
      %v5853 = vadd.f32 0.0, %v5852
      %v5854 = vpop.f32.mrb[0].mxu0
      %v5855 = vpop.f32.mrb[0].mxu0
      %v5856 = vadd.f32 0.0, %v5855
      %v5857 = vpop.f32.mrb[0].mxu0
      %5858 = vmatprep.mubr.bf16.mxu0 0
      %5859 = vmatmul.mubr.bf16.gmra.mrb[0].mxu0 %v5703
      %v5860 = vpop.f32.mrb[0].mxu0
      %v5861 = vadd.f32 0.0, %v5860
      %v5862 = vpop.f32.mrb[0].mxu0
      %v5863 = vpop.f32.mrb[0].mxu0
      %v5864 = vadd.f32 0.0, %v5863
      %v5865 = vpop.f32.mrb[0].mxu0
      %5866 = vmatprep.mubr.bf16.mxu0 0
      %5867 = vmatmul.mubr.bf16.gmra.mrb[0].mxu0 %v5704
      %v5868 = vpop.f32.mrb[0].mxu0
      %v5869 = vadd.f32 0.0, %v5868
      %v5870 = vpop.f32.mrb[0].mxu0
      %v5871 = vpop.f32.mrb[0].mxu0
      %v5872 = vadd.f32 0.0, %v5871
      %v5873 = vpop.f32.mrb[0].mxu0
      %5874 = vmatprep.mubr.bf16.mxu0 0
      %5875 = vmatmul.mubr.bf16.gmra.mrb[0].mxu0 %v5705
      %v5876 = vpop.f32.mrb[0].mxu0
      %v5877 = vadd.f32 0.0, %v5876
      %v5878 = vpop.f32.mrb[0].mxu0
      %v5879 = vpop.f32.mrb[0].mxu0
      %v5880 = vadd.f32 0.0, %v5879
      %v5881 = vpop.f32.mrb[0].mxu0
      %5882 = vmatprep.mubr.bf16.mxu0 0
      %5883 = vmatmul.mubr.bf16.gmra.mrb[0].mxu0 %v5706
      %v5884 = vpop.f32.mrb[0].mxu0
      %v5885 = vadd.f32 0.0, %v5884
      %v5886 = vpop.f32.mrb[0].mxu0
      %v5887 = vpop.f32.mrb[0].mxu0
      %v5888 = vadd.f32 0.0, %v5887
      %v5889 = vpop.f32.mrb[0].mxu0
      %5890 = vmatprep.mubr.bf16.mxu0 0
      %5891 = vmatmul.mubr.bf16.gmra.mrb[0].mxu0 %v5707
      %v5892 = vpop.f32.mrb[0].mxu0
      %v5893 = vadd.f32 0.0, %v5892
      %v5894 = vpop.f32.mrb[0].mxu0
      %v5895 = vpop.f32.mrb[0].mxu0
      %v5896 = vadd.f32 0.0, %v5895
      %v5897 = vpop.f32.mrb[0].mxu0
      %5898 = vmatprep.mubr.bf16.mxu0 0
      %5899 = vmatmul.mubr.bf16.gmra.mrb[0].mxu0 %v5708
      %v5900 = vpop.f32.mrb[0].mxu0
      %v5901 = vadd.f32 0.0, %v5900
      %v5902 = vpop.f32.mrb[0].mxu0
      %v5903 = vpop.f32.mrb[0].mxu0
      %v5904 = vadd.f32 0.0, %v5903
      %v5905 = vpop.f32.mrb[0].mxu0
      %5906 = vmatprep.mubr.bf16.mxu0 0
      %5907 = vmatmul.mubr.bf16.gmra.mrb[0].mxu0 %v5709
      %v5908 = vpop.f32.mrb[0].mxu0
      %v5909 = vadd.f32 0.0, %v5908
      %v5910 = vpop.f32.mrb[0].mxu0
      %v5911 = vpop.f32.mrb[0].mxu0
      %v5912 = vadd.f32 0.0, %v5911
      %v5913 = vpop.f32.mrb[0].mxu0
      %5914 = vmatprep.mubr.bf16.mxu0 0
      %5915 = vmatmul.mubr.bf16.gmra.mrb[0].mxu0 %v5710
      %v5916 = vpop.f32.mrb[0].mxu0
      %v5917 = vadd.f32 0.0, %v5916
      %v5918 = vpop.f32.mrb[0].mxu0
      %v5919 = vpop.f32.mrb[0].mxu0
      %v5920 = vadd.f32 0.0, %v5919
      %v5921 = vpop.f32.mrb[0].mxu0
      %5922 = vmatprep.mubr.bf16.mxu0 0
      %5923 = vmatmul.mubr.bf16.gmra.mrb[0].mxu0 %v5711
      %v5924 = vpop.f32.mrb[0].mxu0
      %v5925 = vadd.f32 0.0, %v5924
      %v5926 = vpop.f32.mrb[0].mxu0
      %v5927 = vpop.f32.mrb[0].mxu0
      %v5928 = vadd.f32 0.0, %v5927
      %v5929 = vpop.f32.mrb[0].mxu0
      %5930 = vmatprep.mubr.bf16.mxu0 0
      %5931 = vmatmul.mubr.bf16.gmra.mrb[0].mxu0 %v5712
      %v5932 = vpop.f32.mrb[0].mxu0
      %v5933 = vadd.f32 0.0, %v5932
      %v5934 = vpop.f32.mrb[0].mxu0
      %v5935 = vpop.f32.mrb[0].mxu0
      %v5936 = vadd.f32 0.0, %v5935
      %v5937 = vpop.f32.mrb[0].mxu0
      %5938 = vdwg.mxu0
      %v5939 = vadd.f32 %v5665, %v5813
      %v5940 = vadd.f32 %v5666, %v5816
      %v5941 = vadd.f32 %v5667, %v5821
      %v5942 = vadd.f32 %v5668, %v5824
      %v5943 = vadd.f32 %v5669, %v5829
      %v5944 = vadd.f32 %v5670, %v5832
      %v5945 = vadd.f32 %v5671, %v5837
      %v5946 = vadd.f32 %v5672, %v5840
      %v5947 = vadd.f32 %v5673, %v5845
      %v5948 = vadd.f32 %v5674, %v5848
      %v5949 = vadd.f32 %v5675, %v5853
      %v5950 = vadd.f32 %v5676, %v5856
      %v5951 = vadd.f32 %v5677, %v5861
      %v5952 = vadd.f32 %v5678, %v5864
      %v5953 = vadd.f32 %v5679, %v5869
      %v5954 = vadd.f32 %v5680, %v5872
      %v5955 = vadd.f32 %v5681, %v5877
      %v5956 = vadd.f32 %v5682, %v5880
      %v5957 = vadd.f32 %v5683, %v5885
      %v5958 = vadd.f32 %v5684, %v5888
      %v5959 = vadd.f32 %v5685, %v5893
      %v5960 = vadd.f32 %v5686, %v5896
      %v5961 = vadd.f32 %v5687, %v5901
      %v5962 = vadd.f32 %v5688, %v5904
      %v5963 = vadd.f32 %v5689, %v5909
      %v5964 = vadd.f32 %v5690, %v5912
      %v5965 = vadd.f32 %v5691, %v5917
      %v5966 = vadd.f32 %v5692, %v5920
      %v5967 = vadd.f32 %v5693, %v5925
      %v5968 = vadd.f32 %v5694, %v5928
      %v5969 = vadd.f32 %v5695, %v5933
      %v5970 = vadd.f32 %v5696, %v5936
      %s5971 = scalar_lea.vmem [#allocation2], 16
      %v5972 = vld [vmem:[%s5971] sm:$0xff]
      %v5973 = vld [vmem:[%s5971 + $0x8] sm:$0xff]
      %v5974 = vld [vmem:[%s5971 + $0x10] sm:$0xff]
      %v5975 = vld [vmem:[%s5971 + $0x18] sm:$0xff]
      %v5976 = vld [vmem:[%s5971 + $0x20] sm:$0xff]
      %v5977 = vld [vmem:[%s5971 + $0x28] sm:$0xff]
      %v5978 = vld [vmem:[%s5971 + $0x30] sm:$0xff]
      %v5979 = vld [vmem:[%s5971 + $0x38] sm:$0xff]
      %v5980 = vld [vmem:[%s5971 + $0x40] sm:$0xff]
      %v5981 = vld [vmem:[%s5971 + $0x48] sm:$0xff]
      %v5982 = vld [vmem:[%s5971 + $0x50] sm:$0xff]
      %v5983 = vld [vmem:[%s5971 + $0x58] sm:$0xff]
      %v5984 = vld [vmem:[%s5971 + $0x60] sm:$0xff]
      %v5985 = vld [vmem:[%s5971 + $0x68] sm:$0xff]
      %v5986 = vld [vmem:[%s5971 + $0x70] sm:$0xff]
      %v5987 = vld [vmem:[%s5971 + $0x78] sm:$0xff]
      %s5988 = scalar_lea.vmem %s4, 384
      %v5989 = vld [vmem:[%s5988] sm:$0xf]
      %v5990 = vld [vmem:[%s5988 + $0x4] sm:$0xf]
      %v5991 = vld [vmem:[%s5988 + $0x8] sm:$0xf]
      %v5992 = vld [vmem:[%s5988 + $0xc] sm:$0xf]
      %v5993 = vld [vmem:[%s5988 + $0x10] sm:$0xf]
      %v5994 = vld [vmem:[%s5988 + $0x14] sm:$0xf]
      %v5995 = vld [vmem:[%s5988 + $0x18] sm:$0xf]
      %v5996 = vld [vmem:[%s5988 + $0x1c] sm:$0xf]
      %v5997 = vld [vmem:[%s5988 + $0x20] sm:$0xf]
      %v5998 = vld [vmem:[%s5988 + $0x24] sm:$0xf]
      %v5999 = vld [vmem:[%s5988 + $0x28] sm:$0xf]
      %v6000 = vld [vmem:[%s5988 + $0x2c] sm:$0xf]
      %v6001 = vld [vmem:[%s5988 + $0x30] sm:$0xf]
      %v6002 = vld [vmem:[%s5988 + $0x34] sm:$0xf]
      %v6003 = vld [vmem:[%s5988 + $0x38] sm:$0xf]
      %v6004 = vld [vmem:[%s5988 + $0x3c] sm:$0xf]
      %v6021 = vunpack.c.l.b16 %v5989
      %v6022 = vunpack.c.l.b16 %v5990
      %v6023 = vunpack.c.l.b16 %v5991
      %v6024 = vunpack.c.l.b16 %v5992
      %v6025 = vunpack.c.l.b16 %v5993
      %v6026 = vunpack.c.l.b16 %v5994
      %v6027 = vunpack.c.l.b16 %v5995
      %v6028 = vunpack.c.l.b16 %v5996
      %v6029 = vunpack.c.l.b16 %v5997
      %v6030 = vunpack.c.l.b16 %v5998
      %v6031 = vunpack.c.l.b16 %v5999
      %v6032 = vunpack.c.l.b16 %v6000
      %v6033 = vunpack.c.l.b16 %v6001
      %v6034 = vunpack.c.l.b16 %v6002
      %v6035 = vunpack.c.l.b16 %v6003
      %v6036 = vunpack.c.l.b16 %v6004
      %v6037 = vpack.c.b16 %v6022, %v6021
      %v6038 = vpack.c.b16 %v6024, %v6023
      %v6039 = vpack.c.b16 %v6026, %v6025
      %v6040 = vpack.c.b16 %v6028, %v6027
      %v6041 = vpack.c.b16 %v6030, %v6029
      %v6042 = vpack.c.b16 %v6032, %v6031
      %v6043 = vpack.c.b16 %v6034, %v6033
      %v6044 = vpack.c.b16 %v6036, %v6035
      %6053 = vmatprep.subr.bf16.mxu0 0
      %6054 = vmatpush1.bf16.msra.mxu0 %v6037
      %6055 = vmatprep.subr.bf16.mxu0 0
      %6056 = vmatpush1.bf16.msra.mxu0 %v6038
      %6057 = vmatprep.subr.bf16.mxu0 0
      %6058 = vmatpush1.bf16.msra.mxu0 %v6039
      %6059 = vmatprep.subr.bf16.mxu0 0
      %6060 = vmatpush1.bf16.msra.mxu0 %v6040
      %6061 = vmatprep.subr.bf16.mxu0 0
      %6062 = vmatpush1.bf16.msra.mxu0 %v6041
      %6063 = vmatprep.subr.bf16.mxu0 0
      %6064 = vmatpush1.bf16.msra.mxu0 %v6042
      %6065 = vmatprep.subr.bf16.mxu0 0
      %6066 = vmatpush1.bf16.msra.mxu0 %v6043
      %6067 = vmatprep.subr.bf16.mxu0 0
      %6068 = vmatpush1.bf16.msra.mxu0 %v6044
      %6069 = vmatprep.subr.bf16.mxu0 0
      %6070 = vmatpush1.bf16.msra.mxu0 0
      %6071 = vmatprep.subr.bf16.mxu0 0
      %6072 = vmatpush1.bf16.msra.mxu0 0
      %6073 = vmatprep.subr.bf16.mxu0 0
      %6074 = vmatpush1.bf16.msra.mxu0 0
      %6075 = vmatprep.subr.bf16.mxu0 0
      %6076 = vmatpush1.bf16.msra.mxu0 0
      %6077 = vmatprep.subr.bf16.mxu0 0
      %6078 = vmatpush1.bf16.msra.mxu0 0
      %6079 = vmatprep.subr.bf16.mxu0 0
      %6080 = vmatpush1.bf16.msra.mxu0 0
      %6081 = vmatprep.subr.bf16.mxu0 0
      %6082 = vmatpush1.bf16.msra.mxu0 0
      %6083 = vmatprep.subr.bf16.mxu0 0
      %6084 = vmatpush1.bf16.msra.mxu0 0
      %6085 = vmatprep.mubr.bf16.mxu0 0
      %6086 = vmatmul.mubr.bf16.gmra.mrb[0].mxu0 %v5972
      %v6087 = vpop.f32.mrb[0].mxu0
      %v6088 = vadd.f32 0.0, %v6087
      %v6089 = vpop.f32.mrb[0].mxu0
      %v6090 = vpop.f32.mrb[0].mxu0
      %v6091 = vadd.f32 0.0, %v6090
      %v6092 = vpop.f32.mrb[0].mxu0
      %6093 = vmatprep.mubr.bf16.mxu0 0
      %6094 = vmatmul.mubr.bf16.gmra.mrb[0].mxu0 %v5973
      %v6095 = vpop.f32.mrb[0].mxu0
      %v6096 = vadd.f32 0.0, %v6095
      %v6097 = vpop.f32.mrb[0].mxu0
      %v6098 = vpop.f32.mrb[0].mxu0
      %v6099 = vadd.f32 0.0, %v6098
      %v6100 = vpop.f32.mrb[0].mxu0
      %6101 = vmatprep.mubr.bf16.mxu0 0
      %6102 = vmatmul.mubr.bf16.gmra.mrb[0].mxu0 %v5974
      %v6103 = vpop.f32.mrb[0].mxu0
      %v6104 = vadd.f32 0.0, %v6103
      %v6105 = vpop.f32.mrb[0].mxu0
      %v6106 = vpop.f32.mrb[0].mxu0
      %v6107 = vadd.f32 0.0, %v6106
      %v6108 = vpop.f32.mrb[0].mxu0
      %6109 = vmatprep.mubr.bf16.mxu0 0
      %6110 = vmatmul.mubr.bf16.gmra.mrb[0].mxu0 %v5975
      %v6111 = vpop.f32.mrb[0].mxu0
      %v6112 = vadd.f32 0.0, %v6111
      %v6113 = vpop.f32.mrb[0].mxu0
      %v6114 = vpop.f32.mrb[0].mxu0
      %v6115 = vadd.f32 0.0, %v6114
      %v6116 = vpop.f32.mrb[0].mxu0
      %6117 = vmatprep.mubr.bf16.mxu0 0
      %6118 = vmatmul.mubr.bf16.gmra.mrb[0].mxu0 %v5976
      %v6119 = vpop.f32.mrb[0].mxu0
      %v6120 = vadd.f32 0.0, %v6119
      %v6121 = vpop.f32.mrb[0].mxu0
      %v6122 = vpop.f32.mrb[0].mxu0
      %v6123 = vadd.f32 0.0, %v6122
      %v6124 = vpop.f32.mrb[0].mxu0
      %6125 = vmatprep.mubr.bf16.mxu0 0
      %6126 = vmatmul.mubr.bf16.gmra.mrb[0].mxu0 %v5977
      %v6127 = vpop.f32.mrb[0].mxu0
      %v6128 = vadd.f32 0.0, %v6127
      %v6129 = vpop.f32.mrb[0].mxu0
      %v6130 = vpop.f32.mrb[0].mxu0
      %v6131 = vadd.f32 0.0, %v6130
      %v6132 = vpop.f32.mrb[0].mxu0
      %6133 = vmatprep.mubr.bf16.mxu0 0
      %6134 = vmatmul.mubr.bf16.gmra.mrb[0].mxu0 %v5978
      %v6135 = vpop.f32.mrb[0].mxu0
      %v6136 = vadd.f32 0.0, %v6135
      %v6137 = vpop.f32.mrb[0].mxu0
      %v6138 = vpop.f32.mrb[0].mxu0
      %v6139 = vadd.f32 0.0, %v6138
      %v6140 = vpop.f32.mrb[0].mxu0
      %6141 = vmatprep.mubr.bf16.mxu0 0
      %6142 = vmatmul.mubr.bf16.gmra.mrb[0].mxu0 %v5979
      %v6143 = vpop.f32.mrb[0].mxu0
      %v6144 = vadd.f32 0.0, %v6143
      %v6145 = vpop.f32.mrb[0].mxu0
      %v6146 = vpop.f32.mrb[0].mxu0
      %v6147 = vadd.f32 0.0, %v6146
      %v6148 = vpop.f32.mrb[0].mxu0
      %6149 = vmatprep.mubr.bf16.mxu0 0
      %6150 = vmatmul.mubr.bf16.gmra.mrb[0].mxu0 %v5980
      %v6151 = vpop.f32.mrb[0].mxu0
      %v6152 = vadd.f32 0.0, %v6151
      %v6153 = vpop.f32.mrb[0].mxu0
      %v6154 = vpop.f32.mrb[0].mxu0
      %v6155 = vadd.f32 0.0, %v6154
      %v6156 = vpop.f32.mrb[0].mxu0
      %6157 = vmatprep.mubr.bf16.mxu0 0
      %6158 = vmatmul.mubr.bf16.gmra.mrb[0].mxu0 %v5981
      %v6159 = vpop.f32.mrb[0].mxu0
      %v6160 = vadd.f32 0.0, %v6159
      %v6161 = vpop.f32.mrb[0].mxu0
      %v6162 = vpop.f32.mrb[0].mxu0
      %v6163 = vadd.f32 0.0, %v6162
      %v6164 = vpop.f32.mrb[0].mxu0
      %6165 = vmatprep.mubr.bf16.mxu0 0
      %6166 = vmatmul.mubr.bf16.gmra.mrb[0].mxu0 %v5982
      %v6167 = vpop.f32.mrb[0].mxu0
      %v6168 = vadd.f32 0.0, %v6167
      %v6169 = vpop.f32.mrb[0].mxu0
      %v6170 = vpop.f32.mrb[0].mxu0
      %v6171 = vadd.f32 0.0, %v6170
      %v6172 = vpop.f32.mrb[0].mxu0
      %6173 = vmatprep.mubr.bf16.mxu0 0
      %6174 = vmatmul.mubr.bf16.gmra.mrb[0].mxu0 %v5983
      %v6175 = vpop.f32.mrb[0].mxu0
      %v6176 = vadd.f32 0.0, %v6175
      %v6177 = vpop.f32.mrb[0].mxu0
      %v6178 = vpop.f32.mrb[0].mxu0
      %v6179 = vadd.f32 0.0, %v6178
      %v6180 = vpop.f32.mrb[0].mxu0
      %6181 = vmatprep.mubr.bf16.mxu0 0
      %6182 = vmatmul.mubr.bf16.gmra.mrb[0].mxu0 %v5984
      %v6183 = vpop.f32.mrb[0].mxu0
      %v6184 = vadd.f32 0.0, %v6183
      %v6185 = vpop.f32.mrb[0].mxu0
      %v6186 = vpop.f32.mrb[0].mxu0
      %v6187 = vadd.f32 0.0, %v6186
      %v6188 = vpop.f32.mrb[0].mxu0
      %6189 = vmatprep.mubr.bf16.mxu0 0
      %6190 = vmatmul.mubr.bf16.gmra.mrb[0].mxu0 %v5985
      %v6191 = vpop.f32.mrb[0].mxu0
      %v6192 = vadd.f32 0.0, %v6191
      %v6193 = vpop.f32.mrb[0].mxu0
      %v6194 = vpop.f32.mrb[0].mxu0
      %v6195 = vadd.f32 0.0, %v6194
      %v6196 = vpop.f32.mrb[0].mxu0
      %6197 = vmatprep.mubr.bf16.mxu0 0
      %6198 = vmatmul.mubr.bf16.gmra.mrb[0].mxu0 %v5986
      %v6199 = vpop.f32.mrb[0].mxu0
      %v6200 = vadd.f32 0.0, %v6199
      %v6201 = vpop.f32.mrb[0].mxu0
      %v6202 = vpop.f32.mrb[0].mxu0
      %v6203 = vadd.f32 0.0, %v6202
      %v6204 = vpop.f32.mrb[0].mxu0
      %6205 = vmatprep.mubr.bf16.mxu0 0
      %6206 = vmatmul.mubr.bf16.gmra.mrb[0].mxu0 %v5987
      %v6207 = vpop.f32.mrb[0].mxu0
      %v6208 = vadd.f32 0.0, %v6207
      %v6209 = vpop.f32.mrb[0].mxu0
      %v6210 = vpop.f32.mrb[0].mxu0
      %v6211 = vadd.f32 0.0, %v6210
      %v6212 = vpop.f32.mrb[0].mxu0
      %6213 = vdwg.mxu0
      %v6214 = vadd.f32 %v5939, %v6088
      %v6215 = vadd.f32 %v5940, %v6091
      %v6216 = vadd.f32 %v5941, %v6096
      %v6217 = vadd.f32 %v5942, %v6099
      %v6218 = vadd.f32 %v5943, %v6104
      %v6219 = vadd.f32 %v5944, %v6107
      %v6220 = vadd.f32 %v5945, %v6112
      %v6221 = vadd.f32 %v5946, %v6115
      %v6222 = vadd.f32 %v5947, %v6120
      %v6223 = vadd.f32 %v5948, %v6123
      %v6224 = vadd.f32 %v5949, %v6128
      %v6225 = vadd.f32 %v5950, %v6131
      %v6226 = vadd.f32 %v5951, %v6136
      %v6227 = vadd.f32 %v5952, %v6139
      %v6228 = vadd.f32 %v5953, %v6144
      %v6229 = vadd.f32 %v5954, %v6147
      %v6230 = vadd.f32 %v5955, %v6152
      %v6231 = vadd.f32 %v5956, %v6155
      %v6232 = vadd.f32 %v5957, %v6160
      %v6233 = vadd.f32 %v5958, %v6163
      %v6234 = vadd.f32 %v5959, %v6168
      %v6235 = vadd.f32 %v5960, %v6171
      %v6236 = vadd.f32 %v5961, %v6176
      %v6237 = vadd.f32 %v5962, %v6179
      %v6238 = vadd.f32 %v5963, %v6184
      %v6239 = vadd.f32 %v5964, %v6187
      %v6240 = vadd.f32 %v5965, %v6192
      %v6241 = vadd.f32 %v5966, %v6195
      %v6242 = vadd.f32 %v5967, %v6200
      %v6243 = vadd.f32 %v5968, %v6203
      %v6244 = vadd.f32 %v5969, %v6208
      %v6245 = vadd.f32 %v5970, %v6211
      %s6246 = scalar_lea.vmem [#allocation2], 160
      %v6247 = vld [vmem:[%s6246] sm:$0xff]
      %v6248 = vld [vmem:[%s6246 + $0x8] sm:$0xff]
      %v6249 = vld [vmem:[%s6246 + $0x10] sm:$0xff]
      %v6250 = vld [vmem:[%s6246 + $0x18] sm:$0xff]
      %v6251 = vld [vmem:[%s6246 + $0x20] sm:$0xff]
      %v6252 = vld [vmem:[%s6246 + $0x28] sm:$0xff]
      %v6253 = vld [vmem:[%s6246 + $0x30] sm:$0xff]
      %v6254 = vld [vmem:[%s6246 + $0x38] sm:$0xff]
      %v6255 = vld [vmem:[%s6246 + $0x40] sm:$0xff]
      %v6256 = vld [vmem:[%s6246 + $0x48] sm:$0xff]
      %v6257 = vld [vmem:[%s6246 + $0x50] sm:$0xff]
      %v6258 = vld [vmem:[%s6246 + $0x58] sm:$0xff]
      %v6259 = vld [vmem:[%s6246 + $0x60] sm:$0xff]
      %v6260 = vld [vmem:[%s6246 + $0x68] sm:$0xff]
      %v6261 = vld [vmem:[%s6246 + $0x70] sm:$0xff]
      %v6262 = vld [vmem:[%s6246 + $0x78] sm:$0xff]
      %s6263 = scalar_lea.vmem %s4, 448
      %v6264 = vld [vmem:[%s6263] sm:$0xf]
      %v6265 = vld [vmem:[%s6263 + $0x4] sm:$0xf]
      %v6266 = vld [vmem:[%s6263 + $0x8] sm:$0xf]
      %v6267 = vld [vmem:[%s6263 + $0xc] sm:$0xf]
      %v6268 = vld [vmem:[%s6263 + $0x10] sm:$0xf]
      %v6269 = vld [vmem:[%s6263 + $0x14] sm:$0xf]
      %v6270 = vld [vmem:[%s6263 + $0x18] sm:$0xf]
      %v6271 = vld [vmem:[%s6263 + $0x1c] sm:$0xf]
      %v6272 = vld [vmem:[%s6263 + $0x20] sm:$0xf]
      %v6273 = vld [vmem:[%s6263 + $0x24] sm:$0xf]
      %v6274 = vld [vmem:[%s6263 + $0x28] sm:$0xf]
      %v6275 = vld [vmem:[%s6263 + $0x2c] sm:$0xf]
      %v6276 = vld [vmem:[%s6263 + $0x30] sm:$0xf]
      %v6277 = vld [vmem:[%s6263 + $0x34] sm:$0xf]
      %v6278 = vld [vmem:[%s6263 + $0x38] sm:$0xf]
      %v6279 = vld [vmem:[%s6263 + $0x3c] sm:$0xf]
      %v6296 = vunpack.c.l.b16 %v6264
      %v6297 = vunpack.c.l.b16 %v6265
      %v6298 = vunpack.c.l.b16 %v6266
      %v6299 = vunpack.c.l.b16 %v6267
      %v6300 = vunpack.c.l.b16 %v6268
      %v6301 = vunpack.c.l.b16 %v6269
      %v6302 = vunpack.c.l.b16 %v6270
      %v6303 = vunpack.c.l.b16 %v6271
      %v6304 = vunpack.c.l.b16 %v6272
      %v6305 = vunpack.c.l.b16 %v6273
      %v6306 = vunpack.c.l.b16 %v6274
      %v6307 = vunpack.c.l.b16 %v6275
      %v6308 = vunpack.c.l.b16 %v6276
      %v6309 = vunpack.c.l.b16 %v6277
      %v6310 = vunpack.c.l.b16 %v6278
      %v6311 = vunpack.c.l.b16 %v6279
      %v6312 = vpack.c.b16 %v6297, %v6296
      %v6313 = vpack.c.b16 %v6299, %v6298
      %v6314 = vpack.c.b16 %v6301, %v6300
      %v6315 = vpack.c.b16 %v6303, %v6302
      %v6316 = vpack.c.b16 %v6305, %v6304
      %v6317 = vpack.c.b16 %v6307, %v6306
      %v6318 = vpack.c.b16 %v6309, %v6308
      %v6319 = vpack.c.b16 %v6311, %v6310
      %6328 = vmatprep.subr.bf16.mxu0 0
      %6329 = vmatpush1.bf16.msra.mxu0 %v6312
      %6330 = vmatprep.subr.bf16.mxu0 0
      %6331 = vmatpush1.bf16.msra.mxu0 %v6313
      %6332 = vmatprep.subr.bf16.mxu0 0
      %6333 = vmatpush1.bf16.msra.mxu0 %v6314
      %6334 = vmatprep.subr.bf16.mxu0 0
      %6335 = vmatpush1.bf16.msra.mxu0 %v6315
      %6336 = vmatprep.subr.bf16.mxu0 0
      %6337 = vmatpush1.bf16.msra.mxu0 %v6316
      %6338 = vmatprep.subr.bf16.mxu0 0
      %6339 = vmatpush1.bf16.msra.mxu0 %v6317
      %6340 = vmatprep.subr.bf16.mxu0 0
      %6341 = vmatpush1.bf16.msra.mxu0 %v6318
      %6342 = vmatprep.subr.bf16.mxu0 0
      %6343 = vmatpush1.bf16.msra.mxu0 %v6319
      %6344 = vmatprep.subr.bf16.mxu0 0
      %6345 = vmatpush1.bf16.msra.mxu0 0
      %6346 = vmatprep.subr.bf16.mxu0 0
      %6347 = vmatpush1.bf16.msra.mxu0 0
      %6348 = vmatprep.subr.bf16.mxu0 0
      %6349 = vmatpush1.bf16.msra.mxu0 0
      %6350 = vmatprep.subr.bf16.mxu0 0
      %6351 = vmatpush1.bf16.msra.mxu0 0
      %6352 = vmatprep.subr.bf16.mxu0 0
      %6353 = vmatpush1.bf16.msra.mxu0 0
      %6354 = vmatprep.subr.bf16.mxu0 0
      %6355 = vmatpush1.bf16.msra.mxu0 0
      %6356 = vmatprep.subr.bf16.mxu0 0
      %6357 = vmatpush1.bf16.msra.mxu0 0
      %6358 = vmatprep.subr.bf16.mxu0 0
      %6359 = vmatpush1.bf16.msra.mxu0 0
      %6360 = vmatprep.mubr.bf16.mxu0 0
      %6361 = vmatmul.mubr.bf16.gmra.mrb[0].mxu0 %v6247
      %v6362 = vpop.f32.mrb[0].mxu0
      %v6363 = vadd.f32 0.0, %v6362
      %v6364 = vpop.f32.mrb[0].mxu0
      %v6365 = vpop.f32.mrb[0].mxu0
      %v6366 = vadd.f32 0.0, %v6365
      %v6367 = vpop.f32.mrb[0].mxu0
      %6368 = vmatprep.mubr.bf16.mxu0 0
      %6369 = vmatmul.mubr.bf16.gmra.mrb[0].mxu0 %v6248
      %v6370 = vpop.f32.mrb[0].mxu0
      %v6371 = vadd.f32 0.0, %v6370
      %v6372 = vpop.f32.mrb[0].mxu0
      %v6373 = vpop.f32.mrb[0].mxu0
      %v6374 = vadd.f32 0.0, %v6373
      %v6375 = vpop.f32.mrb[0].mxu0
      %6376 = vmatprep.mubr.bf16.mxu0 0
      %6377 = vmatmul.mubr.bf16.gmra.mrb[0].mxu0 %v6249
      %v6378 = vpop.f32.mrb[0].mxu0
      %v6379 = vadd.f32 0.0, %v6378
      %v6380 = vpop.f32.mrb[0].mxu0
      %v6381 = vpop.f32.mrb[0].mxu0
      %v6382 = vadd.f32 0.0, %v6381
      %v6383 = vpop.f32.mrb[0].mxu0
      %6384 = vmatprep.mubr.bf16.mxu0 0
      %6385 = vmatmul.mubr.bf16.gmra.mrb[0].mxu0 %v6250
      %v6386 = vpop.f32.mrb[0].mxu0
      %v6387 = vadd.f32 0.0, %v6386
      %v6388 = vpop.f32.mrb[0].mxu0
      %v6389 = vpop.f32.mrb[0].mxu0
      %v6390 = vadd.f32 0.0, %v6389
      %v6391 = vpop.f32.mrb[0].mxu0
      %6392 = vmatprep.mubr.bf16.mxu0 0
      %6393 = vmatmul.mubr.bf16.gmra.mrb[0].mxu0 %v6251
      %v6394 = vpop.f32.mrb[0].mxu0
      %v6395 = vadd.f32 0.0, %v6394
      %v6396 = vpop.f32.mrb[0].mxu0
      %v6397 = vpop.f32.mrb[0].mxu0
      %v6398 = vadd.f32 0.0, %v6397
      %v6399 = vpop.f32.mrb[0].mxu0
      %6400 = vmatprep.mubr.bf16.mxu0 0
      %6401 = vmatmul.mubr.bf16.gmra.mrb[0].mxu0 %v6252
      %v6402 = vpop.f32.mrb[0].mxu0
      %v6403 = vadd.f32 0.0, %v6402
      %v6404 = vpop.f32.mrb[0].mxu0
      %v6405 = vpop.f32.mrb[0].mxu0
      %v6406 = vadd.f32 0.0, %v6405
      %v6407 = vpop.f32.mrb[0].mxu0
      %6408 = vmatprep.mubr.bf16.mxu0 0
      %6409 = vmatmul.mubr.bf16.gmra.mrb[0].mxu0 %v6253
      %v6410 = vpop.f32.mrb[0].mxu0
      %v6411 = vadd.f32 0.0, %v6410
      %v6412 = vpop.f32.mrb[0].mxu0
      %v6413 = vpop.f32.mrb[0].mxu0
      %v6414 = vadd.f32 0.0, %v6413
      %v6415 = vpop.f32.mrb[0].mxu0
      %6416 = vmatprep.mubr.bf16.mxu0 0
      %6417 = vmatmul.mubr.bf16.gmra.mrb[0].mxu0 %v6254
      %v6418 = vpop.f32.mrb[0].mxu0
      %v6419 = vadd.f32 0.0, %v6418
      %v6420 = vpop.f32.mrb[0].mxu0
      %v6421 = vpop.f32.mrb[0].mxu0
      %v6422 = vadd.f32 0.0, %v6421
      %v6423 = vpop.f32.mrb[0].mxu0
      %6424 = vmatprep.mubr.bf16.mxu0 0
      %6425 = vmatmul.mubr.bf16.gmra.mrb[0].mxu0 %v6255
      %v6426 = vpop.f32.mrb[0].mxu0
      %v6427 = vadd.f32 0.0, %v6426
      %v6428 = vpop.f32.mrb[0].mxu0
      %v6429 = vpop.f32.mrb[0].mxu0
      %v6430 = vadd.f32 0.0, %v6429
      %v6431 = vpop.f32.mrb[0].mxu0
      %6432 = vmatprep.mubr.bf16.mxu0 0
      %6433 = vmatmul.mubr.bf16.gmra.mrb[0].mxu0 %v6256
      %v6434 = vpop.f32.mrb[0].mxu0
      %v6435 = vadd.f32 0.0, %v6434
      %v6436 = vpop.f32.mrb[0].mxu0
      %v6437 = vpop.f32.mrb[0].mxu0
      %v6438 = vadd.f32 0.0, %v6437
      %v6439 = vpop.f32.mrb[0].mxu0
      %6440 = vmatprep.mubr.bf16.mxu0 0
      %6441 = vmatmul.mubr.bf16.gmra.mrb[0].mxu0 %v6257
      %v6442 = vpop.f32.mrb[0].mxu0
      %v6443 = vadd.f32 0.0, %v6442
      %v6444 = vpop.f32.mrb[0].mxu0
      %v6445 = vpop.f32.mrb[0].mxu0
      %v6446 = vadd.f32 0.0, %v6445
      %v6447 = vpop.f32.mrb[0].mxu0
      %6448 = vmatprep.mubr.bf16.mxu0 0
      %6449 = vmatmul.mubr.bf16.gmra.mrb[0].mxu0 %v6258
      %v6450 = vpop.f32.mrb[0].mxu0
      %v6451 = vadd.f32 0.0, %v6450
      %v6452 = vpop.f32.mrb[0].mxu0
      %v6453 = vpop.f32.mrb[0].mxu0
      %v6454 = vadd.f32 0.0, %v6453
      %v6455 = vpop.f32.mrb[0].mxu0
      %6456 = vmatprep.mubr.bf16.mxu0 0
      %6457 = vmatmul.mubr.bf16.gmra.mrb[0].mxu0 %v6259
      %v6458 = vpop.f32.mrb[0].mxu0
      %v6459 = vadd.f32 0.0, %v6458
      %v6460 = vpop.f32.mrb[0].mxu0
      %v6461 = vpop.f32.mrb[0].mxu0
      %v6462 = vadd.f32 0.0, %v6461
      %v6463 = vpop.f32.mrb[0].mxu0
      %6464 = vmatprep.mubr.bf16.mxu0 0
      %6465 = vmatmul.mubr.bf16.gmra.mrb[0].mxu0 %v6260
      %v6466 = vpop.f32.mrb[0].mxu0
      %v6467 = vadd.f32 0.0, %v6466
      %v6468 = vpop.f32.mrb[0].mxu0
      %v6469 = vpop.f32.mrb[0].mxu0
      %v6470 = vadd.f32 0.0, %v6469
      %v6471 = vpop.f32.mrb[0].mxu0
      %6472 = vmatprep.mubr.bf16.mxu0 0
      %6473 = vmatmul.mubr.bf16.gmra.mrb[0].mxu0 %v6261
      %v6474 = vpop.f32.mrb[0].mxu0
      %v6475 = vadd.f32 0.0, %v6474
      %v6476 = vpop.f32.mrb[0].mxu0
      %v6477 = vpop.f32.mrb[0].mxu0
      %v6478 = vadd.f32 0.0, %v6477
      %v6479 = vpop.f32.mrb[0].mxu0
      %6480 = vmatprep.mubr.bf16.mxu0 0
      %6481 = vmatmul.mubr.bf16.gmra.mrb[0].mxu0 %v6262
      %v6482 = vpop.f32.mrb[0].mxu0
      %v6483 = vadd.f32 0.0, %v6482
      %v6484 = vpop.f32.mrb[0].mxu0
      %v6485 = vpop.f32.mrb[0].mxu0
      %v6486 = vadd.f32 0.0, %v6485
      %v6487 = vpop.f32.mrb[0].mxu0
      %6488 = vdwg.mxu0
      %v6489 = vadd.f32 %v6214, %v6363
      %v6490 = vadd.f32 %v6215, %v6366
      %v6491 = vadd.f32 %v6216, %v6371
      %v6492 = vadd.f32 %v6217, %v6374
      %v6493 = vadd.f32 %v6218, %v6379
      %v6494 = vadd.f32 %v6219, %v6382
      %v6495 = vadd.f32 %v6220, %v6387
      %v6496 = vadd.f32 %v6221, %v6390
      %v6497 = vadd.f32 %v6222, %v6395
      %v6498 = vadd.f32 %v6223, %v6398
      %v6499 = vadd.f32 %v6224, %v6403
      %v6500 = vadd.f32 %v6225, %v6406
      %v6501 = vadd.f32 %v6226, %v6411
      %v6502 = vadd.f32 %v6227, %v6414
      %v6503 = vadd.f32 %v6228, %v6419
      %v6504 = vadd.f32 %v6229, %v6422
      %v6505 = vadd.f32 %v6230, %v6427
      %v6506 = vadd.f32 %v6231, %v6430
      %v6507 = vadd.f32 %v6232, %v6435
      %v6508 = vadd.f32 %v6233, %v6438
      %v6509 = vadd.f32 %v6234, %v6443
      %v6510 = vadd.f32 %v6235, %v6446
      %v6511 = vadd.f32 %v6236, %v6451
      %v6512 = vadd.f32 %v6237, %v6454
      %v6513 = vadd.f32 %v6238, %v6459
      %v6514 = vadd.f32 %v6239, %v6462
      %v6515 = vadd.f32 %v6240, %v6467
      %v6516 = vadd.f32 %v6241, %v6470
      %v6517 = vadd.f32 %v6242, %v6475
      %v6518 = vadd.f32 %v6243, %v6478
      %v6519 = vadd.f32 %v6244, %v6483
      %v6520 = vadd.f32 %v6245, %v6486
      %s6521 = scalar_lea.vmem [#allocation2], 304
      %v6522 = vld [vmem:[%s6521] sm:$0xff]
      %v6523 = vld [vmem:[%s6521 + $0x8] sm:$0xff]
      %v6524 = vld [vmem:[%s6521 + $0x10] sm:$0xff]
      %v6525 = vld [vmem:[%s6521 + $0x18] sm:$0xff]
      %v6526 = vld [vmem:[%s6521 + $0x20] sm:$0xff]
      %v6527 = vld [vmem:[%s6521 + $0x28] sm:$0xff]
      %v6528 = vld [vmem:[%s6521 + $0x30] sm:$0xff]
      %v6529 = vld [vmem:[%s6521 + $0x38] sm:$0xff]
      %v6530 = vld [vmem:[%s6521 + $0x40] sm:$0xff]
      %v6531 = vld [vmem:[%s6521 + $0x48] sm:$0xff]
      %v6532 = vld [vmem:[%s6521 + $0x50] sm:$0xff]
      %v6533 = vld [vmem:[%s6521 + $0x58] sm:$0xff]
      %v6534 = vld [vmem:[%s6521 + $0x60] sm:$0xff]
      %v6535 = vld [vmem:[%s6521 + $0x68] sm:$0xff]
      %v6536 = vld [vmem:[%s6521 + $0x70] sm:$0xff]
      %v6537 = vld [vmem:[%s6521 + $0x78] sm:$0xff]
      %s6538 = scalar_lea.vmem %s4, 512
      %v6539 = vld [vmem:[%s6538] sm:$0xf]
      %v6540 = vld [vmem:[%s6538 + $0x4] sm:$0xf]
      %v6541 = vld [vmem:[%s6538 + $0x8] sm:$0xf]
      %v6542 = vld [vmem:[%s6538 + $0xc] sm:$0xf]
      %v6543 = vld [vmem:[%s6538 + $0x10] sm:$0xf]
      %v6544 = vld [vmem:[%s6538 + $0x14] sm:$0xf]
      %v6545 = vld [vmem:[%s6538 + $0x18] sm:$0xf]
      %v6546 = vld [vmem:[%s6538 + $0x1c] sm:$0xf]
      %v6547 = vld [vmem:[%s6538 + $0x20] sm:$0xf]
      %v6548 = vld [vmem:[%s6538 + $0x24] sm:$0xf]
      %v6549 = vld [vmem:[%s6538 + $0x28] sm:$0xf]
      %v6550 = vld [vmem:[%s6538 + $0x2c] sm:$0xf]
      %v6551 = vld [vmem:[%s6538 + $0x30] sm:$0xf]
      %v6552 = vld [vmem:[%s6538 + $0x34] sm:$0xf]
      %v6553 = vld [vmem:[%s6538 + $0x38] sm:$0xf]
      %v6554 = vld [vmem:[%s6538 + $0x3c] sm:$0xf]
      %v6571 = vunpack.c.l.b16 %v6539
      %v6572 = vunpack.c.l.b16 %v6540
      %v6573 = vunpack.c.l.b16 %v6541
      %v6574 = vunpack.c.l.b16 %v6542
      %v6575 = vunpack.c.l.b16 %v6543
      %v6576 = vunpack.c.l.b16 %v6544
      %v6577 = vunpack.c.l.b16 %v6545
      %v6578 = vunpack.c.l.b16 %v6546
      %v6579 = vunpack.c.l.b16 %v6547
      %v6580 = vunpack.c.l.b16 %v6548
      %v6581 = vunpack.c.l.b16 %v6549
      %v6582 = vunpack.c.l.b16 %v6550
      %v6583 = vunpack.c.l.b16 %v6551
      %v6584 = vunpack.c.l.b16 %v6552
      %v6585 = vunpack.c.l.b16 %v6553
      %v6586 = vunpack.c.l.b16 %v6554
      %v6587 = vpack.c.b16 %v6572, %v6571
      %v6588 = vpack.c.b16 %v6574, %v6573
      %v6589 = vpack.c.b16 %v6576, %v6575
      %v6590 = vpack.c.b16 %v6578, %v6577
      %v6591 = vpack.c.b16 %v6580, %v6579
      %v6592 = vpack.c.b16 %v6582, %v6581
      %v6593 = vpack.c.b16 %v6584, %v6583
      %v6594 = vpack.c.b16 %v6586, %v6585
      %6603 = vmatprep.subr.bf16.mxu0 0
      %6604 = vmatpush1.bf16.msra.mxu0 %v6587
      %6605 = vmatprep.subr.bf16.mxu0 0
      %6606 = vmatpush1.bf16.msra.mxu0 %v6588
      %6607 = vmatprep.subr.bf16.mxu0 0
      %6608 = vmatpush1.bf16.msra.mxu0 %v6589
      %6609 = vmatprep.subr.bf16.mxu0 0
      %6610 = vmatpush1.bf16.msra.mxu0 %v6590
      %6611 = vmatprep.subr.bf16.mxu0 0
      %6612 = vmatpush1.bf16.msra.mxu0 %v6591
      %6613 = vmatprep.subr.bf16.mxu0 0
      %6614 = vmatpush1.bf16.msra.mxu0 %v6592
      %6615 = vmatprep.subr.bf16.mxu0 0
      %6616 = vmatpush1.bf16.msra.mxu0 %v6593
      %6617 = vmatprep.subr.bf16.mxu0 0
      %6618 = vmatpush1.bf16.msra.mxu0 %v6594
      %6619 = vmatprep.subr.bf16.mxu0 0
      %6620 = vmatpush1.bf16.msra.mxu0 0
      %6621 = vmatprep.subr.bf16.mxu0 0
      %6622 = vmatpush1.bf16.msra.mxu0 0
      %6623 = vmatprep.subr.bf16.mxu0 0
      %6624 = vmatpush1.bf16.msra.mxu0 0
      %6625 = vmatprep.subr.bf16.mxu0 0
      %6626 = vmatpush1.bf16.msra.mxu0 0
      %6627 = vmatprep.subr.bf16.mxu0 0
      %6628 = vmatpush1.bf16.msra.mxu0 0
      %6629 = vmatprep.subr.bf16.mxu0 0
      %6630 = vmatpush1.bf16.msra.mxu0 0
      %6631 = vmatprep.subr.bf16.mxu0 0
      %6632 = vmatpush1.bf16.msra.mxu0 0
      %6633 = vmatprep.subr.bf16.mxu0 0
      %6634 = vmatpush1.bf16.msra.mxu0 0
      %6635 = vmatprep.mubr.bf16.mxu0 0
      %6636 = vmatmul.mubr.bf16.gmra.mrb[0].mxu0 %v6522
      %v6637 = vpop.f32.mrb[0].mxu0
      %v6638 = vadd.f32 0.0, %v6637
      %v6639 = vpop.f32.mrb[0].mxu0
      %v6640 = vpop.f32.mrb[0].mxu0
      %v6641 = vadd.f32 0.0, %v6640
      %v6642 = vpop.f32.mrb[0].mxu0
      %6643 = vmatprep.mubr.bf16.mxu0 0
      %6644 = vmatmul.mubr.bf16.gmra.mrb[0].mxu0 %v6523
      %v6645 = vpop.f32.mrb[0].mxu0
      %v6646 = vadd.f32 0.0, %v6645
      %v6647 = vpop.f32.mrb[0].mxu0
      %v6648 = vpop.f32.mrb[0].mxu0
      %v6649 = vadd.f32 0.0, %v6648
      %v6650 = vpop.f32.mrb[0].mxu0
      %6651 = vmatprep.mubr.bf16.mxu0 0
      %6652 = vmatmul.mubr.bf16.gmra.mrb[0].mxu0 %v6524
      %v6653 = vpop.f32.mrb[0].mxu0
      %v6654 = vadd.f32 0.0, %v6653
      %v6655 = vpop.f32.mrb[0].mxu0
      %v6656 = vpop.f32.mrb[0].mxu0
      %v6657 = vadd.f32 0.0, %v6656
      %v6658 = vpop.f32.mrb[0].mxu0
      %6659 = vmatprep.mubr.bf16.mxu0 0
      %6660 = vmatmul.mubr.bf16.gmra.mrb[0].mxu0 %v6525
      %v6661 = vpop.f32.mrb[0].mxu0
      %v6662 = vadd.f32 0.0, %v6661
      %v6663 = vpop.f32.mrb[0].mxu0
      %v6664 = vpop.f32.mrb[0].mxu0
      %v6665 = vadd.f32 0.0, %v6664
      %v6666 = vpop.f32.mrb[0].mxu0
      %6667 = vmatprep.mubr.bf16.mxu0 0
      %6668 = vmatmul.mubr.bf16.gmra.mrb[0].mxu0 %v6526
      %v6669 = vpop.f32.mrb[0].mxu0
      %v6670 = vadd.f32 0.0, %v6669
      %v6671 = vpop.f32.mrb[0].mxu0
      %v6672 = vpop.f32.mrb[0].mxu0
      %v6673 = vadd.f32 0.0, %v6672
      %v6674 = vpop.f32.mrb[0].mxu0
      %6675 = vmatprep.mubr.bf16.mxu0 0
      %6676 = vmatmul.mubr.bf16.gmra.mrb[0].mxu0 %v6527
      %v6677 = vpop.f32.mrb[0].mxu0
      %v6678 = vadd.f32 0.0, %v6677
      %v6679 = vpop.f32.mrb[0].mxu0
      %v6680 = vpop.f32.mrb[0].mxu0
      %v6681 = vadd.f32 0.0, %v6680
      %v6682 = vpop.f32.mrb[0].mxu0
      %6683 = vmatprep.mubr.bf16.mxu0 0
      %6684 = vmatmul.mubr.bf16.gmra.mrb[0].mxu0 %v6528
      %v6685 = vpop.f32.mrb[0].mxu0
      %v6686 = vadd.f32 0.0, %v6685
      %v6687 = vpop.f32.mrb[0].mxu0
      %v6688 = vpop.f32.mrb[0].mxu0
      %v6689 = vadd.f32 0.0, %v6688
      %v6690 = vpop.f32.mrb[0].mxu0
      %6691 = vmatprep.mubr.bf16.mxu0 0
      %6692 = vmatmul.mubr.bf16.gmra.mrb[0].mxu0 %v6529
      %v6693 = vpop.f32.mrb[0].mxu0
      %v6694 = vadd.f32 0.0, %v6693
      %v6695 = vpop.f32.mrb[0].mxu0
      %v6696 = vpop.f32.mrb[0].mxu0
      %v6697 = vadd.f32 0.0, %v6696
      %v6698 = vpop.f32.mrb[0].mxu0
      %6699 = vmatprep.mubr.bf16.mxu0 0
      %6700 = vmatmul.mubr.bf16.gmra.mrb[0].mxu0 %v6530
      %v6701 = vpop.f32.mrb[0].mxu0
      %v6702 = vadd.f32 0.0, %v6701
      %v6703 = vpop.f32.mrb[0].mxu0
      %v6704 = vpop.f32.mrb[0].mxu0
      %v6705 = vadd.f32 0.0, %v6704
      %v6706 = vpop.f32.mrb[0].mxu0
      %6707 = vmatprep.mubr.bf16.mxu0 0
      %6708 = vmatmul.mubr.bf16.gmra.mrb[0].mxu0 %v6531
      %v6709 = vpop.f32.mrb[0].mxu0
      %v6710 = vadd.f32 0.0, %v6709
      %v6711 = vpop.f32.mrb[0].mxu0
      %v6712 = vpop.f32.mrb[0].mxu0
      %v6713 = vadd.f32 0.0, %v6712
      %v6714 = vpop.f32.mrb[0].mxu0
      %6715 = vmatprep.mubr.bf16.mxu0 0
      %6716 = vmatmul.mubr.bf16.gmra.mrb[0].mxu0 %v6532
      %v6717 = vpop.f32.mrb[0].mxu0
      %v6718 = vadd.f32 0.0, %v6717
      %v6719 = vpop.f32.mrb[0].mxu0
      %v6720 = vpop.f32.mrb[0].mxu0
      %v6721 = vadd.f32 0.0, %v6720
      %v6722 = vpop.f32.mrb[0].mxu0
      %6723 = vmatprep.mubr.bf16.mxu0 0
      %6724 = vmatmul.mubr.bf16.gmra.mrb[0].mxu0 %v6533
      %v6725 = vpop.f32.mrb[0].mxu0
      %v6726 = vadd.f32 0.0, %v6725
      %v6727 = vpop.f32.mrb[0].mxu0
      %v6728 = vpop.f32.mrb[0].mxu0
      %v6729 = vadd.f32 0.0, %v6728
      %v6730 = vpop.f32.mrb[0].mxu0
      %6731 = vmatprep.mubr.bf16.mxu0 0
      %6732 = vmatmul.mubr.bf16.gmra.mrb[0].mxu0 %v6534
      %v6733 = vpop.f32.mrb[0].mxu0
      %v6734 = vadd.f32 0.0, %v6733
      %v6735 = vpop.f32.mrb[0].mxu0
      %v6736 = vpop.f32.mrb[0].mxu0
      %v6737 = vadd.f32 0.0, %v6736
      %v6738 = vpop.f32.mrb[0].mxu0
      %6739 = vmatprep.mubr.bf16.mxu0 0
      %6740 = vmatmul.mubr.bf16.gmra.mrb[0].mxu0 %v6535
      %v6741 = vpop.f32.mrb[0].mxu0
      %v6742 = vadd.f32 0.0, %v6741
      %v6743 = vpop.f32.mrb[0].mxu0
      %v6744 = vpop.f32.mrb[0].mxu0
      %v6745 = vadd.f32 0.0, %v6744
      %v6746 = vpop.f32.mrb[0].mxu0
      %6747 = vmatprep.mubr.bf16.mxu0 0
      %6748 = vmatmul.mubr.bf16.gmra.mrb[0].mxu0 %v6536
      %v6749 = vpop.f32.mrb[0].mxu0
      %v6750 = vadd.f32 0.0, %v6749
      %v6751 = vpop.f32.mrb[0].mxu0
      %v6752 = vpop.f32.mrb[0].mxu0
      %v6753 = vadd.f32 0.0, %v6752
      %v6754 = vpop.f32.mrb[0].mxu0
      %6755 = vmatprep.mubr.bf16.mxu0 0
      %6756 = vmatmul.mubr.bf16.gmra.mrb[0].mxu0 %v6537
      %v6757 = vpop.f32.mrb[0].mxu0
      %v6758 = vadd.f32 0.0, %v6757
      %v6759 = vpop.f32.mrb[0].mxu0
      %v6760 = vpop.f32.mrb[0].mxu0
      %v6761 = vadd.f32 0.0, %v6760
      %v6762 = vpop.f32.mrb[0].mxu0
      %6763 = vdwg.mxu0
      %v6764 = vadd.f32 %v6489, %v6638
      %v6765 = vadd.f32 %v6490, %v6641
      %v6766 = vadd.f32 %v6491, %v6646
      %v6767 = vadd.f32 %v6492, %v6649
      %v6768 = vadd.f32 %v6493, %v6654
      %v6769 = vadd.f32 %v6494, %v6657
      %v6770 = vadd.f32 %v6495, %v6662
      %v6771 = vadd.f32 %v6496, %v6665
      %v6772 = vadd.f32 %v6497, %v6670
      %v6773 = vadd.f32 %v6498, %v6673
      %v6774 = vadd.f32 %v6499, %v6678
      %v6775 = vadd.f32 %v6500, %v6681
      %v6776 = vadd.f32 %v6501, %v6686
      %v6777 = vadd.f32 %v6502, %v6689
      %v6778 = vadd.f32 %v6503, %v6694
      %v6779 = vadd.f32 %v6504, %v6697
      %v6780 = vadd.f32 %v6505, %v6702
      %v6781 = vadd.f32 %v6506, %v6705
      %v6782 = vadd.f32 %v6507, %v6710
      %v6783 = vadd.f32 %v6508, %v6713
      %v6784 = vadd.f32 %v6509, %v6718
      %v6785 = vadd.f32 %v6510, %v6721
      %v6786 = vadd.f32 %v6511, %v6726
      %v6787 = vadd.f32 %v6512, %v6729
      %v6788 = vadd.f32 %v6513, %v6734
      %v6789 = vadd.f32 %v6514, %v6737
      %v6790 = vadd.f32 %v6515, %v6742
      %v6791 = vadd.f32 %v6516, %v6745
      %v6792 = vadd.f32 %v6517, %v6750
      %v6793 = vadd.f32 %v6518, %v6753
      %v6794 = vadd.f32 %v6519, %v6758
      %v6795 = vadd.f32 %v6520, %v6761
      %v6796 = vld [vmem:[%s5] sm:$0x1]
      %v6798 = vlaneseq
      %v6799 = vshrl.u32 %v6798, 7
      %v6800 = vsub.s32 0, %v6799
      %v6801 = vrot.slane %v6796, %v6800
      %v6803 = vmul.f32 %v6764, %v6801
      %v6804 = vmul.f32 %v6765, %v6801
      %v6805 = vmul.f32 %v6766, %v6801
      %v6806 = vmul.f32 %v6767, %v6801
      %v6807 = vmul.f32 %v6768, %v6801
      %v6808 = vmul.f32 %v6769, %v6801
      %v6809 = vmul.f32 %v6770, %v6801
      %v6810 = vmul.f32 %v6771, %v6801
      %v6811 = vmul.f32 %v6772, %v6801
      %v6812 = vmul.f32 %v6773, %v6801
      %v6813 = vmul.f32 %v6774, %v6801
      %v6814 = vmul.f32 %v6775, %v6801
      %v6815 = vmul.f32 %v6776, %v6801
      %v6816 = vmul.f32 %v6777, %v6801
      %v6817 = vmul.f32 %v6778, %v6801
      %v6818 = vmul.f32 %v6779, %v6801
      %v6819 = vmul.f32 %v6780, %v6801
      %v6820 = vmul.f32 %v6781, %v6801
      %v6821 = vmul.f32 %v6782, %v6801
      %v6822 = vmul.f32 %v6783, %v6801
      %v6823 = vmul.f32 %v6784, %v6801
      %v6824 = vmul.f32 %v6785, %v6801
      %v6825 = vmul.f32 %v6786, %v6801
      %v6826 = vmul.f32 %v6787, %v6801
      %v6827 = vmul.f32 %v6788, %v6801
      %v6828 = vmul.f32 %v6789, %v6801
      %v6829 = vmul.f32 %v6790, %v6801
      %v6830 = vmul.f32 %v6791, %v6801
      %v6831 = vmul.f32 %v6792, %v6801
      %v6832 = vmul.f32 %v6793, %v6801
      %v6833 = vmul.f32 %v6794, %v6801
      %v6834 = vmul.f32 %v6795, %v6801
      %v6835 = vld [vmem:[%s6] sm:$0x1]
      %v6837 = vlaneseq
      %v6838 = vshrl.u32 %v6837, 7
      %v6839 = vsub.s32 0, %v6838
      %v6840 = vrot.slane %v6835, %v6839
      %v6842 = vadd.f32 %v6803, %v6840
      %v6843 = vadd.f32 %v6804, %v6840
      %v6844 = vadd.f32 %v6805, %v6840
      %v6845 = vadd.f32 %v6806, %v6840
      %v6846 = vadd.f32 %v6807, %v6840
      %v6847 = vadd.f32 %v6808, %v6840
      %v6848 = vadd.f32 %v6809, %v6840
      %v6849 = vadd.f32 %v6810, %v6840
      %v6850 = vadd.f32 %v6811, %v6840
      %v6851 = vadd.f32 %v6812, %v6840
      %v6852 = vadd.f32 %v6813, %v6840
      %v6853 = vadd.f32 %v6814, %v6840
      %v6854 = vadd.f32 %v6815, %v6840
      %v6855 = vadd.f32 %v6816, %v6840
      %v6856 = vadd.f32 %v6817, %v6840
      %v6857 = vadd.f32 %v6818, %v6840
      %v6858 = vadd.f32 %v6819, %v6840
      %v6859 = vadd.f32 %v6820, %v6840
      %v6860 = vadd.f32 %v6821, %v6840
      %v6861 = vadd.f32 %v6822, %v6840
      %v6862 = vadd.f32 %v6823, %v6840
      %v6863 = vadd.f32 %v6824, %v6840
      %v6864 = vadd.f32 %v6825, %v6840
      %v6865 = vadd.f32 %v6826, %v6840
      %v6866 = vadd.f32 %v6827, %v6840
      %v6867 = vadd.f32 %v6828, %v6840
      %v6868 = vadd.f32 %v6829, %v6840
      %v6869 = vadd.f32 %v6830, %v6840
      %v6870 = vadd.f32 %v6831, %v6840
      %v6871 = vadd.f32 %v6832, %v6840
      %v6872 = vadd.f32 %v6833, %v6840
      %v6873 = vadd.f32 %v6834, %v6840
      %v6874 = vmax.f32 %v6842, 0.0
      %v6875 = vmax.f32 %v6843, 0.0
      %v6876 = vmax.f32 %v6844, 0.0
      %v6877 = vmax.f32 %v6845, 0.0
      %v6878 = vmax.f32 %v6846, 0.0
      %v6879 = vmax.f32 %v6847, 0.0
      %v6880 = vmax.f32 %v6848, 0.0
      %v6881 = vmax.f32 %v6849, 0.0
      %v6882 = vmax.f32 %v6850, 0.0
      %v6883 = vmax.f32 %v6851, 0.0
      %v6884 = vmax.f32 %v6852, 0.0
      %v6885 = vmax.f32 %v6853, 0.0
      %v6886 = vmax.f32 %v6854, 0.0
      %v6887 = vmax.f32 %v6855, 0.0
      %v6888 = vmax.f32 %v6856, 0.0
      %v6889 = vmax.f32 %v6857, 0.0
      %v6890 = vmax.f32 %v6858, 0.0
      %v6891 = vmax.f32 %v6859, 0.0
      %v6892 = vmax.f32 %v6860, 0.0
      %v6893 = vmax.f32 %v6861, 0.0
      %v6894 = vmax.f32 %v6862, 0.0
      %v6895 = vmax.f32 %v6863, 0.0
      %v6896 = vmax.f32 %v6864, 0.0
      %v6897 = vmax.f32 %v6865, 0.0
      %v6898 = vmax.f32 %v6866, 0.0
      %v6899 = vmax.f32 %v6867, 0.0
      %v6900 = vmax.f32 %v6868, 0.0
      %v6901 = vmax.f32 %v6869, 0.0
      %v6902 = vmax.f32 %v6870, 0.0
      %v6903 = vmax.f32 %v6871, 0.0
      %v6904 = vmax.f32 %v6872, 0.0
      %v6905 = vmax.f32 %v6873, 0.0
      %v6906 = vpack.c.bf16 %v6875, %v6874
      %v6907 = vpack.c.bf16 %v6877, %v6876
      %v6908 = vpack.c.bf16 %v6879, %v6878
      %v6909 = vpack.c.bf16 %v6881, %v6880
      %v6910 = vpack.c.bf16 %v6883, %v6882
      %v6911 = vpack.c.bf16 %v6885, %v6884
      %v6912 = vpack.c.bf16 %v6887, %v6886
      %v6913 = vpack.c.bf16 %v6889, %v6888
      %v6914 = vpack.c.bf16 %v6891, %v6890
      %v6915 = vpack.c.bf16 %v6893, %v6892
      %v6916 = vpack.c.bf16 %v6895, %v6894
      %v6917 = vpack.c.bf16 %v6897, %v6896
      %v6918 = vpack.c.bf16 %v6899, %v6898
      %v6919 = vpack.c.bf16 %v6901, %v6900
      %v6920 = vpack.c.bf16 %v6903, %v6902
      %v6921 = vpack.c.bf16 %v6905, %v6904
      %s6922 = scalar_lea.vmem [#allocation3], 152
      %6923 = vst [vmem:[%s6922] sm:$0xff] %v6906
      %6924 = vst [vmem:[%s6922 + $0x8] sm:$0xff] %v6907
      %6925 = vst [vmem:[%s6922 + $0x10] sm:$0xff] %v6908
      %6926 = vst [vmem:[%s6922 + $0x18] sm:$0xff] %v6909
      %6927 = vst [vmem:[%s6922 + $0x20] sm:$0xff] %v6910
      %6928 = vst [vmem:[%s6922 + $0x28] sm:$0xff] %v6911
      %6929 = vst [vmem:[%s6922 + $0x30] sm:$0xff] %v6912
      %6930 = vst [vmem:[%s6922 + $0x38] sm:$0xff] %v6913
      %6931 = vst [vmem:[%s6922 + $0x40] sm:$0xff] %v6914
      %6932 = vst [vmem:[%s6922 + $0x48] sm:$0xff] %v6915
      %6933 = vst [vmem:[%s6922 + $0x50] sm:$0xff] %v6916
      %6934 = vst [vmem:[%s6922 + $0x58] sm:$0xff] %v6917
      %6935 = vst [vmem:[%s6922 + $0x60] sm:$0xff] %v6918
      %6936 = vst [vmem:[%s6922 + $0x68] sm:$0xff] %v6919
      %6937 = vst [vmem:[%s6922 + $0x70] sm:$0xff] %v6920
      %6938 = vst [vmem:[%s6922 + $0x78] sm:$0xff] %v6921
      %v6940 = vshrl.u32 %v6906, 16
      %v6942 = vrot.slane %v6940, 7
      %v6943 = vshll.u32 %v6906, 16
      %v6945 = vor.u32 %v6942, %v6943
      %v6947 = vshrl.u32 %v6907, 16
      %v6949 = vrot.slane %v6947, 7
      %v6950 = vshll.u32 %v6907, 16
      %v6952 = vor.u32 %v6949, %v6950
      %v6954 = vshrl.u32 %v6908, 16
      %v6956 = vrot.slane %v6954, 7
      %v6957 = vshll.u32 %v6908, 16
      %v6959 = vor.u32 %v6956, %v6957
      %v6961 = vshrl.u32 %v6909, 16
      %v6963 = vrot.slane %v6961, 7
      %v6964 = vshll.u32 %v6909, 16
      %v6966 = vor.u32 %v6963, %v6964
      %v6968 = vshrl.u32 %v6910, 16
      %v6970 = vrot.slane %v6968, 7
      %v6971 = vshll.u32 %v6910, 16
      %v6973 = vor.u32 %v6970, %v6971
      %v6975 = vshrl.u32 %v6911, 16
      %v6977 = vrot.slane %v6975, 7
      %v6978 = vshll.u32 %v6911, 16
      %v6980 = vor.u32 %v6977, %v6978
      %v6982 = vshrl.u32 %v6912, 16
      %v6984 = vrot.slane %v6982, 7
      %v6985 = vshll.u32 %v6912, 16
      %v6987 = vor.u32 %v6984, %v6985
      %v6989 = vshrl.u32 %v6913, 16
      %v6991 = vrot.slane %v6989, 7
      %v6992 = vshll.u32 %v6913, 16
      %v6994 = vor.u32 %v6991, %v6992
      %v6996 = vshrl.u32 %v6914, 16
      %v6998 = vrot.slane %v6996, 7
      %v6999 = vshll.u32 %v6914, 16
      %v7001 = vor.u32 %v6998, %v6999
      %v7003 = vshrl.u32 %v6915, 16
      %v7005 = vrot.slane %v7003, 7
      %v7006 = vshll.u32 %v6915, 16
      %v7008 = vor.u32 %v7005, %v7006
      %v7010 = vshrl.u32 %v6916, 16
      %v7012 = vrot.slane %v7010, 7
      %v7013 = vshll.u32 %v6916, 16
      %v7015 = vor.u32 %v7012, %v7013
      %v7017 = vshrl.u32 %v6917, 16
      %v7019 = vrot.slane %v7017, 7
      %v7020 = vshll.u32 %v6917, 16
      %v7022 = vor.u32 %v7019, %v7020
      %v7024 = vshrl.u32 %v6918, 16
      %v7026 = vrot.slane %v7024, 7
      %v7027 = vshll.u32 %v6918, 16
      %v7029 = vor.u32 %v7026, %v7027
      %v7031 = vshrl.u32 %v6919, 16
      %v7033 = vrot.slane %v7031, 7
      %v7034 = vshll.u32 %v6919, 16
      %v7036 = vor.u32 %v7033, %v7034
      %v7038 = vshrl.u32 %v6920, 16
      %v7040 = vrot.slane %v7038, 7
      %v7041 = vshll.u32 %v6920, 16
      %v7043 = vor.u32 %v7040, %v7041
      %v7045 = vshrl.u32 %v6921, 16
      %v7047 = vrot.slane %v7045, 7
      %v7048 = vshll.u32 %v6921, 16
      %v7050 = vor.u32 %v7047, %v7048
      %s7067 = scalar_lea.vmem [#allocation3], 8
      %v7068 = vld [vmem:[%s7067] sm:$0xff]
      %v7069 = vsel %vm4131, %v6945, %v7068
      %7070 = vst [vmem:[%s7067] sm:$0xff] %v7069
      %v7071 = vld [vmem:[%s7067 + $0x8] sm:$0xff]
      %v7072 = vsel %vm4131, %v6952, %v7071
      %7073 = vst [vmem:[%s7067 + $0x8] sm:$0xff] %v7072
      %v7074 = vld [vmem:[%s7067 + $0x10] sm:$0xff]
      %v7075 = vsel %vm4131, %v6959, %v7074
      %7076 = vst [vmem:[%s7067 + $0x10] sm:$0xff] %v7075
      %v7077 = vld [vmem:[%s7067 + $0x18] sm:$0xff]
      %v7078 = vsel %vm4131, %v6966, %v7077
      %7079 = vst [vmem:[%s7067 + $0x18] sm:$0xff] %v7078
      %v7080 = vld [vmem:[%s7067 + $0x20] sm:$0xff]
      %v7081 = vsel %vm4131, %v6973, %v7080
      %7082 = vst [vmem:[%s7067 + $0x20] sm:$0xff] %v7081
      %v7083 = vld [vmem:[%s7067 + $0x28] sm:$0xff]
      %v7084 = vsel %vm4131, %v6980, %v7083
      %7085 = vst [vmem:[%s7067 + $0x28] sm:$0xff] %v7084
      %v7086 = vld [vmem:[%s7067 + $0x30] sm:$0xff]
      %v7087 = vsel %vm4131, %v6987, %v7086
      %7088 = vst [vmem:[%s7067 + $0x30] sm:$0xff] %v7087
      %v7089 = vld [vmem:[%s7067 + $0x38] sm:$0xff]
      %v7090 = vsel %vm4131, %v6994, %v7089
      %7091 = vst [vmem:[%s7067 + $0x38] sm:$0xff] %v7090
      %v7092 = vld [vmem:[%s7067 + $0x40] sm:$0xff]
      %v7093 = vsel %vm4131, %v7001, %v7092
      %7094 = vst [vmem:[%s7067 + $0x40] sm:$0xff] %v7093
      %v7095 = vld [vmem:[%s7067 + $0x48] sm:$0xff]
      %v7096 = vsel %vm4131, %v7008, %v7095
      %7097 = vst [vmem:[%s7067 + $0x48] sm:$0xff] %v7096
      %v7098 = vld [vmem:[%s7067 + $0x50] sm:$0xff]
      %v7099 = vsel %vm4131, %v7015, %v7098
      %7100 = vst [vmem:[%s7067 + $0x50] sm:$0xff] %v7099
      %v7101 = vld [vmem:[%s7067 + $0x58] sm:$0xff]
      %v7102 = vsel %vm4131, %v7022, %v7101
      %7103 = vst [vmem:[%s7067 + $0x58] sm:$0xff] %v7102
      %v7104 = vld [vmem:[%s7067 + $0x60] sm:$0xff]
      %v7105 = vsel %vm4131, %v7029, %v7104
      %7106 = vst [vmem:[%s7067 + $0x60] sm:$0xff] %v7105
      %v7107 = vld [vmem:[%s7067 + $0x68] sm:$0xff]
      %v7108 = vsel %vm4131, %v7036, %v7107
      %7109 = vst [vmem:[%s7067 + $0x68] sm:$0xff] %v7108
      %v7110 = vld [vmem:[%s7067 + $0x70] sm:$0xff]
      %v7111 = vsel %vm4131, %v7043, %v7110
      %7112 = vst [vmem:[%s7067 + $0x70] sm:$0xff] %v7111
      %v7113 = vld [vmem:[%s7067 + $0x78] sm:$0xff]
      %v7114 = vsel %vm4131, %v7050, %v7113
      %7115 = vst [vmem:[%s7067 + $0x78] sm:$0xff] %v7114
      %v7116 = vld [vmem:[%s7067] sm:$0x1]
      %v7117 = vsel %vm4182, 0, %v7116
      %7118 = vst [vmem:[%s7067] sm:$0x1] %v7117
      %v7119 = vld [vmem:[%s7067 + $0x8] sm:$0x1]
      %v7120 = vsel %vm4182, 0, %v7119
      %7121 = vst [vmem:[%s7067 + $0x8] sm:$0x1] %v7120
      %v7122 = vld [vmem:[%s7067 + $0x10] sm:$0x1]
      %v7123 = vsel %vm4182, 0, %v7122
      %7124 = vst [vmem:[%s7067 + $0x10] sm:$0x1] %v7123
      %v7125 = vld [vmem:[%s7067 + $0x18] sm:$0x1]
      %v7126 = vsel %vm4182, 0, %v7125
      %7127 = vst [vmem:[%s7067 + $0x18] sm:$0x1] %v7126
      %v7128 = vld [vmem:[%s7067 + $0x20] sm:$0x1]
      %v7129 = vsel %vm4182, 0, %v7128
      %7130 = vst [vmem:[%s7067 + $0x20] sm:$0x1] %v7129
      %v7131 = vld [vmem:[%s7067 + $0x28] sm:$0x1]
      %v7132 = vsel %vm4182, 0, %v7131
      %7133 = vst [vmem:[%s7067 + $0x28] sm:$0x1] %v7132
      %v7134 = vld [vmem:[%s7067 + $0x30] sm:$0x1]
      %v7135 = vsel %vm4182, 0, %v7134
      %7136 = vst [vmem:[%s7067 + $0x30] sm:$0x1] %v7135
      %v7137 = vld [vmem:[%s7067 + $0x38] sm:$0x1]
      %v7138 = vsel %vm4182, 0, %v7137
      %7139 = vst [vmem:[%s7067 + $0x38] sm:$0x1] %v7138
      %v7140 = vld [vmem:[%s7067 + $0x40] sm:$0x1]
      %v7141 = vsel %vm4182, 0, %v7140
      %7142 = vst [vmem:[%s7067 + $0x40] sm:$0x1] %v7141
      %v7143 = vld [vmem:[%s7067 + $0x48] sm:$0x1]
      %v7144 = vsel %vm4182, 0, %v7143
      %7145 = vst [vmem:[%s7067 + $0x48] sm:$0x1] %v7144
      %v7146 = vld [vmem:[%s7067 + $0x50] sm:$0x1]
      %v7147 = vsel %vm4182, 0, %v7146
      %7148 = vst [vmem:[%s7067 + $0x50] sm:$0x1] %v7147
      %v7149 = vld [vmem:[%s7067 + $0x58] sm:$0x1]
      %v7150 = vsel %vm4182, 0, %v7149
      %7151 = vst [vmem:[%s7067 + $0x58] sm:$0x1] %v7150
      %v7152 = vld [vmem:[%s7067 + $0x60] sm:$0x1]
      %v7153 = vsel %vm4182, 0, %v7152
      %7154 = vst [vmem:[%s7067 + $0x60] sm:$0x1] %v7153
      %v7155 = vld [vmem:[%s7067 + $0x68] sm:$0x1]
      %v7156 = vsel %vm4182, 0, %v7155
      %7157 = vst [vmem:[%s7067 + $0x68] sm:$0x1] %v7156
      %v7158 = vld [vmem:[%s7067 + $0x70] sm:$0x1]
      %v7159 = vsel %vm4182, 0, %v7158
      %7160 = vst [vmem:[%s7067 + $0x70] sm:$0x1] %v7159
      %v7161 = vld [vmem:[%s7067 + $0x78] sm:$0x1]
      %v7162 = vsel %vm4182, 0, %v7161
      %7163 = vst [vmem:[%s7067 + $0x78] sm:$0x1] %v7162
      %v7164 = vrot.slane %v6943, 1
      %v7165 = vor.u32 %v6940, %v7164
      %v7166 = vrot.slane %v6950, 1
      %v7167 = vor.u32 %v6947, %v7166
      %v7168 = vrot.slane %v6957, 1
      %v7169 = vor.u32 %v6954, %v7168
      %v7170 = vrot.slane %v6964, 1
      %v7171 = vor.u32 %v6961, %v7170
      %v7172 = vrot.slane %v6971, 1
      %v7173 = vor.u32 %v6968, %v7172
      %v7174 = vrot.slane %v6978, 1
      %v7175 = vor.u32 %v6975, %v7174
      %v7176 = vrot.slane %v6985, 1
      %v7177 = vor.u32 %v6982, %v7176
      %v7178 = vrot.slane %v6992, 1
      %v7179 = vor.u32 %v6989, %v7178
      %v7180 = vrot.slane %v6999, 1
      %v7181 = vor.u32 %v6996, %v7180
      %v7182 = vrot.slane %v7006, 1
      %v7183 = vor.u32 %v7003, %v7182
      %v7184 = vrot.slane %v7013, 1
      %v7185 = vor.u32 %v7010, %v7184
      %v7186 = vrot.slane %v7020, 1
      %v7187 = vor.u32 %v7017, %v7186
      %v7188 = vrot.slane %v7027, 1
      %v7189 = vor.u32 %v7024, %v7188
      %v7190 = vrot.slane %v7034, 1
      %v7191 = vor.u32 %v7031, %v7190
      %v7192 = vrot.slane %v7041, 1
      %v7193 = vor.u32 %v7038, %v7192
      %v7194 = vrot.slane %v7048, 1
      %v7195 = vor.u32 %v7045, %v7194
      %s7212 = scalar_lea.vmem [#allocation3], 296
      %v7213 = vld [vmem:[%s7212] sm:$0xff]
      %v7214 = vsel %vm4281, %v7165, %v7213
      %7215 = vst [vmem:[%s7212] sm:$0xff] %v7214
      %v7216 = vld [vmem:[%s7212 + $0x8] sm:$0xff]
      %v7217 = vsel %vm4281, %v7167, %v7216
      %7218 = vst [vmem:[%s7212 + $0x8] sm:$0xff] %v7217
      %v7219 = vld [vmem:[%s7212 + $0x10] sm:$0xff]
      %v7220 = vsel %vm4281, %v7169, %v7219
      %7221 = vst [vmem:[%s7212 + $0x10] sm:$0xff] %v7220
      %v7222 = vld [vmem:[%s7212 + $0x18] sm:$0xff]
      %v7223 = vsel %vm4281, %v7171, %v7222
      %7224 = vst [vmem:[%s7212 + $0x18] sm:$0xff] %v7223
      %v7225 = vld [vmem:[%s7212 + $0x20] sm:$0xff]
      %v7226 = vsel %vm4281, %v7173, %v7225
      %7227 = vst [vmem:[%s7212 + $0x20] sm:$0xff] %v7226
      %v7228 = vld [vmem:[%s7212 + $0x28] sm:$0xff]
      %v7229 = vsel %vm4281, %v7175, %v7228
      %7230 = vst [vmem:[%s7212 + $0x28] sm:$0xff] %v7229
      %v7231 = vld [vmem:[%s7212 + $0x30] sm:$0xff]
      %v7232 = vsel %vm4281, %v7177, %v7231
      %7233 = vst [vmem:[%s7212 + $0x30] sm:$0xff] %v7232
      %v7234 = vld [vmem:[%s7212 + $0x38] sm:$0xff]
      %v7235 = vsel %vm4281, %v7179, %v7234
      %7236 = vst [vmem:[%s7212 + $0x38] sm:$0xff] %v7235
      %v7237 = vld [vmem:[%s7212 + $0x40] sm:$0xff]
      %v7238 = vsel %vm4281, %v7181, %v7237
      %7239 = vst [vmem:[%s7212 + $0x40] sm:$0xff] %v7238
      %v7240 = vld [vmem:[%s7212 + $0x48] sm:$0xff]
      %v7241 = vsel %vm4281, %v7183, %v7240
      %7242 = vst [vmem:[%s7212 + $0x48] sm:$0xff] %v7241
      %v7243 = vld [vmem:[%s7212 + $0x50] sm:$0xff]
      %v7244 = vsel %vm4281, %v7185, %v7243
      %7245 = vst [vmem:[%s7212 + $0x50] sm:$0xff] %v7244
      %v7246 = vld [vmem:[%s7212 + $0x58] sm:$0xff]
      %v7247 = vsel %vm4281, %v7187, %v7246
      %7248 = vst [vmem:[%s7212 + $0x58] sm:$0xff] %v7247
      %v7249 = vld [vmem:[%s7212 + $0x60] sm:$0xff]
      %v7250 = vsel %vm4281, %v7189, %v7249
      %7251 = vst [vmem:[%s7212 + $0x60] sm:$0xff] %v7250
      %v7252 = vld [vmem:[%s7212 + $0x68] sm:$0xff]
      %v7253 = vsel %vm4281, %v7191, %v7252
      %7254 = vst [vmem:[%s7212 + $0x68] sm:$0xff] %v7253
      %v7255 = vld [vmem:[%s7212 + $0x70] sm:$0xff]
      %v7256 = vsel %vm4281, %v7193, %v7255
      %7257 = vst [vmem:[%s7212 + $0x70] sm:$0xff] %v7256
      %v7258 = vld [vmem:[%s7212 + $0x78] sm:$0xff]
      %v7259 = vsel %vm4281, %v7195, %v7258
      %7260 = vst [vmem:[%s7212 + $0x78] sm:$0xff] %v7259
      %v7261 = vld [vmem:[%s7212] sm:$0x80]
      %v7262 = vsel %vm4332, 0, %v7261
      %7263 = vst [vmem:[%s7212] sm:$0x80] %v7262
      %v7264 = vld [vmem:[%s7212 + $0x8] sm:$0x80]
      %v7265 = vsel %vm4332, 0, %v7264
      %7266 = vst [vmem:[%s7212 + $0x8] sm:$0x80] %v7265
      %v7267 = vld [vmem:[%s7212 + $0x10] sm:$0x80]
      %v7268 = vsel %vm4332, 0, %v7267
      %7269 = vst [vmem:[%s7212 + $0x10] sm:$0x80] %v7268
      %v7270 = vld [vmem:[%s7212 + $0x18] sm:$0x80]
      %v7271 = vsel %vm4332, 0, %v7270
      %7272 = vst [vmem:[%s7212 + $0x18] sm:$0x80] %v7271
      %v7273 = vld [vmem:[%s7212 + $0x20] sm:$0x80]
      %v7274 = vsel %vm4332, 0, %v7273
      %7275 = vst [vmem:[%s7212 + $0x20] sm:$0x80] %v7274
      %v7276 = vld [vmem:[%s7212 + $0x28] sm:$0x80]
      %v7277 = vsel %vm4332, 0, %v7276
      %7278 = vst [vmem:[%s7212 + $0x28] sm:$0x80] %v7277
      %v7279 = vld [vmem:[%s7212 + $0x30] sm:$0x80]
      %v7280 = vsel %vm4332, 0, %v7279
      %7281 = vst [vmem:[%s7212 + $0x30] sm:$0x80] %v7280
      %v7282 = vld [vmem:[%s7212 + $0x38] sm:$0x80]
      %v7283 = vsel %vm4332, 0, %v7282
      %7284 = vst [vmem:[%s7212 + $0x38] sm:$0x80] %v7283
      %v7285 = vld [vmem:[%s7212 + $0x40] sm:$0x80]
      %v7286 = vsel %vm4332, 0, %v7285
      %7287 = vst [vmem:[%s7212 + $0x40] sm:$0x80] %v7286
      %v7288 = vld [vmem:[%s7212 + $0x48] sm:$0x80]
      %v7289 = vsel %vm4332, 0, %v7288
      %7290 = vst [vmem:[%s7212 + $0x48] sm:$0x80] %v7289
      %v7291 = vld [vmem:[%s7212 + $0x50] sm:$0x80]
      %v7292 = vsel %vm4332, 0, %v7291
      %7293 = vst [vmem:[%s7212 + $0x50] sm:$0x80] %v7292
      %v7294 = vld [vmem:[%s7212 + $0x58] sm:$0x80]
      %v7295 = vsel %vm4332, 0, %v7294
      %7296 = vst [vmem:[%s7212 + $0x58] sm:$0x80] %v7295
      %v7297 = vld [vmem:[%s7212 + $0x60] sm:$0x80]
      %v7298 = vsel %vm4332, 0, %v7297
      %7299 = vst [vmem:[%s7212 + $0x60] sm:$0x80] %v7298
      %v7300 = vld [vmem:[%s7212 + $0x68] sm:$0x80]
      %v7301 = vsel %vm4332, 0, %v7300
      %7302 = vst [vmem:[%s7212 + $0x68] sm:$0x80] %v7301
      %v7303 = vld [vmem:[%s7212 + $0x70] sm:$0x80]
      %v7304 = vsel %vm4332, 0, %v7303
      %7305 = vst [vmem:[%s7212 + $0x70] sm:$0x80] %v7304
      %v7306 = vld [vmem:[%s7212 + $0x78] sm:$0x80]
      %v7307 = vsel %vm4332, 0, %v7306
      %7308 = vst [vmem:[%s7212 + $0x78] sm:$0x80] %v7307
      %7309 = vst [vmem:[#allocation3] sm:$0xff] 0
      %s7310 = scalar_lea.vmem [#allocation3], 136
      %7311 = vst [vmem:[%s7310] sm:$0xff] 0
      %s7312 = scalar_lea.vmem [#allocation3], 144
      %7313 = vst [vmem:[%s7312] sm:$0xff] 0
      %s7314 = scalar_lea.vmem [#allocation3], 280
      %7315 = vst [vmem:[%s7314] sm:$0xff] 0
      %s7316 = scalar_lea.vmem [#allocation3], 288
      %7317 = vst [vmem:[%s7316] sm:$0xff] 0
      %s7318 = scalar_lea.vmem [#allocation3], 424
      %7319 = vst [vmem:[%s7318] sm:$0xff] 0
      %v7320 = vld [vmem:[%s3983] sm:$0xff]
      %v7321 = vld [vmem:[%s3983 + $0x8] sm:$0xff]
      %v7322 = vld [vmem:[%s3983 + $0x10] sm:$0xff]
      %v7323 = vld [vmem:[%s3983 + $0x18] sm:$0xff]
      %v7324 = vld [vmem:[%s3983 + $0x20] sm:$0xff]
      %v7325 = vld [vmem:[%s3983 + $0x28] sm:$0xff]
      %v7326 = vld [vmem:[%s3983 + $0x30] sm:$0xff]
      %v7327 = vld [vmem:[%s3983 + $0x38] sm:$0xff]
      %v7328 = vld [vmem:[%s3983 + $0x40] sm:$0xff]
      %v7329 = vld [vmem:[%s3983 + $0x48] sm:$0xff]
      %v7330 = vld [vmem:[%s3983 + $0x50] sm:$0xff]
      %v7331 = vld [vmem:[%s3983 + $0x58] sm:$0xff]
      %v7332 = vld [vmem:[%s3983 + $0x60] sm:$0xff]
      %v7333 = vld [vmem:[%s3983 + $0x68] sm:$0xff]
      %v7334 = vld [vmem:[%s3983 + $0x70] sm:$0xff]
      %v7335 = vld [vmem:[%s3983 + $0x78] sm:$0xff]
      %v7336 = vld [vmem:[#allocation3] sm:$0xff]
      %v7337 = vld [vmem:[#allocation3 + $0x8] sm:$0xff]
      %v7338 = vld [vmem:[#allocation3 + $0x10] sm:$0xff]
      %v7339 = vld [vmem:[#allocation3 + $0x18] sm:$0xff]
      %v7340 = vld [vmem:[#allocation3 + $0x20] sm:$0xff]
      %v7341 = vld [vmem:[#allocation3 + $0x28] sm:$0xff]
      %v7342 = vld [vmem:[#allocation3 + $0x30] sm:$0xff]
      %v7343 = vld [vmem:[#allocation3 + $0x38] sm:$0xff]
      %v7344 = vld [vmem:[#allocation3 + $0x40] sm:$0xff]
      %v7345 = vld [vmem:[#allocation3 + $0x48] sm:$0xff]
      %v7346 = vld [vmem:[#allocation3 + $0x50] sm:$0xff]
      %v7347 = vld [vmem:[#allocation3 + $0x58] sm:$0xff]
      %v7348 = vld [vmem:[#allocation3 + $0x60] sm:$0xff]
      %v7349 = vld [vmem:[#allocation3 + $0x68] sm:$0xff]
      %v7350 = vld [vmem:[#allocation3 + $0x70] sm:$0xff]
      %v7351 = vld [vmem:[#allocation3 + $0x78] sm:$0xff]
      %v7352 = vld [vmem:[%s7] sm:$0xf]
      %v7353 = vld [vmem:[%s7 + $0x4] sm:$0xf]
      %v7354 = vld [vmem:[%s7 + $0x8] sm:$0xf]
      %v7355 = vld [vmem:[%s7 + $0xc] sm:$0xf]
      %v7356 = vld [vmem:[%s7 + $0x10] sm:$0xf]
      %v7357 = vld [vmem:[%s7 + $0x14] sm:$0xf]
      %v7358 = vld [vmem:[%s7 + $0x18] sm:$0xf]
      %v7359 = vld [vmem:[%s7 + $0x1c] sm:$0xf]
      %v7360 = vld [vmem:[%s7 + $0x20] sm:$0xf]
      %v7361 = vld [vmem:[%s7 + $0x24] sm:$0xf]
      %v7362 = vld [vmem:[%s7 + $0x28] sm:$0xf]
      %v7363 = vld [vmem:[%s7 + $0x2c] sm:$0xf]
      %v7364 = vld [vmem:[%s7 + $0x30] sm:$0xf]
      %v7365 = vld [vmem:[%s7 + $0x34] sm:$0xf]
      %v7366 = vld [vmem:[%s7 + $0x38] sm:$0xf]
      %v7367 = vld [vmem:[%s7 + $0x3c] sm:$0xf]
      %v7368 = vld [vmem:[%s7312] sm:$0xff]
      %v7369 = vld [vmem:[%s7312 + $0x8] sm:$0xff]
      %v7370 = vld [vmem:[%s7312 + $0x10] sm:$0xff]
      %v7371 = vld [vmem:[%s7312 + $0x18] sm:$0xff]
      %v7372 = vld [vmem:[%s7312 + $0x20] sm:$0xff]
      %v7373 = vld [vmem:[%s7312 + $0x28] sm:$0xff]
      %v7374 = vld [vmem:[%s7312 + $0x30] sm:$0xff]
      %v7375 = vld [vmem:[%s7312 + $0x38] sm:$0xff]
      %v7376 = vld [vmem:[%s7312 + $0x40] sm:$0xff]
      %v7377 = vld [vmem:[%s7312 + $0x48] sm:$0xff]
      %v7378 = vld [vmem:[%s7312 + $0x50] sm:$0xff]
      %v7379 = vld [vmem:[%s7312 + $0x58] sm:$0xff]
      %v7380 = vld [vmem:[%s7312 + $0x60] sm:$0xff]
      %v7381 = vld [vmem:[%s7312 + $0x68] sm:$0xff]
      %v7382 = vld [vmem:[%s7312 + $0x70] sm:$0xff]
      %v7383 = vld [vmem:[%s7312 + $0x78] sm:$0xff]
      %s7384 = scalar_lea.vmem %s7, 64
      %v7385 = vld [vmem:[%s7384] sm:$0xf]
      %v7386 = vld [vmem:[%s7384 + $0x4] sm:$0xf]
      %v7387 = vld [vmem:[%s7384 + $0x8] sm:$0xf]
      %v7388 = vld [vmem:[%s7384 + $0xc] sm:$0xf]
      %v7389 = vld [vmem:[%s7384 + $0x10] sm:$0xf]
      %v7390 = vld [vmem:[%s7384 + $0x14] sm:$0xf]
      %v7391 = vld [vmem:[%s7384 + $0x18] sm:$0xf]
      %v7392 = vld [vmem:[%s7384 + $0x1c] sm:$0xf]
      %v7393 = vld [vmem:[%s7384 + $0x20] sm:$0xf]
      %v7394 = vld [vmem:[%s7384 + $0x24] sm:$0xf]
      %v7395 = vld [vmem:[%s7384 + $0x28] sm:$0xf]
      %v7396 = vld [vmem:[%s7384 + $0x2c] sm:$0xf]
      %v7397 = vld [vmem:[%s7384 + $0x30] sm:$0xf]
      %v7398 = vld [vmem:[%s7384 + $0x34] sm:$0xf]
      %v7399 = vld [vmem:[%s7384 + $0x38] sm:$0xf]
      %v7400 = vld [vmem:[%s7384 + $0x3c] sm:$0xf]
      %v7417 = vunpack.c.l.b16 %v7385
      %v7418 = vunpack.c.l.b16 %v7386
      %v7419 = vunpack.c.l.b16 %v7387
      %v7420 = vunpack.c.l.b16 %v7388
      %v7421 = vunpack.c.l.b16 %v7389
      %v7422 = vunpack.c.l.b16 %v7390
      %v7423 = vunpack.c.l.b16 %v7391
      %v7424 = vunpack.c.l.b16 %v7392
      %v7425 = vunpack.c.l.b16 %v7393
      %v7426 = vunpack.c.l.b16 %v7394
      %v7427 = vunpack.c.l.b16 %v7395
      %v7428 = vunpack.c.l.b16 %v7396
      %v7429 = vunpack.c.l.b16 %v7397
      %v7430 = vunpack.c.l.b16 %v7398
      %v7431 = vunpack.c.l.b16 %v7399
      %v7432 = vunpack.c.l.b16 %v7400
      %v7433 = vpack.c.b16 %v7418, %v7417
      %v7434 = vpack.c.b16 %v7420, %v7419
      %v7435 = vpack.c.b16 %v7422, %v7421
      %v7436 = vpack.c.b16 %v7424, %v7423
      %v7437 = vpack.c.b16 %v7426, %v7425
      %v7438 = vpack.c.b16 %v7428, %v7427
      %v7439 = vpack.c.b16 %v7430, %v7429
      %v7440 = vpack.c.b16 %v7432, %v7431
      %7449 = vmatprep.subr.bf16.mxu0 0
      %7450 = vmatpush1.bf16.msra.mxu0 %v7433
      %7451 = vmatprep.subr.bf16.mxu0 0
      %7452 = vmatpush1.bf16.msra.mxu0 %v7434
      %7453 = vmatprep.subr.bf16.mxu0 0
      %7454 = vmatpush1.bf16.msra.mxu0 %v7435
      %7455 = vmatprep.subr.bf16.mxu0 0
      %7456 = vmatpush1.bf16.msra.mxu0 %v7436
      %7457 = vmatprep.subr.bf16.mxu0 0
      %7458 = vmatpush1.bf16.msra.mxu0 %v7437
      %7459 = vmatprep.subr.bf16.mxu0 0
      %7460 = vmatpush1.bf16.msra.mxu0 %v7438
      %7461 = vmatprep.subr.bf16.mxu0 0
      %7462 = vmatpush1.bf16.msra.mxu0 %v7439
      %7463 = vmatprep.subr.bf16.mxu0 0
      %7464 = vmatpush1.bf16.msra.mxu0 %v7440
      %7465 = vmatprep.subr.bf16.mxu0 0
      %7466 = vmatpush1.bf16.msra.mxu0 0
      %7467 = vmatprep.subr.bf16.mxu0 0
      %7468 = vmatpush1.bf16.msra.mxu0 0
      %7469 = vmatprep.subr.bf16.mxu0 0
      %7470 = vmatpush1.bf16.msra.mxu0 0
      %7471 = vmatprep.subr.bf16.mxu0 0
      %7472 = vmatpush1.bf16.msra.mxu0 0
      %7473 = vmatprep.subr.bf16.mxu0 0
      %7474 = vmatpush1.bf16.msra.mxu0 0
      %7475 = vmatprep.subr.bf16.mxu0 0
      %7476 = vmatpush1.bf16.msra.mxu0 0
      %7477 = vmatprep.subr.bf16.mxu0 0
      %7478 = vmatpush1.bf16.msra.mxu0 0
      %7479 = vmatprep.subr.bf16.mxu0 0
      %7480 = vmatpush1.bf16.msra.mxu0 0
      %7481 = vmatprep.mubr.bf16.mxu0 0
      %7482 = vmatmul.mubr.bf16.gmra.mrb[0].mxu0 %v7368
      %v7483 = vpop.f32.mrb[0].mxu0
      %v7484 = vadd.f32 0.0, %v7483
      %v7485 = vpop.f32.mrb[0].mxu0
      %v7486 = vpop.f32.mrb[0].mxu0
      %v7487 = vadd.f32 0.0, %v7486
      %v7488 = vpop.f32.mrb[0].mxu0
      %7489 = vmatprep.mubr.bf16.mxu0 0
      %7490 = vmatmul.mubr.bf16.gmra.mrb[0].mxu0 %v7369
      %v7491 = vpop.f32.mrb[0].mxu0
      %v7492 = vadd.f32 0.0, %v7491
      %v7493 = vpop.f32.mrb[0].mxu0
      %v7494 = vpop.f32.mrb[0].mxu0
      %v7495 = vadd.f32 0.0, %v7494
      %v7496 = vpop.f32.mrb[0].mxu0
      %7497 = vmatprep.mubr.bf16.mxu0 0
      %7498 = vmatmul.mubr.bf16.gmra.mrb[0].mxu0 %v7370
      %v7499 = vpop.f32.mrb[0].mxu0
      %v7500 = vadd.f32 0.0, %v7499
      %v7501 = vpop.f32.mrb[0].mxu0
      %v7502 = vpop.f32.mrb[0].mxu0
      %v7503 = vadd.f32 0.0, %v7502
      %v7504 = vpop.f32.mrb[0].mxu0
      %7505 = vmatprep.mubr.bf16.mxu0 0
      %7506 = vmatmul.mubr.bf16.gmra.mrb[0].mxu0 %v7371
      %v7507 = vpop.f32.mrb[0].mxu0
      %v7508 = vadd.f32 0.0, %v7507
      %v7509 = vpop.f32.mrb[0].mxu0
      %v7510 = vpop.f32.mrb[0].mxu0
      %v7511 = vadd.f32 0.0, %v7510
      %v7512 = vpop.f32.mrb[0].mxu0
      %7513 = vmatprep.mubr.bf16.mxu0 0
      %7514 = vmatmul.mubr.bf16.gmra.mrb[0].mxu0 %v7372
      %v7515 = vpop.f32.mrb[0].mxu0
      %v7516 = vadd.f32 0.0, %v7515
      %v7517 = vpop.f32.mrb[0].mxu0
      %v7518 = vpop.f32.mrb[0].mxu0
      %v7519 = vadd.f32 0.0, %v7518
      %v7520 = vpop.f32.mrb[0].mxu0
      %7521 = vmatprep.mubr.bf16.mxu0 0
      %7522 = vmatmul.mubr.bf16.gmra.mrb[0].mxu0 %v7373
      %v7523 = vpop.f32.mrb[0].mxu0
      %v7524 = vadd.f32 0.0, %v7523
      %v7525 = vpop.f32.mrb[0].mxu0
      %v7526 = vpop.f32.mrb[0].mxu0
      %v7527 = vadd.f32 0.0, %v7526
      %v7528 = vpop.f32.mrb[0].mxu0
      %7529 = vmatprep.mubr.bf16.mxu0 0
      %7530 = vmatmul.mubr.bf16.gmra.mrb[0].mxu0 %v7374
      %v7531 = vpop.f32.mrb[0].mxu0
      %v7532 = vadd.f32 0.0, %v7531
      %v7533 = vpop.f32.mrb[0].mxu0
      %v7534 = vpop.f32.mrb[0].mxu0
      %v7535 = vadd.f32 0.0, %v7534
      %v7536 = vpop.f32.mrb[0].mxu0
      %7537 = vmatprep.mubr.bf16.mxu0 0
      %7538 = vmatmul.mubr.bf16.gmra.mrb[0].mxu0 %v7375
      %v7539 = vpop.f32.mrb[0].mxu0
      %v7540 = vadd.f32 0.0, %v7539
      %v7541 = vpop.f32.mrb[0].mxu0
      %v7542 = vpop.f32.mrb[0].mxu0
      %v7543 = vadd.f32 0.0, %v7542
      %v7544 = vpop.f32.mrb[0].mxu0
      %7545 = vmatprep.mubr.bf16.mxu0 0
      %7546 = vmatmul.mubr.bf16.gmra.mrb[0].mxu0 %v7376
      %v7547 = vpop.f32.mrb[0].mxu0
      %v7548 = vadd.f32 0.0, %v7547
      %v7549 = vpop.f32.mrb[0].mxu0
      %v7550 = vpop.f32.mrb[0].mxu0
      %v7551 = vadd.f32 0.0, %v7550
      %v7552 = vpop.f32.mrb[0].mxu0
      %7553 = vmatprep.mubr.bf16.mxu0 0
      %7554 = vmatmul.mubr.bf16.gmra.mrb[0].mxu0 %v7377
      %v7555 = vpop.f32.mrb[0].mxu0
      %v7556 = vadd.f32 0.0, %v7555
      %v7557 = vpop.f32.mrb[0].mxu0
      %v7558 = vpop.f32.mrb[0].mxu0
      %v7559 = vadd.f32 0.0, %v7558
      %v7560 = vpop.f32.mrb[0].mxu0
      %7561 = vmatprep.mubr.bf16.mxu0 0
      %7562 = vmatmul.mubr.bf16.gmra.mrb[0].mxu0 %v7378
      %v7563 = vpop.f32.mrb[0].mxu0
      %v7564 = vadd.f32 0.0, %v7563
      %v7565 = vpop.f32.mrb[0].mxu0
      %v7566 = vpop.f32.mrb[0].mxu0
      %v7567 = vadd.f32 0.0, %v7566
      %v7568 = vpop.f32.mrb[0].mxu0
      %7569 = vmatprep.mubr.bf16.mxu0 0
      %7570 = vmatmul.mubr.bf16.gmra.mrb[0].mxu0 %v7379
      %v7571 = vpop.f32.mrb[0].mxu0
      %v7572 = vadd.f32 0.0, %v7571
      %v7573 = vpop.f32.mrb[0].mxu0
      %v7574 = vpop.f32.mrb[0].mxu0
      %v7575 = vadd.f32 0.0, %v7574
      %v7576 = vpop.f32.mrb[0].mxu0
      %7577 = vmatprep.mubr.bf16.mxu0 0
      %7578 = vmatmul.mubr.bf16.gmra.mrb[0].mxu0 %v7380
      %v7579 = vpop.f32.mrb[0].mxu0
      %v7580 = vadd.f32 0.0, %v7579
      %v7581 = vpop.f32.mrb[0].mxu0
      %v7582 = vpop.f32.mrb[0].mxu0
      %v7583 = vadd.f32 0.0, %v7582
      %v7584 = vpop.f32.mrb[0].mxu0
      %7585 = vmatprep.mubr.bf16.mxu0 0
      %7586 = vmatmul.mubr.bf16.gmra.mrb[0].mxu0 %v7381
      %v7587 = vpop.f32.mrb[0].mxu0
      %v7588 = vadd.f32 0.0, %v7587
      %v7589 = vpop.f32.mrb[0].mxu0
      %v7590 = vpop.f32.mrb[0].mxu0
      %v7591 = vadd.f32 0.0, %v7590
      %v7592 = vpop.f32.mrb[0].mxu0
      %7593 = vmatprep.mubr.bf16.mxu0 0
      %7594 = vmatmul.mubr.bf16.gmra.mrb[0].mxu0 %v7382
      %v7595 = vpop.f32.mrb[0].mxu0
      %v7596 = vadd.f32 0.0, %v7595
      %v7597 = vpop.f32.mrb[0].mxu0
      %v7598 = vpop.f32.mrb[0].mxu0
      %v7599 = vadd.f32 0.0, %v7598
      %v7600 = vpop.f32.mrb[0].mxu0
      %7601 = vmatprep.mubr.bf16.mxu0 0
      %7602 = vmatmul.mubr.bf16.gmra.mrb[0].mxu0 %v7383
      %v7603 = vpop.f32.mrb[0].mxu0
      %v7604 = vadd.f32 0.0, %v7603
      %v7605 = vpop.f32.mrb[0].mxu0
      %v7606 = vpop.f32.mrb[0].mxu0
      %v7607 = vadd.f32 0.0, %v7606
      %v7608 = vpop.f32.mrb[0].mxu0
      %7609 = vdwg.mxu0
      %v7626 = vunpack.c.l.b16 %v7352
      %v7627 = vunpack.c.l.b16 %v7353
      %v7628 = vunpack.c.l.b16 %v7354
      %v7629 = vunpack.c.l.b16 %v7355
      %v7630 = vunpack.c.l.b16 %v7356
      %v7631 = vunpack.c.l.b16 %v7357
      %v7632 = vunpack.c.l.b16 %v7358
      %v7633 = vunpack.c.l.b16 %v7359
      %v7634 = vunpack.c.l.b16 %v7360
      %v7635 = vunpack.c.l.b16 %v7361
      %v7636 = vunpack.c.l.b16 %v7362
      %v7637 = vunpack.c.l.b16 %v7363
      %v7638 = vunpack.c.l.b16 %v7364
      %v7639 = vunpack.c.l.b16 %v7365
      %v7640 = vunpack.c.l.b16 %v7366
      %v7641 = vunpack.c.l.b16 %v7367
      %v7642 = vpack.c.b16 %v7627, %v7626
      %v7643 = vpack.c.b16 %v7629, %v7628
      %v7644 = vpack.c.b16 %v7631, %v7630
      %v7645 = vpack.c.b16 %v7633, %v7632
      %v7646 = vpack.c.b16 %v7635, %v7634
      %v7647 = vpack.c.b16 %v7637, %v7636
      %v7648 = vpack.c.b16 %v7639, %v7638
      %v7649 = vpack.c.b16 %v7641, %v7640
      %7658 = vmatprep.subr.bf16.mxu0 0
      %7659 = vmatpush1.bf16.msra.mxu0 %v7642
      %7660 = vmatprep.subr.bf16.mxu0 0
      %7661 = vmatpush1.bf16.msra.mxu0 %v7643
      %7662 = vmatprep.subr.bf16.mxu0 0
      %7663 = vmatpush1.bf16.msra.mxu0 %v7644
      %7664 = vmatprep.subr.bf16.mxu0 0
      %7665 = vmatpush1.bf16.msra.mxu0 %v7645
      %7666 = vmatprep.subr.bf16.mxu0 0
      %7667 = vmatpush1.bf16.msra.mxu0 %v7646
      %7668 = vmatprep.subr.bf16.mxu0 0
      %7669 = vmatpush1.bf16.msra.mxu0 %v7647
      %7670 = vmatprep.subr.bf16.mxu0 0
      %7671 = vmatpush1.bf16.msra.mxu0 %v7648
      %7672 = vmatprep.subr.bf16.mxu0 0
      %7673 = vmatpush1.bf16.msra.mxu0 %v7649
      %7674 = vmatprep.subr.bf16.mxu0 0
      %7675 = vmatpush1.bf16.msra.mxu0 0
      %7676 = vmatprep.subr.bf16.mxu0 0
      %7677 = vmatpush1.bf16.msra.mxu0 0
      %7678 = vmatprep.subr.bf16.mxu0 0
      %7679 = vmatpush1.bf16.msra.mxu0 0
      %7680 = vmatprep.subr.bf16.mxu0 0
      %7681 = vmatpush1.bf16.msra.mxu0 0
      %7682 = vmatprep.subr.bf16.mxu0 0
      %7683 = vmatpush1.bf16.msra.mxu0 0
      %7684 = vmatprep.subr.bf16.mxu0 0
      %7685 = vmatpush1.bf16.msra.mxu0 0
      %7686 = vmatprep.subr.bf16.mxu0 0
      %7687 = vmatpush1.bf16.msra.mxu0 0
      %7688 = vmatprep.subr.bf16.mxu0 0
      %7689 = vmatpush1.bf16.msra.mxu0 0
      %7690 = vmatprep.mubr.bf16.mxu0 0
      %7691 = vmatmul.mubr.bf16.gmra.mrb[0].mxu0 %v7336
      %v7692 = vpop.f32.mrb[0].mxu0
      %v7693 = vadd.f32 %v7484, %v7692
      %v7694 = vpop.f32.mrb[0].mxu0
      %v7695 = vpop.f32.mrb[0].mxu0
      %v7696 = vadd.f32 %v7487, %v7695
      %v7697 = vpop.f32.mrb[0].mxu0
      %7698 = vmatprep.mubr.bf16.mxu0 0
      %7699 = vmatmul.mubr.bf16.gmra.mrb[0].mxu0 %v7337
      %v7700 = vpop.f32.mrb[0].mxu0
      %v7701 = vadd.f32 %v7492, %v7700
      %v7702 = vpop.f32.mrb[0].mxu0
      %v7703 = vpop.f32.mrb[0].mxu0
      %v7704 = vadd.f32 %v7495, %v7703
      %v7705 = vpop.f32.mrb[0].mxu0
      %7706 = vmatprep.mubr.bf16.mxu0 0
      %7707 = vmatmul.mubr.bf16.gmra.mrb[0].mxu0 %v7338
      %v7708 = vpop.f32.mrb[0].mxu0
      %v7709 = vadd.f32 %v7500, %v7708
      %v7710 = vpop.f32.mrb[0].mxu0
      %v7711 = vpop.f32.mrb[0].mxu0
      %v7712 = vadd.f32 %v7503, %v7711
      %v7713 = vpop.f32.mrb[0].mxu0
      %7714 = vmatprep.mubr.bf16.mxu0 0
      %7715 = vmatmul.mubr.bf16.gmra.mrb[0].mxu0 %v7339
      %v7716 = vpop.f32.mrb[0].mxu0
      %v7717 = vadd.f32 %v7508, %v7716
      %v7718 = vpop.f32.mrb[0].mxu0
      %v7719 = vpop.f32.mrb[0].mxu0
      %v7720 = vadd.f32 %v7511, %v7719
      %v7721 = vpop.f32.mrb[0].mxu0
      %7722 = vmatprep.mubr.bf16.mxu0 0
      %7723 = vmatmul.mubr.bf16.gmra.mrb[0].mxu0 %v7340
      %v7724 = vpop.f32.mrb[0].mxu0
      %v7725 = vadd.f32 %v7516, %v7724
      %v7726 = vpop.f32.mrb[0].mxu0
      %v7727 = vpop.f32.mrb[0].mxu0
      %v7728 = vadd.f32 %v7519, %v7727
      %v7729 = vpop.f32.mrb[0].mxu0
      %7730 = vmatprep.mubr.bf16.mxu0 0
      %7731 = vmatmul.mubr.bf16.gmra.mrb[0].mxu0 %v7341
      %v7732 = vpop.f32.mrb[0].mxu0
      %v7733 = vadd.f32 %v7524, %v7732
      %v7734 = vpop.f32.mrb[0].mxu0
      %v7735 = vpop.f32.mrb[0].mxu0
      %v7736 = vadd.f32 %v7527, %v7735
      %v7737 = vpop.f32.mrb[0].mxu0
      %7738 = vmatprep.mubr.bf16.mxu0 0
      %7739 = vmatmul.mubr.bf16.gmra.mrb[0].mxu0 %v7342
      %v7740 = vpop.f32.mrb[0].mxu0
      %v7741 = vadd.f32 %v7532, %v7740
      %v7742 = vpop.f32.mrb[0].mxu0
      %v7743 = vpop.f32.mrb[0].mxu0
      %v7744 = vadd.f32 %v7535, %v7743
      %v7745 = vpop.f32.mrb[0].mxu0
      %7746 = vmatprep.mubr.bf16.mxu0 0
      %7747 = vmatmul.mubr.bf16.gmra.mrb[0].mxu0 %v7343
      %v7748 = vpop.f32.mrb[0].mxu0
      %v7749 = vadd.f32 %v7540, %v7748
      %v7750 = vpop.f32.mrb[0].mxu0
      %v7751 = vpop.f32.mrb[0].mxu0
      %v7752 = vadd.f32 %v7543, %v7751
      %v7753 = vpop.f32.mrb[0].mxu0
      %7754 = vmatprep.mubr.bf16.mxu0 0
      %7755 = vmatmul.mubr.bf16.gmra.mrb[0].mxu0 %v7344
      %v7756 = vpop.f32.mrb[0].mxu0
      %v7757 = vadd.f32 %v7548, %v7756
      %v7758 = vpop.f32.mrb[0].mxu0
      %v7759 = vpop.f32.mrb[0].mxu0
      %v7760 = vadd.f32 %v7551, %v7759
      %v7761 = vpop.f32.mrb[0].mxu0
      %7762 = vmatprep.mubr.bf16.mxu0 0
      %7763 = vmatmul.mubr.bf16.gmra.mrb[0].mxu0 %v7345
      %v7764 = vpop.f32.mrb[0].mxu0
      %v7765 = vadd.f32 %v7556, %v7764
      %v7766 = vpop.f32.mrb[0].mxu0
      %v7767 = vpop.f32.mrb[0].mxu0
      %v7768 = vadd.f32 %v7559, %v7767
      %v7769 = vpop.f32.mrb[0].mxu0
      %7770 = vmatprep.mubr.bf16.mxu0 0
      %7771 = vmatmul.mubr.bf16.gmra.mrb[0].mxu0 %v7346
      %v7772 = vpop.f32.mrb[0].mxu0
      %v7773 = vadd.f32 %v7564, %v7772
      %v7774 = vpop.f32.mrb[0].mxu0
      %v7775 = vpop.f32.mrb[0].mxu0
      %v7776 = vadd.f32 %v7567, %v7775
      %v7777 = vpop.f32.mrb[0].mxu0
      %7778 = vmatprep.mubr.bf16.mxu0 0
      %7779 = vmatmul.mubr.bf16.gmra.mrb[0].mxu0 %v7347
      %v7780 = vpop.f32.mrb[0].mxu0
      %v7781 = vadd.f32 %v7572, %v7780
      %v7782 = vpop.f32.mrb[0].mxu0
      %v7783 = vpop.f32.mrb[0].mxu0
      %v7784 = vadd.f32 %v7575, %v7783
      %v7785 = vpop.f32.mrb[0].mxu0
      %7786 = vmatprep.mubr.bf16.mxu0 0
      %7787 = vmatmul.mubr.bf16.gmra.mrb[0].mxu0 %v7348
      %v7788 = vpop.f32.mrb[0].mxu0
      %v7789 = vadd.f32 %v7580, %v7788
      %v7790 = vpop.f32.mrb[0].mxu0
      %v7791 = vpop.f32.mrb[0].mxu0
      %v7792 = vadd.f32 %v7583, %v7791
      %v7793 = vpop.f32.mrb[0].mxu0
      %7794 = vmatprep.mubr.bf16.mxu0 0
      %7795 = vmatmul.mubr.bf16.gmra.mrb[0].mxu0 %v7349
      %v7796 = vpop.f32.mrb[0].mxu0
      %v7797 = vadd.f32 %v7588, %v7796
      %v7798 = vpop.f32.mrb[0].mxu0
      %v7799 = vpop.f32.mrb[0].mxu0
      %v7800 = vadd.f32 %v7591, %v7799
      %v7801 = vpop.f32.mrb[0].mxu0
      %7802 = vmatprep.mubr.bf16.mxu0 0
      %7803 = vmatmul.mubr.bf16.gmra.mrb[0].mxu0 %v7350
      %v7804 = vpop.f32.mrb[0].mxu0
      %v7805 = vadd.f32 %v7596, %v7804
      %v7806 = vpop.f32.mrb[0].mxu0
      %v7807 = vpop.f32.mrb[0].mxu0
      %v7808 = vadd.f32 %v7599, %v7807
      %v7809 = vpop.f32.mrb[0].mxu0
      %7810 = vmatprep.mubr.bf16.mxu0 0
      %7811 = vmatmul.mubr.bf16.gmra.mrb[0].mxu0 %v7351
      %v7812 = vpop.f32.mrb[0].mxu0
      %v7813 = vadd.f32 %v7604, %v7812
      %v7814 = vpop.f32.mrb[0].mxu0
      %v7815 = vpop.f32.mrb[0].mxu0
      %v7816 = vadd.f32 %v7607, %v7815
      %v7817 = vpop.f32.mrb[0].mxu0
      %7818 = vdwg.mxu0
      %v7819 = vld [vmem:[%s7316] sm:$0xff]
      %v7820 = vld [vmem:[%s7316 + $0x8] sm:$0xff]
      %v7821 = vld [vmem:[%s7316 + $0x10] sm:$0xff]
      %v7822 = vld [vmem:[%s7316 + $0x18] sm:$0xff]
      %v7823 = vld [vmem:[%s7316 + $0x20] sm:$0xff]
      %v7824 = vld [vmem:[%s7316 + $0x28] sm:$0xff]
      %v7825 = vld [vmem:[%s7316 + $0x30] sm:$0xff]
      %v7826 = vld [vmem:[%s7316 + $0x38] sm:$0xff]
      %v7827 = vld [vmem:[%s7316 + $0x40] sm:$0xff]
      %v7828 = vld [vmem:[%s7316 + $0x48] sm:$0xff]
      %v7829 = vld [vmem:[%s7316 + $0x50] sm:$0xff]
      %v7830 = vld [vmem:[%s7316 + $0x58] sm:$0xff]
      %v7831 = vld [vmem:[%s7316 + $0x60] sm:$0xff]
      %v7832 = vld [vmem:[%s7316 + $0x68] sm:$0xff]
      %v7833 = vld [vmem:[%s7316 + $0x70] sm:$0xff]
      %v7834 = vld [vmem:[%s7316 + $0x78] sm:$0xff]
      %s7835 = scalar_lea.vmem %s7, 128
      %v7836 = vld [vmem:[%s7835] sm:$0xf]
      %v7837 = vld [vmem:[%s7835 + $0x4] sm:$0xf]
      %v7838 = vld [vmem:[%s7835 + $0x8] sm:$0xf]
      %v7839 = vld [vmem:[%s7835 + $0xc] sm:$0xf]
      %v7840 = vld [vmem:[%s7835 + $0x10] sm:$0xf]
      %v7841 = vld [vmem:[%s7835 + $0x14] sm:$0xf]
      %v7842 = vld [vmem:[%s7835 + $0x18] sm:$0xf]
      %v7843 = vld [vmem:[%s7835 + $0x1c] sm:$0xf]
      %v7844 = vld [vmem:[%s7835 + $0x20] sm:$0xf]
      %v7845 = vld [vmem:[%s7835 + $0x24] sm:$0xf]
      %v7846 = vld [vmem:[%s7835 + $0x28] sm:$0xf]
      %v7847 = vld [vmem:[%s7835 + $0x2c] sm:$0xf]
      %v7848 = vld [vmem:[%s7835 + $0x30] sm:$0xf]
      %v7849 = vld [vmem:[%s7835 + $0x34] sm:$0xf]
      %v7850 = vld [vmem:[%s7835 + $0x38] sm:$0xf]
      %v7851 = vld [vmem:[%s7835 + $0x3c] sm:$0xf]
      %v7868 = vunpack.c.l.b16 %v7836
      %v7869 = vunpack.c.l.b16 %v7837
      %v7870 = vunpack.c.l.b16 %v7838
      %v7871 = vunpack.c.l.b16 %v7839
      %v7872 = vunpack.c.l.b16 %v7840
      %v7873 = vunpack.c.l.b16 %v7841
      %v7874 = vunpack.c.l.b16 %v7842
      %v7875 = vunpack.c.l.b16 %v7843
      %v7876 = vunpack.c.l.b16 %v7844
      %v7877 = vunpack.c.l.b16 %v7845
      %v7878 = vunpack.c.l.b16 %v7846
      %v7879 = vunpack.c.l.b16 %v7847
      %v7880 = vunpack.c.l.b16 %v7848
      %v7881 = vunpack.c.l.b16 %v7849
      %v7882 = vunpack.c.l.b16 %v7850
      %v7883 = vunpack.c.l.b16 %v7851
      %v7884 = vpack.c.b16 %v7869, %v7868
      %v7885 = vpack.c.b16 %v7871, %v7870
      %v7886 = vpack.c.b16 %v7873, %v7872
      %v7887 = vpack.c.b16 %v7875, %v7874
      %v7888 = vpack.c.b16 %v7877, %v7876
      %v7889 = vpack.c.b16 %v7879, %v7878
      %v7890 = vpack.c.b16 %v7881, %v7880
      %v7891 = vpack.c.b16 %v7883, %v7882
      %7900 = vmatprep.subr.bf16.mxu0 0
      %7901 = vmatpush1.bf16.msra.mxu0 %v7884
      %7902 = vmatprep.subr.bf16.mxu0 0
      %7903 = vmatpush1.bf16.msra.mxu0 %v7885
      %7904 = vmatprep.subr.bf16.mxu0 0
      %7905 = vmatpush1.bf16.msra.mxu0 %v7886
      %7906 = vmatprep.subr.bf16.mxu0 0
      %7907 = vmatpush1.bf16.msra.mxu0 %v7887
      %7908 = vmatprep.subr.bf16.mxu0 0
      %7909 = vmatpush1.bf16.msra.mxu0 %v7888
      %7910 = vmatprep.subr.bf16.mxu0 0
      %7911 = vmatpush1.bf16.msra.mxu0 %v7889
      %7912 = vmatprep.subr.bf16.mxu0 0
      %7913 = vmatpush1.bf16.msra.mxu0 %v7890
      %7914 = vmatprep.subr.bf16.mxu0 0
      %7915 = vmatpush1.bf16.msra.mxu0 %v7891
      %7916 = vmatprep.subr.bf16.mxu0 0
      %7917 = vmatpush1.bf16.msra.mxu0 0
      %7918 = vmatprep.subr.bf16.mxu0 0
      %7919 = vmatpush1.bf16.msra.mxu0 0
      %7920 = vmatprep.subr.bf16.mxu0 0
      %7921 = vmatpush1.bf16.msra.mxu0 0
      %7922 = vmatprep.subr.bf16.mxu0 0
      %7923 = vmatpush1.bf16.msra.mxu0 0
      %7924 = vmatprep.subr.bf16.mxu0 0
      %7925 = vmatpush1.bf16.msra.mxu0 0
      %7926 = vmatprep.subr.bf16.mxu0 0
      %7927 = vmatpush1.bf16.msra.mxu0 0
      %7928 = vmatprep.subr.bf16.mxu0 0
      %7929 = vmatpush1.bf16.msra.mxu0 0
      %7930 = vmatprep.subr.bf16.mxu0 0
      %7931 = vmatpush1.bf16.msra.mxu0 0
      %7932 = vmatprep.mubr.bf16.mxu0 0
      %7933 = vmatmul.mubr.bf16.gmra.mrb[0].mxu0 %v7819
      %v7934 = vpop.f32.mrb[0].mxu0
      %v7935 = vadd.f32 0.0, %v7934
      %v7936 = vpop.f32.mrb[0].mxu0
      %v7937 = vpop.f32.mrb[0].mxu0
      %v7938 = vadd.f32 0.0, %v7937
      %v7939 = vpop.f32.mrb[0].mxu0
      %7940 = vmatprep.mubr.bf16.mxu0 0
      %7941 = vmatmul.mubr.bf16.gmra.mrb[0].mxu0 %v7820
      %v7942 = vpop.f32.mrb[0].mxu0
      %v7943 = vadd.f32 0.0, %v7942
      %v7944 = vpop.f32.mrb[0].mxu0
      %v7945 = vpop.f32.mrb[0].mxu0
      %v7946 = vadd.f32 0.0, %v7945
      %v7947 = vpop.f32.mrb[0].mxu0
      %7948 = vmatprep.mubr.bf16.mxu0 0
      %7949 = vmatmul.mubr.bf16.gmra.mrb[0].mxu0 %v7821
      %v7950 = vpop.f32.mrb[0].mxu0
      %v7951 = vadd.f32 0.0, %v7950
      %v7952 = vpop.f32.mrb[0].mxu0
      %v7953 = vpop.f32.mrb[0].mxu0
      %v7954 = vadd.f32 0.0, %v7953
      %v7955 = vpop.f32.mrb[0].mxu0
      %7956 = vmatprep.mubr.bf16.mxu0 0
      %7957 = vmatmul.mubr.bf16.gmra.mrb[0].mxu0 %v7822
      %v7958 = vpop.f32.mrb[0].mxu0
      %v7959 = vadd.f32 0.0, %v7958
      %v7960 = vpop.f32.mrb[0].mxu0
      %v7961 = vpop.f32.mrb[0].mxu0
      %v7962 = vadd.f32 0.0, %v7961
      %v7963 = vpop.f32.mrb[0].mxu0
      %7964 = vmatprep.mubr.bf16.mxu0 0
      %7965 = vmatmul.mubr.bf16.gmra.mrb[0].mxu0 %v7823
      %v7966 = vpop.f32.mrb[0].mxu0
      %v7967 = vadd.f32 0.0, %v7966
      %v7968 = vpop.f32.mrb[0].mxu0
      %v7969 = vpop.f32.mrb[0].mxu0
      %v7970 = vadd.f32 0.0, %v7969
      %v7971 = vpop.f32.mrb[0].mxu0
      %7972 = vmatprep.mubr.bf16.mxu0 0
      %7973 = vmatmul.mubr.bf16.gmra.mrb[0].mxu0 %v7824
      %v7974 = vpop.f32.mrb[0].mxu0
      %v7975 = vadd.f32 0.0, %v7974
      %v7976 = vpop.f32.mrb[0].mxu0
      %v7977 = vpop.f32.mrb[0].mxu0
      %v7978 = vadd.f32 0.0, %v7977
      %v7979 = vpop.f32.mrb[0].mxu0
      %7980 = vmatprep.mubr.bf16.mxu0 0
      %7981 = vmatmul.mubr.bf16.gmra.mrb[0].mxu0 %v7825
      %v7982 = vpop.f32.mrb[0].mxu0
      %v7983 = vadd.f32 0.0, %v7982
      %v7984 = vpop.f32.mrb[0].mxu0
      %v7985 = vpop.f32.mrb[0].mxu0
      %v7986 = vadd.f32 0.0, %v7985
      %v7987 = vpop.f32.mrb[0].mxu0
      %7988 = vmatprep.mubr.bf16.mxu0 0
      %7989 = vmatmul.mubr.bf16.gmra.mrb[0].mxu0 %v7826
      %v7990 = vpop.f32.mrb[0].mxu0
      %v7991 = vadd.f32 0.0, %v7990
      %v7992 = vpop.f32.mrb[0].mxu0
      %v7993 = vpop.f32.mrb[0].mxu0
      %v7994 = vadd.f32 0.0, %v7993
      %v7995 = vpop.f32.mrb[0].mxu0
      %7996 = vmatprep.mubr.bf16.mxu0 0
      %7997 = vmatmul.mubr.bf16.gmra.mrb[0].mxu0 %v7827
      %v7998 = vpop.f32.mrb[0].mxu0
      %v7999 = vadd.f32 0.0, %v7998
      %v8000 = vpop.f32.mrb[0].mxu0
      %v8001 = vpop.f32.mrb[0].mxu0
      %v8002 = vadd.f32 0.0, %v8001
      %v8003 = vpop.f32.mrb[0].mxu0
      %8004 = vmatprep.mubr.bf16.mxu0 0
      %8005 = vmatmul.mubr.bf16.gmra.mrb[0].mxu0 %v7828
      %v8006 = vpop.f32.mrb[0].mxu0
      %v8007 = vadd.f32 0.0, %v8006
      %v8008 = vpop.f32.mrb[0].mxu0
      %v8009 = vpop.f32.mrb[0].mxu0
      %v8010 = vadd.f32 0.0, %v8009
      %v8011 = vpop.f32.mrb[0].mxu0
      %8012 = vmatprep.mubr.bf16.mxu0 0
      %8013 = vmatmul.mubr.bf16.gmra.mrb[0].mxu0 %v7829
      %v8014 = vpop.f32.mrb[0].mxu0
      %v8015 = vadd.f32 0.0, %v8014
      %v8016 = vpop.f32.mrb[0].mxu0
      %v8017 = vpop.f32.mrb[0].mxu0
      %v8018 = vadd.f32 0.0, %v8017
      %v8019 = vpop.f32.mrb[0].mxu0
      %8020 = vmatprep.mubr.bf16.mxu0 0
      %8021 = vmatmul.mubr.bf16.gmra.mrb[0].mxu0 %v7830
      %v8022 = vpop.f32.mrb[0].mxu0
      %v8023 = vadd.f32 0.0, %v8022
      %v8024 = vpop.f32.mrb[0].mxu0
      %v8025 = vpop.f32.mrb[0].mxu0
      %v8026 = vadd.f32 0.0, %v8025
      %v8027 = vpop.f32.mrb[0].mxu0
      %8028 = vmatprep.mubr.bf16.mxu0 0
      %8029 = vmatmul.mubr.bf16.gmra.mrb[0].mxu0 %v7831
      %v8030 = vpop.f32.mrb[0].mxu0
      %v8031 = vadd.f32 0.0, %v8030
      %v8032 = vpop.f32.mrb[0].mxu0
      %v8033 = vpop.f32.mrb[0].mxu0
      %v8034 = vadd.f32 0.0, %v8033
      %v8035 = vpop.f32.mrb[0].mxu0
      %8036 = vmatprep.mubr.bf16.mxu0 0
      %8037 = vmatmul.mubr.bf16.gmra.mrb[0].mxu0 %v7832
      %v8038 = vpop.f32.mrb[0].mxu0
      %v8039 = vadd.f32 0.0, %v8038
      %v8040 = vpop.f32.mrb[0].mxu0
      %v8041 = vpop.f32.mrb[0].mxu0
      %v8042 = vadd.f32 0.0, %v8041
      %v8043 = vpop.f32.mrb[0].mxu0
      %8044 = vmatprep.mubr.bf16.mxu0 0
      %8045 = vmatmul.mubr.bf16.gmra.mrb[0].mxu0 %v7833
      %v8046 = vpop.f32.mrb[0].mxu0
      %v8047 = vadd.f32 0.0, %v8046
      %v8048 = vpop.f32.mrb[0].mxu0
      %v8049 = vpop.f32.mrb[0].mxu0
      %v8050 = vadd.f32 0.0, %v8049
      %v8051 = vpop.f32.mrb[0].mxu0
      %8052 = vmatprep.mubr.bf16.mxu0 0
      %8053 = vmatmul.mubr.bf16.gmra.mrb[0].mxu0 %v7834
      %v8054 = vpop.f32.mrb[0].mxu0
      %v8055 = vadd.f32 0.0, %v8054
      %v8056 = vpop.f32.mrb[0].mxu0
      %v8057 = vpop.f32.mrb[0].mxu0
      %v8058 = vadd.f32 0.0, %v8057
      %v8059 = vpop.f32.mrb[0].mxu0
      %8060 = vdwg.mxu0
      %v8061 = vadd.f32 %v7693, %v7935
      %v8062 = vadd.f32 %v7696, %v7938
      %v8063 = vadd.f32 %v7701, %v7943
      %v8064 = vadd.f32 %v7704, %v7946
      %v8065 = vadd.f32 %v7709, %v7951
      %v8066 = vadd.f32 %v7712, %v7954
      %v8067 = vadd.f32 %v7717, %v7959
      %v8068 = vadd.f32 %v7720, %v7962
      %v8069 = vadd.f32 %v7725, %v7967
      %v8070 = vadd.f32 %v7728, %v7970
      %v8071 = vadd.f32 %v7733, %v7975
      %v8072 = vadd.f32 %v7736, %v7978
      %v8073 = vadd.f32 %v7741, %v7983
      %v8074 = vadd.f32 %v7744, %v7986
      %v8075 = vadd.f32 %v7749, %v7991
      %v8076 = vadd.f32 %v7752, %v7994
      %v8077 = vadd.f32 %v7757, %v7999
      %v8078 = vadd.f32 %v7760, %v8002
      %v8079 = vadd.f32 %v7765, %v8007
      %v8080 = vadd.f32 %v7768, %v8010
      %v8081 = vadd.f32 %v7773, %v8015
      %v8082 = vadd.f32 %v7776, %v8018
      %v8083 = vadd.f32 %v7781, %v8023
      %v8084 = vadd.f32 %v7784, %v8026
      %v8085 = vadd.f32 %v7789, %v8031
      %v8086 = vadd.f32 %v7792, %v8034
      %v8087 = vadd.f32 %v7797, %v8039
      %v8088 = vadd.f32 %v7800, %v8042
      %v8089 = vadd.f32 %v7805, %v8047
      %v8090 = vadd.f32 %v7808, %v8050
      %v8091 = vadd.f32 %v7813, %v8055
      %v8092 = vadd.f32 %v7816, %v8058
      %v8093 = vld [vmem:[%s7067] sm:$0xff]
      %v8094 = vld [vmem:[%s7067 + $0x8] sm:$0xff]
      %v8095 = vld [vmem:[%s7067 + $0x10] sm:$0xff]
      %v8096 = vld [vmem:[%s7067 + $0x18] sm:$0xff]
      %v8097 = vld [vmem:[%s7067 + $0x20] sm:$0xff]
      %v8098 = vld [vmem:[%s7067 + $0x28] sm:$0xff]
      %v8099 = vld [vmem:[%s7067 + $0x30] sm:$0xff]
      %v8100 = vld [vmem:[%s7067 + $0x38] sm:$0xff]
      %v8101 = vld [vmem:[%s7067 + $0x40] sm:$0xff]
      %v8102 = vld [vmem:[%s7067 + $0x48] sm:$0xff]
      %v8103 = vld [vmem:[%s7067 + $0x50] sm:$0xff]
      %v8104 = vld [vmem:[%s7067 + $0x58] sm:$0xff]
      %v8105 = vld [vmem:[%s7067 + $0x60] sm:$0xff]
      %v8106 = vld [vmem:[%s7067 + $0x68] sm:$0xff]
      %v8107 = vld [vmem:[%s7067 + $0x70] sm:$0xff]
      %v8108 = vld [vmem:[%s7067 + $0x78] sm:$0xff]
      %s8109 = scalar_lea.vmem %s7, 192
      %v8110 = vld [vmem:[%s8109] sm:$0xf]
      %v8111 = vld [vmem:[%s8109 + $0x4] sm:$0xf]
      %v8112 = vld [vmem:[%s8109 + $0x8] sm:$0xf]
      %v8113 = vld [vmem:[%s8109 + $0xc] sm:$0xf]
      %v8114 = vld [vmem:[%s8109 + $0x10] sm:$0xf]
      %v8115 = vld [vmem:[%s8109 + $0x14] sm:$0xf]
      %v8116 = vld [vmem:[%s8109 + $0x18] sm:$0xf]
      %v8117 = vld [vmem:[%s8109 + $0x1c] sm:$0xf]
      %v8118 = vld [vmem:[%s8109 + $0x20] sm:$0xf]
      %v8119 = vld [vmem:[%s8109 + $0x24] sm:$0xf]
      %v8120 = vld [vmem:[%s8109 + $0x28] sm:$0xf]
      %v8121 = vld [vmem:[%s8109 + $0x2c] sm:$0xf]
      %v8122 = vld [vmem:[%s8109 + $0x30] sm:$0xf]
      %v8123 = vld [vmem:[%s8109 + $0x34] sm:$0xf]
      %v8124 = vld [vmem:[%s8109 + $0x38] sm:$0xf]
      %v8125 = vld [vmem:[%s8109 + $0x3c] sm:$0xf]
      %v8142 = vunpack.c.l.b16 %v8110
      %v8143 = vunpack.c.l.b16 %v8111
      %v8144 = vunpack.c.l.b16 %v8112
      %v8145 = vunpack.c.l.b16 %v8113
      %v8146 = vunpack.c.l.b16 %v8114
      %v8147 = vunpack.c.l.b16 %v8115
      %v8148 = vunpack.c.l.b16 %v8116
      %v8149 = vunpack.c.l.b16 %v8117
      %v8150 = vunpack.c.l.b16 %v8118
      %v8151 = vunpack.c.l.b16 %v8119
      %v8152 = vunpack.c.l.b16 %v8120
      %v8153 = vunpack.c.l.b16 %v8121
      %v8154 = vunpack.c.l.b16 %v8122
      %v8155 = vunpack.c.l.b16 %v8123
      %v8156 = vunpack.c.l.b16 %v8124
      %v8157 = vunpack.c.l.b16 %v8125
      %v8158 = vpack.c.b16 %v8143, %v8142
      %v8159 = vpack.c.b16 %v8145, %v8144
      %v8160 = vpack.c.b16 %v8147, %v8146
      %v8161 = vpack.c.b16 %v8149, %v8148
      %v8162 = vpack.c.b16 %v8151, %v8150
      %v8163 = vpack.c.b16 %v8153, %v8152
      %v8164 = vpack.c.b16 %v8155, %v8154
      %v8165 = vpack.c.b16 %v8157, %v8156
      %8174 = vmatprep.subr.bf16.mxu0 0
      %8175 = vmatpush1.bf16.msra.mxu0 %v8158
      %8176 = vmatprep.subr.bf16.mxu0 0
      %8177 = vmatpush1.bf16.msra.mxu0 %v8159
      %8178 = vmatprep.subr.bf16.mxu0 0
      %8179 = vmatpush1.bf16.msra.mxu0 %v8160
      %8180 = vmatprep.subr.bf16.mxu0 0
      %8181 = vmatpush1.bf16.msra.mxu0 %v8161
      %8182 = vmatprep.subr.bf16.mxu0 0
      %8183 = vmatpush1.bf16.msra.mxu0 %v8162
      %8184 = vmatprep.subr.bf16.mxu0 0
      %8185 = vmatpush1.bf16.msra.mxu0 %v8163
      %8186 = vmatprep.subr.bf16.mxu0 0
      %8187 = vmatpush1.bf16.msra.mxu0 %v8164
      %8188 = vmatprep.subr.bf16.mxu0 0
      %8189 = vmatpush1.bf16.msra.mxu0 %v8165
      %8190 = vmatprep.subr.bf16.mxu0 0
      %8191 = vmatpush1.bf16.msra.mxu0 0
      %8192 = vmatprep.subr.bf16.mxu0 0
      %8193 = vmatpush1.bf16.msra.mxu0 0
      %8194 = vmatprep.subr.bf16.mxu0 0
      %8195 = vmatpush1.bf16.msra.mxu0 0
      %8196 = vmatprep.subr.bf16.mxu0 0
      %8197 = vmatpush1.bf16.msra.mxu0 0
      %8198 = vmatprep.subr.bf16.mxu0 0
      %8199 = vmatpush1.bf16.msra.mxu0 0
      %8200 = vmatprep.subr.bf16.mxu0 0
      %8201 = vmatpush1.bf16.msra.mxu0 0
      %8202 = vmatprep.subr.bf16.mxu0 0
      %8203 = vmatpush1.bf16.msra.mxu0 0
      %8204 = vmatprep.subr.bf16.mxu0 0
      %8205 = vmatpush1.bf16.msra.mxu0 0
      %8206 = vmatprep.mubr.bf16.mxu0 0
      %8207 = vmatmul.mubr.bf16.gmra.mrb[0].mxu0 %v8093
      %v8208 = vpop.f32.mrb[0].mxu0
      %v8209 = vadd.f32 0.0, %v8208
      %v8210 = vpop.f32.mrb[0].mxu0
      %v8211 = vpop.f32.mrb[0].mxu0
      %v8212 = vadd.f32 0.0, %v8211
      %v8213 = vpop.f32.mrb[0].mxu0
      %8214 = vmatprep.mubr.bf16.mxu0 0
      %8215 = vmatmul.mubr.bf16.gmra.mrb[0].mxu0 %v8094
      %v8216 = vpop.f32.mrb[0].mxu0
      %v8217 = vadd.f32 0.0, %v8216
      %v8218 = vpop.f32.mrb[0].mxu0
      %v8219 = vpop.f32.mrb[0].mxu0
      %v8220 = vadd.f32 0.0, %v8219
      %v8221 = vpop.f32.mrb[0].mxu0
      %8222 = vmatprep.mubr.bf16.mxu0 0
      %8223 = vmatmul.mubr.bf16.gmra.mrb[0].mxu0 %v8095
      %v8224 = vpop.f32.mrb[0].mxu0
      %v8225 = vadd.f32 0.0, %v8224
      %v8226 = vpop.f32.mrb[0].mxu0
      %v8227 = vpop.f32.mrb[0].mxu0
      %v8228 = vadd.f32 0.0, %v8227
      %v8229 = vpop.f32.mrb[0].mxu0
      %8230 = vmatprep.mubr.bf16.mxu0 0
      %8231 = vmatmul.mubr.bf16.gmra.mrb[0].mxu0 %v8096
      %v8232 = vpop.f32.mrb[0].mxu0
      %v8233 = vadd.f32 0.0, %v8232
      %v8234 = vpop.f32.mrb[0].mxu0
      %v8235 = vpop.f32.mrb[0].mxu0
      %v8236 = vadd.f32 0.0, %v8235
      %v8237 = vpop.f32.mrb[0].mxu0
      %8238 = vmatprep.mubr.bf16.mxu0 0
      %8239 = vmatmul.mubr.bf16.gmra.mrb[0].mxu0 %v8097
      %v8240 = vpop.f32.mrb[0].mxu0
      %v8241 = vadd.f32 0.0, %v8240
      %v8242 = vpop.f32.mrb[0].mxu0
      %v8243 = vpop.f32.mrb[0].mxu0
      %v8244 = vadd.f32 0.0, %v8243
      %v8245 = vpop.f32.mrb[0].mxu0
      %8246 = vmatprep.mubr.bf16.mxu0 0
      %8247 = vmatmul.mubr.bf16.gmra.mrb[0].mxu0 %v8098
      %v8248 = vpop.f32.mrb[0].mxu0
      %v8249 = vadd.f32 0.0, %v8248
      %v8250 = vpop.f32.mrb[0].mxu0
      %v8251 = vpop.f32.mrb[0].mxu0
      %v8252 = vadd.f32 0.0, %v8251
      %v8253 = vpop.f32.mrb[0].mxu0
      %8254 = vmatprep.mubr.bf16.mxu0 0
      %8255 = vmatmul.mubr.bf16.gmra.mrb[0].mxu0 %v8099
      %v8256 = vpop.f32.mrb[0].mxu0
      %v8257 = vadd.f32 0.0, %v8256
      %v8258 = vpop.f32.mrb[0].mxu0
      %v8259 = vpop.f32.mrb[0].mxu0
      %v8260 = vadd.f32 0.0, %v8259
      %v8261 = vpop.f32.mrb[0].mxu0
      %8262 = vmatprep.mubr.bf16.mxu0 0
      %8263 = vmatmul.mubr.bf16.gmra.mrb[0].mxu0 %v8100
      %v8264 = vpop.f32.mrb[0].mxu0
      %v8265 = vadd.f32 0.0, %v8264
      %v8266 = vpop.f32.mrb[0].mxu0
      %v8267 = vpop.f32.mrb[0].mxu0
      %v8268 = vadd.f32 0.0, %v8267
      %v8269 = vpop.f32.mrb[0].mxu0
      %8270 = vmatprep.mubr.bf16.mxu0 0
      %8271 = vmatmul.mubr.bf16.gmra.mrb[0].mxu0 %v8101
      %v8272 = vpop.f32.mrb[0].mxu0
      %v8273 = vadd.f32 0.0, %v8272
      %v8274 = vpop.f32.mrb[0].mxu0
      %v8275 = vpop.f32.mrb[0].mxu0
      %v8276 = vadd.f32 0.0, %v8275
      %v8277 = vpop.f32.mrb[0].mxu0
      %8278 = vmatprep.mubr.bf16.mxu0 0
      %8279 = vmatmul.mubr.bf16.gmra.mrb[0].mxu0 %v8102
      %v8280 = vpop.f32.mrb[0].mxu0
      %v8281 = vadd.f32 0.0, %v8280
      %v8282 = vpop.f32.mrb[0].mxu0
      %v8283 = vpop.f32.mrb[0].mxu0
      %v8284 = vadd.f32 0.0, %v8283
      %v8285 = vpop.f32.mrb[0].mxu0
      %8286 = vmatprep.mubr.bf16.mxu0 0
      %8287 = vmatmul.mubr.bf16.gmra.mrb[0].mxu0 %v8103
      %v8288 = vpop.f32.mrb[0].mxu0
      %v8289 = vadd.f32 0.0, %v8288
      %v8290 = vpop.f32.mrb[0].mxu0
      %v8291 = vpop.f32.mrb[0].mxu0
      %v8292 = vadd.f32 0.0, %v8291
      %v8293 = vpop.f32.mrb[0].mxu0
      %8294 = vmatprep.mubr.bf16.mxu0 0
      %8295 = vmatmul.mubr.bf16.gmra.mrb[0].mxu0 %v8104
      %v8296 = vpop.f32.mrb[0].mxu0
      %v8297 = vadd.f32 0.0, %v8296
      %v8298 = vpop.f32.mrb[0].mxu0
      %v8299 = vpop.f32.mrb[0].mxu0
      %v8300 = vadd.f32 0.0, %v8299
      %v8301 = vpop.f32.mrb[0].mxu0
      %8302 = vmatprep.mubr.bf16.mxu0 0
      %8303 = vmatmul.mubr.bf16.gmra.mrb[0].mxu0 %v8105
      %v8304 = vpop.f32.mrb[0].mxu0
      %v8305 = vadd.f32 0.0, %v8304
      %v8306 = vpop.f32.mrb[0].mxu0
      %v8307 = vpop.f32.mrb[0].mxu0
      %v8308 = vadd.f32 0.0, %v8307
      %v8309 = vpop.f32.mrb[0].mxu0
      %8310 = vmatprep.mubr.bf16.mxu0 0
      %8311 = vmatmul.mubr.bf16.gmra.mrb[0].mxu0 %v8106
      %v8312 = vpop.f32.mrb[0].mxu0
      %v8313 = vadd.f32 0.0, %v8312
      %v8314 = vpop.f32.mrb[0].mxu0
      %v8315 = vpop.f32.mrb[0].mxu0
      %v8316 = vadd.f32 0.0, %v8315
      %v8317 = vpop.f32.mrb[0].mxu0
      %8318 = vmatprep.mubr.bf16.mxu0 0
      %8319 = vmatmul.mubr.bf16.gmra.mrb[0].mxu0 %v8107
      %v8320 = vpop.f32.mrb[0].mxu0
      %v8321 = vadd.f32 0.0, %v8320
      %v8322 = vpop.f32.mrb[0].mxu0
      %v8323 = vpop.f32.mrb[0].mxu0
      %v8324 = vadd.f32 0.0, %v8323
      %v8325 = vpop.f32.mrb[0].mxu0
      %8326 = vmatprep.mubr.bf16.mxu0 0
      %8327 = vmatmul.mubr.bf16.gmra.mrb[0].mxu0 %v8108
      %v8328 = vpop.f32.mrb[0].mxu0
      %v8329 = vadd.f32 0.0, %v8328
      %v8330 = vpop.f32.mrb[0].mxu0
      %v8331 = vpop.f32.mrb[0].mxu0
      %v8332 = vadd.f32 0.0, %v8331
      %v8333 = vpop.f32.mrb[0].mxu0
      %8334 = vdwg.mxu0
      %v8335 = vadd.f32 %v8061, %v8209
      %v8336 = vadd.f32 %v8062, %v8212
      %v8337 = vadd.f32 %v8063, %v8217
      %v8338 = vadd.f32 %v8064, %v8220
      %v8339 = vadd.f32 %v8065, %v8225
      %v8340 = vadd.f32 %v8066, %v8228
      %v8341 = vadd.f32 %v8067, %v8233
      %v8342 = vadd.f32 %v8068, %v8236
      %v8343 = vadd.f32 %v8069, %v8241
      %v8344 = vadd.f32 %v8070, %v8244
      %v8345 = vadd.f32 %v8071, %v8249
      %v8346 = vadd.f32 %v8072, %v8252
      %v8347 = vadd.f32 %v8073, %v8257
      %v8348 = vadd.f32 %v8074, %v8260
      %v8349 = vadd.f32 %v8075, %v8265
      %v8350 = vadd.f32 %v8076, %v8268
      %v8351 = vadd.f32 %v8077, %v8273
      %v8352 = vadd.f32 %v8078, %v8276
      %v8353 = vadd.f32 %v8079, %v8281
      %v8354 = vadd.f32 %v8080, %v8284
      %v8355 = vadd.f32 %v8081, %v8289
      %v8356 = vadd.f32 %v8082, %v8292
      %v8357 = vadd.f32 %v8083, %v8297
      %v8358 = vadd.f32 %v8084, %v8300
      %v8359 = vadd.f32 %v8085, %v8305
      %v8360 = vadd.f32 %v8086, %v8308
      %v8361 = vadd.f32 %v8087, %v8313
      %v8362 = vadd.f32 %v8088, %v8316
      %v8363 = vadd.f32 %v8089, %v8321
      %v8364 = vadd.f32 %v8090, %v8324
      %v8365 = vadd.f32 %v8091, %v8329
      %v8366 = vadd.f32 %v8092, %v8332
      %v8367 = vld [vmem:[%s6922] sm:$0xff]
      %v8368 = vld [vmem:[%s6922 + $0x8] sm:$0xff]
      %v8369 = vld [vmem:[%s6922 + $0x10] sm:$0xff]
      %v8370 = vld [vmem:[%s6922 + $0x18] sm:$0xff]
      %v8371 = vld [vmem:[%s6922 + $0x20] sm:$0xff]
      %v8372 = vld [vmem:[%s6922 + $0x28] sm:$0xff]
      %v8373 = vld [vmem:[%s6922 + $0x30] sm:$0xff]
      %v8374 = vld [vmem:[%s6922 + $0x38] sm:$0xff]
      %v8375 = vld [vmem:[%s6922 + $0x40] sm:$0xff]
      %v8376 = vld [vmem:[%s6922 + $0x48] sm:$0xff]
      %v8377 = vld [vmem:[%s6922 + $0x50] sm:$0xff]
      %v8378 = vld [vmem:[%s6922 + $0x58] sm:$0xff]
      %v8379 = vld [vmem:[%s6922 + $0x60] sm:$0xff]
      %v8380 = vld [vmem:[%s6922 + $0x68] sm:$0xff]
      %v8381 = vld [vmem:[%s6922 + $0x70] sm:$0xff]
      %v8382 = vld [vmem:[%s6922 + $0x78] sm:$0xff]
      %s8383 = scalar_lea.vmem %s7, 256
      %v8384 = vld [vmem:[%s8383] sm:$0xf]
      %v8385 = vld [vmem:[%s8383 + $0x4] sm:$0xf]
      %v8386 = vld [vmem:[%s8383 + $0x8] sm:$0xf]
      %v8387 = vld [vmem:[%s8383 + $0xc] sm:$0xf]
      %v8388 = vld [vmem:[%s8383 + $0x10] sm:$0xf]
      %v8389 = vld [vmem:[%s8383 + $0x14] sm:$0xf]
      %v8390 = vld [vmem:[%s8383 + $0x18] sm:$0xf]
      %v8391 = vld [vmem:[%s8383 + $0x1c] sm:$0xf]
      %v8392 = vld [vmem:[%s8383 + $0x20] sm:$0xf]
      %v8393 = vld [vmem:[%s8383 + $0x24] sm:$0xf]
      %v8394 = vld [vmem:[%s8383 + $0x28] sm:$0xf]
      %v8395 = vld [vmem:[%s8383 + $0x2c] sm:$0xf]
      %v8396 = vld [vmem:[%s8383 + $0x30] sm:$0xf]
      %v8397 = vld [vmem:[%s8383 + $0x34] sm:$0xf]
      %v8398 = vld [vmem:[%s8383 + $0x38] sm:$0xf]
      %v8399 = vld [vmem:[%s8383 + $0x3c] sm:$0xf]
      %v8416 = vunpack.c.l.b16 %v8384
      %v8417 = vunpack.c.l.b16 %v8385
      %v8418 = vunpack.c.l.b16 %v8386
      %v8419 = vunpack.c.l.b16 %v8387
      %v8420 = vunpack.c.l.b16 %v8388
      %v8421 = vunpack.c.l.b16 %v8389
      %v8422 = vunpack.c.l.b16 %v8390
      %v8423 = vunpack.c.l.b16 %v8391
      %v8424 = vunpack.c.l.b16 %v8392
      %v8425 = vunpack.c.l.b16 %v8393
      %v8426 = vunpack.c.l.b16 %v8394
      %v8427 = vunpack.c.l.b16 %v8395
      %v8428 = vunpack.c.l.b16 %v8396
      %v8429 = vunpack.c.l.b16 %v8397
      %v8430 = vunpack.c.l.b16 %v8398
      %v8431 = vunpack.c.l.b16 %v8399
      %v8432 = vpack.c.b16 %v8417, %v8416
      %v8433 = vpack.c.b16 %v8419, %v8418
      %v8434 = vpack.c.b16 %v8421, %v8420
      %v8435 = vpack.c.b16 %v8423, %v8422
      %v8436 = vpack.c.b16 %v8425, %v8424
      %v8437 = vpack.c.b16 %v8427, %v8426
      %v8438 = vpack.c.b16 %v8429, %v8428
      %v8439 = vpack.c.b16 %v8431, %v8430
      %8448 = vmatprep.subr.bf16.mxu0 0
      %8449 = vmatpush1.bf16.msra.mxu0 %v8432
      %8450 = vmatprep.subr.bf16.mxu0 0
      %8451 = vmatpush1.bf16.msra.mxu0 %v8433
      %8452 = vmatprep.subr.bf16.mxu0 0
      %8453 = vmatpush1.bf16.msra.mxu0 %v8434
      %8454 = vmatprep.subr.bf16.mxu0 0
      %8455 = vmatpush1.bf16.msra.mxu0 %v8435
      %8456 = vmatprep.subr.bf16.mxu0 0
      %8457 = vmatpush1.bf16.msra.mxu0 %v8436
      %8458 = vmatprep.subr.bf16.mxu0 0
      %8459 = vmatpush1.bf16.msra.mxu0 %v8437
      %8460 = vmatprep.subr.bf16.mxu0 0
      %8461 = vmatpush1.bf16.msra.mxu0 %v8438
      %8462 = vmatprep.subr.bf16.mxu0 0
      %8463 = vmatpush1.bf16.msra.mxu0 %v8439
      %8464 = vmatprep.subr.bf16.mxu0 0
      %8465 = vmatpush1.bf16.msra.mxu0 0
      %8466 = vmatprep.subr.bf16.mxu0 0
      %8467 = vmatpush1.bf16.msra.mxu0 0
      %8468 = vmatprep.subr.bf16.mxu0 0
      %8469 = vmatpush1.bf16.msra.mxu0 0
      %8470 = vmatprep.subr.bf16.mxu0 0
      %8471 = vmatpush1.bf16.msra.mxu0 0
      %8472 = vmatprep.subr.bf16.mxu0 0
      %8473 = vmatpush1.bf16.msra.mxu0 0
      %8474 = vmatprep.subr.bf16.mxu0 0
      %8475 = vmatpush1.bf16.msra.mxu0 0
      %8476 = vmatprep.subr.bf16.mxu0 0
      %8477 = vmatpush1.bf16.msra.mxu0 0
      %8478 = vmatprep.subr.bf16.mxu0 0
      %8479 = vmatpush1.bf16.msra.mxu0 0
      %8480 = vmatprep.mubr.bf16.mxu0 0
      %8481 = vmatmul.mubr.bf16.gmra.mrb[0].mxu0 %v8367
      %v8482 = vpop.f32.mrb[0].mxu0
      %v8483 = vadd.f32 0.0, %v8482
      %v8484 = vpop.f32.mrb[0].mxu0
      %v8485 = vpop.f32.mrb[0].mxu0
      %v8486 = vadd.f32 0.0, %v8485
      %v8487 = vpop.f32.mrb[0].mxu0
      %8488 = vmatprep.mubr.bf16.mxu0 0
      %8489 = vmatmul.mubr.bf16.gmra.mrb[0].mxu0 %v8368
      %v8490 = vpop.f32.mrb[0].mxu0
      %v8491 = vadd.f32 0.0, %v8490
      %v8492 = vpop.f32.mrb[0].mxu0
      %v8493 = vpop.f32.mrb[0].mxu0
      %v8494 = vadd.f32 0.0, %v8493
      %v8495 = vpop.f32.mrb[0].mxu0
      %8496 = vmatprep.mubr.bf16.mxu0 0
      %8497 = vmatmul.mubr.bf16.gmra.mrb[0].mxu0 %v8369
      %v8498 = vpop.f32.mrb[0].mxu0
      %v8499 = vadd.f32 0.0, %v8498
      %v8500 = vpop.f32.mrb[0].mxu0
      %v8501 = vpop.f32.mrb[0].mxu0
      %v8502 = vadd.f32 0.0, %v8501
      %v8503 = vpop.f32.mrb[0].mxu0
      %8504 = vmatprep.mubr.bf16.mxu0 0
      %8505 = vmatmul.mubr.bf16.gmra.mrb[0].mxu0 %v8370
      %v8506 = vpop.f32.mrb[0].mxu0
      %v8507 = vadd.f32 0.0, %v8506
      %v8508 = vpop.f32.mrb[0].mxu0
      %v8509 = vpop.f32.mrb[0].mxu0
      %v8510 = vadd.f32 0.0, %v8509
      %v8511 = vpop.f32.mrb[0].mxu0
      %8512 = vmatprep.mubr.bf16.mxu0 0
      %8513 = vmatmul.mubr.bf16.gmra.mrb[0].mxu0 %v8371
      %v8514 = vpop.f32.mrb[0].mxu0
      %v8515 = vadd.f32 0.0, %v8514
      %v8516 = vpop.f32.mrb[0].mxu0
      %v8517 = vpop.f32.mrb[0].mxu0
      %v8518 = vadd.f32 0.0, %v8517
      %v8519 = vpop.f32.mrb[0].mxu0
      %8520 = vmatprep.mubr.bf16.mxu0 0
      %8521 = vmatmul.mubr.bf16.gmra.mrb[0].mxu0 %v8372
      %v8522 = vpop.f32.mrb[0].mxu0
      %v8523 = vadd.f32 0.0, %v8522
      %v8524 = vpop.f32.mrb[0].mxu0
      %v8525 = vpop.f32.mrb[0].mxu0
      %v8526 = vadd.f32 0.0, %v8525
      %v8527 = vpop.f32.mrb[0].mxu0
      %8528 = vmatprep.mubr.bf16.mxu0 0
      %8529 = vmatmul.mubr.bf16.gmra.mrb[0].mxu0 %v8373
      %v8530 = vpop.f32.mrb[0].mxu0
      %v8531 = vadd.f32 0.0, %v8530
      %v8532 = vpop.f32.mrb[0].mxu0
      %v8533 = vpop.f32.mrb[0].mxu0
      %v8534 = vadd.f32 0.0, %v8533
      %v8535 = vpop.f32.mrb[0].mxu0
      %8536 = vmatprep.mubr.bf16.mxu0 0
      %8537 = vmatmul.mubr.bf16.gmra.mrb[0].mxu0 %v8374
      %v8538 = vpop.f32.mrb[0].mxu0
      %v8539 = vadd.f32 0.0, %v8538
      %v8540 = vpop.f32.mrb[0].mxu0
      %v8541 = vpop.f32.mrb[0].mxu0
      %v8542 = vadd.f32 0.0, %v8541
      %v8543 = vpop.f32.mrb[0].mxu0
      %8544 = vmatprep.mubr.bf16.mxu0 0
      %8545 = vmatmul.mubr.bf16.gmra.mrb[0].mxu0 %v8375
      %v8546 = vpop.f32.mrb[0].mxu0
      %v8547 = vadd.f32 0.0, %v8546
      %v8548 = vpop.f32.mrb[0].mxu0
      %v8549 = vpop.f32.mrb[0].mxu0
      %v8550 = vadd.f32 0.0, %v8549
      %v8551 = vpop.f32.mrb[0].mxu0
      %8552 = vmatprep.mubr.bf16.mxu0 0
      %8553 = vmatmul.mubr.bf16.gmra.mrb[0].mxu0 %v8376
      %v8554 = vpop.f32.mrb[0].mxu0
      %v8555 = vadd.f32 0.0, %v8554
      %v8556 = vpop.f32.mrb[0].mxu0
      %v8557 = vpop.f32.mrb[0].mxu0
      %v8558 = vadd.f32 0.0, %v8557
      %v8559 = vpop.f32.mrb[0].mxu0
      %8560 = vmatprep.mubr.bf16.mxu0 0
      %8561 = vmatmul.mubr.bf16.gmra.mrb[0].mxu0 %v8377
      %v8562 = vpop.f32.mrb[0].mxu0
      %v8563 = vadd.f32 0.0, %v8562
      %v8564 = vpop.f32.mrb[0].mxu0
      %v8565 = vpop.f32.mrb[0].mxu0
      %v8566 = vadd.f32 0.0, %v8565
      %v8567 = vpop.f32.mrb[0].mxu0
      %8568 = vmatprep.mubr.bf16.mxu0 0
      %8569 = vmatmul.mubr.bf16.gmra.mrb[0].mxu0 %v8378
      %v8570 = vpop.f32.mrb[0].mxu0
      %v8571 = vadd.f32 0.0, %v8570
      %v8572 = vpop.f32.mrb[0].mxu0
      %v8573 = vpop.f32.mrb[0].mxu0
      %v8574 = vadd.f32 0.0, %v8573
      %v8575 = vpop.f32.mrb[0].mxu0
      %8576 = vmatprep.mubr.bf16.mxu0 0
      %8577 = vmatmul.mubr.bf16.gmra.mrb[0].mxu0 %v8379
      %v8578 = vpop.f32.mrb[0].mxu0
      %v8579 = vadd.f32 0.0, %v8578
      %v8580 = vpop.f32.mrb[0].mxu0
      %v8581 = vpop.f32.mrb[0].mxu0
      %v8582 = vadd.f32 0.0, %v8581
      %v8583 = vpop.f32.mrb[0].mxu0
      %8584 = vmatprep.mubr.bf16.mxu0 0
      %8585 = vmatmul.mubr.bf16.gmra.mrb[0].mxu0 %v8380
      %v8586 = vpop.f32.mrb[0].mxu0
      %v8587 = vadd.f32 0.0, %v8586
      %v8588 = vpop.f32.mrb[0].mxu0
      %v8589 = vpop.f32.mrb[0].mxu0
      %v8590 = vadd.f32 0.0, %v8589
      %v8591 = vpop.f32.mrb[0].mxu0
      %8592 = vmatprep.mubr.bf16.mxu0 0
      %8593 = vmatmul.mubr.bf16.gmra.mrb[0].mxu0 %v8381
      %v8594 = vpop.f32.mrb[0].mxu0
      %v8595 = vadd.f32 0.0, %v8594
      %v8596 = vpop.f32.mrb[0].mxu0
      %v8597 = vpop.f32.mrb[0].mxu0
      %v8598 = vadd.f32 0.0, %v8597
      %v8599 = vpop.f32.mrb[0].mxu0
      %8600 = vmatprep.mubr.bf16.mxu0 0
      %8601 = vmatmul.mubr.bf16.gmra.mrb[0].mxu0 %v8382
      %v8602 = vpop.f32.mrb[0].mxu0
      %v8603 = vadd.f32 0.0, %v8602
      %v8604 = vpop.f32.mrb[0].mxu0
      %v8605 = vpop.f32.mrb[0].mxu0
      %v8606 = vadd.f32 0.0, %v8605
      %v8607 = vpop.f32.mrb[0].mxu0
      %8608 = vdwg.mxu0
      %v8609 = vadd.f32 %v8335, %v8483
      %v8610 = vadd.f32 %v8336, %v8486
      %v8611 = vadd.f32 %v8337, %v8491
      %v8612 = vadd.f32 %v8338, %v8494
      %v8613 = vadd.f32 %v8339, %v8499
      %v8614 = vadd.f32 %v8340, %v8502
      %v8615 = vadd.f32 %v8341, %v8507
      %v8616 = vadd.f32 %v8342, %v8510
      %v8617 = vadd.f32 %v8343, %v8515
      %v8618 = vadd.f32 %v8344, %v8518
      %v8619 = vadd.f32 %v8345, %v8523
      %v8620 = vadd.f32 %v8346, %v8526
      %v8621 = vadd.f32 %v8347, %v8531
      %v8622 = vadd.f32 %v8348, %v8534
      %v8623 = vadd.f32 %v8349, %v8539
      %v8624 = vadd.f32 %v8350, %v8542
      %v8625 = vadd.f32 %v8351, %v8547
      %v8626 = vadd.f32 %v8352, %v8550
      %v8627 = vadd.f32 %v8353, %v8555
      %v8628 = vadd.f32 %v8354, %v8558
      %v8629 = vadd.f32 %v8355, %v8563
      %v8630 = vadd.f32 %v8356, %v8566
      %v8631 = vadd.f32 %v8357, %v8571
      %v8632 = vadd.f32 %v8358, %v8574
      %v8633 = vadd.f32 %v8359, %v8579
      %v8634 = vadd.f32 %v8360, %v8582
      %v8635 = vadd.f32 %v8361, %v8587
      %v8636 = vadd.f32 %v8362, %v8590
      %v8637 = vadd.f32 %v8363, %v8595
      %v8638 = vadd.f32 %v8364, %v8598
      %v8639 = vadd.f32 %v8365, %v8603
      %v8640 = vadd.f32 %v8366, %v8606
      %v8641 = vld [vmem:[%s7212] sm:$0xff]
      %v8642 = vld [vmem:[%s7212 + $0x8] sm:$0xff]
      %v8643 = vld [vmem:[%s7212 + $0x10] sm:$0xff]
      %v8644 = vld [vmem:[%s7212 + $0x18] sm:$0xff]
      %v8645 = vld [vmem:[%s7212 + $0x20] sm:$0xff]
      %v8646 = vld [vmem:[%s7212 + $0x28] sm:$0xff]
      %v8647 = vld [vmem:[%s7212 + $0x30] sm:$0xff]
      %v8648 = vld [vmem:[%s7212 + $0x38] sm:$0xff]
      %v8649 = vld [vmem:[%s7212 + $0x40] sm:$0xff]
      %v8650 = vld [vmem:[%s7212 + $0x48] sm:$0xff]
      %v8651 = vld [vmem:[%s7212 + $0x50] sm:$0xff]
      %v8652 = vld [vmem:[%s7212 + $0x58] sm:$0xff]
      %v8653 = vld [vmem:[%s7212 + $0x60] sm:$0xff]
      %v8654 = vld [vmem:[%s7212 + $0x68] sm:$0xff]
      %v8655 = vld [vmem:[%s7212 + $0x70] sm:$0xff]
      %v8656 = vld [vmem:[%s7212 + $0x78] sm:$0xff]
      %s8657 = scalar_lea.vmem %s7, 320
      %v8658 = vld [vmem:[%s8657] sm:$0xf]
      %v8659 = vld [vmem:[%s8657 + $0x4] sm:$0xf]
      %v8660 = vld [vmem:[%s8657 + $0x8] sm:$0xf]
      %v8661 = vld [vmem:[%s8657 + $0xc] sm:$0xf]
      %v8662 = vld [vmem:[%s8657 + $0x10] sm:$0xf]
      %v8663 = vld [vmem:[%s8657 + $0x14] sm:$0xf]
      %v8664 = vld [vmem:[%s8657 + $0x18] sm:$0xf]
      %v8665 = vld [vmem:[%s8657 + $0x1c] sm:$0xf]
      %v8666 = vld [vmem:[%s8657 + $0x20] sm:$0xf]
      %v8667 = vld [vmem:[%s8657 + $0x24] sm:$0xf]
      %v8668 = vld [vmem:[%s8657 + $0x28] sm:$0xf]
      %v8669 = vld [vmem:[%s8657 + $0x2c] sm:$0xf]
      %v8670 = vld [vmem:[%s8657 + $0x30] sm:$0xf]
      %v8671 = vld [vmem:[%s8657 + $0x34] sm:$0xf]
      %v8672 = vld [vmem:[%s8657 + $0x38] sm:$0xf]
      %v8673 = vld [vmem:[%s8657 + $0x3c] sm:$0xf]
      %v8690 = vunpack.c.l.b16 %v8658
      %v8691 = vunpack.c.l.b16 %v8659
      %v8692 = vunpack.c.l.b16 %v8660
      %v8693 = vunpack.c.l.b16 %v8661
      %v8694 = vunpack.c.l.b16 %v8662
      %v8695 = vunpack.c.l.b16 %v8663
      %v8696 = vunpack.c.l.b16 %v8664
      %v8697 = vunpack.c.l.b16 %v8665
      %v8698 = vunpack.c.l.b16 %v8666
      %v8699 = vunpack.c.l.b16 %v8667
      %v8700 = vunpack.c.l.b16 %v8668
      %v8701 = vunpack.c.l.b16 %v8669
      %v8702 = vunpack.c.l.b16 %v8670
      %v8703 = vunpack.c.l.b16 %v8671
      %v8704 = vunpack.c.l.b16 %v8672
      %v8705 = vunpack.c.l.b16 %v8673
      %v8706 = vpack.c.b16 %v8691, %v8690
      %v8707 = vpack.c.b16 %v8693, %v8692
      %v8708 = vpack.c.b16 %v8695, %v8694
      %v8709 = vpack.c.b16 %v8697, %v8696
      %v8710 = vpack.c.b16 %v8699, %v8698
      %v8711 = vpack.c.b16 %v8701, %v8700
      %v8712 = vpack.c.b16 %v8703, %v8702
      %v8713 = vpack.c.b16 %v8705, %v8704
      %8722 = vmatprep.subr.bf16.mxu0 0
      %8723 = vmatpush1.bf16.msra.mxu0 %v8706
      %8724 = vmatprep.subr.bf16.mxu0 0
      %8725 = vmatpush1.bf16.msra.mxu0 %v8707
      %8726 = vmatprep.subr.bf16.mxu0 0
      %8727 = vmatpush1.bf16.msra.mxu0 %v8708
      %8728 = vmatprep.subr.bf16.mxu0 0
      %8729 = vmatpush1.bf16.msra.mxu0 %v8709
      %8730 = vmatprep.subr.bf16.mxu0 0
      %8731 = vmatpush1.bf16.msra.mxu0 %v8710
      %8732 = vmatprep.subr.bf16.mxu0 0
      %8733 = vmatpush1.bf16.msra.mxu0 %v8711
      %8734 = vmatprep.subr.bf16.mxu0 0
      %8735 = vmatpush1.bf16.msra.mxu0 %v8712
      %8736 = vmatprep.subr.bf16.mxu0 0
      %8737 = vmatpush1.bf16.msra.mxu0 %v8713
      %8738 = vmatprep.subr.bf16.mxu0 0
      %8739 = vmatpush1.bf16.msra.mxu0 0
      %8740 = vmatprep.subr.bf16.mxu0 0
      %8741 = vmatpush1.bf16.msra.mxu0 0
      %8742 = vmatprep.subr.bf16.mxu0 0
      %8743 = vmatpush1.bf16.msra.mxu0 0
      %8744 = vmatprep.subr.bf16.mxu0 0
      %8745 = vmatpush1.bf16.msra.mxu0 0
      %8746 = vmatprep.subr.bf16.mxu0 0
      %8747 = vmatpush1.bf16.msra.mxu0 0
      %8748 = vmatprep.subr.bf16.mxu0 0
      %8749 = vmatpush1.bf16.msra.mxu0 0
      %8750 = vmatprep.subr.bf16.mxu0 0
      %8751 = vmatpush1.bf16.msra.mxu0 0
      %8752 = vmatprep.subr.bf16.mxu0 0
      %8753 = vmatpush1.bf16.msra.mxu0 0
      %8754 = vmatprep.mubr.bf16.mxu0 0
      %8755 = vmatmul.mubr.bf16.gmra.mrb[0].mxu0 %v8641
      %v8756 = vpop.f32.mrb[0].mxu0
      %v8757 = vadd.f32 0.0, %v8756
      %v8758 = vpop.f32.mrb[0].mxu0
      %v8759 = vpop.f32.mrb[0].mxu0
      %v8760 = vadd.f32 0.0, %v8759
      %v8761 = vpop.f32.mrb[0].mxu0
      %8762 = vmatprep.mubr.bf16.mxu0 0
      %8763 = vmatmul.mubr.bf16.gmra.mrb[0].mxu0 %v8642
      %v8764 = vpop.f32.mrb[0].mxu0
      %v8765 = vadd.f32 0.0, %v8764
      %v8766 = vpop.f32.mrb[0].mxu0
      %v8767 = vpop.f32.mrb[0].mxu0
      %v8768 = vadd.f32 0.0, %v8767
      %v8769 = vpop.f32.mrb[0].mxu0
      %8770 = vmatprep.mubr.bf16.mxu0 0
      %8771 = vmatmul.mubr.bf16.gmra.mrb[0].mxu0 %v8643
      %v8772 = vpop.f32.mrb[0].mxu0
      %v8773 = vadd.f32 0.0, %v8772
      %v8774 = vpop.f32.mrb[0].mxu0
      %v8775 = vpop.f32.mrb[0].mxu0
      %v8776 = vadd.f32 0.0, %v8775
      %v8777 = vpop.f32.mrb[0].mxu0
      %8778 = vmatprep.mubr.bf16.mxu0 0
      %8779 = vmatmul.mubr.bf16.gmra.mrb[0].mxu0 %v8644
      %v8780 = vpop.f32.mrb[0].mxu0
      %v8781 = vadd.f32 0.0, %v8780
      %v8782 = vpop.f32.mrb[0].mxu0
      %v8783 = vpop.f32.mrb[0].mxu0
      %v8784 = vadd.f32 0.0, %v8783
      %v8785 = vpop.f32.mrb[0].mxu0
      %8786 = vmatprep.mubr.bf16.mxu0 0
      %8787 = vmatmul.mubr.bf16.gmra.mrb[0].mxu0 %v8645
      %v8788 = vpop.f32.mrb[0].mxu0
      %v8789 = vadd.f32 0.0, %v8788
      %v8790 = vpop.f32.mrb[0].mxu0
      %v8791 = vpop.f32.mrb[0].mxu0
      %v8792 = vadd.f32 0.0, %v8791
      %v8793 = vpop.f32.mrb[0].mxu0
      %8794 = vmatprep.mubr.bf16.mxu0 0
      %8795 = vmatmul.mubr.bf16.gmra.mrb[0].mxu0 %v8646
      %v8796 = vpop.f32.mrb[0].mxu0
      %v8797 = vadd.f32 0.0, %v8796
      %v8798 = vpop.f32.mrb[0].mxu0
      %v8799 = vpop.f32.mrb[0].mxu0
      %v8800 = vadd.f32 0.0, %v8799
      %v8801 = vpop.f32.mrb[0].mxu0
      %8802 = vmatprep.mubr.bf16.mxu0 0
      %8803 = vmatmul.mubr.bf16.gmra.mrb[0].mxu0 %v8647
      %v8804 = vpop.f32.mrb[0].mxu0
      %v8805 = vadd.f32 0.0, %v8804
      %v8806 = vpop.f32.mrb[0].mxu0
      %v8807 = vpop.f32.mrb[0].mxu0
      %v8808 = vadd.f32 0.0, %v8807
      %v8809 = vpop.f32.mrb[0].mxu0
      %8810 = vmatprep.mubr.bf16.mxu0 0
      %8811 = vmatmul.mubr.bf16.gmra.mrb[0].mxu0 %v8648
      %v8812 = vpop.f32.mrb[0].mxu0
      %v8813 = vadd.f32 0.0, %v8812
      %v8814 = vpop.f32.mrb[0].mxu0
      %v8815 = vpop.f32.mrb[0].mxu0
      %v8816 = vadd.f32 0.0, %v8815
      %v8817 = vpop.f32.mrb[0].mxu0
      %8818 = vmatprep.mubr.bf16.mxu0 0
      %8819 = vmatmul.mubr.bf16.gmra.mrb[0].mxu0 %v8649
      %v8820 = vpop.f32.mrb[0].mxu0
      %v8821 = vadd.f32 0.0, %v8820
      %v8822 = vpop.f32.mrb[0].mxu0
      %v8823 = vpop.f32.mrb[0].mxu0
      %v8824 = vadd.f32 0.0, %v8823
      %v8825 = vpop.f32.mrb[0].mxu0
      %8826 = vmatprep.mubr.bf16.mxu0 0
      %8827 = vmatmul.mubr.bf16.gmra.mrb[0].mxu0 %v8650
      %v8828 = vpop.f32.mrb[0].mxu0
      %v8829 = vadd.f32 0.0, %v8828
      %v8830 = vpop.f32.mrb[0].mxu0
      %v8831 = vpop.f32.mrb[0].mxu0
      %v8832 = vadd.f32 0.0, %v8831
      %v8833 = vpop.f32.mrb[0].mxu0
      %8834 = vmatprep.mubr.bf16.mxu0 0
      %8835 = vmatmul.mubr.bf16.gmra.mrb[0].mxu0 %v8651
      %v8836 = vpop.f32.mrb[0].mxu0
      %v8837 = vadd.f32 0.0, %v8836
      %v8838 = vpop.f32.mrb[0].mxu0
      %v8839 = vpop.f32.mrb[0].mxu0
      %v8840 = vadd.f32 0.0, %v8839
      %v8841 = vpop.f32.mrb[0].mxu0
      %8842 = vmatprep.mubr.bf16.mxu0 0
      %8843 = vmatmul.mubr.bf16.gmra.mrb[0].mxu0 %v8652
      %v8844 = vpop.f32.mrb[0].mxu0
      %v8845 = vadd.f32 0.0, %v8844
      %v8846 = vpop.f32.mrb[0].mxu0
      %v8847 = vpop.f32.mrb[0].mxu0
      %v8848 = vadd.f32 0.0, %v8847
      %v8849 = vpop.f32.mrb[0].mxu0
      %8850 = vmatprep.mubr.bf16.mxu0 0
      %8851 = vmatmul.mubr.bf16.gmra.mrb[0].mxu0 %v8653
      %v8852 = vpop.f32.mrb[0].mxu0
      %v8853 = vadd.f32 0.0, %v8852
      %v8854 = vpop.f32.mrb[0].mxu0
      %v8855 = vpop.f32.mrb[0].mxu0
      %v8856 = vadd.f32 0.0, %v8855
      %v8857 = vpop.f32.mrb[0].mxu0
      %8858 = vmatprep.mubr.bf16.mxu0 0
      %8859 = vmatmul.mubr.bf16.gmra.mrb[0].mxu0 %v8654
      %v8860 = vpop.f32.mrb[0].mxu0
      %v8861 = vadd.f32 0.0, %v8860
      %v8862 = vpop.f32.mrb[0].mxu0
      %v8863 = vpop.f32.mrb[0].mxu0
      %v8864 = vadd.f32 0.0, %v8863
      %v8865 = vpop.f32.mrb[0].mxu0
      %8866 = vmatprep.mubr.bf16.mxu0 0
      %8867 = vmatmul.mubr.bf16.gmra.mrb[0].mxu0 %v8655
      %v8868 = vpop.f32.mrb[0].mxu0
      %v8869 = vadd.f32 0.0, %v8868
      %v8870 = vpop.f32.mrb[0].mxu0
      %v8871 = vpop.f32.mrb[0].mxu0
      %v8872 = vadd.f32 0.0, %v8871
      %v8873 = vpop.f32.mrb[0].mxu0
      %8874 = vmatprep.mubr.bf16.mxu0 0
      %8875 = vmatmul.mubr.bf16.gmra.mrb[0].mxu0 %v8656
      %v8876 = vpop.f32.mrb[0].mxu0
      %v8877 = vadd.f32 0.0, %v8876
      %v8878 = vpop.f32.mrb[0].mxu0
      %v8879 = vpop.f32.mrb[0].mxu0
      %v8880 = vadd.f32 0.0, %v8879
      %v8881 = vpop.f32.mrb[0].mxu0
      %8882 = vdwg.mxu0
      %v8883 = vadd.f32 %v8609, %v8757
      %v8884 = vadd.f32 %v8610, %v8760
      %v8885 = vadd.f32 %v8611, %v8765
      %v8886 = vadd.f32 %v8612, %v8768
      %v8887 = vadd.f32 %v8613, %v8773
      %v8888 = vadd.f32 %v8614, %v8776
      %v8889 = vadd.f32 %v8615, %v8781
      %v8890 = vadd.f32 %v8616, %v8784
      %v8891 = vadd.f32 %v8617, %v8789
      %v8892 = vadd.f32 %v8618, %v8792
      %v8893 = vadd.f32 %v8619, %v8797
      %v8894 = vadd.f32 %v8620, %v8800
      %v8895 = vadd.f32 %v8621, %v8805
      %v8896 = vadd.f32 %v8622, %v8808
      %v8897 = vadd.f32 %v8623, %v8813
      %v8898 = vadd.f32 %v8624, %v8816
      %v8899 = vadd.f32 %v8625, %v8821
      %v8900 = vadd.f32 %v8626, %v8824
      %v8901 = vadd.f32 %v8627, %v8829
      %v8902 = vadd.f32 %v8628, %v8832
      %v8903 = vadd.f32 %v8629, %v8837
      %v8904 = vadd.f32 %v8630, %v8840
      %v8905 = vadd.f32 %v8631, %v8845
      %v8906 = vadd.f32 %v8632, %v8848
      %v8907 = vadd.f32 %v8633, %v8853
      %v8908 = vadd.f32 %v8634, %v8856
      %v8909 = vadd.f32 %v8635, %v8861
      %v8910 = vadd.f32 %v8636, %v8864
      %v8911 = vadd.f32 %v8637, %v8869
      %v8912 = vadd.f32 %v8638, %v8872
      %v8913 = vadd.f32 %v8639, %v8877
      %v8914 = vadd.f32 %v8640, %v8880
      %s8915 = scalar_lea.vmem [#allocation3], 16
      %v8916 = vld [vmem:[%s8915] sm:$0xff]
      %v8917 = vld [vmem:[%s8915 + $0x8] sm:$0xff]
      %v8918 = vld [vmem:[%s8915 + $0x10] sm:$0xff]
      %v8919 = vld [vmem:[%s8915 + $0x18] sm:$0xff]
      %v8920 = vld [vmem:[%s8915 + $0x20] sm:$0xff]
      %v8921 = vld [vmem:[%s8915 + $0x28] sm:$0xff]
      %v8922 = vld [vmem:[%s8915 + $0x30] sm:$0xff]
      %v8923 = vld [vmem:[%s8915 + $0x38] sm:$0xff]
      %v8924 = vld [vmem:[%s8915 + $0x40] sm:$0xff]
      %v8925 = vld [vmem:[%s8915 + $0x48] sm:$0xff]
      %v8926 = vld [vmem:[%s8915 + $0x50] sm:$0xff]
      %v8927 = vld [vmem:[%s8915 + $0x58] sm:$0xff]
      %v8928 = vld [vmem:[%s8915 + $0x60] sm:$0xff]
      %v8929 = vld [vmem:[%s8915 + $0x68] sm:$0xff]
      %v8930 = vld [vmem:[%s8915 + $0x70] sm:$0xff]
      %v8931 = vld [vmem:[%s8915 + $0x78] sm:$0xff]
      %s8932 = scalar_lea.vmem %s7, 384
      %v8933 = vld [vmem:[%s8932] sm:$0xf]
      %v8934 = vld [vmem:[%s8932 + $0x4] sm:$0xf]
      %v8935 = vld [vmem:[%s8932 + $0x8] sm:$0xf]
      %v8936 = vld [vmem:[%s8932 + $0xc] sm:$0xf]
      %v8937 = vld [vmem:[%s8932 + $0x10] sm:$0xf]
      %v8938 = vld [vmem:[%s8932 + $0x14] sm:$0xf]
      %v8939 = vld [vmem:[%s8932 + $0x18] sm:$0xf]
      %v8940 = vld [vmem:[%s8932 + $0x1c] sm:$0xf]
      %v8941 = vld [vmem:[%s8932 + $0x20] sm:$0xf]
      %v8942 = vld [vmem:[%s8932 + $0x24] sm:$0xf]
      %v8943 = vld [vmem:[%s8932 + $0x28] sm:$0xf]
      %v8944 = vld [vmem:[%s8932 + $0x2c] sm:$0xf]
      %v8945 = vld [vmem:[%s8932 + $0x30] sm:$0xf]
      %v8946 = vld [vmem:[%s8932 + $0x34] sm:$0xf]
      %v8947 = vld [vmem:[%s8932 + $0x38] sm:$0xf]
      %v8948 = vld [vmem:[%s8932 + $0x3c] sm:$0xf]
      %v8965 = vunpack.c.l.b16 %v8933
      %v8966 = vunpack.c.l.b16 %v8934
      %v8967 = vunpack.c.l.b16 %v8935
      %v8968 = vunpack.c.l.b16 %v8936
      %v8969 = vunpack.c.l.b16 %v8937
      %v8970 = vunpack.c.l.b16 %v8938
      %v8971 = vunpack.c.l.b16 %v8939
      %v8972 = vunpack.c.l.b16 %v8940
      %v8973 = vunpack.c.l.b16 %v8941
      %v8974 = vunpack.c.l.b16 %v8942
      %v8975 = vunpack.c.l.b16 %v8943
      %v8976 = vunpack.c.l.b16 %v8944
      %v8977 = vunpack.c.l.b16 %v8945
      %v8978 = vunpack.c.l.b16 %v8946
      %v8979 = vunpack.c.l.b16 %v8947
      %v8980 = vunpack.c.l.b16 %v8948
      %v8981 = vpack.c.b16 %v8966, %v8965
      %v8982 = vpack.c.b16 %v8968, %v8967
      %v8983 = vpack.c.b16 %v8970, %v8969
      %v8984 = vpack.c.b16 %v8972, %v8971
      %v8985 = vpack.c.b16 %v8974, %v8973
      %v8986 = vpack.c.b16 %v8976, %v8975
      %v8987 = vpack.c.b16 %v8978, %v8977
      %v8988 = vpack.c.b16 %v8980, %v8979
      %8997 = vmatprep.subr.bf16.mxu0 0
      %8998 = vmatpush1.bf16.msra.mxu0 %v8981
      %8999 = vmatprep.subr.bf16.mxu0 0
      %9000 = vmatpush1.bf16.msra.mxu0 %v8982
      %9001 = vmatprep.subr.bf16.mxu0 0
      %9002 = vmatpush1.bf16.msra.mxu0 %v8983
      %9003 = vmatprep.subr.bf16.mxu0 0
      %9004 = vmatpush1.bf16.msra.mxu0 %v8984
      %9005 = vmatprep.subr.bf16.mxu0 0
      %9006 = vmatpush1.bf16.msra.mxu0 %v8985
      %9007 = vmatprep.subr.bf16.mxu0 0
      %9008 = vmatpush1.bf16.msra.mxu0 %v8986
      %9009 = vmatprep.subr.bf16.mxu0 0
      %9010 = vmatpush1.bf16.msra.mxu0 %v8987
      %9011 = vmatprep.subr.bf16.mxu0 0
      %9012 = vmatpush1.bf16.msra.mxu0 %v8988
      %9013 = vmatprep.subr.bf16.mxu0 0
      %9014 = vmatpush1.bf16.msra.mxu0 0
      %9015 = vmatprep.subr.bf16.mxu0 0
      %9016 = vmatpush1.bf16.msra.mxu0 0
      %9017 = vmatprep.subr.bf16.mxu0 0
      %9018 = vmatpush1.bf16.msra.mxu0 0
      %9019 = vmatprep.subr.bf16.mxu0 0
      %9020 = vmatpush1.bf16.msra.mxu0 0
      %9021 = vmatprep.subr.bf16.mxu0 0
      %9022 = vmatpush1.bf16.msra.mxu0 0
      %9023 = vmatprep.subr.bf16.mxu0 0
      %9024 = vmatpush1.bf16.msra.mxu0 0
      %9025 = vmatprep.subr.bf16.mxu0 0
      %9026 = vmatpush1.bf16.msra.mxu0 0
      %9027 = vmatprep.subr.bf16.mxu0 0
      %9028 = vmatpush1.bf16.msra.mxu0 0
      %9029 = vmatprep.mubr.bf16.mxu0 0
      %9030 = vmatmul.mubr.bf16.gmra.mrb[0].mxu0 %v8916
      %v9031 = vpop.f32.mrb[0].mxu0
      %v9032 = vadd.f32 0.0, %v9031
      %v9033 = vpop.f32.mrb[0].mxu0
      %v9034 = vpop.f32.mrb[0].mxu0
      %v9035 = vadd.f32 0.0, %v9034
      %v9036 = vpop.f32.mrb[0].mxu0
      %9037 = vmatprep.mubr.bf16.mxu0 0
      %9038 = vmatmul.mubr.bf16.gmra.mrb[0].mxu0 %v8917
      %v9039 = vpop.f32.mrb[0].mxu0
      %v9040 = vadd.f32 0.0, %v9039
      %v9041 = vpop.f32.mrb[0].mxu0
      %v9042 = vpop.f32.mrb[0].mxu0
      %v9043 = vadd.f32 0.0, %v9042
      %v9044 = vpop.f32.mrb[0].mxu0
      %9045 = vmatprep.mubr.bf16.mxu0 0
      %9046 = vmatmul.mubr.bf16.gmra.mrb[0].mxu0 %v8918
      %v9047 = vpop.f32.mrb[0].mxu0
      %v9048 = vadd.f32 0.0, %v9047
      %v9049 = vpop.f32.mrb[0].mxu0
      %v9050 = vpop.f32.mrb[0].mxu0
      %v9051 = vadd.f32 0.0, %v9050
      %v9052 = vpop.f32.mrb[0].mxu0
      %9053 = vmatprep.mubr.bf16.mxu0 0
      %9054 = vmatmul.mubr.bf16.gmra.mrb[0].mxu0 %v8919
      %v9055 = vpop.f32.mrb[0].mxu0
      %v9056 = vadd.f32 0.0, %v9055
      %v9057 = vpop.f32.mrb[0].mxu0
      %v9058 = vpop.f32.mrb[0].mxu0
      %v9059 = vadd.f32 0.0, %v9058
      %v9060 = vpop.f32.mrb[0].mxu0
      %9061 = vmatprep.mubr.bf16.mxu0 0
      %9062 = vmatmul.mubr.bf16.gmra.mrb[0].mxu0 %v8920
      %v9063 = vpop.f32.mrb[0].mxu0
      %v9064 = vadd.f32 0.0, %v9063
      %v9065 = vpop.f32.mrb[0].mxu0
      %v9066 = vpop.f32.mrb[0].mxu0
      %v9067 = vadd.f32 0.0, %v9066
      %v9068 = vpop.f32.mrb[0].mxu0
      %9069 = vmatprep.mubr.bf16.mxu0 0
      %9070 = vmatmul.mubr.bf16.gmra.mrb[0].mxu0 %v8921
      %v9071 = vpop.f32.mrb[0].mxu0
      %v9072 = vadd.f32 0.0, %v9071
      %v9073 = vpop.f32.mrb[0].mxu0
      %v9074 = vpop.f32.mrb[0].mxu0
      %v9075 = vadd.f32 0.0, %v9074
      %v9076 = vpop.f32.mrb[0].mxu0
      %9077 = vmatprep.mubr.bf16.mxu0 0
      %9078 = vmatmul.mubr.bf16.gmra.mrb[0].mxu0 %v8922
      %v9079 = vpop.f32.mrb[0].mxu0
      %v9080 = vadd.f32 0.0, %v9079
      %v9081 = vpop.f32.mrb[0].mxu0
      %v9082 = vpop.f32.mrb[0].mxu0
      %v9083 = vadd.f32 0.0, %v9082
      %v9084 = vpop.f32.mrb[0].mxu0
      %9085 = vmatprep.mubr.bf16.mxu0 0
      %9086 = vmatmul.mubr.bf16.gmra.mrb[0].mxu0 %v8923
      %v9087 = vpop.f32.mrb[0].mxu0
      %v9088 = vadd.f32 0.0, %v9087
      %v9089 = vpop.f32.mrb[0].mxu0
      %v9090 = vpop.f32.mrb[0].mxu0
      %v9091 = vadd.f32 0.0, %v9090
      %v9092 = vpop.f32.mrb[0].mxu0
      %9093 = vmatprep.mubr.bf16.mxu0 0
      %9094 = vmatmul.mubr.bf16.gmra.mrb[0].mxu0 %v8924
      %v9095 = vpop.f32.mrb[0].mxu0
      %v9096 = vadd.f32 0.0, %v9095
      %v9097 = vpop.f32.mrb[0].mxu0
      %v9098 = vpop.f32.mrb[0].mxu0
      %v9099 = vadd.f32 0.0, %v9098
      %v9100 = vpop.f32.mrb[0].mxu0
      %9101 = vmatprep.mubr.bf16.mxu0 0
      %9102 = vmatmul.mubr.bf16.gmra.mrb[0].mxu0 %v8925
      %v9103 = vpop.f32.mrb[0].mxu0
      %v9104 = vadd.f32 0.0, %v9103
      %v9105 = vpop.f32.mrb[0].mxu0
      %v9106 = vpop.f32.mrb[0].mxu0
      %v9107 = vadd.f32 0.0, %v9106
      %v9108 = vpop.f32.mrb[0].mxu0
      %9109 = vmatprep.mubr.bf16.mxu0 0
      %9110 = vmatmul.mubr.bf16.gmra.mrb[0].mxu0 %v8926
      %v9111 = vpop.f32.mrb[0].mxu0
      %v9112 = vadd.f32 0.0, %v9111
      %v9113 = vpop.f32.mrb[0].mxu0
      %v9114 = vpop.f32.mrb[0].mxu0
      %v9115 = vadd.f32 0.0, %v9114
      %v9116 = vpop.f32.mrb[0].mxu0
      %9117 = vmatprep.mubr.bf16.mxu0 0
      %9118 = vmatmul.mubr.bf16.gmra.mrb[0].mxu0 %v8927
      %v9119 = vpop.f32.mrb[0].mxu0
      %v9120 = vadd.f32 0.0, %v9119
      %v9121 = vpop.f32.mrb[0].mxu0
      %v9122 = vpop.f32.mrb[0].mxu0
      %v9123 = vadd.f32 0.0, %v9122
      %v9124 = vpop.f32.mrb[0].mxu0
      %9125 = vmatprep.mubr.bf16.mxu0 0
      %9126 = vmatmul.mubr.bf16.gmra.mrb[0].mxu0 %v8928
      %v9127 = vpop.f32.mrb[0].mxu0
      %v9128 = vadd.f32 0.0, %v9127
      %v9129 = vpop.f32.mrb[0].mxu0
      %v9130 = vpop.f32.mrb[0].mxu0
      %v9131 = vadd.f32 0.0, %v9130
      %v9132 = vpop.f32.mrb[0].mxu0
      %9133 = vmatprep.mubr.bf16.mxu0 0
      %9134 = vmatmul.mubr.bf16.gmra.mrb[0].mxu0 %v8929
      %v9135 = vpop.f32.mrb[0].mxu0
      %v9136 = vadd.f32 0.0, %v9135
      %v9137 = vpop.f32.mrb[0].mxu0
      %v9138 = vpop.f32.mrb[0].mxu0
      %v9139 = vadd.f32 0.0, %v9138
      %v9140 = vpop.f32.mrb[0].mxu0
      %9141 = vmatprep.mubr.bf16.mxu0 0
      %9142 = vmatmul.mubr.bf16.gmra.mrb[0].mxu0 %v8930
      %v9143 = vpop.f32.mrb[0].mxu0
      %v9144 = vadd.f32 0.0, %v9143
      %v9145 = vpop.f32.mrb[0].mxu0
      %v9146 = vpop.f32.mrb[0].mxu0
      %v9147 = vadd.f32 0.0, %v9146
      %v9148 = vpop.f32.mrb[0].mxu0
      %9149 = vmatprep.mubr.bf16.mxu0 0
      %9150 = vmatmul.mubr.bf16.gmra.mrb[0].mxu0 %v8931
      %v9151 = vpop.f32.mrb[0].mxu0
      %v9152 = vadd.f32 0.0, %v9151
      %v9153 = vpop.f32.mrb[0].mxu0
      %v9154 = vpop.f32.mrb[0].mxu0
      %v9155 = vadd.f32 0.0, %v9154
      %v9156 = vpop.f32.mrb[0].mxu0
      %9157 = vdwg.mxu0
      %v9158 = vadd.f32 %v8883, %v9032
      %v9159 = vadd.f32 %v8884, %v9035
      %v9160 = vadd.f32 %v8885, %v9040
      %v9161 = vadd.f32 %v8886, %v9043
      %v9162 = vadd.f32 %v8887, %v9048
      %v9163 = vadd.f32 %v8888, %v9051
      %v9164 = vadd.f32 %v8889, %v9056
      %v9165 = vadd.f32 %v8890, %v9059
      %v9166 = vadd.f32 %v8891, %v9064
      %v9167 = vadd.f32 %v8892, %v9067
      %v9168 = vadd.f32 %v8893, %v9072
      %v9169 = vadd.f32 %v8894, %v9075
      %v9170 = vadd.f32 %v8895, %v9080
      %v9171 = vadd.f32 %v8896, %v9083
      %v9172 = vadd.f32 %v8897, %v9088
      %v9173 = vadd.f32 %v8898, %v9091
      %v9174 = vadd.f32 %v8899, %v9096
      %v9175 = vadd.f32 %v8900, %v9099
      %v9176 = vadd.f32 %v8901, %v9104
      %v9177 = vadd.f32 %v8902, %v9107
      %v9178 = vadd.f32 %v8903, %v9112
      %v9179 = vadd.f32 %v8904, %v9115
      %v9180 = vadd.f32 %v8905, %v9120
      %v9181 = vadd.f32 %v8906, %v9123
      %v9182 = vadd.f32 %v8907, %v9128
      %v9183 = vadd.f32 %v8908, %v9131
      %v9184 = vadd.f32 %v8909, %v9136
      %v9185 = vadd.f32 %v8910, %v9139
      %v9186 = vadd.f32 %v8911, %v9144
      %v9187 = vadd.f32 %v8912, %v9147
      %v9188 = vadd.f32 %v8913, %v9152
      %v9189 = vadd.f32 %v8914, %v9155
      %s9190 = scalar_lea.vmem [#allocation3], 160
      %v9191 = vld [vmem:[%s9190] sm:$0xff]
      %v9192 = vld [vmem:[%s9190 + $0x8] sm:$0xff]
      %v9193 = vld [vmem:[%s9190 + $0x10] sm:$0xff]
      %v9194 = vld [vmem:[%s9190 + $0x18] sm:$0xff]
      %v9195 = vld [vmem:[%s9190 + $0x20] sm:$0xff]
      %v9196 = vld [vmem:[%s9190 + $0x28] sm:$0xff]
      %v9197 = vld [vmem:[%s9190 + $0x30] sm:$0xff]
      %v9198 = vld [vmem:[%s9190 + $0x38] sm:$0xff]
      %v9199 = vld [vmem:[%s9190 + $0x40] sm:$0xff]
      %v9200 = vld [vmem:[%s9190 + $0x48] sm:$0xff]
      %v9201 = vld [vmem:[%s9190 + $0x50] sm:$0xff]
      %v9202 = vld [vmem:[%s9190 + $0x58] sm:$0xff]
      %v9203 = vld [vmem:[%s9190 + $0x60] sm:$0xff]
      %v9204 = vld [vmem:[%s9190 + $0x68] sm:$0xff]
      %v9205 = vld [vmem:[%s9190 + $0x70] sm:$0xff]
      %v9206 = vld [vmem:[%s9190 + $0x78] sm:$0xff]
      %s9207 = scalar_lea.vmem %s7, 448
      %v9208 = vld [vmem:[%s9207] sm:$0xf]
      %v9209 = vld [vmem:[%s9207 + $0x4] sm:$0xf]
      %v9210 = vld [vmem:[%s9207 + $0x8] sm:$0xf]
      %v9211 = vld [vmem:[%s9207 + $0xc] sm:$0xf]
      %v9212 = vld [vmem:[%s9207 + $0x10] sm:$0xf]
      %v9213 = vld [vmem:[%s9207 + $0x14] sm:$0xf]
      %v9214 = vld [vmem:[%s9207 + $0x18] sm:$0xf]
      %v9215 = vld [vmem:[%s9207 + $0x1c] sm:$0xf]
      %v9216 = vld [vmem:[%s9207 + $0x20] sm:$0xf]
      %v9217 = vld [vmem:[%s9207 + $0x24] sm:$0xf]
      %v9218 = vld [vmem:[%s9207 + $0x28] sm:$0xf]
      %v9219 = vld [vmem:[%s9207 + $0x2c] sm:$0xf]
      %v9220 = vld [vmem:[%s9207 + $0x30] sm:$0xf]
      %v9221 = vld [vmem:[%s9207 + $0x34] sm:$0xf]
      %v9222 = vld [vmem:[%s9207 + $0x38] sm:$0xf]
      %v9223 = vld [vmem:[%s9207 + $0x3c] sm:$0xf]
      %v9240 = vunpack.c.l.b16 %v9208
      %v9241 = vunpack.c.l.b16 %v9209
      %v9242 = vunpack.c.l.b16 %v9210
      %v9243 = vunpack.c.l.b16 %v9211
      %v9244 = vunpack.c.l.b16 %v9212
      %v9245 = vunpack.c.l.b16 %v9213
      %v9246 = vunpack.c.l.b16 %v9214
      %v9247 = vunpack.c.l.b16 %v9215
      %v9248 = vunpack.c.l.b16 %v9216
      %v9249 = vunpack.c.l.b16 %v9217
      %v9250 = vunpack.c.l.b16 %v9218
      %v9251 = vunpack.c.l.b16 %v9219
      %v9252 = vunpack.c.l.b16 %v9220
      %v9253 = vunpack.c.l.b16 %v9221
      %v9254 = vunpack.c.l.b16 %v9222
      %v9255 = vunpack.c.l.b16 %v9223
      %v9256 = vpack.c.b16 %v9241, %v9240
      %v9257 = vpack.c.b16 %v9243, %v9242
      %v9258 = vpack.c.b16 %v9245, %v9244
      %v9259 = vpack.c.b16 %v9247, %v9246
      %v9260 = vpack.c.b16 %v9249, %v9248
      %v9261 = vpack.c.b16 %v9251, %v9250
      %v9262 = vpack.c.b16 %v9253, %v9252
      %v9263 = vpack.c.b16 %v9255, %v9254
      %9272 = vmatprep.subr.bf16.mxu0 0
      %9273 = vmatpush1.bf16.msra.mxu0 %v9256
      %9274 = vmatprep.subr.bf16.mxu0 0
      %9275 = vmatpush1.bf16.msra.mxu0 %v9257
      %9276 = vmatprep.subr.bf16.mxu0 0
      %9277 = vmatpush1.bf16.msra.mxu0 %v9258
      %9278 = vmatprep.subr.bf16.mxu0 0
      %9279 = vmatpush1.bf16.msra.mxu0 %v9259
      %9280 = vmatprep.subr.bf16.mxu0 0
      %9281 = vmatpush1.bf16.msra.mxu0 %v9260
      %9282 = vmatprep.subr.bf16.mxu0 0
      %9283 = vmatpush1.bf16.msra.mxu0 %v9261
      %9284 = vmatprep.subr.bf16.mxu0 0
      %9285 = vmatpush1.bf16.msra.mxu0 %v9262
      %9286 = vmatprep.subr.bf16.mxu0 0
      %9287 = vmatpush1.bf16.msra.mxu0 %v9263
      %9288 = vmatprep.subr.bf16.mxu0 0
      %9289 = vmatpush1.bf16.msra.mxu0 0
      %9290 = vmatprep.subr.bf16.mxu0 0
      %9291 = vmatpush1.bf16.msra.mxu0 0
      %9292 = vmatprep.subr.bf16.mxu0 0
      %9293 = vmatpush1.bf16.msra.mxu0 0
      %9294 = vmatprep.subr.bf16.mxu0 0
      %9295 = vmatpush1.bf16.msra.mxu0 0
      %9296 = vmatprep.subr.bf16.mxu0 0
      %9297 = vmatpush1.bf16.msra.mxu0 0
      %9298 = vmatprep.subr.bf16.mxu0 0
      %9299 = vmatpush1.bf16.msra.mxu0 0
      %9300 = vmatprep.subr.bf16.mxu0 0
      %9301 = vmatpush1.bf16.msra.mxu0 0
      %9302 = vmatprep.subr.bf16.mxu0 0
      %9303 = vmatpush1.bf16.msra.mxu0 0
      %9304 = vmatprep.mubr.bf16.mxu0 0
      %9305 = vmatmul.mubr.bf16.gmra.mrb[0].mxu0 %v9191
      %v9306 = vpop.f32.mrb[0].mxu0
      %v9307 = vadd.f32 0.0, %v9306
      %v9308 = vpop.f32.mrb[0].mxu0
      %v9309 = vpop.f32.mrb[0].mxu0
      %v9310 = vadd.f32 0.0, %v9309
      %v9311 = vpop.f32.mrb[0].mxu0
      %9312 = vmatprep.mubr.bf16.mxu0 0
      %9313 = vmatmul.mubr.bf16.gmra.mrb[0].mxu0 %v9192
      %v9314 = vpop.f32.mrb[0].mxu0
      %v9315 = vadd.f32 0.0, %v9314
      %v9316 = vpop.f32.mrb[0].mxu0
      %v9317 = vpop.f32.mrb[0].mxu0
      %v9318 = vadd.f32 0.0, %v9317
      %v9319 = vpop.f32.mrb[0].mxu0
      %9320 = vmatprep.mubr.bf16.mxu0 0
      %9321 = vmatmul.mubr.bf16.gmra.mrb[0].mxu0 %v9193
      %v9322 = vpop.f32.mrb[0].mxu0
      %v9323 = vadd.f32 0.0, %v9322
      %v9324 = vpop.f32.mrb[0].mxu0
      %v9325 = vpop.f32.mrb[0].mxu0
      %v9326 = vadd.f32 0.0, %v9325
      %v9327 = vpop.f32.mrb[0].mxu0
      %9328 = vmatprep.mubr.bf16.mxu0 0
      %9329 = vmatmul.mubr.bf16.gmra.mrb[0].mxu0 %v9194
      %v9330 = vpop.f32.mrb[0].mxu0
      %v9331 = vadd.f32 0.0, %v9330
      %v9332 = vpop.f32.mrb[0].mxu0
      %v9333 = vpop.f32.mrb[0].mxu0
      %v9334 = vadd.f32 0.0, %v9333
      %v9335 = vpop.f32.mrb[0].mxu0
      %9336 = vmatprep.mubr.bf16.mxu0 0
      %9337 = vmatmul.mubr.bf16.gmra.mrb[0].mxu0 %v9195
      %v9338 = vpop.f32.mrb[0].mxu0
      %v9339 = vadd.f32 0.0, %v9338
      %v9340 = vpop.f32.mrb[0].mxu0
      %v9341 = vpop.f32.mrb[0].mxu0
      %v9342 = vadd.f32 0.0, %v9341
      %v9343 = vpop.f32.mrb[0].mxu0
      %9344 = vmatprep.mubr.bf16.mxu0 0
      %9345 = vmatmul.mubr.bf16.gmra.mrb[0].mxu0 %v9196
      %v9346 = vpop.f32.mrb[0].mxu0
      %v9347 = vadd.f32 0.0, %v9346
      %v9348 = vpop.f32.mrb[0].mxu0
      %v9349 = vpop.f32.mrb[0].mxu0
      %v9350 = vadd.f32 0.0, %v9349
      %v9351 = vpop.f32.mrb[0].mxu0
      %9352 = vmatprep.mubr.bf16.mxu0 0
      %9353 = vmatmul.mubr.bf16.gmra.mrb[0].mxu0 %v9197
      %v9354 = vpop.f32.mrb[0].mxu0
      %v9355 = vadd.f32 0.0, %v9354
      %v9356 = vpop.f32.mrb[0].mxu0
      %v9357 = vpop.f32.mrb[0].mxu0
      %v9358 = vadd.f32 0.0, %v9357
      %v9359 = vpop.f32.mrb[0].mxu0
      %9360 = vmatprep.mubr.bf16.mxu0 0
      %9361 = vmatmul.mubr.bf16.gmra.mrb[0].mxu0 %v9198
      %v9362 = vpop.f32.mrb[0].mxu0
      %v9363 = vadd.f32 0.0, %v9362
      %v9364 = vpop.f32.mrb[0].mxu0
      %v9365 = vpop.f32.mrb[0].mxu0
      %v9366 = vadd.f32 0.0, %v9365
      %v9367 = vpop.f32.mrb[0].mxu0
      %9368 = vmatprep.mubr.bf16.mxu0 0
      %9369 = vmatmul.mubr.bf16.gmra.mrb[0].mxu0 %v9199
      %v9370 = vpop.f32.mrb[0].mxu0
      %v9371 = vadd.f32 0.0, %v9370
      %v9372 = vpop.f32.mrb[0].mxu0
      %v9373 = vpop.f32.mrb[0].mxu0
      %v9374 = vadd.f32 0.0, %v9373
      %v9375 = vpop.f32.mrb[0].mxu0
      %9376 = vmatprep.mubr.bf16.mxu0 0
      %9377 = vmatmul.mubr.bf16.gmra.mrb[0].mxu0 %v9200
      %v9378 = vpop.f32.mrb[0].mxu0
      %v9379 = vadd.f32 0.0, %v9378
      %v9380 = vpop.f32.mrb[0].mxu0
      %v9381 = vpop.f32.mrb[0].mxu0
      %v9382 = vadd.f32 0.0, %v9381
      %v9383 = vpop.f32.mrb[0].mxu0
      %9384 = vmatprep.mubr.bf16.mxu0 0
      %9385 = vmatmul.mubr.bf16.gmra.mrb[0].mxu0 %v9201
      %v9386 = vpop.f32.mrb[0].mxu0
      %v9387 = vadd.f32 0.0, %v9386
      %v9388 = vpop.f32.mrb[0].mxu0
      %v9389 = vpop.f32.mrb[0].mxu0
      %v9390 = vadd.f32 0.0, %v9389
      %v9391 = vpop.f32.mrb[0].mxu0
      %9392 = vmatprep.mubr.bf16.mxu0 0
      %9393 = vmatmul.mubr.bf16.gmra.mrb[0].mxu0 %v9202
      %v9394 = vpop.f32.mrb[0].mxu0
      %v9395 = vadd.f32 0.0, %v9394
      %v9396 = vpop.f32.mrb[0].mxu0
      %v9397 = vpop.f32.mrb[0].mxu0
      %v9398 = vadd.f32 0.0, %v9397
      %v9399 = vpop.f32.mrb[0].mxu0
      %9400 = vmatprep.mubr.bf16.mxu0 0
      %9401 = vmatmul.mubr.bf16.gmra.mrb[0].mxu0 %v9203
      %v9402 = vpop.f32.mrb[0].mxu0
      %v9403 = vadd.f32 0.0, %v9402
      %v9404 = vpop.f32.mrb[0].mxu0
      %v9405 = vpop.f32.mrb[0].mxu0
      %v9406 = vadd.f32 0.0, %v9405
      %v9407 = vpop.f32.mrb[0].mxu0
      %9408 = vmatprep.mubr.bf16.mxu0 0
      %9409 = vmatmul.mubr.bf16.gmra.mrb[0].mxu0 %v9204
      %v9410 = vpop.f32.mrb[0].mxu0
      %v9411 = vadd.f32 0.0, %v9410
      %v9412 = vpop.f32.mrb[0].mxu0
      %v9413 = vpop.f32.mrb[0].mxu0
      %v9414 = vadd.f32 0.0, %v9413
      %v9415 = vpop.f32.mrb[0].mxu0
      %9416 = vmatprep.mubr.bf16.mxu0 0
      %9417 = vmatmul.mubr.bf16.gmra.mrb[0].mxu0 %v9205
      %v9418 = vpop.f32.mrb[0].mxu0
      %v9419 = vadd.f32 0.0, %v9418
      %v9420 = vpop.f32.mrb[0].mxu0
      %v9421 = vpop.f32.mrb[0].mxu0
      %v9422 = vadd.f32 0.0, %v9421
      %v9423 = vpop.f32.mrb[0].mxu0
      %9424 = vmatprep.mubr.bf16.mxu0 0
      %9425 = vmatmul.mubr.bf16.gmra.mrb[0].mxu0 %v9206
      %v9426 = vpop.f32.mrb[0].mxu0
      %v9427 = vadd.f32 0.0, %v9426
      %v9428 = vpop.f32.mrb[0].mxu0
      %v9429 = vpop.f32.mrb[0].mxu0
      %v9430 = vadd.f32 0.0, %v9429
      %v9431 = vpop.f32.mrb[0].mxu0
      %9432 = vdwg.mxu0
      %v9433 = vadd.f32 %v9158, %v9307
      %v9434 = vadd.f32 %v9159, %v9310
      %v9435 = vadd.f32 %v9160, %v9315
      %v9436 = vadd.f32 %v9161, %v9318
      %v9437 = vadd.f32 %v9162, %v9323
      %v9438 = vadd.f32 %v9163, %v9326
      %v9439 = vadd.f32 %v9164, %v9331
      %v9440 = vadd.f32 %v9165, %v9334
      %v9441 = vadd.f32 %v9166, %v9339
      %v9442 = vadd.f32 %v9167, %v9342
      %v9443 = vadd.f32 %v9168, %v9347
      %v9444 = vadd.f32 %v9169, %v9350
      %v9445 = vadd.f32 %v9170, %v9355
      %v9446 = vadd.f32 %v9171, %v9358
      %v9447 = vadd.f32 %v9172, %v9363
      %v9448 = vadd.f32 %v9173, %v9366
      %v9449 = vadd.f32 %v9174, %v9371
      %v9450 = vadd.f32 %v9175, %v9374
      %v9451 = vadd.f32 %v9176, %v9379
      %v9452 = vadd.f32 %v9177, %v9382
      %v9453 = vadd.f32 %v9178, %v9387
      %v9454 = vadd.f32 %v9179, %v9390
      %v9455 = vadd.f32 %v9180, %v9395
      %v9456 = vadd.f32 %v9181, %v9398
      %v9457 = vadd.f32 %v9182, %v9403
      %v9458 = vadd.f32 %v9183, %v9406
      %v9459 = vadd.f32 %v9184, %v9411
      %v9460 = vadd.f32 %v9185, %v9414
      %v9461 = vadd.f32 %v9186, %v9419
      %v9462 = vadd.f32 %v9187, %v9422
      %v9463 = vadd.f32 %v9188, %v9427
      %v9464 = vadd.f32 %v9189, %v9430
      %s9465 = scalar_lea.vmem [#allocation3], 304
      %v9466 = vld [vmem:[%s9465] sm:$0xff]
      %v9467 = vld [vmem:[%s9465 + $0x8] sm:$0xff]
      %v9468 = vld [vmem:[%s9465 + $0x10] sm:$0xff]
      %v9469 = vld [vmem:[%s9465 + $0x18] sm:$0xff]
      %v9470 = vld [vmem:[%s9465 + $0x20] sm:$0xff]
      %v9471 = vld [vmem:[%s9465 + $0x28] sm:$0xff]
      %v9472 = vld [vmem:[%s9465 + $0x30] sm:$0xff]
      %v9473 = vld [vmem:[%s9465 + $0x38] sm:$0xff]
      %v9474 = vld [vmem:[%s9465 + $0x40] sm:$0xff]
      %v9475 = vld [vmem:[%s9465 + $0x48] sm:$0xff]
      %v9476 = vld [vmem:[%s9465 + $0x50] sm:$0xff]
      %v9477 = vld [vmem:[%s9465 + $0x58] sm:$0xff]
      %v9478 = vld [vmem:[%s9465 + $0x60] sm:$0xff]
      %v9479 = vld [vmem:[%s9465 + $0x68] sm:$0xff]
      %v9480 = vld [vmem:[%s9465 + $0x70] sm:$0xff]
      %v9481 = vld [vmem:[%s9465 + $0x78] sm:$0xff]
      %s9482 = scalar_lea.vmem %s7, 512
      %v9483 = vld [vmem:[%s9482] sm:$0xf]
      %v9484 = vld [vmem:[%s9482 + $0x4] sm:$0xf]
      %v9485 = vld [vmem:[%s9482 + $0x8] sm:$0xf]
      %v9486 = vld [vmem:[%s9482 + $0xc] sm:$0xf]
      %v9487 = vld [vmem:[%s9482 + $0x10] sm:$0xf]
      %v9488 = vld [vmem:[%s9482 + $0x14] sm:$0xf]
      %v9489 = vld [vmem:[%s9482 + $0x18] sm:$0xf]
      %v9490 = vld [vmem:[%s9482 + $0x1c] sm:$0xf]
      %v9491 = vld [vmem:[%s9482 + $0x20] sm:$0xf]
      %v9492 = vld [vmem:[%s9482 + $0x24] sm:$0xf]
      %v9493 = vld [vmem:[%s9482 + $0x28] sm:$0xf]
      %v9494 = vld [vmem:[%s9482 + $0x2c] sm:$0xf]
      %v9495 = vld [vmem:[%s9482 + $0x30] sm:$0xf]
      %v9496 = vld [vmem:[%s9482 + $0x34] sm:$0xf]
      %v9497 = vld [vmem:[%s9482 + $0x38] sm:$0xf]
      %v9498 = vld [vmem:[%s9482 + $0x3c] sm:$0xf]
      %v9515 = vunpack.c.l.b16 %v9483
      %v9516 = vunpack.c.l.b16 %v9484
      %v9517 = vunpack.c.l.b16 %v9485
      %v9518 = vunpack.c.l.b16 %v9486
      %v9519 = vunpack.c.l.b16 %v9487
      %v9520 = vunpack.c.l.b16 %v9488
      %v9521 = vunpack.c.l.b16 %v9489
      %v9522 = vunpack.c.l.b16 %v9490
      %v9523 = vunpack.c.l.b16 %v9491
      %v9524 = vunpack.c.l.b16 %v9492
      %v9525 = vunpack.c.l.b16 %v9493
      %v9526 = vunpack.c.l.b16 %v9494
      %v9527 = vunpack.c.l.b16 %v9495
      %v9528 = vunpack.c.l.b16 %v9496
      %v9529 = vunpack.c.l.b16 %v9497
      %v9530 = vunpack.c.l.b16 %v9498
      %v9531 = vpack.c.b16 %v9516, %v9515
      %v9532 = vpack.c.b16 %v9518, %v9517
      %v9533 = vpack.c.b16 %v9520, %v9519
      %v9534 = vpack.c.b16 %v9522, %v9521
      %v9535 = vpack.c.b16 %v9524, %v9523
      %v9536 = vpack.c.b16 %v9526, %v9525
      %v9537 = vpack.c.b16 %v9528, %v9527
      %v9538 = vpack.c.b16 %v9530, %v9529
      %9547 = vmatprep.subr.bf16.mxu0 0
      %9548 = vmatpush1.bf16.msra.mxu0 %v9531
      %9549 = vmatprep.subr.bf16.mxu0 0
      %9550 = vmatpush1.bf16.msra.mxu0 %v9532
      %9551 = vmatprep.subr.bf16.mxu0 0
      %9552 = vmatpush1.bf16.msra.mxu0 %v9533
      %9553 = vmatprep.subr.bf16.mxu0 0
      %9554 = vmatpush1.bf16.msra.mxu0 %v9534
      %9555 = vmatprep.subr.bf16.mxu0 0
      %9556 = vmatpush1.bf16.msra.mxu0 %v9535
      %9557 = vmatprep.subr.bf16.mxu0 0
      %9558 = vmatpush1.bf16.msra.mxu0 %v9536
      %9559 = vmatprep.subr.bf16.mxu0 0
      %9560 = vmatpush1.bf16.msra.mxu0 %v9537
      %9561 = vmatprep.subr.bf16.mxu0 0
      %9562 = vmatpush1.bf16.msra.mxu0 %v9538
      %9563 = vmatprep.subr.bf16.mxu0 0
      %9564 = vmatpush1.bf16.msra.mxu0 0
      %9565 = vmatprep.subr.bf16.mxu0 0
      %9566 = vmatpush1.bf16.msra.mxu0 0
      %9567 = vmatprep.subr.bf16.mxu0 0
      %9568 = vmatpush1.bf16.msra.mxu0 0
      %9569 = vmatprep.subr.bf16.mxu0 0
      %9570 = vmatpush1.bf16.msra.mxu0 0
      %9571 = vmatprep.subr.bf16.mxu0 0
      %9572 = vmatpush1.bf16.msra.mxu0 0
      %9573 = vmatprep.subr.bf16.mxu0 0
      %9574 = vmatpush1.bf16.msra.mxu0 0
      %9575 = vmatprep.subr.bf16.mxu0 0
      %9576 = vmatpush1.bf16.msra.mxu0 0
      %9577 = vmatprep.subr.bf16.mxu0 0
      %9578 = vmatpush1.bf16.msra.mxu0 0
      %9579 = vmatprep.mubr.bf16.mxu0 0
      %9580 = vmatmul.mubr.bf16.gmra.mrb[0].mxu0 %v9466
      %v9581 = vpop.f32.mrb[0].mxu0
      %v9582 = vadd.f32 0.0, %v9581
      %v9583 = vpop.f32.mrb[0].mxu0
      %v9584 = vpop.f32.mrb[0].mxu0
      %v9585 = vadd.f32 0.0, %v9584
      %v9586 = vpop.f32.mrb[0].mxu0
      %9587 = vmatprep.mubr.bf16.mxu0 0
      %9588 = vmatmul.mubr.bf16.gmra.mrb[0].mxu0 %v9467
      %v9589 = vpop.f32.mrb[0].mxu0
      %v9590 = vadd.f32 0.0, %v9589
      %v9591 = vpop.f32.mrb[0].mxu0
      %v9592 = vpop.f32.mrb[0].mxu0
      %v9593 = vadd.f32 0.0, %v9592
      %v9594 = vpop.f32.mrb[0].mxu0
      %9595 = vmatprep.mubr.bf16.mxu0 0
      %9596 = vmatmul.mubr.bf16.gmra.mrb[0].mxu0 %v9468
      %v9597 = vpop.f32.mrb[0].mxu0
      %v9598 = vadd.f32 0.0, %v9597
      %v9599 = vpop.f32.mrb[0].mxu0
      %v9600 = vpop.f32.mrb[0].mxu0
      %v9601 = vadd.f32 0.0, %v9600
      %v9602 = vpop.f32.mrb[0].mxu0
      %9603 = vmatprep.mubr.bf16.mxu0 0
      %9604 = vmatmul.mubr.bf16.gmra.mrb[0].mxu0 %v9469
      %v9605 = vpop.f32.mrb[0].mxu0
      %v9606 = vadd.f32 0.0, %v9605
      %v9607 = vpop.f32.mrb[0].mxu0
      %v9608 = vpop.f32.mrb[0].mxu0
      %v9609 = vadd.f32 0.0, %v9608
      %v9610 = vpop.f32.mrb[0].mxu0
      %9611 = vmatprep.mubr.bf16.mxu0 0
      %9612 = vmatmul.mubr.bf16.gmra.mrb[0].mxu0 %v9470
      %v9613 = vpop.f32.mrb[0].mxu0
      %v9614 = vadd.f32 0.0, %v9613
      %v9615 = vpop.f32.mrb[0].mxu0
      %v9616 = vpop.f32.mrb[0].mxu0
      %v9617 = vadd.f32 0.0, %v9616
      %v9618 = vpop.f32.mrb[0].mxu0
      %9619 = vmatprep.mubr.bf16.mxu0 0
      %9620 = vmatmul.mubr.bf16.gmra.mrb[0].mxu0 %v9471
      %v9621 = vpop.f32.mrb[0].mxu0
      %v9622 = vadd.f32 0.0, %v9621
      %v9623 = vpop.f32.mrb[0].mxu0
      %v9624 = vpop.f32.mrb[0].mxu0
      %v9625 = vadd.f32 0.0, %v9624
      %v9626 = vpop.f32.mrb[0].mxu0
      %9627 = vmatprep.mubr.bf16.mxu0 0
      %9628 = vmatmul.mubr.bf16.gmra.mrb[0].mxu0 %v9472
      %v9629 = vpop.f32.mrb[0].mxu0
      %v9630 = vadd.f32 0.0, %v9629
      %v9631 = vpop.f32.mrb[0].mxu0
      %v9632 = vpop.f32.mrb[0].mxu0
      %v9633 = vadd.f32 0.0, %v9632
      %v9634 = vpop.f32.mrb[0].mxu0
      %9635 = vmatprep.mubr.bf16.mxu0 0
      %9636 = vmatmul.mubr.bf16.gmra.mrb[0].mxu0 %v9473
      %v9637 = vpop.f32.mrb[0].mxu0
      %v9638 = vadd.f32 0.0, %v9637
      %v9639 = vpop.f32.mrb[0].mxu0
      %v9640 = vpop.f32.mrb[0].mxu0
      %v9641 = vadd.f32 0.0, %v9640
      %v9642 = vpop.f32.mrb[0].mxu0
      %9643 = vmatprep.mubr.bf16.mxu0 0
      %9644 = vmatmul.mubr.bf16.gmra.mrb[0].mxu0 %v9474
      %v9645 = vpop.f32.mrb[0].mxu0
      %v9646 = vadd.f32 0.0, %v9645
      %v9647 = vpop.f32.mrb[0].mxu0
      %v9648 = vpop.f32.mrb[0].mxu0
      %v9649 = vadd.f32 0.0, %v9648
      %v9650 = vpop.f32.mrb[0].mxu0
      %9651 = vmatprep.mubr.bf16.mxu0 0
      %9652 = vmatmul.mubr.bf16.gmra.mrb[0].mxu0 %v9475
      %v9653 = vpop.f32.mrb[0].mxu0
      %v9654 = vadd.f32 0.0, %v9653
      %v9655 = vpop.f32.mrb[0].mxu0
      %v9656 = vpop.f32.mrb[0].mxu0
      %v9657 = vadd.f32 0.0, %v9656
      %v9658 = vpop.f32.mrb[0].mxu0
      %9659 = vmatprep.mubr.bf16.mxu0 0
      %9660 = vmatmul.mubr.bf16.gmra.mrb[0].mxu0 %v9476
      %v9661 = vpop.f32.mrb[0].mxu0
      %v9662 = vadd.f32 0.0, %v9661
      %v9663 = vpop.f32.mrb[0].mxu0
      %v9664 = vpop.f32.mrb[0].mxu0
      %v9665 = vadd.f32 0.0, %v9664
      %v9666 = vpop.f32.mrb[0].mxu0
      %9667 = vmatprep.mubr.bf16.mxu0 0
      %9668 = vmatmul.mubr.bf16.gmra.mrb[0].mxu0 %v9477
      %v9669 = vpop.f32.mrb[0].mxu0
      %v9670 = vadd.f32 0.0, %v9669
      %v9671 = vpop.f32.mrb[0].mxu0
      %v9672 = vpop.f32.mrb[0].mxu0
      %v9673 = vadd.f32 0.0, %v9672
      %v9674 = vpop.f32.mrb[0].mxu0
      %9675 = vmatprep.mubr.bf16.mxu0 0
      %9676 = vmatmul.mubr.bf16.gmra.mrb[0].mxu0 %v9478
      %v9677 = vpop.f32.mrb[0].mxu0
      %v9678 = vadd.f32 0.0, %v9677
      %v9679 = vpop.f32.mrb[0].mxu0
      %v9680 = vpop.f32.mrb[0].mxu0
      %v9681 = vadd.f32 0.0, %v9680
      %v9682 = vpop.f32.mrb[0].mxu0
      %9683 = vmatprep.mubr.bf16.mxu0 0
      %9684 = vmatmul.mubr.bf16.gmra.mrb[0].mxu0 %v9479
      %v9685 = vpop.f32.mrb[0].mxu0
      %v9686 = vadd.f32 0.0, %v9685
      %v9687 = vpop.f32.mrb[0].mxu0
      %v9688 = vpop.f32.mrb[0].mxu0
      %v9689 = vadd.f32 0.0, %v9688
      %v9690 = vpop.f32.mrb[0].mxu0
      %9691 = vmatprep.mubr.bf16.mxu0 0
      %9692 = vmatmul.mubr.bf16.gmra.mrb[0].mxu0 %v9480
      %v9693 = vpop.f32.mrb[0].mxu0
      %v9694 = vadd.f32 0.0, %v9693
      %v9695 = vpop.f32.mrb[0].mxu0
      %v9696 = vpop.f32.mrb[0].mxu0
      %v9697 = vadd.f32 0.0, %v9696
      %v9698 = vpop.f32.mrb[0].mxu0
      %9699 = vmatprep.mubr.bf16.mxu0 0
      %9700 = vmatmul.mubr.bf16.gmra.mrb[0].mxu0 %v9481
      %v9701 = vpop.f32.mrb[0].mxu0
      %v9702 = vadd.f32 0.0, %v9701
      %v9703 = vpop.f32.mrb[0].mxu0
      %v9704 = vpop.f32.mrb[0].mxu0
      %v9705 = vadd.f32 0.0, %v9704
      %v9706 = vpop.f32.mrb[0].mxu0
      %9707 = vdwg.mxu0
      %v9708 = vadd.f32 %v9433, %v9582
      %v9709 = vadd.f32 %v9434, %v9585
      %v9710 = vadd.f32 %v9435, %v9590
      %v9711 = vadd.f32 %v9436, %v9593
      %v9712 = vadd.f32 %v9437, %v9598
      %v9713 = vadd.f32 %v9438, %v9601
      %v9714 = vadd.f32 %v9439, %v9606
      %v9715 = vadd.f32 %v9440, %v9609
      %v9716 = vadd.f32 %v9441, %v9614
      %v9717 = vadd.f32 %v9442, %v9617
      %v9718 = vadd.f32 %v9443, %v9622
      %v9719 = vadd.f32 %v9444, %v9625
      %v9720 = vadd.f32 %v9445, %v9630
      %v9721 = vadd.f32 %v9446, %v9633
      %v9722 = vadd.f32 %v9447, %v9638
      %v9723 = vadd.f32 %v9448, %v9641
      %v9724 = vadd.f32 %v9449, %v9646
      %v9725 = vadd.f32 %v9450, %v9649
      %v9726 = vadd.f32 %v9451, %v9654
      %v9727 = vadd.f32 %v9452, %v9657
      %v9728 = vadd.f32 %v9453, %v9662
      %v9729 = vadd.f32 %v9454, %v9665
      %v9730 = vadd.f32 %v9455, %v9670
      %v9731 = vadd.f32 %v9456, %v9673
      %v9732 = vadd.f32 %v9457, %v9678
      %v9733 = vadd.f32 %v9458, %v9681
      %v9734 = vadd.f32 %v9459, %v9686
      %v9735 = vadd.f32 %v9460, %v9689
      %v9736 = vadd.f32 %v9461, %v9694
      %v9737 = vadd.f32 %v9462, %v9697
      %v9738 = vadd.f32 %v9463, %v9702
      %v9739 = vadd.f32 %v9464, %v9705
      %v9740 = vld [vmem:[%s8] sm:$0x1]
      %v9742 = vlaneseq
      %v9743 = vshrl.u32 %v9742, 7
      %v9744 = vsub.s32 0, %v9743
      %v9745 = vrot.slane %v9740, %v9744
      %v9747 = vmul.f32 %v9708, %v9745
      %v9748 = vmul.f32 %v9709, %v9745
      %v9749 = vmul.f32 %v9710, %v9745
      %v9750 = vmul.f32 %v9711, %v9745
      %v9751 = vmul.f32 %v9712, %v9745
      %v9752 = vmul.f32 %v9713, %v9745
      %v9753 = vmul.f32 %v9714, %v9745
      %v9754 = vmul.f32 %v9715, %v9745
      %v9755 = vmul.f32 %v9716, %v9745
      %v9756 = vmul.f32 %v9717, %v9745
      %v9757 = vmul.f32 %v9718, %v9745
      %v9758 = vmul.f32 %v9719, %v9745
      %v9759 = vmul.f32 %v9720, %v9745
      %v9760 = vmul.f32 %v9721, %v9745
      %v9761 = vmul.f32 %v9722, %v9745
      %v9762 = vmul.f32 %v9723, %v9745
      %v9763 = vmul.f32 %v9724, %v9745
      %v9764 = vmul.f32 %v9725, %v9745
      %v9765 = vmul.f32 %v9726, %v9745
      %v9766 = vmul.f32 %v9727, %v9745
      %v9767 = vmul.f32 %v9728, %v9745
      %v9768 = vmul.f32 %v9729, %v9745
      %v9769 = vmul.f32 %v9730, %v9745
      %v9770 = vmul.f32 %v9731, %v9745
      %v9771 = vmul.f32 %v9732, %v9745
      %v9772 = vmul.f32 %v9733, %v9745
      %v9773 = vmul.f32 %v9734, %v9745
      %v9774 = vmul.f32 %v9735, %v9745
      %v9775 = vmul.f32 %v9736, %v9745
      %v9776 = vmul.f32 %v9737, %v9745
      %v9777 = vmul.f32 %v9738, %v9745
      %v9778 = vmul.f32 %v9739, %v9745
      %v9779 = vld [vmem:[%s9] sm:$0x1]
      %v9781 = vlaneseq
      %v9782 = vshrl.u32 %v9781, 7
      %v9783 = vsub.s32 0, %v9782
      %v9784 = vrot.slane %v9779, %v9783
      %v9786 = vadd.f32 %v9747, %v9784
      %v9787 = vadd.f32 %v9748, %v9784
      %v9788 = vadd.f32 %v9749, %v9784
      %v9789 = vadd.f32 %v9750, %v9784
      %v9790 = vadd.f32 %v9751, %v9784
      %v9791 = vadd.f32 %v9752, %v9784
      %v9792 = vadd.f32 %v9753, %v9784
      %v9793 = vadd.f32 %v9754, %v9784
      %v9794 = vadd.f32 %v9755, %v9784
      %v9795 = vadd.f32 %v9756, %v9784
      %v9796 = vadd.f32 %v9757, %v9784
      %v9797 = vadd.f32 %v9758, %v9784
      %v9798 = vadd.f32 %v9759, %v9784
      %v9799 = vadd.f32 %v9760, %v9784
      %v9800 = vadd.f32 %v9761, %v9784
      %v9801 = vadd.f32 %v9762, %v9784
      %v9802 = vadd.f32 %v9763, %v9784
      %v9803 = vadd.f32 %v9764, %v9784
      %v9804 = vadd.f32 %v9765, %v9784
      %v9805 = vadd.f32 %v9766, %v9784
      %v9806 = vadd.f32 %v9767, %v9784
      %v9807 = vadd.f32 %v9768, %v9784
      %v9808 = vadd.f32 %v9769, %v9784
      %v9809 = vadd.f32 %v9770, %v9784
      %v9810 = vadd.f32 %v9771, %v9784
      %v9811 = vadd.f32 %v9772, %v9784
      %v9812 = vadd.f32 %v9773, %v9784
      %v9813 = vadd.f32 %v9774, %v9784
      %v9814 = vadd.f32 %v9775, %v9784
      %v9815 = vadd.f32 %v9776, %v9784
      %v9816 = vadd.f32 %v9777, %v9784
      %v9817 = vadd.f32 %v9778, %v9784
      %v9818 = vunpack.c.l.bf16 %v7320
      %v9819 = vunpack.c.h.bf16 %v7320
      %v9820 = vunpack.c.l.bf16 %v7321
      %v9821 = vunpack.c.h.bf16 %v7321
      %v9822 = vunpack.c.l.bf16 %v7322
      %v9823 = vunpack.c.h.bf16 %v7322
      %v9824 = vunpack.c.l.bf16 %v7323
      %v9825 = vunpack.c.h.bf16 %v7323
      %v9826 = vunpack.c.l.bf16 %v7324
      %v9827 = vunpack.c.h.bf16 %v7324
      %v9828 = vunpack.c.l.bf16 %v7325
      %v9829 = vunpack.c.h.bf16 %v7325
      %v9830 = vunpack.c.l.bf16 %v7326
      %v9831 = vunpack.c.h.bf16 %v7326
      %v9832 = vunpack.c.l.bf16 %v7327
      %v9833 = vunpack.c.h.bf16 %v7327
      %v9834 = vunpack.c.l.bf16 %v7328
      %v9835 = vunpack.c.h.bf16 %v7328
      %v9836 = vunpack.c.l.bf16 %v7329
      %v9837 = vunpack.c.h.bf16 %v7329
      %v9838 = vunpack.c.l.bf16 %v7330
      %v9839 = vunpack.c.h.bf16 %v7330
      %v9840 = vunpack.c.l.bf16 %v7331
      %v9841 = vunpack.c.h.bf16 %v7331
      %v9842 = vunpack.c.l.bf16 %v7332
      %v9843 = vunpack.c.h.bf16 %v7332
      %v9844 = vunpack.c.l.bf16 %v7333
      %v9845 = vunpack.c.h.bf16 %v7333
      %v9846 = vunpack.c.l.bf16 %v7334
      %v9847 = vunpack.c.h.bf16 %v7334
      %v9848 = vunpack.c.l.bf16 %v7335
      %v9849 = vunpack.c.h.bf16 %v7335
      %v9850 = vadd.f32 %v9786, %v9818
      %v9851 = vadd.f32 %v9787, %v9819
      %v9852 = vadd.f32 %v9788, %v9820
      %v9853 = vadd.f32 %v9789, %v9821
      %v9854 = vadd.f32 %v9790, %v9822
      %v9855 = vadd.f32 %v9791, %v9823
      %v9856 = vadd.f32 %v9792, %v9824
      %v9857 = vadd.f32 %v9793, %v9825
      %v9858 = vadd.f32 %v9794, %v9826
      %v9859 = vadd.f32 %v9795, %v9827
      %v9860 = vadd.f32 %v9796, %v9828
      %v9861 = vadd.f32 %v9797, %v9829
      %v9862 = vadd.f32 %v9798, %v9830
      %v9863 = vadd.f32 %v9799, %v9831
      %v9864 = vadd.f32 %v9800, %v9832
      %v9865 = vadd.f32 %v9801, %v9833
      %v9866 = vadd.f32 %v9802, %v9834
      %v9867 = vadd.f32 %v9803, %v9835
      %v9868 = vadd.f32 %v9804, %v9836
      %v9869 = vadd.f32 %v9805, %v9837
      %v9870 = vadd.f32 %v9806, %v9838
      %v9871 = vadd.f32 %v9807, %v9839
      %v9872 = vadd.f32 %v9808, %v9840
      %v9873 = vadd.f32 %v9809, %v9841
      %v9874 = vadd.f32 %v9810, %v9842
      %v9875 = vadd.f32 %v9811, %v9843
      %v9876 = vadd.f32 %v9812, %v9844
      %v9877 = vadd.f32 %v9813, %v9845
      %v9878 = vadd.f32 %v9814, %v9846
      %v9879 = vadd.f32 %v9815, %v9847
      %v9880 = vadd.f32 %v9816, %v9848
      %v9881 = vadd.f32 %v9817, %v9849
      %v9882 = vmax.f32 %v9850, 0.0
      %v9883 = vmax.f32 %v9851, 0.0
      %v9884 = vmax.f32 %v9852, 0.0
      %v9885 = vmax.f32 %v9853, 0.0
      %v9886 = vmax.f32 %v9854, 0.0
      %v9887 = vmax.f32 %v9855, 0.0
      %v9888 = vmax.f32 %v9856, 0.0
      %v9889 = vmax.f32 %v9857, 0.0
      %v9890 = vmax.f32 %v9858, 0.0
      %v9891 = vmax.f32 %v9859, 0.0
      %v9892 = vmax.f32 %v9860, 0.0
      %v9893 = vmax.f32 %v9861, 0.0
      %v9894 = vmax.f32 %v9862, 0.0
      %v9895 = vmax.f32 %v9863, 0.0
      %v9896 = vmax.f32 %v9864, 0.0
      %v9897 = vmax.f32 %v9865, 0.0
      %v9898 = vmax.f32 %v9866, 0.0
      %v9899 = vmax.f32 %v9867, 0.0
      %v9900 = vmax.f32 %v9868, 0.0
      %v9901 = vmax.f32 %v9869, 0.0
      %v9902 = vmax.f32 %v9870, 0.0
      %v9903 = vmax.f32 %v9871, 0.0
      %v9904 = vmax.f32 %v9872, 0.0
      %v9905 = vmax.f32 %v9873, 0.0
      %v9906 = vmax.f32 %v9874, 0.0
      %v9907 = vmax.f32 %v9875, 0.0
      %v9908 = vmax.f32 %v9876, 0.0
      %v9909 = vmax.f32 %v9877, 0.0
      %v9910 = vmax.f32 %v9878, 0.0
      %v9911 = vmax.f32 %v9879, 0.0
      %v9912 = vmax.f32 %v9880, 0.0
      %v9913 = vmax.f32 %v9881, 0.0
      %v9914 = vpack.c.bf16 %v9883, %v9882
      %v9915 = vpack.c.bf16 %v9885, %v9884
      %v9916 = vpack.c.bf16 %v9887, %v9886
      %v9917 = vpack.c.bf16 %v9889, %v9888
      %v9918 = vpack.c.bf16 %v9891, %v9890
      %v9919 = vpack.c.bf16 %v9893, %v9892
      %v9920 = vpack.c.bf16 %v9895, %v9894
      %v9921 = vpack.c.bf16 %v9897, %v9896
      %v9922 = vpack.c.bf16 %v9899, %v9898
      %v9923 = vpack.c.bf16 %v9901, %v9900
      %v9924 = vpack.c.bf16 %v9903, %v9902
      %v9925 = vpack.c.bf16 %v9905, %v9904
      %v9926 = vpack.c.bf16 %v9907, %v9906
      %v9927 = vpack.c.bf16 %v9909, %v9908
      %v9928 = vpack.c.bf16 %v9911, %v9910
      %v9929 = vpack.c.bf16 %v9913, %v9912
      %v9930 = vld [vmem:[%s10] sm:$0xf]
      %v9931 = vld [vmem:[%s10 + $0x4] sm:$0xf]
      %v9932 = vld [vmem:[%s10 + $0x8] sm:$0xf]
      %v9933 = vld [vmem:[%s10 + $0xc] sm:$0xf]
      %v9934 = vld [vmem:[%s10 + $0x10] sm:$0xf]
      %v9935 = vld [vmem:[%s10 + $0x14] sm:$0xf]
      %v9936 = vld [vmem:[%s10 + $0x18] sm:$0xf]
      %v9937 = vld [vmem:[%s10 + $0x1c] sm:$0xf]
      %v9938 = vld [vmem:[%s10 + $0x20] sm:$0xf]
      %v9939 = vld [vmem:[%s10 + $0x24] sm:$0xf]
      %v9940 = vld [vmem:[%s10 + $0x28] sm:$0xf]
      %v9941 = vld [vmem:[%s10 + $0x2c] sm:$0xf]
      %v9942 = vld [vmem:[%s10 + $0x30] sm:$0xf]
      %v9943 = vld [vmem:[%s10 + $0x34] sm:$0xf]
      %v9944 = vld [vmem:[%s10 + $0x38] sm:$0xf]
      %v9945 = vld [vmem:[%s10 + $0x3c] sm:$0xf]
      %v9962 = vunpack.c.l.b16 %v9930
      %v9963 = vunpack.c.l.b16 %v9931
      %v9964 = vunpack.c.l.b16 %v9932
      %v9965 = vunpack.c.l.b16 %v9933
      %v9966 = vunpack.c.l.b16 %v9934
      %v9967 = vunpack.c.l.b16 %v9935
      %v9968 = vunpack.c.l.b16 %v9936
      %v9969 = vunpack.c.l.b16 %v9937
      %v9970 = vunpack.c.l.b16 %v9938
      %v9971 = vunpack.c.l.b16 %v9939
      %v9972 = vunpack.c.l.b16 %v9940
      %v9973 = vunpack.c.l.b16 %v9941
      %v9974 = vunpack.c.l.b16 %v9942
      %v9975 = vunpack.c.l.b16 %v9943
      %v9976 = vunpack.c.l.b16 %v9944
      %v9977 = vunpack.c.l.b16 %v9945
      %v9978 = vpack.c.b16 %v9963, %v9962
      %v9979 = vpack.c.b16 %v9965, %v9964
      %v9980 = vpack.c.b16 %v9967, %v9966
      %v9981 = vpack.c.b16 %v9969, %v9968
      %v9982 = vpack.c.b16 %v9971, %v9970
      %v9983 = vpack.c.b16 %v9973, %v9972
      %v9984 = vpack.c.b16 %v9975, %v9974
      %v9985 = vpack.c.b16 %v9977, %v9976
      %9994 = vmatprep.subr.bf16.mxu0 0
      %9995 = vmatpush1.bf16.msra.mxu0 %v9978
      %9996 = vmatprep.subr.bf16.mxu0 0
      %9997 = vmatpush1.bf16.msra.mxu0 %v9979
      %9998 = vmatprep.subr.bf16.mxu0 0
      %9999 = vmatpush1.bf16.msra.mxu0 %v9980
      %10000 = vmatprep.subr.bf16.mxu0 0
      %10001 = vmatpush1.bf16.msra.mxu0 %v9981
      %10002 = vmatprep.subr.bf16.mxu0 0
      %10003 = vmatpush1.bf16.msra.mxu0 %v9982
      %10004 = vmatprep.subr.bf16.mxu0 0
      %10005 = vmatpush1.bf16.msra.mxu0 %v9983
      %10006 = vmatprep.subr.bf16.mxu0 0
      %10007 = vmatpush1.bf16.msra.mxu0 %v9984
      %10008 = vmatprep.subr.bf16.mxu0 0
      %10009 = vmatpush1.bf16.msra.mxu0 %v9985
      %10010 = vmatprep.subr.bf16.mxu0 0
      %10011 = vmatpush1.bf16.msra.mxu0 0
      %10012 = vmatprep.subr.bf16.mxu0 0
      %10013 = vmatpush1.bf16.msra.mxu0 0
      %10014 = vmatprep.subr.bf16.mxu0 0
      %10015 = vmatpush1.bf16.msra.mxu0 0
      %10016 = vmatprep.subr.bf16.mxu0 0
      %10017 = vmatpush1.bf16.msra.mxu0 0
      %10018 = vmatprep.subr.bf16.mxu0 0
      %10019 = vmatpush1.bf16.msra.mxu0 0
      %10020 = vmatprep.subr.bf16.mxu0 0
      %10021 = vmatpush1.bf16.msra.mxu0 0
      %10022 = vmatprep.subr.bf16.mxu0 0
      %10023 = vmatpush1.bf16.msra.mxu0 0
      %10024 = vmatprep.subr.bf16.mxu0 0
      %10025 = vmatpush1.bf16.msra.mxu0 0
      %10026 = vmatprep.mubr.bf16.mxu0 0
      %10027 = vmatmul.mubr.bf16.gmra.mrb[0].mxu0 %v9914
      %v10028 = vpop.f32.mrb[0].mxu0
      %v10029 = vadd.f32 0.0, %v10028
      %v10030 = vpop.f32.mrb[0].mxu0
      %v10031 = vpop.f32.mrb[0].mxu0
      %v10032 = vadd.f32 0.0, %v10031
      %v10033 = vpop.f32.mrb[0].mxu0
      %10034 = vmatprep.mubr.bf16.mxu0 0
      %10035 = vmatmul.mubr.bf16.gmra.mrb[0].mxu0 %v9915
      %v10036 = vpop.f32.mrb[0].mxu0
      %v10037 = vadd.f32 0.0, %v10036
      %v10038 = vpop.f32.mrb[0].mxu0
      %v10039 = vpop.f32.mrb[0].mxu0
      %v10040 = vadd.f32 0.0, %v10039
      %v10041 = vpop.f32.mrb[0].mxu0
      %10042 = vmatprep.mubr.bf16.mxu0 0
      %10043 = vmatmul.mubr.bf16.gmra.mrb[0].mxu0 %v9916
      %v10044 = vpop.f32.mrb[0].mxu0
      %v10045 = vadd.f32 0.0, %v10044
      %v10046 = vpop.f32.mrb[0].mxu0
      %v10047 = vpop.f32.mrb[0].mxu0
      %v10048 = vadd.f32 0.0, %v10047
      %v10049 = vpop.f32.mrb[0].mxu0
      %10050 = vmatprep.mubr.bf16.mxu0 0
      %10051 = vmatmul.mubr.bf16.gmra.mrb[0].mxu0 %v9917
      %v10052 = vpop.f32.mrb[0].mxu0
      %v10053 = vadd.f32 0.0, %v10052
      %v10054 = vpop.f32.mrb[0].mxu0
      %v10055 = vpop.f32.mrb[0].mxu0
      %v10056 = vadd.f32 0.0, %v10055
      %v10057 = vpop.f32.mrb[0].mxu0
      %10058 = vmatprep.mubr.bf16.mxu0 0
      %10059 = vmatmul.mubr.bf16.gmra.mrb[0].mxu0 %v9918
      %v10060 = vpop.f32.mrb[0].mxu0
      %v10061 = vadd.f32 0.0, %v10060
      %v10062 = vpop.f32.mrb[0].mxu0
      %v10063 = vpop.f32.mrb[0].mxu0
      %v10064 = vadd.f32 0.0, %v10063
      %v10065 = vpop.f32.mrb[0].mxu0
      %10066 = vmatprep.mubr.bf16.mxu0 0
      %10067 = vmatmul.mubr.bf16.gmra.mrb[0].mxu0 %v9919
      %v10068 = vpop.f32.mrb[0].mxu0
      %v10069 = vadd.f32 0.0, %v10068
      %v10070 = vpop.f32.mrb[0].mxu0
      %v10071 = vpop.f32.mrb[0].mxu0
      %v10072 = vadd.f32 0.0, %v10071
      %v10073 = vpop.f32.mrb[0].mxu0
      %10074 = vmatprep.mubr.bf16.mxu0 0
      %10075 = vmatmul.mubr.bf16.gmra.mrb[0].mxu0 %v9920
      %v10076 = vpop.f32.mrb[0].mxu0
      %v10077 = vadd.f32 0.0, %v10076
      %v10078 = vpop.f32.mrb[0].mxu0
      %v10079 = vpop.f32.mrb[0].mxu0
      %v10080 = vadd.f32 0.0, %v10079
      %v10081 = vpop.f32.mrb[0].mxu0
      %10082 = vmatprep.mubr.bf16.mxu0 0
      %10083 = vmatmul.mubr.bf16.gmra.mrb[0].mxu0 %v9921
      %v10084 = vpop.f32.mrb[0].mxu0
      %v10085 = vadd.f32 0.0, %v10084
      %v10086 = vpop.f32.mrb[0].mxu0
      %v10087 = vpop.f32.mrb[0].mxu0
      %v10088 = vadd.f32 0.0, %v10087
      %v10089 = vpop.f32.mrb[0].mxu0
      %10090 = vmatprep.mubr.bf16.mxu0 0
      %10091 = vmatmul.mubr.bf16.gmra.mrb[0].mxu0 %v9922
      %v10092 = vpop.f32.mrb[0].mxu0
      %v10093 = vadd.f32 0.0, %v10092
      %v10094 = vpop.f32.mrb[0].mxu0
      %v10095 = vpop.f32.mrb[0].mxu0
      %v10096 = vadd.f32 0.0, %v10095
      %v10097 = vpop.f32.mrb[0].mxu0
      %10098 = vmatprep.mubr.bf16.mxu0 0
      %10099 = vmatmul.mubr.bf16.gmra.mrb[0].mxu0 %v9923
      %v10100 = vpop.f32.mrb[0].mxu0
      %v10101 = vadd.f32 0.0, %v10100
      %v10102 = vpop.f32.mrb[0].mxu0
      %v10103 = vpop.f32.mrb[0].mxu0
      %v10104 = vadd.f32 0.0, %v10103
      %v10105 = vpop.f32.mrb[0].mxu0
      %10106 = vmatprep.mubr.bf16.mxu0 0
      %10107 = vmatmul.mubr.bf16.gmra.mrb[0].mxu0 %v9924
      %v10108 = vpop.f32.mrb[0].mxu0
      %v10109 = vadd.f32 0.0, %v10108
      %v10110 = vpop.f32.mrb[0].mxu0
      %v10111 = vpop.f32.mrb[0].mxu0
      %v10112 = vadd.f32 0.0, %v10111
      %v10113 = vpop.f32.mrb[0].mxu0
      %10114 = vmatprep.mubr.bf16.mxu0 0
      %10115 = vmatmul.mubr.bf16.gmra.mrb[0].mxu0 %v9925
      %v10116 = vpop.f32.mrb[0].mxu0
      %v10117 = vadd.f32 0.0, %v10116
      %v10118 = vpop.f32.mrb[0].mxu0
      %v10119 = vpop.f32.mrb[0].mxu0
      %v10120 = vadd.f32 0.0, %v10119
      %v10121 = vpop.f32.mrb[0].mxu0
      %10122 = vmatprep.mubr.bf16.mxu0 0
      %10123 = vmatmul.mubr.bf16.gmra.mrb[0].mxu0 %v9926
      %v10124 = vpop.f32.mrb[0].mxu0
      %v10125 = vadd.f32 0.0, %v10124
      %v10126 = vpop.f32.mrb[0].mxu0
      %v10127 = vpop.f32.mrb[0].mxu0
      %v10128 = vadd.f32 0.0, %v10127
      %v10129 = vpop.f32.mrb[0].mxu0
      %10130 = vmatprep.mubr.bf16.mxu0 0
      %10131 = vmatmul.mubr.bf16.gmra.mrb[0].mxu0 %v9927
      %v10132 = vpop.f32.mrb[0].mxu0
      %v10133 = vadd.f32 0.0, %v10132
      %v10134 = vpop.f32.mrb[0].mxu0
      %v10135 = vpop.f32.mrb[0].mxu0
      %v10136 = vadd.f32 0.0, %v10135
      %v10137 = vpop.f32.mrb[0].mxu0
      %10138 = vmatprep.mubr.bf16.mxu0 0
      %10139 = vmatmul.mubr.bf16.gmra.mrb[0].mxu0 %v9928
      %v10140 = vpop.f32.mrb[0].mxu0
      %v10141 = vadd.f32 0.0, %v10140
      %v10142 = vpop.f32.mrb[0].mxu0
      %v10143 = vpop.f32.mrb[0].mxu0
      %v10144 = vadd.f32 0.0, %v10143
      %v10145 = vpop.f32.mrb[0].mxu0
      %10146 = vmatprep.mubr.bf16.mxu0 0
      %10147 = vmatmul.mubr.bf16.gmra.mrb[0].mxu0 %v9929
      %v10148 = vpop.f32.mrb[0].mxu0
      %v10149 = vadd.f32 0.0, %v10148
      %v10150 = vpop.f32.mrb[0].mxu0
      %v10151 = vpop.f32.mrb[0].mxu0
      %v10152 = vadd.f32 0.0, %v10151
      %v10153 = vpop.f32.mrb[0].mxu0
      %10154 = vdwg.mxu0
      %v10155 = vld [vmem:[%s11] sm:$0x1]
      %v10157 = vlaneseq
      %v10158 = vshrl.u32 %v10157, 7
      %v10159 = vsub.s32 0, %v10158
      %v10160 = vrot.slane %v10155, %v10159
      %v10162 = vmul.f32 %v10029, %v10160
      %v10163 = vmul.f32 %v10032, %v10160
      %v10164 = vmul.f32 %v10037, %v10160
      %v10165 = vmul.f32 %v10040, %v10160
      %v10166 = vmul.f32 %v10045, %v10160
      %v10167 = vmul.f32 %v10048, %v10160
      %v10168 = vmul.f32 %v10053, %v10160
      %v10169 = vmul.f32 %v10056, %v10160
      %v10170 = vmul.f32 %v10061, %v10160
      %v10171 = vmul.f32 %v10064, %v10160
      %v10172 = vmul.f32 %v10069, %v10160
      %v10173 = vmul.f32 %v10072, %v10160
      %v10174 = vmul.f32 %v10077, %v10160
      %v10175 = vmul.f32 %v10080, %v10160
      %v10176 = vmul.f32 %v10085, %v10160
      %v10177 = vmul.f32 %v10088, %v10160
      %v10178 = vmul.f32 %v10093, %v10160
      %v10179 = vmul.f32 %v10096, %v10160
      %v10180 = vmul.f32 %v10101, %v10160
      %v10181 = vmul.f32 %v10104, %v10160
      %v10182 = vmul.f32 %v10109, %v10160
      %v10183 = vmul.f32 %v10112, %v10160
      %v10184 = vmul.f32 %v10117, %v10160
      %v10185 = vmul.f32 %v10120, %v10160
      %v10186 = vmul.f32 %v10125, %v10160
      %v10187 = vmul.f32 %v10128, %v10160
      %v10188 = vmul.f32 %v10133, %v10160
      %v10189 = vmul.f32 %v10136, %v10160
      %v10190 = vmul.f32 %v10141, %v10160
      %v10191 = vmul.f32 %v10144, %v10160
      %v10192 = vmul.f32 %v10149, %v10160
      %v10193 = vmul.f32 %v10152, %v10160
      %v10194 = vld [vmem:[%s12] sm:$0x1]
      %v10196 = vlaneseq
      %v10197 = vshrl.u32 %v10196, 7
      %v10198 = vsub.s32 0, %v10197
      %v10199 = vrot.slane %v10194, %v10198
      %v10201 = vadd.f32 %v10162, %v10199
      %v10202 = vadd.f32 %v10163, %v10199
      %v10203 = vadd.f32 %v10164, %v10199
      %v10204 = vadd.f32 %v10165, %v10199
      %v10205 = vadd.f32 %v10166, %v10199
      %v10206 = vadd.f32 %v10167, %v10199
      %v10207 = vadd.f32 %v10168, %v10199
      %v10208 = vadd.f32 %v10169, %v10199
      %v10209 = vadd.f32 %v10170, %v10199
      %v10210 = vadd.f32 %v10171, %v10199
      %v10211 = vadd.f32 %v10172, %v10199
      %v10212 = vadd.f32 %v10173, %v10199
      %v10213 = vadd.f32 %v10174, %v10199
      %v10214 = vadd.f32 %v10175, %v10199
      %v10215 = vadd.f32 %v10176, %v10199
      %v10216 = vadd.f32 %v10177, %v10199
      %v10217 = vadd.f32 %v10178, %v10199
      %v10218 = vadd.f32 %v10179, %v10199
      %v10219 = vadd.f32 %v10180, %v10199
      %v10220 = vadd.f32 %v10181, %v10199
      %v10221 = vadd.f32 %v10182, %v10199
      %v10222 = vadd.f32 %v10183, %v10199
      %v10223 = vadd.f32 %v10184, %v10199
      %v10224 = vadd.f32 %v10185, %v10199
      %v10225 = vadd.f32 %v10186, %v10199
      %v10226 = vadd.f32 %v10187, %v10199
      %v10227 = vadd.f32 %v10188, %v10199
      %v10228 = vadd.f32 %v10189, %v10199
      %v10229 = vadd.f32 %v10190, %v10199
      %v10230 = vadd.f32 %v10191, %v10199
      %v10231 = vadd.f32 %v10192, %v10199
      %v10232 = vadd.f32 %v10193, %v10199
      %v10233 = vmax.f32 %v10201, 0.0
      %v10234 = vmax.f32 %v10202, 0.0
      %v10235 = vmax.f32 %v10203, 0.0
      %v10236 = vmax.f32 %v10204, 0.0
      %v10237 = vmax.f32 %v10205, 0.0
      %v10238 = vmax.f32 %v10206, 0.0
      %v10239 = vmax.f32 %v10207, 0.0
      %v10240 = vmax.f32 %v10208, 0.0
      %v10241 = vmax.f32 %v10209, 0.0
      %v10242 = vmax.f32 %v10210, 0.0
      %v10243 = vmax.f32 %v10211, 0.0
      %v10244 = vmax.f32 %v10212, 0.0
      %v10245 = vmax.f32 %v10213, 0.0
      %v10246 = vmax.f32 %v10214, 0.0
      %v10247 = vmax.f32 %v10215, 0.0
      %v10248 = vmax.f32 %v10216, 0.0
      %v10249 = vmax.f32 %v10217, 0.0
      %v10250 = vmax.f32 %v10218, 0.0
      %v10251 = vmax.f32 %v10219, 0.0
      %v10252 = vmax.f32 %v10220, 0.0
      %v10253 = vmax.f32 %v10221, 0.0
      %v10254 = vmax.f32 %v10222, 0.0
      %v10255 = vmax.f32 %v10223, 0.0
      %v10256 = vmax.f32 %v10224, 0.0
      %v10257 = vmax.f32 %v10225, 0.0
      %v10258 = vmax.f32 %v10226, 0.0
      %v10259 = vmax.f32 %v10227, 0.0
      %v10260 = vmax.f32 %v10228, 0.0
      %v10261 = vmax.f32 %v10229, 0.0
      %v10262 = vmax.f32 %v10230, 0.0
      %v10263 = vmax.f32 %v10231, 0.0
      %v10264 = vmax.f32 %v10232, 0.0
      %v10265 = vadd.f32 %v10233, %v10234
      %v10266 = vadd.f32 %v10265, %v10235
      %v10267 = vadd.f32 %v10266, %v10236
      %v10268 = vadd.f32 %v10267, %v10237
      %v10269 = vadd.f32 %v10268, %v10238
      %v10270 = vadd.f32 %v10269, %v10239
      %v10271 = vadd.f32 %v10270, %v10240
      %v10272 = vadd.f32 %v10271, %v10241
      %v10273 = vadd.f32 %v10272, %v10242
      %v10274 = vadd.f32 %v10273, %v10243
      %v10275 = vadd.f32 %v10274, %v10244
      %v10276 = vadd.f32 %v10275, %v10245
      %v10277 = vadd.f32 %v10276, %v10246
      %v10278 = vadd.f32 %v10277, %v10247
      %v10279 = vadd.f32 %v10278, %v10248
      %v10280 = vadd.f32 %v10279, %v10249
      %v10281 = vadd.f32 %v10280, %v10250
      %v10282 = vadd.f32 %v10281, %v10251
      %v10283 = vadd.f32 %v10282, %v10252
      %v10284 = vadd.f32 %v10283, %v10253
      %v10285 = vadd.f32 %v10284, %v10254
      %v10286 = vadd.f32 %v10285, %v10255
      %v10287 = vadd.f32 %v10286, %v10256
      %v10288 = vadd.f32 %v10287, %v10257
      %v10289 = vadd.f32 %v10288, %v10258
      %v10290 = vadd.f32 %v10289, %v10259
      %v10291 = vadd.f32 %v10290, %v10260
      %v10292 = vadd.f32 %v10291, %v10261
      %v10293 = vadd.f32 %v10292, %v10262
      %v10294 = vadd.f32 %v10293, %v10263
      %v10295 = vadd.f32 %v10294, %v10264
      %v10296 = vrot.slane %v10295, 4
      %v10297 = vadd.f32 %v10295, %v10296
      %v10298 = vrot.slane %v10297, 2
      %v10299 = vadd.f32 %v10297, %v10298
      %v10300 = vrot.slane %v10299, 1
      %v10301 = vadd.f32 %v10299, %v10300
      %v10302 = vmul.f32 %v10301, 0.00390625
      %10303 = vst [vmem:[%s438] sm:$0xff] %v10302
      %p10304 = scmp.lt.s32.totalorder %s24, 1
      %s10305 = scalar_select %p10304, %s24, 1
      %s10306 = smul.addr %s10305, 8
      %s10307 = scalar_lea.vmem %s13, %s10306
      // Predicated region
      $region73: #{feature_extractor_forward.1} parent=71 // pred_check
        %p10308 = pneg %p320
      $region74: #{feature_extractor_forward.1} parent=71 // pred_check_branch
        %10310 = sbr.rel (%p10308) target = $region76
      $region75: #{feature_extractor_forward.1} parent=71 // pred_region
        _
      $region76: #{feature_extractor_forward.1} parent=71 // pred_fallthru
        _
    $region72: #{feature_extractor_forward.1} parent=5 // pred_fallthru
      _
    %p10311 = scmp.le.s32.totalorder 2, %s19
    // Predicated region
    $region77: #{feature_extractor_forward.1} parent=5 // pred_check
      %p10312 = pneg %p10311
    $region78: #{feature_extractor_forward.1} parent=5 // pred_check_branch
      %10314 = sbr.rel (%p10312) target = $region80
    $region79: #{feature_extractor_forward.1} parent=5 // pred_region
      %s10315 = ssub.s32 %s19, 2
      // Predicated region
      $region81: #{feature_extractor_forward.1} parent=79 // pred_check
        %p10316 = pneg %p326
      $region82: #{feature_extractor_forward.1} parent=79 // pred_check_branch
        %10318 = sbr.rel (%p10316) target = $region84
      $region83: #{feature_extractor_forward.1} parent=79 // pred_region
        %p10319 = scmp.lt.s32.totalorder %s25, 1
        %s10320 = scalar_select %p10319, %s25, 1
        %s10321 = smul.addr %s10320, 8
        %s10322 = scalar_lea.vmem %s13, %s10321
      $region84: #{feature_extractor_forward.1} parent=79 // pred_fallthru
        _
    $region80: #{feature_extractor_forward.1} parent=5 // pred_fallthru
      _
  $region6: #{feature_extractor_forward.1} parent=0 // loop_footer
    %s23 = sadd.s32 1, %s19
  $region7: #{feature_extractor_forward.1} parent=0 // loop_footer_branch
    %18 = sbr.rel target = $region3
  $region8: #{feature_extractor_forward.1} parent=0 // loop_exit
    _

</llo_original>
